<compile_context>
chip_gen: v7x
topology: tpu7x:2x2x1
jax: 0.10.0
libtpu: 0.0.40
codegen_flags: <defaults>
</compile_context>

<pallas_src>
import functools

import jax
import jax.numpy as jnp
from jax.experimental import pallas as pl
from jax.experimental.pallas import tpu as pltpu


# --------------------------------------------------------------------------------------
# helpers
# --------------------------------------------------------------------------------------
def _round_up(x, m):
    return ((x + m - 1) // m) * m


@functools.lru_cache(maxsize=None)
def _vmem_budget():
    """(tile working-set budget, compiler scoped-VMEM limit), generation-aware."""
    try:
        cap = int(pltpu.get_tpu_info().vmem_capacity_bytes)
    except Exception:
        cap = 64 * 1024 * 1024                      # conservative fallback (v7x-sized)
    budget = int(cap * 0.45)                        # ~28 MiB on v7x, ~57 MiB on v5e/v6e
    limit = min(int(cap * 0.85), cap - (8 << 20))   # leave headroom for internal scratch
    return budget, limit


@functools.lru_cache(maxsize=None)
def _num_tensorcores():
    """TensorCores per chip (megacore).  Detection errors are performance-only."""
    try:
        kind = jax.devices()[0].device_kind.lower()
    except Exception:
        return 1
    if any(t in kind for t in ("lite", "v5e", "v6e", "v6")):
        return 1
    if any(t in kind for t in ("v7", "7x", "v4", "v5p", "v5")):
        return 2
    return 1


def _apply_activation(x, activation):
    if activation == "relu":
        return jnp.maximum(x, 0.0)
    if activation == "leaky_relu":
        return jnp.where(x >= 0.0, x, 0.2 * x)
    return x


def _pick_tm(m, pp, coutp, budget):
    """Largest M-tile (multiple of 8) whose pipelined working set fits the budget.
    Weights/bias are single-buffered (pl.Buffered(1)); streamed tensors double-buffered."""
    m8 = _round_up(max(m, 8), 8)
    for tm in (2048, 1024, 512, 256, 128, 64, 32, 16, 8):
        if tm > m8:
            continue
        vmem = (2 * tm * pp * 2          # px   bf16, double-buffered
                + 2 * tm * 4             # msum f32,  double-buffered
                + pp * coutp * 2         # weights bf16, single-buffered
                + coutp * 4              # bias f32, single-buffered
                + 2 * tm * coutp * 2     # out bf16, double-buffered
                + 2 * 8 * coutp * 4)     # stats accumulator f32
        if vmem <= budget:
            return tm
    return 8


# --------------------------------------------------------------------------------------
# Pallas kernels
# --------------------------------------------------------------------------------------
def _pconv_kernel(px_ref, msum_ref, w_ref, b_ref, out_ref, *maybe_stats,
                  activation, apply_act, collect_stats):
    # conv matmul on the MXU (bf16 inputs, f32 accumulation)
    raw = jnp.dot(px_ref[...], w_ref[...], preferred_element_type=jnp.float32)  # (TM, Coutp)

    # partial-conv renormalization: (conv - bias)/mask_sum + bias, zero where mask_sum == 0
    # (mask values are exactly 0/1, so the float == 0.0 test is exact; matches the module's
    #  masked_fill_ formulation, no slide_winsize numerator)
    msum = msum_ref[...]                                    # (TM, 1)
    is_zero = msum == 0.0
    denom = jnp.where(is_zero, 1.0, msum)
    inv = pl.reciprocal(denom, approx=True)                 # EUP, separate VLIW slot
    out = raw * inv + b_ref[...]
    out = jnp.where(is_zero, 0.0, out)

    if apply_act:
        out = _apply_activation(out, activation)

    out_ref[...] = out.astype(out_ref.dtype)                # bf16 store (halves HBM traffic)

    if collect_stats:
        stats_ref = maybe_stats[0]                          # (8, Coutp) per-core resident acc

        @pl.when(pl.program_id(1) == 0)                     # inner (arbitrary) axis start
        def _():
            stats_ref[...] = jnp.zeros_like(stats_ref)

        # one full-block update (avoids masked sub-row read-modify-write stores)
        s = jnp.sum(out, axis=0, keepdims=True)             # (1, Coutp), f32
        ss = jnp.sum(out * out, axis=0, keepdims=True)      # (1, Coutp), f32
        pad = jnp.zeros((6, s.shape[1]), jnp.float32)
        stats_ref[...] += jnp.concatenate([s, ss, pad], axis=0)


def _bn_act_kernel(x_ref, stats_ref, out_ref, *, activation, inv_m, eps=1e-5):
    # BatchNorm2d, training mode: biased batch stats over (N, H, W), weight=1, bias=0.
    # TODO(synk): running_mean / running_var buffer updates are stateful and not modeled
    # (they do not affect the forward output in training mode).
    x = x_ref[...].astype(jnp.float32)
    mean = stats_ref[0:1, :] * inv_m
    var = stats_ref[1:2, :] * inv_m - mean * mean
    var = jnp.maximum(var, 0.0)
    y = (x - mean) * jax.lax.rsqrt(var + eps)
    out_ref[...] = _apply_activation(y, activation).astype(out_ref.dtype)


# --------------------------------------------------------------------------------------
# one partial-conv layer (glue + pallas_call)
# --------------------------------------------------------------------------------------
def partial_conv_layer(x, mask, w, b, *, stride, pad, use_bn, activation):
    """x: (N, H, W, Cin) f32/bf16.  mask: (N, H, W, Cin) f32.  w: (K, K, Cin, Cout)."""
    N, H, W, Cin = x.shape
    K = w.shape[0]
    Cout = w.shape[-1]
    Ho = (H + 2 * pad - K) // stride + 1
    Wo = (W + 2 * pad - K) // stride + 1
    M = N * Ho * Wo
    P = K * K * Cin

    # --- glue: im2col of (x * mask) built directly in bf16; mask window sum in f32 ---
    xm = (x * mask).astype(jnp.bfloat16)
    xp = jnp.pad(xm, ((0, 0), (pad, pad), (pad, pad), (0, 0)))
    mch = jnp.sum(mask, axis=-1, keepdims=True)              # channel-summed mask, f32
    mp = jnp.pad(mch, ((0, 0), (pad, pad), (pad, pad), (0, 0)))

    cols = []
    msum_hw = None
    for kh in range(K):
        for kw in range(K):
            cols.append(xp[:, kh:kh + stride * Ho:stride, kw:kw + stride * Wo:stride, :])
            sl = mp[:, kh:kh + stride * Ho:stride, kw:kw + stride * Wo:stride, :]
            msum_hw = sl if msum_hw is None else msum_hw + sl

    # TODO(synk): for the stride-1 K=3 decoder layers, replace this 9x im2col with an
    # in-kernel kh/kw loop of shifted (TM, Cin)x(Cin, Cout) matmuls over the padded NHWC block.
    px = jnp.concatenate(cols, axis=-1).reshape(M, P)        # bf16, order ((kh*K+kw)*Cin + c)
    msum = msum_hw.reshape(M, 1)                             # f32

    # --- pad to MXU/lane-friendly shapes and pick the M tile (generation-aware VMEM) ---
    Pp = _round_up(P, 128)
    Coutp = _round_up(Cout, 128)
    budget, vmem_limit = _vmem_budget()
    TM = _pick_tm(M, Pp, Coutp, budget)
    n_cores = _num_tensorcores() if use_bn else 1
    Mp = _round_up(M, n_cores * TM)

    px_p = jnp.pad(px, ((0, Mp - M), (0, Pp - P)))                                  # bf16
    msum_p = jnp.pad(msum, ((0, Mp - M), (0, 0))).astype(jnp.float32)
    wf_p = jnp.pad(w.reshape(P, Cout), ((0, Pp - P), (0, Coutp - Cout))).astype(jnp.bfloat16)
    bias = b if b is not None else jnp.zeros((Cout,), jnp.float32)
    bias_p = jnp.pad(bias.reshape(1, Cout), ((0, 0), (0, Coutp - Cout))).astype(jnp.float32)

    resident = pl.Buffered(1)   # constant index_map blocks: single VMEM buffer, no re-DMA

    if use_bn:
        steps = Mp // (n_cores * TM)
        grid = (n_cores, steps)
        in_specs = [
            pl.BlockSpec((TM, Pp), lambda c, i: (c * steps + i, 0)),
            pl.BlockSpec((TM, 1), lambda c, i: (c * steps + i, 0)),
            pl.BlockSpec((Pp, Coutp), lambda c, i: (0, 0), pipeline_mode=resident),
            pl.BlockSpec((1, Coutp), lambda c, i: (0, 0), pipeline_mode=resident),
        ]
        out_shape = (jax.ShapeDtypeStruct((Mp, Coutp), jnp.bfloat16),
                     jax.ShapeDtypeStruct((n_cores * 8, Coutp), jnp.float32))
        out_specs = (pl.BlockSpec((TM, Coutp), lambda c, i: (c * steps + i, 0)),
                     pl.BlockSpec((8, Coutp), lambda c, i: (c, 0)))
        # stats block is revisited only along the inner axis; outer axis feeds megacore
        semantics = ("parallel", "arbitrary")
    else:
        grid = (Mp // TM,)
        in_specs = [
            pl.BlockSpec((TM, Pp), lambda i: (i, 0)),
            pl.BlockSpec((TM, 1), lambda i: (i, 0)),
            pl.BlockSpec((Pp, Coutp), lambda i: (0, 0), pipeline_mode=resident),
            pl.BlockSpec((1, Coutp), lambda i: (0, 0), pipeline_mode=resident),
        ]
        out_shape = jax.ShapeDtypeStruct((Mp, Coutp), jnp.bfloat16)
        out_specs = pl.BlockSpec((TM, Coutp), lambda i: (i, 0))
        semantics = ("parallel",)

    kernel1 = functools.partial(_pconv_kernel, activation=activation,
                                apply_act=not use_bn, collect_stats=use_bn)
    res = pl.pallas_call(
        kernel1,
        out_shape=out_shape,
        grid=grid,
        in_specs=in_specs,
        out_specs=out_specs,
        compiler_params=pltpu.CompilerParams(
            dimension_semantics=semantics, vmem_limit_bytes=vmem_limit),
    )(px_p, msum_p, wf_p, bias_p)

    if use_bn:
        out_prebn, stats_all = res
        # combine per-core partial sums (tiny glue reduction)
        stats = jnp.sum(stats_all.reshape(n_cores, 8, Coutp), axis=0)
        kernel2 = functools.partial(_bn_act_kernel, activation=activation,
                                    inv_m=1.0 / float(M))
        out2d = pl.pallas_call(
            kernel2,
            out_shape=jax.ShapeDtypeStruct((Mp, Coutp), jnp.bfloat16),
            grid=(Mp // TM,),
            in_specs=[pl.BlockSpec((TM, Coutp), lambda i: (i, 0)),
                      pl.BlockSpec((8, Coutp), lambda i: (0, 0), pipeline_mode=resident)],
            out_specs=pl.BlockSpec((TM, Coutp), lambda i: (i, 0)),
            input_output_aliases={0: 0},     # reuse the pre-BN buffer as the BN output
            compiler_params=pltpu.CompilerParams(
                dimension_semantics=("parallel",), vmem_limit_bytes=vmem_limit),
        )(out_prebn, stats)
    else:
        out2d = res

    out = out2d[:M, :Cout].reshape(N, Ho, Wo, Cout)          # bf16
    # new_mask is channel-identical: 1 where the window saw any valid pixel
    new_mask = jnp.broadcast_to((msum_hw > 0.0).astype(jnp.float32), (N, Ho, Wo, Cout))
    return out, new_mask


# --------------------------------------------------------------------------------------
# Network definition (layer configs match PartialConvNet exactly)
# --------------------------------------------------------------------------------------
def enc_cfg(i):
    if i == 1:
        return dict(cin=3, cout=64, k=7, s=2, p=3, bn=False, act="relu", bias=False)
    if i == 2:
        return dict(cin=64, cout=128, k=5, s=2, p=2, bn=True, act="relu", bias=False)
    if i == 3:
        return dict(cin=128, cout=256, k=3, s=2, p=1, bn=True, act="relu", bias=False)
    if i == 4:
        return dict(cin=256, cout=512, k=3, s=2, p=1, bn=True, act="relu", bias=False)
    return dict(cin=512, cout=512, k=3, s=2, p=1, bn=True, act="relu", bias=False)


def dec_cfg(i):
    if i >= 5:
        return dict(cin=512 + 512, cout=512, k=3, s=1, p=1, bn=True, act="leaky_relu", bias=False)
    if i == 4:
        return dict(cin=512 + 256, cout=256, k=3, s=1, p=1, bn=True, act="leaky_relu", bias=False)
    if i == 3:
        return dict(cin=256 + 128, cout=128, k=3, s=1, p=1, bn=True, act="leaky_relu", bias=False)
    if i == 2:
        return dict(cin=128 + 64, cout=64, k=3, s=1, p=1, bn=True, act="leaky_relu", bias=False)
    return dict(cin=64 + 3, cout=3, k=3, s=1, p=1, bn=False, act="", bias=True)


def init_params(key, layers):
    """Deterministic init: kaiming_normal(fan_in) for conv weights (like the PyTorch module)."""
    params = {}
    for i in range(1, layers + 1):
        cfg = enc_cfg(i)
        key, kw_ = jax.random.split(key)
        fan_in = cfg["cin"] * cfg["k"] * cfg["k"]
        w = jax.random.normal(kw_, (cfg["k"], cfg["k"], cfg["cin"], cfg["cout"]),
                              jnp.float32) * (2.0 / fan_in) ** 0.5
        params[f"encoder_{i}"] = (w, None)
    for i in range(layers, 0, -1):
        cfg = dec_cfg(i)
        key, kw_, kb_ = jax.random.split(key, 3)
        fan_in = cfg["cin"] * cfg["k"] * cfg["k"]
        w = jax.random.normal(kw_, (cfg["k"], cfg["k"], cfg["cin"], cfg["cout"]),
                              jnp.float32) * (2.0 / fan_in) ** 0.5
        if cfg["bias"]:
            bound = 1.0 / fan_in ** 0.5
            b = jax.random.uniform(kb_, (cfg["cout"],), jnp.float32, -bound, bound)
        else:
            b = None
        params[f"decoder_{i}"] = (w, b)
    return params


def _upsample2x(x):  # nearest-neighbor, scale_factor=2 (F.interpolate default mode)
    return jnp.repeat(jnp.repeat(x, 2, axis=1), 2, axis=2)


def partial_conv_net(x_nchw, mask_nchw, params, *, layers):
    x = jnp.transpose(x_nchw, (0, 2, 3, 1)).astype(jnp.float32)
    m = jnp.transpose(mask_nchw, (0, 2, 3, 1)).astype(jnp.float32)

    enc_h = {0: x}
    enc_m = {0: m}
    h, mk = x, m
    for i in range(1, layers + 1):
        cfg = enc_cfg(i)
        w, b = params[f"encoder_{i}"]
        h, mk = partial_conv_layer(h, mk, w, b, stride=cfg["s"], pad=cfg["p"],
                                   use_bn=cfg["bn"], activation=cfg["act"])
        enc_h[i], enc_m[i] = h, mk

    out, omask = h, mk
    for i in range(layers, 0, -1):
        out = _upsample2x(out)
        omask = _upsample2x(omask)
        out = jnp.concatenate([out, enc_h[i - 1].astype(out.dtype)], axis=-1)
        omask = jnp.concatenate([omask, enc_m[i - 1]], axis=-1)
        cfg = dec_cfg(i)
        w, b = params[f"decoder_{i}"]
        out, omask = partial_conv_layer(out, omask, w, b, stride=cfg["s"], pad=cfg["p"],
                                        use_bn=cfg["bn"], activation=cfg["act"])

    return jnp.transpose(out, (0, 3, 1, 2)).astype(jnp.float32)


# --------------------------------------------------------------------------------------
if __name__ == "__main__":
    layers = 3
    input_size = 2 ** (layers + 1)      # PartialConvNet assertion: 2**(layers+1) == input_size
    N, C = 2, 3

    key = jax.random.PRNGKey(0)
    kx, km, kp = jax.random.split(key, 3)
    x_nchw = jax.random.normal(kx, (N, C, input_size, input_size), jnp.float32)
    mask_nchw = jax.random.bernoulli(km, 0.75, (N, C, input_size, input_size)).astype(jnp.float32)
    params = init_params(kp, layers)

    net = jax.jit(functools.partial(partial_conv_net, layers=layers))
    out = net(x_nchw, mask_nchw, params)
    out = jax.block_until_ready(out)

    assert out.shape == (N, C, input_size, input_size), out.shape
    assert bool(jnp.all(jnp.isfinite(out)))
    print("KERNEL_OK")
</pallas_src>

<mosaic_0001>
module attributes {stable_mosaic.version = 11 : i64} {
  func.func @_pconv_kernel(%arg0: i32, %arg1: memref<128x256xbf16, #tpu.memory_space<vmem>>, %arg2: memref<128x1xf32, #tpu.memory_space<vmem>>, %arg3: memref<256x128xbf16, #tpu.memory_space<vmem>>, %arg4: memref<1x128xf32, #tpu.memory_space<vmem>>, %arg5: memref<128x128xbf16, #tpu.memory_space<vmem>>) attributes {dimension_semantics = [#tpu.dimension_semantics<parallel>], iteration_bounds = array<i64: 1>, scalar_prefetch = 0 : i64, scratch_operands = 0 : i64, tpu.core_type = #tpu.core_type<tc>, window_params = [{transform_indices = @transform_0, window_bounds = array<i64: 128, 256>}, {transform_indices = @transform_1, window_bounds = array<i64: 128, 1>}, {pipeline_mode = #tpu.pipeline_mode<synchronous>, transform_indices = @transform_2, window_bounds = array<i64: 256, 128>}, {pipeline_mode = #tpu.pipeline_mode<synchronous>, transform_indices = @transform_3, window_bounds = array<i64: 1, 128>}, {transform_indices = @transform_4, window_bounds = array<i64: 128, 128>}]} {
    %c0 = arith.constant 0 : index
    %c0_0 = arith.constant 0 : index
    %0 = vector.load %arg1[%c0, %c0_0] : memref<128x256xbf16, #tpu.memory_space<vmem>>, vector<128x256xbf16>
    %c0_1 = arith.constant 0 : index
    %c0_2 = arith.constant 0 : index
    %1 = vector.load %arg3[%c0_1, %c0_2] : memref<256x128xbf16, #tpu.memory_space<vmem>>, vector<256x128xbf16>
    %cst = arith.constant dense<0.000000e+00> : vector<128x128xf32>
    %2 = tpu.matmul %0, %1, %cst {dimension_numbers = #tpu.dot_dimension_numbers<[1], [0], [0], [1], [0, 0, 1, 1], [], []>} : vector<128x256xbf16>, vector<256x128xbf16>, vector<128x128xf32> -> vector<128x128xf32>
    %c0_3 = arith.constant 0 : index
    %c0_4 = arith.constant 0 : index
    %3 = vector.load %arg2[%c0_3, %c0_4] : memref<128x1xf32, #tpu.memory_space<vmem>>, vector<128x1xf32>
    %cst_5 = arith.constant 0.000000e+00 : f32
    %4 = vector.broadcast %cst_5 : f32 to vector<128x1xf32>
    %5 = arith.cmpf oeq, %3, %4 : vector<128x1xf32>
    %cst_6 = arith.constant 1.000000e+00 : f32
    %6 = vector.broadcast %cst_6 : f32 to vector<128x1xf32>
    %7 = arith.select %5, %6, %3 : vector<128x1xi1>, vector<128x1xf32>
    %8 = tpu.reciprocal %7 {approx = true} : vector<128x1xf32> -> vector<128x1xf32>
    %9 = vector.broadcast %8 : vector<128x1xf32> to vector<128x128xf32>
    %10 = arith.mulf %2, %9 : vector<128x128xf32>
    %c0_7 = arith.constant 0 : index
    %c0_8 = arith.constant 0 : index
    %11 = vector.load %arg4[%c0_7, %c0_8] : memref<1x128xf32, #tpu.memory_space<vmem>>, vector<1x128xf32>
    %12 = vector.broadcast %11 : vector<1x128xf32> to vector<128x128xf32>
    %13 = arith.addf %10, %12 : vector<128x128xf32>
    %cst_9 = arith.constant 0.000000e+00 : f32
    %14 = vector.shape_cast %5 : vector<128x1xi1> to vector<128x1xi1>
    %15 = vector.broadcast %14 : vector<128x1xi1> to vector<128x128xi1>
    %16 = vector.broadcast %cst_9 : f32 to vector<128x128xf32>
    %17 = arith.select %15, %16, %13 : vector<128x128xi1>, vector<128x128xf32>
    %cst_10 = arith.constant 0.000000e+00 : f32
    %18 = vector.broadcast %cst_10 : f32 to vector<128x128xf32>
    %19 = arith.maximumf %17, %18 : vector<128x128xf32>
    %20 = arith.truncf %19 : vector<128x128xf32> to vector<128x128xbf16>
    %c0_11 = arith.constant 0 : index
    %c0_12 = arith.constant 0 : index
    %21 = vector.load %arg5[%c0_11, %c0_12] : memref<128x128xbf16, #tpu.memory_space<vmem>>, vector<128x128xbf16>
    tpu.vector_store %arg5[%c0_11, %c0_12], %20 {strides = array<i32>} : memref<128x128xbf16, #tpu.memory_space<vmem>>, vector<128x128xbf16>,
    return
  }
  func.func @transform_0(%arg0: i32) -> (i32, i32) {
    %c0_i32 = arith.constant 0 : i32
    %c0_i32_0 = arith.constant 0 : i32
    return %arg0, %c0_i32 : i32, i32
  }
  func.func @transform_1(%arg0: i32) -> (i32, i32) {
    %c0_i32 = arith.constant 0 : i32
    %c0_i32_0 = arith.constant 0 : i32
    return %arg0, %c0_i32 : i32, i32
  }
  func.func @transform_2(%arg0: i32) -> (i32, i32) {
    %c0_i32 = arith.constant 0 : i32
    %c0_i32_0 = arith.constant 0 : i32
    %c0_i32_1 = arith.constant 0 : i32
    return %c0_i32, %c0_i32_0 : i32, i32
  }
  func.func @transform_3(%arg0: i32) -> (i32, i32) {
    %c0_i32 = arith.constant 0 : i32
    %c0_i32_0 = arith.constant 0 : i32
    %c0_i32_1 = arith.constant 0 : i32
    return %c0_i32, %c0_i32_0 : i32, i32
  }
  func.func @transform_4(%arg0: i32) -> (i32, i32) {
    %c0_i32 = arith.constant 0 : i32
    %c0_i32_0 = arith.constant 0 : i32
    return %arg0, %c0_i32 : i32, i32
  }
}

module attributes {stable_mosaic.version = 11 : i64} {
  func.func @_pconv_kernel(%arg0: i32, %arg1: i32, %arg2: memref<32x1664xbf16, #tpu.memory_space<vmem>>, %arg3: memref<32x1xf32, #tpu.memory_space<vmem>>, %arg4: memref<1664x128xbf16, #tpu.memory_space<vmem>>, %arg5: memref<1x128xf32, #tpu.memory_space<vmem>>, %arg6: memref<32x128xbf16, #tpu.memory_space<vmem>>, %arg7: memref<8x128xf32, #tpu.memory_space<vmem>>) attributes {dimension_semantics = [#tpu.dimension_semantics<parallel>, #tpu.dimension_semantics<arbitrary>], iteration_bounds = array<i64: 1, 1>, scalar_prefetch = 0 : i64, scratch_operands = 0 : i64, tpu.core_type = #tpu.core_type<tc>, window_params = [{transform_indices = @transform_0, window_bounds = array<i64: 32, 1664>}, {transform_indices = @transform_1, window_bounds = array<i64: 32, 1>}, {pipeline_mode = #tpu.pipeline_mode<synchronous>, transform_indices = @transform_2, window_bounds = array<i64: 1664, 128>}, {pipeline_mode = #tpu.pipeline_mode<synchronous>, transform_indices = @transform_3, window_bounds = array<i64: 1, 128>}, {transform_indices = @transform_4, window_bounds = array<i64: 32, 128>}, {transform_indices = @transform_5, window_bounds = array<i64: 8, 128>}]} {
    %c0 = arith.constant 0 : index
    %c0_0 = arith.constant 0 : index
    %0 = vector.load %arg2[%c0, %c0_0] : memref<32x1664xbf16, #tpu.memory_space<vmem>>, vector<32x1664xbf16>
    %c0_1 = arith.constant 0 : index
    %c0_2 = arith.constant 0 : index
    %1 = vector.load %arg4[%c0_1, %c0_2] : memref<1664x128xbf16, #tpu.memory_space<vmem>>, vector<1664x128xbf16>
    %cst = arith.constant dense<0.000000e+00> : vector<32x128xf32>
    %2 = tpu.matmul %0, %1, %cst {dimension_numbers = #tpu.dot_dimension_numbers<[1], [0], [0], [1], [0, 0, 1, 1], [], []>} : vector<32x1664xbf16>, vector<1664x128xbf16>, vector<32x128xf32> -> vector<32x128xf32>
    %c0_3 = arith.constant 0 : index
    %c0_4 = arith.constant 0 : index
    %3 = vector.load %arg3[%c0_3, %c0_4] : memref<32x1xf32, #tpu.memory_space<vmem>>, vector<32x1xf32>
    %cst_5 = arith.constant 0.000000e+00 : f32
    %4 = vector.broadcast %cst_5 : f32 to vector<32x1xf32>
    %5 = arith.cmpf oeq, %3, %4 : vector<32x1xf32>
    %cst_6 = arith.constant 1.000000e+00 : f32
    %6 = vector.broadcast %cst_6 : f32 to vector<32x1xf32>
    %7 = arith.select %5, %6, %3 : vector<32x1xi1>, vector<32x1xf32>
    %8 = tpu.reciprocal %7 {approx = true} : vector<32x1xf32> -> vector<32x1xf32>
    %9 = vector.broadcast %8 : vector<32x1xf32> to vector<32x128xf32>
    %10 = arith.mulf %2, %9 : vector<32x128xf32>
    %c0_7 = arith.constant 0 : index
    %c0_8 = arith.constant 0 : index
    %11 = vector.load %arg5[%c0_7, %c0_8] : memref<1x128xf32, #tpu.memory_space<vmem>>, vector<1x128xf32>
    %12 = vector.broadcast %11 : vector<1x128xf32> to vector<32x128xf32>
    %13 = arith.addf %10, %12 : vector<32x128xf32>
    %cst_9 = arith.constant 0.000000e+00 : f32
    %14 = vector.shape_cast %5 : vector<32x1xi1> to vector<32x1xi1>
    %15 = vector.broadcast %14 : vector<32x1xi1> to vector<32x128xi1>
    %16 = vector.broadcast %cst_9 : f32 to vector<32x128xf32>
    %17 = arith.select %15, %16, %13 : vector<32x128xi1>, vector<32x128xf32>
    %18 = arith.truncf %17 : vector<32x128xf32> to vector<32x128xbf16>
    %c0_10 = arith.constant 0 : index
    %c0_11 = arith.constant 0 : index
    %19 = vector.load %arg6[%c0_10, %c0_11] : memref<32x128xbf16, #tpu.memory_space<vmem>>, vector<32x128xbf16>
    tpu.vector_store %arg6[%c0_10, %c0_11], %18 {strides = array<i32>} : memref<32x128xbf16, #tpu.memory_space<vmem>>, vector<32x128xbf16>,
    %c0_i32 = arith.constant 0 : i32
    %20 = arith.cmpi eq, %arg1, %c0_i32 : i32
    %21 = arith.extui %20 : i1 to i32
    %c0_i32_12 = arith.constant 0 : i32
    %22 = arith.cmpi ne, %21, %c0_i32_12 : i32
    scf.if %22 {
      %cst_20 = arith.constant 0.000000e+00 : f32
      %33 = vector.broadcast %cst_20 : f32 to vector<8x128xf32>
      %c0_21 = arith.constant 0 : index
      %c0_22 = arith.constant 0 : index
      %34 = vector.load %arg7[%c0_21, %c0_22] : memref<8x128xf32, #tpu.memory_space<vmem>>, vector<8x128xf32>
      tpu.vector_store %arg7[%c0_21, %c0_22], %33 {strides = array<i32>} : memref<8x128xf32, #tpu.memory_space<vmem>>, vector<8x128xf32>,
    } else {
    }
    %cst_13 = arith.constant dense<0.000000e+00> : vector<128xf32>
    %23 = vector.multi_reduction <add>, %17, %cst_13 [0] : vector<32x128xf32> to vector<128xf32>
    %24 = vector.shape_cast %23 : vector<128xf32> to vector<1x128xf32>
    %25 = arith.mulf %17, %17 : vector<32x128xf32>
    %cst_14 = arith.constant dense<0.000000e+00> : vector<128xf32>
    %26 = vector.multi_reduction <add>, %25, %cst_14 [0] : vector<32x128xf32> to vector<128xf32>
    %27 = vector.shape_cast %26 : vector<128xf32> to vector<1x128xf32>
    %cst_15 = arith.constant 0.000000e+00 : f32
    %28 = vector.broadcast %cst_15 : f32 to vector<6x128xf32>
    %c0_16 = arith.constant 0 : index
    %c0_17 = arith.constant 0 : index
    %29 = vector.load %arg7[%c0_16, %c0_17] : memref<8x128xf32, #tpu.memory_space<vmem>>, vector<8x128xf32>
    %30 = tpu.concatenate %24, %27, %28 in 0 : vector<1x128xf32>, vector<1x128xf32>, vector<6x128xf32> -> vector<8x128xf32>
    %31 = arith.addf %29, %30 : vector<8x128xf32>
    %c0_18 = arith.constant 0 : index
    %c0_19 = arith.constant 0 : index
    %32 = vector.load %arg7[%c0_18, %c0_19] : memref<8x128xf32, #tpu.memory_space<vmem>>, vector<8x128xf32>
    tpu.vector_store %arg7[%c0_18, %c0_19], %31 {strides = array<i32>} : memref<8x128xf32, #tpu.memory_space<vmem>>, vector<8x128xf32>,
    return
  }
  func.func @transform_0(%arg0: i32, %arg1: i32) -> (i32, i32) {
    %c1_i32 = arith.constant 1 : i32
    %0 = arith.muli %arg0, %c1_i32 : i32
    %1 = arith.addi %0, %arg1 : i32
    %c0_i32 = arith.constant 0 : i32
    %c0_i32_0 = arith.constant 0 : i32
    return %1, %c0_i32 : i32, i32
  }
  func.func @transform_1(%arg0: i32, %arg1: i32) -> (i32, i32) {
    %c1_i32 = arith.constant 1 : i32
    %0 = arith.muli %arg0, %c1_i32 : i32
    %1 = arith.addi %0, %arg1 : i32
    %c0_i32 = arith.constant 0 : i32
    %c0_i32_0 = arith.constant 0 : i32
    return %1, %c0_i32 : i32, i32
  }
  func.func @transform_2(%arg0: i32, %arg1: i32) -> (i32, i32) {
    %c0_i32 = arith.constant 0 : i32
    %c0_i32_0 = arith.constant 0 : i32
    %c0_i32_1 = arith.constant 0 : i32
    return %c0_i32, %c0_i32_0 : i32, i32
  }
  func.func @transform_3(%arg0: i32, %arg1: i32) -> (i32, i32) {
    %c0_i32 = arith.constant 0 : i32
    %c0_i32_0 = arith.constant 0 : i32
    %c0_i32_1 = arith.constant 0 : i32
    return %c0_i32, %c0_i32_0 : i32, i32
  }
  func.func @transform_4(%arg0: i32, %arg1: i32) -> (i32, i32) {
    %c1_i32 = arith.constant 1 : i32
    %0 = arith.muli %arg0, %c1_i32 : i32
    %1 = arith.addi %0, %arg1 : i32
    %c0_i32 = arith.constant 0 : i32
    %c0_i32_0 = arith.constant 0 : i32
    return %1, %c0_i32 : i32, i32
  }
  func.func @transform_5(%arg0: i32, %arg1: i32) -> (i32, i32) {
    %c0_i32 = arith.constant 0 : i32
    %c0_i32_0 = arith.constant 0 : i32
    return %arg0, %c0_i32 : i32, i32
  }
}

module attributes {stable_mosaic.version = 11 : i64} {
  func.func @_bn_act_kernel(%arg0: i32, %arg1: memref<32x128xbf16, #tpu.memory_space<vmem>>, %arg2: memref<8x128xf32, #tpu.memory_space<vmem>>, %arg3: memref<32x128xbf16, #tpu.memory_space<vmem>>) attributes {dimension_semantics = [#tpu.dimension_semantics<parallel>], iteration_bounds = array<i64: 1>, scalar_prefetch = 0 : i64, scratch_operands = 0 : i64, tpu.core_type = #tpu.core_type<tc>, window_params = [{transform_indices = @transform_0, window_bounds = array<i64: 32, 128>}, {pipeline_mode = #tpu.pipeline_mode<synchronous>, transform_indices = @transform_1, window_bounds = array<i64: 8, 128>}, {transform_indices = @transform_2, window_bounds = array<i64: 32, 128>}]} {
    %c0 = arith.constant 0 : index
    %c0_0 = arith.constant 0 : index
    %0 = vector.load %arg1[%c0, %c0_0] : memref<32x128xbf16, #tpu.memory_space<vmem>>, vector<32x128xbf16>
    %1 = arith.extf %0 : vector<32x128xbf16> to vector<32x128xf32>
    %c0_1 = arith.constant 0 : index
    %c0_2 = arith.constant 0 : index
    %2 = vector.load %arg2[%c0_1, %c0_2] : memref<8x128xf32, #tpu.memory_space<vmem>>, vector<1x128xf32>
    %cst = arith.constant 3.125000e-02 : f32
    %3 = vector.broadcast %cst : f32 to vector<1x128xf32>
    %4 = arith.mulf %2, %3 : vector<1x128xf32>
    %c1 = arith.constant 1 : index
    %c0_3 = arith.constant 0 : index
    %5 = vector.load %arg2[%c1, %c0_3] : memref<8x128xf32, #tpu.memory_space<vmem>>, vector<1x128xf32>
    %cst_4 = arith.constant 3.125000e-02 : f32
    %6 = vector.broadcast %cst_4 : f32 to vector<1x128xf32>
    %7 = arith.mulf %5, %6 : vector<1x128xf32>
    %8 = arith.mulf %4, %4 : vector<1x128xf32>
    %9 = arith.subf %7, %8 : vector<1x128xf32>
    %cst_5 = arith.constant 0.000000e+00 : f32
    %10 = vector.broadcast %cst_5 : f32 to vector<1x128xf32>
    %11 = arith.maximumf %9, %10 : vector<1x128xf32>
    %12 = vector.broadcast %4 : vector<1x128xf32> to vector<32x128xf32>
    %13 = arith.subf %1, %12 : vector<32x128xf32>
    %cst_6 = arith.constant 9.99999974E-6 : f32
    %14 = vector.broadcast %cst_6 : f32 to vector<1x128xf32>
    %15 = arith.addf %11, %14 : vector<1x128xf32>
    %16 = math.rsqrt %15 : vector<1x128xf32>
    %17 = vector.broadcast %16 : vector<1x128xf32> to vector<32x128xf32>
    %18 = arith.mulf %13, %17 : vector<32x128xf32>
    %cst_7 = arith.constant 0.000000e+00 : f32
    %19 = vector.broadcast %cst_7 : f32 to vector<32x128xf32>
    %20 = arith.maximumf %18, %19 : vector<32x128xf32>
    %21 = arith.truncf %20 : vector<32x128xf32> to vector<32x128xbf16>
    %c0_8 = arith.constant 0 : index
    %c0_9 = arith.constant 0 : index
    %22 = vector.load %arg3[%c0_8, %c0_9] : memref<32x128xbf16, #tpu.memory_space<vmem>>, vector<32x128xbf16>
    tpu.vector_store %arg3[%c0_8, %c0_9], %21 {strides = array<i32>} : memref<32x128xbf16, #tpu.memory_space<vmem>>, vector<32x128xbf16>,
    return
  }
  func.func @transform_0(%arg0: i32) -> (i32, i32) {
    %c0_i32 = arith.constant 0 : i32
    %c0_i32_0 = arith.constant 0 : i32
    return %arg0, %c0_i32 : i32, i32
  }
  func.func @transform_1(%arg0: i32) -> (i32, i32) {
    %c0_i32 = arith.constant 0 : i32
    %c0_i32_0 = arith.constant 0 : i32
    %c0_i32_1 = arith.constant 0 : i32
    return %c0_i32, %c0_i32_0 : i32, i32
  }
  func.func @transform_2(%arg0: i32) -> (i32, i32) {
    %c0_i32 = arith.constant 0 : i32
    %c0_i32_0 = arith.constant 0 : i32
    return %arg0, %c0_i32 : i32, i32
  }
}

module attributes {stable_mosaic.version = 11 : i64} {
  func.func @_bn_act_kernel(%arg0: i32, %arg1: memref<8x256xbf16, #tpu.memory_space<vmem>>, %arg2: memref<8x256xf32, #tpu.memory_space<vmem>>, %arg3: memref<8x256xbf16, #tpu.memory_space<vmem>>) attributes {dimension_semantics = [#tpu.dimension_semantics<parallel>], iteration_bounds = array<i64: 1>, scalar_prefetch = 0 : i64, scratch_operands = 0 : i64, tpu.core_type = #tpu.core_type<tc>, window_params = [{transform_indices = @transform_0, window_bounds = array<i64: 8, 256>}, {pipeline_mode = #tpu.pipeline_mode<synchronous>, transform_indices = @transform_1, window_bounds = array<i64: 8, 256>}, {transform_indices = @transform_2, window_bounds = array<i64: 8, 256>}]} {
    %c0 = arith.constant 0 : index
    %c0_0 = arith.constant 0 : index
    %0 = vector.load %arg1[%c0, %c0_0] : memref<8x256xbf16, #tpu.memory_space<vmem>>, vector<8x256xbf16>
    %1 = arith.extf %0 : vector<8x256xbf16> to vector<8x256xf32>
    %c0_1 = arith.constant 0 : index
    %c0_2 = arith.constant 0 : index
    %2 = vector.load %arg2[%c0_1, %c0_2] : memref<8x256xf32, #tpu.memory_space<vmem>>, vector<1x256xf32>
    %cst = arith.constant 1.250000e-01 : f32
    %3 = vector.broadcast %cst : f32 to vector<1x256xf32>
    %4 = arith.mulf %2, %3 : vector<1x256xf32>
    %c1 = arith.constant 1 : index
    %c0_3 = arith.constant 0 : index
    %5 = vector.load %arg2[%c1, %c0_3] : memref<8x256xf32, #tpu.memory_space<vmem>>, vector<1x256xf32>
    %cst_4 = arith.constant 1.250000e-01 : f32
    %6 = vector.broadcast %cst_4 : f32 to vector<1x256xf32>
    %7 = arith.mulf %5, %6 : vector<1x256xf32>
    %8 = arith.mulf %4, %4 : vector<1x256xf32>
    %9 = arith.subf %7, %8 : vector<1x256xf32>
    %cst_5 = arith.constant 0.000000e+00 : f32
    %10 = vector.broadcast %cst_5 : f32 to vector<1x256xf32>
    %11 = arith.maximumf %9, %10 : vector<1x256xf32>
    %12 = vector.broadcast %4 : vector<1x256xf32> to vector<8x256xf32>
    %13 = arith.subf %1, %12 : vector<8x256xf32>
    %cst_6 = arith.constant 9.99999974E-6 : f32
    %14 = vector.broadcast %cst_6 : f32 to vector<1x256xf32>
    %15 = arith.addf %11, %14 : vector<1x256xf32>
    %16 = math.rsqrt %15 : vector<1x256xf32>
    %17 = vector.broadcast %16 : vector<1x256xf32> to vector<8x256xf32>
    %18 = arith.mulf %13, %17 : vector<8x256xf32>
    %cst_7 = arith.constant 0.000000e+00 : f32
    %19 = vector.broadcast %cst_7 : f32 to vector<8x256xf32>
    %20 = arith.maximumf %18, %19 : vector<8x256xf32>
    %21 = arith.truncf %20 : vector<8x256xf32> to vector<8x256xbf16>
    %c0_8 = arith.constant 0 : index
    %c0_9 = arith.constant 0 : index
    %22 = vector.load %arg3[%c0_8, %c0_9] : memref<8x256xbf16, #tpu.memory_space<vmem>>, vector<8x256xbf16>
    tpu.vector_store %arg3[%c0_8, %c0_9], %21 {strides = array<i32>} : memref<8x256xbf16, #tpu.memory_space<vmem>>, vector<8x256xbf16>,
    return
  }
  func.func @transform_0(%arg0: i32) -> (i32, i32) {
    %c0_i32 = arith.constant 0 : i32
    %c0_i32_0 = arith.constant 0 : i32
    return %arg0, %c0_i32 : i32, i32
  }
  func.func @transform_1(%arg0: i32) -> (i32, i32) {
    %c0_i32 = arith.constant 0 : i32
    %c0_i32_0 = arith.constant 0 : i32
    %c0_i32_1 = arith.constant 0 : i32
    return %c0_i32, %c0_i32_0 : i32, i32
  }
  func.func @transform_2(%arg0: i32) -> (i32, i32) {
    %c0_i32 = arith.constant 0 : i32
    %c0_i32_0 = arith.constant 0 : i32
    return %arg0, %c0_i32 : i32, i32
  }
}

module attributes {stable_mosaic.version = 11 : i64} {
  func.func @_pconv_kernel(%arg0: i32, %arg1: i32, %arg2: memref<8x1152xbf16, #tpu.memory_space<vmem>>, %arg3: memref<8x1xf32, #tpu.memory_space<vmem>>, %arg4: memref<1152x256xbf16, #tpu.memory_space<vmem>>, %arg5: memref<1x256xf32, #tpu.memory_space<vmem>>, %arg6: memref<8x256xbf16, #tpu.memory_space<vmem>>, %arg7: memref<8x256xf32, #tpu.memory_space<vmem>>) attributes {dimension_semantics = [#tpu.dimension_semantics<parallel>, #tpu.dimension_semantics<arbitrary>], iteration_bounds = array<i64: 1, 1>, scalar_prefetch = 0 : i64, scratch_operands = 0 : i64, tpu.core_type = #tpu.core_type<tc>, window_params = [{transform_indices = @transform_0, window_bounds = array<i64: 8, 1152>}, {transform_indices = @transform_1, window_bounds = array<i64: 8, 1>}, {pipeline_mode = #tpu.pipeline_mode<synchronous>, transform_indices = @transform_2, window_bounds = array<i64: 1152, 256>}, {pipeline_mode = #tpu.pipeline_mode<synchronous>, transform_indices = @transform_3, window_bounds = array<i64: 1, 256>}, {transform_indices = @transform_4, window_bounds = array<i64: 8, 256>}, {transform_indices = @transform_5, window_bounds = array<i64: 8, 256>}]} {
    %c0 = arith.constant 0 : index
    %c0_0 = arith.constant 0 : index
    %0 = vector.load %arg2[%c0, %c0_0] : memref<8x1152xbf16, #tpu.memory_space<vmem>>, vector<8x1152xbf16>
    %c0_1 = arith.constant 0 : index
    %c0_2 = arith.constant 0 : index
    %1 = vector.load %arg4[%c0_1, %c0_2] : memref<1152x256xbf16, #tpu.memory_space<vmem>>, vector<1152x256xbf16>
    %cst = arith.constant dense<0.000000e+00> : vector<8x256xf32>
    %2 = tpu.matmul %0, %1, %cst {dimension_numbers = #tpu.dot_dimension_numbers<[1], [0], [0], [1], [0, 0, 1, 1], [], []>} : vector<8x1152xbf16>, vector<1152x256xbf16>, vector<8x256xf32> -> vector<8x256xf32>
    %c0_3 = arith.constant 0 : index
    %c0_4 = arith.constant 0 : index
    %3 = vector.load %arg3[%c0_3, %c0_4] : memref<8x1xf32, #tpu.memory_space<vmem>>, vector<8x1xf32>
    %cst_5 = arith.constant 0.000000e+00 : f32
    %4 = vector.broadcast %cst_5 : f32 to vector<8x1xf32>
    %5 = arith.cmpf oeq, %3, %4 : vector<8x1xf32>
    %cst_6 = arith.constant 1.000000e+00 : f32
    %6 = vector.broadcast %cst_6 : f32 to vector<8x1xf32>
    %7 = arith.select %5, %6, %3 : vector<8x1xi1>, vector<8x1xf32>
    %8 = tpu.reciprocal %7 {approx = true} : vector<8x1xf32> -> vector<8x1xf32>
    %9 = vector.broadcast %8 : vector<8x1xf32> to vector<8x256xf32>
    %10 = arith.mulf %2, %9 : vector<8x256xf32>
    %c0_7 = arith.constant 0 : index
    %c0_8 = arith.constant 0 : index
    %11 = vector.load %arg5[%c0_7, %c0_8] : memref<1x256xf32, #tpu.memory_space<vmem>>, vector<1x256xf32>
    %12 = vector.broadcast %11 : vector<1x256xf32> to vector<8x256xf32>
    %13 = arith.addf %10, %12 : vector<8x256xf32>
    %cst_9 = arith.constant 0.000000e+00 : f32
    %14 = vector.shape_cast %5 : vector<8x1xi1> to vector<8x1xi1>
    %15 = vector.broadcast %14 : vector<8x1xi1> to vector<8x256xi1>
    %16 = vector.broadcast %cst_9 : f32 to vector<8x256xf32>
    %17 = arith.select %15, %16, %13 : vector<8x256xi1>, vector<8x256xf32>
    %18 = arith.truncf %17 : vector<8x256xf32> to vector<8x256xbf16>
    %c0_10 = arith.constant 0 : index
    %c0_11 = arith.constant 0 : index
    %19 = vector.load %arg6[%c0_10, %c0_11] : memref<8x256xbf16, #tpu.memory_space<vmem>>, vector<8x256xbf16>
    tpu.vector_store %arg6[%c0_10, %c0_11], %18 {strides = array<i32>} : memref<8x256xbf16, #tpu.memory_space<vmem>>, vector<8x256xbf16>,
    %c0_i32 = arith.constant 0 : i32
    %20 = arith.cmpi eq, %arg1, %c0_i32 : i32
    %21 = arith.extui %20 : i1 to i32
    %c0_i32_12 = arith.constant 0 : i32
    %22 = arith.cmpi ne, %21, %c0_i32_12 : i32
    scf.if %22 {
      %cst_20 = arith.constant 0.000000e+00 : f32
      %33 = vector.broadcast %cst_20 : f32 to vector<8x256xf32>
      %c0_21 = arith.constant 0 : index
      %c0_22 = arith.constant 0 : index
      %34 = vector.load %arg7[%c0_21, %c0_22] : memref<8x256xf32, #tpu.memory_space<vmem>>, vector<8x256xf32>
      tpu.vector_store %arg7[%c0_21, %c0_22], %33 {strides = array<i32>} : memref<8x256xf32, #tpu.memory_space<vmem>>, vector<8x256xf32>,
    } else {
    }
    %cst_13 = arith.constant dense<0.000000e+00> : vector<256xf32>
    %23 = vector.multi_reduction <add>, %17, %cst_13 [0] : vector<8x256xf32> to vector<256xf32>
    %24 = vector.shape_cast %23 : vector<256xf32> to vector<1x256xf32>
    %25 = arith.mulf %17, %17 : vector<8x256xf32>
    %cst_14 = arith.constant dense<0.000000e+00> : vector<256xf32>
    %26 = vector.multi_reduction <add>, %25, %cst_14 [0] : vector<8x256xf32> to vector<256xf32>
    %27 = vector.shape_cast %26 : vector<256xf32> to vector<1x256xf32>
    %cst_15 = arith.constant 0.000000e+00 : f32
    %28 = vector.broadcast %cst_15 : f32 to vector<6x256xf32>
    %c0_16 = arith.constant 0 : index
    %c0_17 = arith.constant 0 : index
    %29 = vector.load %arg7[%c0_16, %c0_17] : memref<8x256xf32, #tpu.memory_space<vmem>>, vector<8x256xf32>
    %30 = tpu.concatenate %24, %27, %28 in 0 : vector<1x256xf32>, vector<1x256xf32>, vector<6x256xf32> -> vector<8x256xf32>
    %31 = arith.addf %29, %30 : vector<8x256xf32>
    %c0_18 = arith.constant 0 : index
    %c0_19 = arith.constant 0 : index
    %32 = vector.load %arg7[%c0_18, %c0_19] : memref<8x256xf32, #tpu.memory_space<vmem>>, vector<8x256xf32>
    tpu.vector_store %arg7[%c0_18, %c0_19], %31 {strides = array<i32>} : memref<8x256xf32, #tpu.memory_space<vmem>>, vector<8x256xf32>,
    return
  }
  func.func @transform_0(%arg0: i32, %arg1: i32) -> (i32, i32) {
    %c1_i32 = arith.constant 1 : i32
    %0 = arith.muli %arg0, %c1_i32 : i32
    %1 = arith.addi %0, %arg1 : i32
    %c0_i32 = arith.constant 0 : i32
    %c0_i32_0 = arith.constant 0 : i32
    return %1, %c0_i32 : i32, i32
  }
  func.func @transform_1(%arg0: i32, %arg1: i32) -> (i32, i32) {
    %c1_i32 = arith.constant 1 : i32
    %0 = arith.muli %arg0, %c1_i32 : i32
    %1 = arith.addi %0, %arg1 : i32
    %c0_i32 = arith.constant 0 : i32
    %c0_i32_0 = arith.constant 0 : i32
    return %1, %c0_i32 : i32, i32
  }
  func.func @transform_2(%arg0: i32, %arg1: i32) -> (i32, i32) {
    %c0_i32 = arith.constant 0 : i32
    %c0_i32_0 = arith.constant 0 : i32
    %c0_i32_1 = arith.constant 0 : i32
    return %c0_i32, %c0_i32_0 : i32, i32
  }
  func.func @transform_3(%arg0: i32, %arg1: i32) -> (i32, i32) {
    %c0_i32 = arith.constant 0 : i32
    %c0_i32_0 = arith.constant 0 : i32
    %c0_i32_1 = arith.constant 0 : i32
    return %c0_i32, %c0_i32_0 : i32, i32
  }
  func.func @transform_4(%arg0: i32, %arg1: i32) -> (i32, i32) {
    %c1_i32 = arith.constant 1 : i32
    %0 = arith.muli %arg0, %c1_i32 : i32
    %1 = arith.addi %0, %arg1 : i32
    %c0_i32 = arith.constant 0 : i32
    %c0_i32_0 = arith.constant 0 : i32
    return %1, %c0_i32 : i32, i32
  }
  func.func @transform_5(%arg0: i32, %arg1: i32) -> (i32, i32) {
    %c0_i32 = arith.constant 0 : i32
    %c0_i32_0 = arith.constant 0 : i32
    return %arg0, %c0_i32 : i32, i32
  }
}

module attributes {stable_mosaic.version = 11 : i64} {
  func.func @_bn_act_kernel(%arg0: i32, %arg1: memref<32x128xbf16, #tpu.memory_space<vmem>>, %arg2: memref<8x128xf32, #tpu.memory_space<vmem>>, %arg3: memref<32x128xbf16, #tpu.memory_space<vmem>>) attributes {dimension_semantics = [#tpu.dimension_semantics<parallel>], iteration_bounds = array<i64: 1>, scalar_prefetch = 0 : i64, scratch_operands = 0 : i64, tpu.core_type = #tpu.core_type<tc>, window_params = [{transform_indices = @transform_0, window_bounds = array<i64: 32, 128>}, {pipeline_mode = #tpu.pipeline_mode<synchronous>, transform_indices = @transform_1, window_bounds = array<i64: 8, 128>}, {transform_indices = @transform_2, window_bounds = array<i64: 32, 128>}]} {
    %c0 = arith.constant 0 : index
    %c0_0 = arith.constant 0 : index
    %0 = vector.load %arg1[%c0, %c0_0] : memref<32x128xbf16, #tpu.memory_space<vmem>>, vector<32x128xbf16>
    %1 = arith.extf %0 : vector<32x128xbf16> to vector<32x128xf32>
    %c0_1 = arith.constant 0 : index
    %c0_2 = arith.constant 0 : index
    %2 = vector.load %arg2[%c0_1, %c0_2] : memref<8x128xf32, #tpu.memory_space<vmem>>, vector<1x128xf32>
    %cst = arith.constant 3.125000e-02 : f32
    %3 = vector.broadcast %cst : f32 to vector<1x128xf32>
    %4 = arith.mulf %2, %3 : vector<1x128xf32>
    %c1 = arith.constant 1 : index
    %c0_3 = arith.constant 0 : index
    %5 = vector.load %arg2[%c1, %c0_3] : memref<8x128xf32, #tpu.memory_space<vmem>>, vector<1x128xf32>
    %cst_4 = arith.constant 3.125000e-02 : f32
    %6 = vector.broadcast %cst_4 : f32 to vector<1x128xf32>
    %7 = arith.mulf %5, %6 : vector<1x128xf32>
    %8 = arith.mulf %4, %4 : vector<1x128xf32>
    %9 = arith.subf %7, %8 : vector<1x128xf32>
    %cst_5 = arith.constant 0.000000e+00 : f32
    %10 = vector.broadcast %cst_5 : f32 to vector<1x128xf32>
    %11 = arith.maximumf %9, %10 : vector<1x128xf32>
    %12 = vector.broadcast %4 : vector<1x128xf32> to vector<32x128xf32>
    %13 = arith.subf %1, %12 : vector<32x128xf32>
    %cst_6 = arith.constant 9.99999974E-6 : f32
    %14 = vector.broadcast %cst_6 : f32 to vector<1x128xf32>
    %15 = arith.addf %11, %14 : vector<1x128xf32>
    %16 = math.rsqrt %15 : vector<1x128xf32>
    %17 = vector.broadcast %16 : vector<1x128xf32> to vector<32x128xf32>
    %18 = arith.mulf %13, %17 : vector<32x128xf32>
    %cst_7 = arith.constant 0.000000e+00 : f32
    %19 = vector.broadcast %cst_7 : f32 to vector<32x128xf32>
    %20 = arith.cmpf oge, %18, %19 : vector<32x128xf32>
    %cst_8 = arith.constant 2.000000e-01 : f32
    %21 = vector.broadcast %cst_8 : f32 to vector<32x128xf32>
    %22 = arith.mulf %21, %18 : vector<32x128xf32>
    %23 = arith.select %20, %18, %22 : vector<32x128xi1>, vector<32x128xf32>
    %24 = arith.truncf %23 : vector<32x128xf32> to vector<32x128xbf16>
    %c0_9 = arith.constant 0 : index
    %c0_10 = arith.constant 0 : index
    %25 = vector.load %arg3[%c0_9, %c0_10] : memref<32x128xbf16, #tpu.memory_space<vmem>>, vector<32x128xbf16>
    tpu.vector_store %arg3[%c0_9, %c0_10], %24 {strides = array<i32>} : memref<32x128xbf16, #tpu.memory_space<vmem>>, vector<32x128xbf16>,
    return
  }
  func.func @transform_0(%arg0: i32) -> (i32, i32) {
    %c0_i32 = arith.constant 0 : i32
    %c0_i32_0 = arith.constant 0 : i32
    return %arg0, %c0_i32 : i32, i32
  }
  func.func @transform_1(%arg0: i32) -> (i32, i32) {
    %c0_i32 = arith.constant 0 : i32
    %c0_i32_0 = arith.constant 0 : i32
    %c0_i32_1 = arith.constant 0 : i32
    return %c0_i32, %c0_i32_0 : i32, i32
  }
  func.func @transform_2(%arg0: i32) -> (i32, i32) {
    %c0_i32 = arith.constant 0 : i32
    %c0_i32_0 = arith.constant 0 : i32
    return %arg0, %c0_i32 : i32, i32
  }
}

module attributes {stable_mosaic.version = 11 : i64} {
  func.func @_pconv_kernel(%arg0: i32, %arg1: i32, %arg2: memref<32x3456xbf16, #tpu.memory_space<vmem>>, %arg3: memref<32x1xf32, #tpu.memory_space<vmem>>, %arg4: memref<3456x128xbf16, #tpu.memory_space<vmem>>, %arg5: memref<1x128xf32, #tpu.memory_space<vmem>>, %arg6: memref<32x128xbf16, #tpu.memory_space<vmem>>, %arg7: memref<8x128xf32, #tpu.memory_space<vmem>>) attributes {dimension_semantics = [#tpu.dimension_semantics<parallel>, #tpu.dimension_semantics<arbitrary>], iteration_bounds = array<i64: 1, 1>, scalar_prefetch = 0 : i64, scratch_operands = 0 : i64, tpu.core_type = #tpu.core_type<tc>, window_params = [{transform_indices = @transform_0, window_bounds = array<i64: 32, 3456>}, {transform_indices = @transform_1, window_bounds = array<i64: 32, 1>}, {pipeline_mode = #tpu.pipeline_mode<synchronous>, transform_indices = @transform_2, window_bounds = array<i64: 3456, 128>}, {pipeline_mode = #tpu.pipeline_mode<synchronous>, transform_indices = @transform_3, window_bounds = array<i64: 1, 128>}, {transform_indices = @transform_4, window_bounds = array<i64: 32, 128>}, {transform_indices = @transform_5, window_bounds = array<i64: 8, 128>}]} {
    %c0 = arith.constant 0 : index
    %c0_0 = arith.constant 0 : index
    %0 = vector.load %arg2[%c0, %c0_0] : memref<32x3456xbf16, #tpu.memory_space<vmem>>, vector<32x3456xbf16>
    %c0_1 = arith.constant 0 : index
    %c0_2 = arith.constant 0 : index
    %1 = vector.load %arg4[%c0_1, %c0_2] : memref<3456x128xbf16, #tpu.memory_space<vmem>>, vector<3456x128xbf16>
    %cst = arith.constant dense<0.000000e+00> : vector<32x128xf32>
    %2 = tpu.matmul %0, %1, %cst {dimension_numbers = #tpu.dot_dimension_numbers<[1], [0], [0], [1], [0, 0, 1, 1], [], []>} : vector<32x3456xbf16>, vector<3456x128xbf16>, vector<32x128xf32> -> vector<32x128xf32>
    %c0_3 = arith.constant 0 : index
    %c0_4 = arith.constant 0 : index
    %3 = vector.load %arg3[%c0_3, %c0_4] : memref<32x1xf32, #tpu.memory_space<vmem>>, vector<32x1xf32>
    %cst_5 = arith.constant 0.000000e+00 : f32
    %4 = vector.broadcast %cst_5 : f32 to vector<32x1xf32>
    %5 = arith.cmpf oeq, %3, %4 : vector<32x1xf32>
    %cst_6 = arith.constant 1.000000e+00 : f32
    %6 = vector.broadcast %cst_6 : f32 to vector<32x1xf32>
    %7 = arith.select %5, %6, %3 : vector<32x1xi1>, vector<32x1xf32>
    %8 = tpu.reciprocal %7 {approx = true} : vector<32x1xf32> -> vector<32x1xf32>
    %9 = vector.broadcast %8 : vector<32x1xf32> to vector<32x128xf32>
    %10 = arith.mulf %2, %9 : vector<32x128xf32>
    %c0_7 = arith.constant 0 : index
    %c0_8 = arith.constant 0 : index
    %11 = vector.load %arg5[%c0_7, %c0_8] : memref<1x128xf32, #tpu.memory_space<vmem>>, vector<1x128xf32>
    %12 = vector.broadcast %11 : vector<1x128xf32> to vector<32x128xf32>
    %13 = arith.addf %10, %12 : vector<32x128xf32>
    %cst_9 = arith.constant 0.000000e+00 : f32
    %14 = vector.shape_cast %5 : vector<32x1xi1> to vector<32x1xi1>
    %15 = vector.broadcast %14 : vector<32x1xi1> to vector<32x128xi1>
    %16 = vector.broadcast %cst_9 : f32 to vector<32x128xf32>
    %17 = arith.select %15, %16, %13 : vector<32x128xi1>, vector<32x128xf32>
    %18 = arith.truncf %17 : vector<32x128xf32> to vector<32x128xbf16>
    %c0_10 = arith.constant 0 : index
    %c0_11 = arith.constant 0 : index
    %19 = vector.load %arg6[%c0_10, %c0_11] : memref<32x128xbf16, #tpu.memory_space<vmem>>, vector<32x128xbf16>
    tpu.vector_store %arg6[%c0_10, %c0_11], %18 {strides = array<i32>} : memref<32x128xbf16, #tpu.memory_space<vmem>>, vector<32x128xbf16>,
    %c0_i32 = arith.constant 0 : i32
    %20 = arith.cmpi eq, %arg1, %c0_i32 : i32
    %21 = arith.extui %20 : i1 to i32
    %c0_i32_12 = arith.constant 0 : i32
    %22 = arith.cmpi ne, %21, %c0_i32_12 : i32
    scf.if %22 {
      %cst_20 = arith.constant 0.000000e+00 : f32
      %33 = vector.broadcast %cst_20 : f32 to vector<8x128xf32>
      %c0_21 = arith.constant 0 : index
      %c0_22 = arith.constant 0 : index
      %34 = vector.load %arg7[%c0_21, %c0_22] : memref<8x128xf32, #tpu.memory_space<vmem>>, vector<8x128xf32>
      tpu.vector_store %arg7[%c0_21, %c0_22], %33 {strides = array<i32>} : memref<8x128xf32, #tpu.memory_space<vmem>>, vector<8x128xf32>,
    } else {
    }
    %cst_13 = arith.constant dense<0.000000e+00> : vector<128xf32>
    %23 = vector.multi_reduction <add>, %17, %cst_13 [0] : vector<32x128xf32> to vector<128xf32>
    %24 = vector.shape_cast %23 : vector<128xf32> to vector<1x128xf32>
    %25 = arith.mulf %17, %17 : vector<32x128xf32>
    %cst_14 = arith.constant dense<0.000000e+00> : vector<128xf32>
    %26 = vector.multi_reduction <add>, %25, %cst_14 [0] : vector<32x128xf32> to vector<128xf32>
    %27 = vector.shape_cast %26 : vector<128xf32> to vector<1x128xf32>
    %cst_15 = arith.constant 0.000000e+00 : f32
    %28 = vector.broadcast %cst_15 : f32 to vector<6x128xf32>
    %c0_16 = arith.constant 0 : index
    %c0_17 = arith.constant 0 : index
    %29 = vector.load %arg7[%c0_16, %c0_17] : memref<8x128xf32, #tpu.memory_space<vmem>>, vector<8x128xf32>
    %30 = tpu.concatenate %24, %27, %28 in 0 : vector<1x128xf32>, vector<1x128xf32>, vector<6x128xf32> -> vector<8x128xf32>
    %31 = arith.addf %29, %30 : vector<8x128xf32>
    %c0_18 = arith.constant 0 : index
    %c0_19 = arith.constant 0 : index
    %32 = vector.load %arg7[%c0_18, %c0_19] : memref<8x128xf32, #tpu.memory_space<vmem>>, vector<8x128xf32>
    tpu.vector_store %arg7[%c0_18, %c0_19], %31 {strides = array<i32>} : memref<8x128xf32, #tpu.memory_space<vmem>>, vector<8x128xf32>,
    return
  }
  func.func @transform_0(%arg0: i32, %arg1: i32) -> (i32, i32) {
    %c1_i32 = arith.constant 1 : i32
    %0 = arith.muli %arg0, %c1_i32 : i32
    %1 = arith.addi %0, %arg1 : i32
    %c0_i32 = arith.constant 0 : i32
    %c0_i32_0 = arith.constant 0 : i32
    return %1, %c0_i32 : i32, i32
  }
  func.func @transform_1(%arg0: i32, %arg1: i32) -> (i32, i32) {
    %c1_i32 = arith.constant 1 : i32
    %0 = arith.muli %arg0, %c1_i32 : i32
    %1 = arith.addi %0, %arg1 : i32
    %c0_i32 = arith.constant 0 : i32
    %c0_i32_0 = arith.constant 0 : i32
    return %1, %c0_i32 : i32, i32
  }
  func.func @transform_2(%arg0: i32, %arg1: i32) -> (i32, i32) {
    %c0_i32 = arith.constant 0 : i32
    %c0_i32_0 = arith.constant 0 : i32
    %c0_i32_1 = arith.constant 0 : i32
    return %c0_i32, %c0_i32_0 : i32, i32
  }
  func.func @transform_3(%arg0: i32, %arg1: i32) -> (i32, i32) {
    %c0_i32 = arith.constant 0 : i32
    %c0_i32_0 = arith.constant 0 : i32
    %c0_i32_1 = arith.constant 0 : i32
    return %c0_i32, %c0_i32_0 : i32, i32
  }
  func.func @transform_4(%arg0: i32, %arg1: i32) -> (i32, i32) {
    %c1_i32 = arith.constant 1 : i32
    %0 = arith.muli %arg0, %c1_i32 : i32
    %1 = arith.addi %0, %arg1 : i32
    %c0_i32 = arith.constant 0 : i32
    %c0_i32_0 = arith.constant 0 : i32
    return %1, %c0_i32 : i32, i32
  }
  func.func @transform_5(%arg0: i32, %arg1: i32) -> (i32, i32) {
    %c0_i32 = arith.constant 0 : i32
    %c0_i32_0 = arith.constant 0 : i32
    return %arg0, %c0_i32 : i32, i32
  }
}

module attributes {stable_mosaic.version = 11 : i64} {
  func.func @_bn_act_kernel(%arg0: i32, %arg1: memref<128x128xbf16, #tpu.memory_space<vmem>>, %arg2: memref<8x128xf32, #tpu.memory_space<vmem>>, %arg3: memref<128x128xbf16, #tpu.memory_space<vmem>>) attributes {dimension_semantics = [#tpu.dimension_semantics<parallel>], iteration_bounds = array<i64: 1>, scalar_prefetch = 0 : i64, scratch_operands = 0 : i64, tpu.core_type = #tpu.core_type<tc>, window_params = [{transform_indices = @transform_0, window_bounds = array<i64: 128, 128>}, {pipeline_mode = #tpu.pipeline_mode<synchronous>, transform_indices = @transform_1, window_bounds = array<i64: 8, 128>}, {transform_indices = @transform_2, window_bounds = array<i64: 128, 128>}]} {
    %c0 = arith.constant 0 : index
    %c0_0 = arith.constant 0 : index
    %0 = vector.load %arg1[%c0, %c0_0] : memref<128x128xbf16, #tpu.memory_space<vmem>>, vector<128x128xbf16>
    %1 = arith.extf %0 : vector<128x128xbf16> to vector<128x128xf32>
    %c0_1 = arith.constant 0 : index
    %c0_2 = arith.constant 0 : index
    %2 = vector.load %arg2[%c0_1, %c0_2] : memref<8x128xf32, #tpu.memory_space<vmem>>, vector<1x128xf32>
    %cst = arith.constant 7.812500e-03 : f32
    %3 = vector.broadcast %cst : f32 to vector<1x128xf32>
    %4 = arith.mulf %2, %3 : vector<1x128xf32>
    %c1 = arith.constant 1 : index
    %c0_3 = arith.constant 0 : index
    %5 = vector.load %arg2[%c1, %c0_3] : memref<8x128xf32, #tpu.memory_space<vmem>>, vector<1x128xf32>
    %cst_4 = arith.constant 7.812500e-03 : f32
    %6 = vector.broadcast %cst_4 : f32 to vector<1x128xf32>
    %7 = arith.mulf %5, %6 : vector<1x128xf32>
    %8 = arith.mulf %4, %4 : vector<1x128xf32>
    %9 = arith.subf %7, %8 : vector<1x128xf32>
    %cst_5 = arith.constant 0.000000e+00 : f32
    %10 = vector.broadcast %cst_5 : f32 to vector<1x128xf32>
    %11 = arith.maximumf %9, %10 : vector<1x128xf32>
    %12 = vector.broadcast %4 : vector<1x128xf32> to vector<128x128xf32>
    %13 = arith.subf %1, %12 : vector<128x128xf32>
    %cst_6 = arith.constant 9.99999974E-6 : f32
    %14 = vector.broadcast %cst_6 : f32 to vector<1x128xf32>
    %15 = arith.addf %11, %14 : vector<1x128xf32>
    %16 = math.rsqrt %15 : vector<1x128xf32>
    %17 = vector.broadcast %16 : vector<1x128xf32> to vector<128x128xf32>
    %18 = arith.mulf %13, %17 : vector<128x128xf32>
    %cst_7 = arith.constant 0.000000e+00 : f32
    %19 = vector.broadcast %cst_7 : f32 to vector<128x128xf32>
    %20 = arith.cmpf oge, %18, %19 : vector<128x128xf32>
    %cst_8 = arith.constant 2.000000e-01 : f32
    %21 = vector.broadcast %cst_8 : f32 to vector<128x128xf32>
    %22 = arith.mulf %21, %18 : vector<128x128xf32>
    %23 = arith.select %20, %18, %22 : vector<128x128xi1>, vector<128x128xf32>
    %24 = arith.truncf %23 : vector<128x128xf32> to vector<128x128xbf16>
    %c0_9 = arith.constant 0 : index
    %c0_10 = arith.constant 0 : index
    %25 = vector.load %arg3[%c0_9, %c0_10] : memref<128x128xbf16, #tpu.memory_space<vmem>>, vector<128x128xbf16>
    tpu.vector_store %arg3[%c0_9, %c0_10], %24 {strides = array<i32>} : memref<128x128xbf16, #tpu.memory_space<vmem>>, vector<128x128xbf16>,
    return
  }
  func.func @transform_0(%arg0: i32) -> (i32, i32) {
    %c0_i32 = arith.constant 0 : i32
    %c0_i32_0 = arith.constant 0 : i32
    return %arg0, %c0_i32 : i32, i32
  }
  func.func @transform_1(%arg0: i32) -> (i32, i32) {
    %c0_i32 = arith.constant 0 : i32
    %c0_i32_0 = arith.constant 0 : i32
    %c0_i32_1 = arith.constant 0 : i32
    return %c0_i32, %c0_i32_0 : i32, i32
  }
  func.func @transform_2(%arg0: i32) -> (i32, i32) {
    %c0_i32 = arith.constant 0 : i32
    %c0_i32_0 = arith.constant 0 : i32
    return %arg0, %c0_i32 : i32, i32
  }
}

module attributes {stable_mosaic.version = 11 : i64} {
  func.func @_pconv_kernel(%arg0: i32, %arg1: i32, %arg2: memref<128x1792xbf16, #tpu.memory_space<vmem>>, %arg3: memref<128x1xf32, #tpu.memory_space<vmem>>, %arg4: memref<1792x128xbf16, #tpu.memory_space<vmem>>, %arg5: memref<1x128xf32, #tpu.memory_space<vmem>>, %arg6: memref<128x128xbf16, #tpu.memory_space<vmem>>, %arg7: memref<8x128xf32, #tpu.memory_space<vmem>>) attributes {dimension_semantics = [#tpu.dimension_semantics<parallel>, #tpu.dimension_semantics<arbitrary>], iteration_bounds = array<i64: 1, 1>, scalar_prefetch = 0 : i64, scratch_operands = 0 : i64, tpu.core_type = #tpu.core_type<tc>, window_params = [{transform_indices = @transform_0, window_bounds = array<i64: 128, 1792>}, {transform_indices = @transform_1, window_bounds = array<i64: 128, 1>}, {pipeline_mode = #tpu.pipeline_mode<synchronous>, transform_indices = @transform_2, window_bounds = array<i64: 1792, 128>}, {pipeline_mode = #tpu.pipeline_mode<synchronous>, transform_indices = @transform_3, window_bounds = array<i64: 1, 128>}, {transform_indices = @transform_4, window_bounds = array<i64: 128, 128>}, {transform_indices = @transform_5, window_bounds = array<i64: 8, 128>}]} {
    %c0 = arith.constant 0 : index
    %c0_0 = arith.constant 0 : index
    %0 = vector.load %arg2[%c0, %c0_0] : memref<128x1792xbf16, #tpu.memory_space<vmem>>, vector<128x1792xbf16>
    %c0_1 = arith.constant 0 : index
    %c0_2 = arith.constant 0 : index
    %1 = vector.load %arg4[%c0_1, %c0_2] : memref<1792x128xbf16, #tpu.memory_space<vmem>>, vector<1792x128xbf16>
    %cst = arith.constant dense<0.000000e+00> : vector<128x128xf32>
    %2 = tpu.matmul %0, %1, %cst {dimension_numbers = #tpu.dot_dimension_numbers<[1], [0], [0], [1], [0, 0, 1, 1], [], []>} : vector<128x1792xbf16>, vector<1792x128xbf16>, vector<128x128xf32> -> vector<128x128xf32>
    %c0_3 = arith.constant 0 : index
    %c0_4 = arith.constant 0 : index
    %3 = vector.load %arg3[%c0_3, %c0_4] : memref<128x1xf32, #tpu.memory_space<vmem>>, vector<128x1xf32>
    %cst_5 = arith.constant 0.000000e+00 : f32
    %4 = vector.broadcast %cst_5 : f32 to vector<128x1xf32>
    %5 = arith.cmpf oeq, %3, %4 : vector<128x1xf32>
    %cst_6 = arith.constant 1.000000e+00 : f32
    %6 = vector.broadcast %cst_6 : f32 to vector<128x1xf32>
    %7 = arith.select %5, %6, %3 : vector<128x1xi1>, vector<128x1xf32>
    %8 = tpu.reciprocal %7 {approx = true} : vector<128x1xf32> -> vector<128x1xf32>
    %9 = vector.broadcast %8 : vector<128x1xf32> to vector<128x128xf32>
    %10 = arith.mulf %2, %9 : vector<128x128xf32>
    %c0_7 = arith.constant 0 : index
    %c0_8 = arith.constant 0 : index
    %11 = vector.load %arg5[%c0_7, %c0_8] : memref<1x128xf32, #tpu.memory_space<vmem>>, vector<1x128xf32>
    %12 = vector.broadcast %11 : vector<1x128xf32> to vector<128x128xf32>
    %13 = arith.addf %10, %12 : vector<128x128xf32>
    %cst_9 = arith.constant 0.000000e+00 : f32
    %14 = vector.shape_cast %5 : vector<128x1xi1> to vector<128x1xi1>
    %15 = vector.broadcast %14 : vector<128x1xi1> to vector<128x128xi1>
    %16 = vector.broadcast %cst_9 : f32 to vector<128x128xf32>
    %17 = arith.select %15, %16, %13 : vector<128x128xi1>, vector<128x128xf32>
    %18 = arith.truncf %17 : vector<128x128xf32> to vector<128x128xbf16>
    %c0_10 = arith.constant 0 : index
    %c0_11 = arith.constant 0 : index
    %19 = vector.load %arg6[%c0_10, %c0_11] : memref<128x128xbf16, #tpu.memory_space<vmem>>, vector<128x128xbf16>
    tpu.vector_store %arg6[%c0_10, %c0_11], %18 {strides = array<i32>} : memref<128x128xbf16, #tpu.memory_space<vmem>>, vector<128x128xbf16>,
    %c0_i32 = arith.constant 0 : i32
    %20 = arith.cmpi eq, %arg1, %c0_i32 : i32
    %21 = arith.extui %20 : i1 to i32
    %c0_i32_12 = arith.constant 0 : i32
    %22 = arith.cmpi ne, %21, %c0_i32_12 : i32
    scf.if %22 {
      %cst_20 = arith.constant 0.000000e+00 : f32
      %33 = vector.broadcast %cst_20 : f32 to vector<8x128xf32>
      %c0_21 = arith.constant 0 : index
      %c0_22 = arith.constant 0 : index
      %34 = vector.load %arg7[%c0_21, %c0_22] : memref<8x128xf32, #tpu.memory_space<vmem>>, vector<8x128xf32>
      tpu.vector_store %arg7[%c0_21, %c0_22], %33 {strides = array<i32>} : memref<8x128xf32, #tpu.memory_space<vmem>>, vector<8x128xf32>,
    } else {
    }
    %cst_13 = arith.constant dense<0.000000e+00> : vector<128xf32>
    %23 = vector.multi_reduction <add>, %17, %cst_13 [0] : vector<128x128xf32> to vector<128xf32>
    %24 = vector.shape_cast %23 : vector<128xf32> to vector<1x128xf32>
    %25 = arith.mulf %17, %17 : vector<128x128xf32>
    %cst_14 = arith.constant dense<0.000000e+00> : vector<128xf32>
    %26 = vector.multi_reduction <add>, %25, %cst_14 [0] : vector<128x128xf32> to vector<128xf32>
    %27 = vector.shape_cast %26 : vector<128xf32> to vector<1x128xf32>
    %cst_15 = arith.constant 0.000000e+00 : f32
    %28 = vector.broadcast %cst_15 : f32 to vector<6x128xf32>
    %c0_16 = arith.constant 0 : index
    %c0_17 = arith.constant 0 : index
    %29 = vector.load %arg7[%c0_16, %c0_17] : memref<8x128xf32, #tpu.memory_space<vmem>>, vector<8x128xf32>
    %30 = tpu.concatenate %24, %27, %28 in 0 : vector<1x128xf32>, vector<1x128xf32>, vector<6x128xf32> -> vector<8x128xf32>
    %31 = arith.addf %29, %30 : vector<8x128xf32>
    %c0_18 = arith.constant 0 : index
    %c0_19 = arith.constant 0 : index
    %32 = vector.load %arg7[%c0_18, %c0_19] : memref<8x128xf32, #tpu.memory_space<vmem>>, vector<8x128xf32>
    tpu.vector_store %arg7[%c0_18, %c0_19], %31 {strides = array<i32>} : memref<8x128xf32, #tpu.memory_space<vmem>>, vector<8x128xf32>,
    return
  }
  func.func @transform_0(%arg0: i32, %arg1: i32) -> (i32, i32) {
    %c1_i32 = arith.constant 1 : i32
    %0 = arith.muli %arg0, %c1_i32 : i32
    %1 = arith.addi %0, %arg1 : i32
    %c0_i32 = arith.constant 0 : i32
    %c0_i32_0 = arith.constant 0 : i32
    return %1, %c0_i32 : i32, i32
  }
  func.func @transform_1(%arg0: i32, %arg1: i32) -> (i32, i32) {
    %c1_i32 = arith.constant 1 : i32
    %0 = arith.muli %arg0, %c1_i32 : i32
    %1 = arith.addi %0, %arg1 : i32
    %c0_i32 = arith.constant 0 : i32
    %c0_i32_0 = arith.constant 0 : i32
    return %1, %c0_i32 : i32, i32
  }
  func.func @transform_2(%arg0: i32, %arg1: i32) -> (i32, i32) {
    %c0_i32 = arith.constant 0 : i32
    %c0_i32_0 = arith.constant 0 : i32
    %c0_i32_1 = arith.constant 0 : i32
    return %c0_i32, %c0_i32_0 : i32, i32
  }
  func.func @transform_3(%arg0: i32, %arg1: i32) -> (i32, i32) {
    %c0_i32 = arith.constant 0 : i32
    %c0_i32_0 = arith.constant 0 : i32
    %c0_i32_1 = arith.constant 0 : i32
    return %c0_i32, %c0_i32_0 : i32, i32
  }
  func.func @transform_4(%arg0: i32, %arg1: i32) -> (i32, i32) {
    %c1_i32 = arith.constant 1 : i32
    %0 = arith.muli %arg0, %c1_i32 : i32
    %1 = arith.addi %0, %arg1 : i32
    %c0_i32 = arith.constant 0 : i32
    %c0_i32_0 = arith.constant 0 : i32
    return %1, %c0_i32 : i32, i32
  }
  func.func @transform_5(%arg0: i32, %arg1: i32) -> (i32, i32) {
    %c0_i32 = arith.constant 0 : i32
    %c0_i32_0 = arith.constant 0 : i32
    return %arg0, %c0_i32 : i32, i32
  }
}

module attributes {stable_mosaic.version = 11 : i64} {
  func.func @_pconv_kernel(%arg0: i32, %arg1: memref<512x640xbf16, #tpu.memory_space<vmem>>, %arg2: memref<512x1xf32, #tpu.memory_space<vmem>>, %arg3: memref<640x128xbf16, #tpu.memory_space<vmem>>, %arg4: memref<1x128xf32, #tpu.memory_space<vmem>>, %arg5: memref<512x128xbf16, #tpu.memory_space<vmem>>) attributes {dimension_semantics = [#tpu.dimension_semantics<parallel>], iteration_bounds = array<i64: 1>, scalar_prefetch = 0 : i64, scratch_operands = 0 : i64, tpu.core_type = #tpu.core_type<tc>, window_params = [{transform_indices = @transform_0, window_bounds = array<i64: 512, 640>}, {transform_indices = @transform_1, window_bounds = array<i64: 512, 1>}, {pipeline_mode = #tpu.pipeline_mode<synchronous>, transform_indices = @transform_2, window_bounds = array<i64: 640, 128>}, {pipeline_mode = #tpu.pipeline_mode<synchronous>, transform_indices = @transform_3, window_bounds = array<i64: 1, 128>}, {transform_indices = @transform_4, window_bounds = array<i64: 512, 128>}]} {
    %c0 = arith.constant 0 : index
    %c0_0 = arith.constant 0 : index
    %0 = vector.load %arg1[%c0, %c0_0] : memref<512x640xbf16, #tpu.memory_space<vmem>>, vector<512x640xbf16>
    %c0_1 = arith.constant 0 : index
    %c0_2 = arith.constant 0 : index
    %1 = vector.load %arg3[%c0_1, %c0_2] : memref<640x128xbf16, #tpu.memory_space<vmem>>, vector<640x128xbf16>
    %cst = arith.constant dense<0.000000e+00> : vector<512x128xf32>
    %2 = tpu.matmul %0, %1, %cst {dimension_numbers = #tpu.dot_dimension_numbers<[1], [0], [0], [1], [0, 0, 1, 1], [], []>} : vector<512x640xbf16>, vector<640x128xbf16>, vector<512x128xf32> -> vector<512x128xf32>
    %c0_3 = arith.constant 0 : index
    %c0_4 = arith.constant 0 : index
    %3 = vector.load %arg2[%c0_3, %c0_4] : memref<512x1xf32, #tpu.memory_space<vmem>>, vector<512x1xf32>
    %cst_5 = arith.constant 0.000000e+00 : f32
    %4 = vector.broadcast %cst_5 : f32 to vector<512x1xf32>
    %5 = arith.cmpf oeq, %3, %4 : vector<512x1xf32>
    %cst_6 = arith.constant 1.000000e+00 : f32
    %6 = vector.broadcast %cst_6 : f32 to vector<512x1xf32>
    %7 = arith.select %5, %6, %3 : vector<512x1xi1>, vector<512x1xf32>
    %8 = tpu.reciprocal %7 {approx = true} : vector<512x1xf32> -> vector<512x1xf32>
    %9 = vector.broadcast %8 : vector<512x1xf32> to vector<512x128xf32>
    %10 = arith.mulf %2, %9 : vector<512x128xf32>
    %c0_7 = arith.constant 0 : index
    %c0_8 = arith.constant 0 : index
    %11 = vector.load %arg4[%c0_7, %c0_8] : memref<1x128xf32, #tpu.memory_space<vmem>>, vector<1x128xf32>
    %12 = vector.broadcast %11 : vector<1x128xf32> to vector<512x128xf32>
    %13 = arith.addf %10, %12 : vector<512x128xf32>
    %cst_9 = arith.constant 0.000000e+00 : f32
    %14 = vector.shape_cast %5 : vector<512x1xi1> to vector<512x1xi1>
    %15 = vector.broadcast %14 : vector<512x1xi1> to vector<512x128xi1>
    %16 = vector.broadcast %cst_9 : f32 to vector<512x128xf32>
    %17 = arith.select %15, %16, %13 : vector<512x128xi1>, vector<512x128xf32>
    %18 = arith.truncf %17 : vector<512x128xf32> to vector<512x128xbf16>
    %c0_10 = arith.constant 0 : index
    %c0_11 = arith.constant 0 : index
    %19 = vector.load %arg5[%c0_10, %c0_11] : memref<512x128xbf16, #tpu.memory_space<vmem>>, vector<512x128xbf16>
    tpu.vector_store %arg5[%c0_10, %c0_11], %18 {strides = array<i32>} : memref<512x128xbf16, #tpu.memory_space<vmem>>, vector<512x128xbf16>,
    return
  }
  func.func @transform_0(%arg0: i32) -> (i32, i32) {
    %c0_i32 = arith.constant 0 : i32
    %c0_i32_0 = arith.constant 0 : i32
    return %arg0, %c0_i32 : i32, i32
  }
  func.func @transform_1(%arg0: i32) -> (i32, i32) {
    %c0_i32 = arith.constant 0 : i32
    %c0_i32_0 = arith.constant 0 : i32
    return %arg0, %c0_i32 : i32, i32
  }
  func.func @transform_2(%arg0: i32) -> (i32, i32) {
    %c0_i32 = arith.constant 0 : i32
    %c0_i32_0 = arith.constant 0 : i32
    %c0_i32_1 = arith.constant 0 : i32
    return %c0_i32, %c0_i32_0 : i32, i32
  }
  func.func @transform_3(%arg0: i32) -> (i32, i32) {
    %c0_i32 = arith.constant 0 : i32
    %c0_i32_0 = arith.constant 0 : i32
    %c0_i32_1 = arith.constant 0 : i32
    return %c0_i32, %c0_i32_0 : i32, i32
  }
  func.func @transform_4(%arg0: i32) -> (i32, i32) {
    %c0_i32 = arith.constant 0 : i32
    %c0_i32_0 = arith.constant 0 : i32
    return %arg0, %c0_i32 : i32, i32
  }
}

</mosaic_0001>

<llo_original>
// kernel: partial_conv_net.10
$region0: #{partial_conv_net.10}
  #allocation0 [shape = 'u32[]', space=smem, size = 0x4, offset = 0x4, fixed_abs, tag = 'smem constant byte address 0x4 - core index']
  #allocation1 [shape = 'u32[144,128]{1,0:T(1,128)}', space=vmem, size = 0x12000, scoped, tag = 'internal scratch']
  %s0 = inlined_call_operand.vmem [shape: bf16[128,256], index: 0, kind: input, shape index: {}]
  %s1 = inlined_call_operand.vmem [shape: f32[128,1], index: 1, kind: input, shape index: {}]
  %s2 = inlined_call_operand.vmem [shape: bf16[256,128], index: 2, kind: input, shape index: {}]
  %s3 = inlined_call_operand.vmem [shape: f32[1,128], index: 3, kind: input, shape index: {}]
  %s4 = inlined_call_operand.vmem [shape: bf16[128,128], index: 4, kind: output, shape index: {}]
  %s5 = sld [smem:[#allocation0]]
  $region26: #{partial_conv_net.10} parent=0
    _
  %s7 = ssub.s32 1, %s5
  %s8 = scalar_select 0, %s7, %s5
  // Predicated region
  $region2: #{partial_conv_net.10} parent=0 // pred_check
    _
  $region3: #{partial_conv_net.10} parent=0 // pred_check_branch
    %10 = sbr.rel (0) target = $region5
  $region4: #{partial_conv_net.10} parent=0 // pred_region
    _
  $region5: #{partial_conv_net.10} parent=0 // pred_fallthru
    _
  // Predicated region
  $region6: #{partial_conv_net.10} parent=0 // pred_check
    _
  $region7: #{partial_conv_net.10} parent=0 // pred_check_branch
    %12 = sbr.rel (0) target = $region9
  $region8: #{partial_conv_net.10} parent=0 // pred_region
    _
  $region9: #{partial_conv_net.10} parent=0 // pred_fallthru
    _
  // Predicated region
  $region10: #{partial_conv_net.10} parent=0 // pred_check
    _
  $region11: #{partial_conv_net.10} parent=0 // pred_check_branch
    %14 = sbr.rel (0) target = $region13
  $region12: #{partial_conv_net.10} parent=0 // pred_region
    _
  $region13: #{partial_conv_net.10} parent=0 // pred_fallthru
    _
  // Predicated region
  $region14: #{partial_conv_net.10} parent=0 // pred_check
    _
  $region15: #{partial_conv_net.10} parent=0 // pred_check_branch
    %16 = sbr.rel (0) target = $region17
  $region16: #{partial_conv_net.10} parent=0 // pred_region
    _
  $region17: #{partial_conv_net.10} parent=0 // pred_fallthru
    _
  %v18 = vld [vmem:[%s0] sm:$0xff]
  %v19 = vld [vmem:[%s0 + $0x8] sm:$0xff]
  %v20 = vld [vmem:[%s0 + $0x10] sm:$0xff]
  %v21 = vld [vmem:[%s0 + $0x18] sm:$0xff]
  %v22 = vld [vmem:[%s0 + $0x20] sm:$0xff]
  %v23 = vld [vmem:[%s0 + $0x28] sm:$0xff]
  %v24 = vld [vmem:[%s0 + $0x30] sm:$0xff]
  %v25 = vld [vmem:[%s0 + $0x38] sm:$0xff]
  %v26 = vld [vmem:[%s0 + $0x40] sm:$0xff]
  %v27 = vld [vmem:[%s0 + $0x48] sm:$0xff]
  %v28 = vld [vmem:[%s0 + $0x50] sm:$0xff]
  %v29 = vld [vmem:[%s0 + $0x58] sm:$0xff]
  %v30 = vld [vmem:[%s0 + $0x60] sm:$0xff]
  %v31 = vld [vmem:[%s0 + $0x68] sm:$0xff]
  %v32 = vld [vmem:[%s0 + $0x70] sm:$0xff]
  %v33 = vld [vmem:[%s0 + $0x78] sm:$0xff]
  %v34 = vld [vmem:[%s2] sm:$0xf]
  %v35 = vld [vmem:[%s2 + $0x4] sm:$0xf]
  %v36 = vld [vmem:[%s2 + $0x8] sm:$0xf]
  %v37 = vld [vmem:[%s2 + $0xc] sm:$0xf]
  %v38 = vld [vmem:[%s2 + $0x10] sm:$0xf]
  %v39 = vld [vmem:[%s2 + $0x14] sm:$0xf]
  %v40 = vld [vmem:[%s2 + $0x18] sm:$0xf]
  %v41 = vld [vmem:[%s2 + $0x1c] sm:$0xf]
  %v42 = vld [vmem:[%s2 + $0x20] sm:$0xf]
  %v43 = vld [vmem:[%s2 + $0x24] sm:$0xf]
  %v44 = vld [vmem:[%s2 + $0x28] sm:$0xf]
  %v45 = vld [vmem:[%s2 + $0x2c] sm:$0xf]
  %v46 = vld [vmem:[%s2 + $0x30] sm:$0xf]
  %v47 = vld [vmem:[%s2 + $0x34] sm:$0xf]
  %v48 = vld [vmem:[%s2 + $0x38] sm:$0xf]
  %v49 = vld [vmem:[%s2 + $0x3c] sm:$0xf]
  %v50 = vld [vmem:[%s2 + $0x40] sm:$0xf]
  %v51 = vld [vmem:[%s2 + $0x44] sm:$0xf]
  %v52 = vld [vmem:[%s2 + $0x48] sm:$0xf]
  %v53 = vld [vmem:[%s2 + $0x4c] sm:$0xf]
  %v54 = vld [vmem:[%s2 + $0x50] sm:$0xf]
  %v55 = vld [vmem:[%s2 + $0x54] sm:$0xf]
  %v56 = vld [vmem:[%s2 + $0x58] sm:$0xf]
  %v57 = vld [vmem:[%s2 + $0x5c] sm:$0xf]
  %v58 = vld [vmem:[%s2 + $0x60] sm:$0xf]
  %v59 = vld [vmem:[%s2 + $0x64] sm:$0xf]
  %v60 = vld [vmem:[%s2 + $0x68] sm:$0xf]
  %v61 = vld [vmem:[%s2 + $0x6c] sm:$0xf]
  %v62 = vld [vmem:[%s2 + $0x70] sm:$0xf]
  %v63 = vld [vmem:[%s2 + $0x74] sm:$0xf]
  %v64 = vld [vmem:[%s2 + $0x78] sm:$0xf]
  %v65 = vld [vmem:[%s2 + $0x7c] sm:$0xf]
  %v82 = vunpack.c.l.b16 %v18
  %v83 = vunpack.c.h.b16 %v18
  %v84 = vunpack.c.l.b16 %v19
  %v85 = vunpack.c.h.b16 %v19
  %v86 = vunpack.c.l.b16 %v20
  %v87 = vunpack.c.h.b16 %v20
  %v88 = vunpack.c.l.b16 %v21
  %v89 = vunpack.c.h.b16 %v21
  %v90 = vunpack.c.l.b16 %v22
  %v91 = vunpack.c.h.b16 %v22
  %v92 = vunpack.c.l.b16 %v23
  %v93 = vunpack.c.h.b16 %v23
  %v94 = vunpack.c.l.b16 %v24
  %v95 = vunpack.c.h.b16 %v24
  %v96 = vunpack.c.l.b16 %v25
  %v97 = vunpack.c.h.b16 %v25
  %v98 = vunpack.c.l.b16 %v26
  %v99 = vunpack.c.h.b16 %v26
  %v100 = vunpack.c.l.b16 %v27
  %v101 = vunpack.c.h.b16 %v27
  %v102 = vunpack.c.l.b16 %v28
  %v103 = vunpack.c.h.b16 %v28
  %v104 = vunpack.c.l.b16 %v29
  %v105 = vunpack.c.h.b16 %v29
  %v106 = vunpack.c.l.b16 %v30
  %v107 = vunpack.c.h.b16 %v30
  %v108 = vunpack.c.l.b16 %v31
  %v109 = vunpack.c.h.b16 %v31
  %v110 = vunpack.c.l.b16 %v32
  %v111 = vunpack.c.h.b16 %v32
  %v112 = vunpack.c.l.b16 %v33
  %v113 = vunpack.c.h.b16 %v33
  %v114 = vpack.c.b16 %v84, %v82
  %v115 = vpack.c.b16 %v85, %v83
  %v116 = vpack.c.b16 %v88, %v86
  %v117 = vpack.c.b16 %v89, %v87
  %v118 = vpack.c.b16 %v92, %v90
  %v119 = vpack.c.b16 %v93, %v91
  %v120 = vpack.c.b16 %v96, %v94
  %v121 = vpack.c.b16 %v97, %v95
  %v122 = vpack.c.b16 %v100, %v98
  %v123 = vpack.c.b16 %v101, %v99
  %v124 = vpack.c.b16 %v104, %v102
  %v125 = vpack.c.b16 %v105, %v103
  %v126 = vpack.c.b16 %v108, %v106
  %v127 = vpack.c.b16 %v109, %v107
  %v128 = vpack.c.b16 %v112, %v110
  %v129 = vpack.c.b16 %v113, %v111
  %v178 = vunpack.c.l.b16 %v34
  %v179 = vunpack.c.l.b16 %v35
  %v180 = vunpack.c.l.b16 %v36
  %v181 = vunpack.c.l.b16 %v37
  %v182 = vunpack.c.l.b16 %v38
  %v183 = vunpack.c.l.b16 %v39
  %v184 = vunpack.c.l.b16 %v40
  %v185 = vunpack.c.l.b16 %v41
  %v186 = vunpack.c.l.b16 %v42
  %v187 = vunpack.c.l.b16 %v43
  %v188 = vunpack.c.l.b16 %v44
  %v189 = vunpack.c.l.b16 %v45
  %v190 = vunpack.c.l.b16 %v46
  %v191 = vunpack.c.l.b16 %v47
  %v192 = vunpack.c.l.b16 %v48
  %v193 = vunpack.c.l.b16 %v49
  %v194 = vunpack.c.l.b16 %v50
  %v195 = vunpack.c.l.b16 %v51
  %v196 = vunpack.c.l.b16 %v52
  %v197 = vunpack.c.l.b16 %v53
  %v198 = vunpack.c.l.b16 %v54
  %v199 = vunpack.c.l.b16 %v55
  %v200 = vunpack.c.l.b16 %v56
  %v201 = vunpack.c.l.b16 %v57
  %v202 = vunpack.c.l.b16 %v58
  %v203 = vunpack.c.l.b16 %v59
  %v204 = vunpack.c.l.b16 %v60
  %v205 = vunpack.c.l.b16 %v61
  %v206 = vunpack.c.l.b16 %v62
  %v207 = vunpack.c.l.b16 %v63
  %v208 = vunpack.c.l.b16 %v64
  %v209 = vunpack.c.l.b16 %v65
  %v210 = vpack.c.b16 %v179, %v178
  %v211 = vpack.c.b16 %v181, %v180
  %v212 = vpack.c.b16 %v183, %v182
  %v213 = vpack.c.b16 %v185, %v184
  %v214 = vpack.c.b16 %v187, %v186
  %v215 = vpack.c.b16 %v189, %v188
  %v216 = vpack.c.b16 %v191, %v190
  %v217 = vpack.c.b16 %v193, %v192
  %v218 = vpack.c.b16 %v195, %v194
  %v219 = vpack.c.b16 %v197, %v196
  %v220 = vpack.c.b16 %v199, %v198
  %v221 = vpack.c.b16 %v201, %v200
  %v222 = vpack.c.b16 %v203, %v202
  %v223 = vpack.c.b16 %v205, %v204
  %v224 = vpack.c.b16 %v207, %v206
  %v225 = vpack.c.b16 %v209, %v208
  %242 = vmatprep.subr.bf16.mxu0 0
  %243 = vmatpush1.bf16.msra.mxu0 %v210
  %244 = vmatprep.subr.bf16.mxu0 0
  %245 = vmatpush1.bf16.msra.mxu0 %v211
  %246 = vmatprep.subr.bf16.mxu0 0
  %247 = vmatpush1.bf16.msra.mxu0 %v212
  %248 = vmatprep.subr.bf16.mxu0 0
  %249 = vmatpush1.bf16.msra.mxu0 %v213
  %250 = vmatprep.subr.bf16.mxu0 0
  %251 = vmatpush1.bf16.msra.mxu0 %v214
  %252 = vmatprep.subr.bf16.mxu0 0
  %253 = vmatpush1.bf16.msra.mxu0 %v215
  %254 = vmatprep.subr.bf16.mxu0 0
  %255 = vmatpush1.bf16.msra.mxu0 %v216
  %256 = vmatprep.subr.bf16.mxu0 0
  %257 = vmatpush1.bf16.msra.mxu0 %v217
  %258 = vmatprep.subr.bf16.mxu0 0
  %259 = vmatpush1.bf16.msra.mxu0 %v218
  %260 = vmatprep.subr.bf16.mxu0 0
  %261 = vmatpush1.bf16.msra.mxu0 %v219
  %262 = vmatprep.subr.bf16.mxu0 0
  %263 = vmatpush1.bf16.msra.mxu0 %v220
  %264 = vmatprep.subr.bf16.mxu0 0
  %265 = vmatpush1.bf16.msra.mxu0 %v221
  %266 = vmatprep.subr.bf16.mxu0 0
  %267 = vmatpush1.bf16.msra.mxu0 %v222
  %268 = vmatprep.subr.bf16.mxu0 0
  %269 = vmatpush1.bf16.msra.mxu0 %v223
  %270 = vmatprep.subr.bf16.mxu0 0
  %271 = vmatpush1.bf16.msra.mxu0 %v224
  %272 = vmatprep.subr.bf16.mxu0 0
  %273 = vmatpush1.bf16.msra.mxu0 %v225
  %274 = vmatprep.mubr.bf16.mxu0 %v115
  %275 = vmatmul.mubr.bf16.gmra.mrb[0].mxu0 %v114
  %v276 = vpop.f32.mrb[0].mxu0
  %v277 = vadd.f32 0.0, %v276
  %v278 = vpop.f32.mrb[0].mxu0
  %v279 = vpop.f32.mrb[0].mxu0
  %v280 = vadd.f32 0.0, %v279
  %v281 = vpop.f32.mrb[0].mxu0
  %282 = vmatprep.mubr.bf16.mxu0 %v117
  %283 = vmatmul.mubr.bf16.gmra.mrb[0].mxu0 %v116
  %v284 = vpop.f32.mrb[0].mxu0
  %v285 = vadd.f32 0.0, %v284
  %v286 = vpop.f32.mrb[0].mxu0
  %v287 = vpop.f32.mrb[0].mxu0
  %v288 = vadd.f32 0.0, %v287
  %v289 = vpop.f32.mrb[0].mxu0
  %290 = vmatprep.mubr.bf16.mxu0 %v119
  %291 = vmatmul.mubr.bf16.gmra.mrb[0].mxu0 %v118
  %v292 = vpop.f32.mrb[0].mxu0
  %v293 = vadd.f32 0.0, %v292
  %v294 = vpop.f32.mrb[0].mxu0
  %v295 = vpop.f32.mrb[0].mxu0
  %v296 = vadd.f32 0.0, %v295
  %v297 = vpop.f32.mrb[0].mxu0
  %298 = vmatprep.mubr.bf16.mxu0 %v121
  %299 = vmatmul.mubr.bf16.gmra.mrb[0].mxu0 %v120
  %v300 = vpop.f32.mrb[0].mxu0
  %v301 = vadd.f32 0.0, %v300
  %v302 = vpop.f32.mrb[0].mxu0
  %v303 = vpop.f32.mrb[0].mxu0
  %v304 = vadd.f32 0.0, %v303
  %v305 = vpop.f32.mrb[0].mxu0
  %306 = vmatprep.mubr.bf16.mxu0 %v123
  %307 = vmatmul.mubr.bf16.gmra.mrb[0].mxu0 %v122
  %v308 = vpop.f32.mrb[0].mxu0
  %v309 = vadd.f32 0.0, %v308
  %v310 = vpop.f32.mrb[0].mxu0
  %v311 = vpop.f32.mrb[0].mxu0
  %v312 = vadd.f32 0.0, %v311
  %v313 = vpop.f32.mrb[0].mxu0
  %314 = vmatprep.mubr.bf16.mxu0 %v125
  %315 = vmatmul.mubr.bf16.gmra.mrb[0].mxu0 %v124
  %v316 = vpop.f32.mrb[0].mxu0
  %v317 = vadd.f32 0.0, %v316
  %v318 = vpop.f32.mrb[0].mxu0
  %v319 = vpop.f32.mrb[0].mxu0
  %v320 = vadd.f32 0.0, %v319
  %v321 = vpop.f32.mrb[0].mxu0
  %322 = vmatprep.mubr.bf16.mxu0 %v127
  %323 = vmatmul.mubr.bf16.gmra.mrb[0].mxu0 %v126
  %v324 = vpop.f32.mrb[0].mxu0
  %v325 = vadd.f32 0.0, %v324
  %v326 = vpop.f32.mrb[0].mxu0
  %v327 = vpop.f32.mrb[0].mxu0
  %v328 = vadd.f32 0.0, %v327
  %v329 = vpop.f32.mrb[0].mxu0
  %330 = vmatprep.mubr.bf16.mxu0 %v129
  %331 = vmatmul.mubr.bf16.gmra.mrb[0].mxu0 %v128
  %v332 = vpop.f32.mrb[0].mxu0
  %v333 = vadd.f32 0.0, %v332
  %v334 = vpop.f32.mrb[0].mxu0
  %v335 = vpop.f32.mrb[0].mxu0
  %v336 = vadd.f32 0.0, %v335
  %v337 = vpop.f32.mrb[0].mxu0
  %338 = vdwg.mxu0
  %v339 = vld [vmem:[%s1] sm:$0xff]
  %v340 = vld [vmem:[%s1 + $0x8] sm:$0xff]
  %v341 = vld [vmem:[%s1 + $0x10] sm:$0xff]
  %v342 = vld [vmem:[%s1 + $0x18] sm:$0xff]
  %v343 = vld [vmem:[%s1 + $0x20] sm:$0xff]
  %v344 = vld [vmem:[%s1 + $0x28] sm:$0xff]
  %v345 = vld [vmem:[%s1 + $0x30] sm:$0xff]
  %v346 = vld [vmem:[%s1 + $0x38] sm:$0xff]
  %v347 = vld [vmem:[%s1 + $0x40] sm:$0xff]
  %v348 = vld [vmem:[%s1 + $0x48] sm:$0xff]
  %v349 = vld [vmem:[%s1 + $0x50] sm:$0xff]
  %v350 = vld [vmem:[%s1 + $0x58] sm:$0xff]
  %v351 = vld [vmem:[%s1 + $0x60] sm:$0xff]
  %v352 = vld [vmem:[%s1 + $0x68] sm:$0xff]
  %v353 = vld [vmem:[%s1 + $0x70] sm:$0xff]
  %v354 = vld [vmem:[%s1 + $0x78] sm:$0xff]
  %vm355 = vcmp.eq.f32.partialorder %v339, 0.0
  %vm356 = vcmp.eq.f32.partialorder %v340, 0.0
  %vm357 = vcmp.eq.f32.partialorder %v341, 0.0
  %vm358 = vcmp.eq.f32.partialorder %v342, 0.0
  %vm359 = vcmp.eq.f32.partialorder %v343, 0.0
  %vm360 = vcmp.eq.f32.partialorder %v344, 0.0
  %vm361 = vcmp.eq.f32.partialorder %v345, 0.0
  %vm362 = vcmp.eq.f32.partialorder %v346, 0.0
  %vm363 = vcmp.eq.f32.partialorder %v347, 0.0
  %vm364 = vcmp.eq.f32.partialorder %v348, 0.0
  %vm365 = vcmp.eq.f32.partialorder %v349, 0.0
  %vm366 = vcmp.eq.f32.partialorder %v350, 0.0
  %vm367 = vcmp.eq.f32.partialorder %v351, 0.0
  %vm368 = vcmp.eq.f32.partialorder %v352, 0.0
  %vm369 = vcmp.eq.f32.partialorder %v353, 0.0
  %vm370 = vcmp.eq.f32.partialorder %v354, 0.0
  %v371 = vsel %vm355, 1.0, %v339
  %v372 = vsel %vm356, 1.0, %v340
  %v373 = vsel %vm357, 1.0, %v341
  %v374 = vsel %vm358, 1.0, %v342
  %v375 = vsel %vm359, 1.0, %v343
  %v376 = vsel %vm360, 1.0, %v344
  %v377 = vsel %vm361, 1.0, %v345
  %v378 = vsel %vm362, 1.0, %v346
  %v379 = vsel %vm363, 1.0, %v347
  %v380 = vsel %vm364, 1.0, %v348
  %v381 = vsel %vm365, 1.0, %v349
  %v382 = vsel %vm366, 1.0, %v350
  %v383 = vsel %vm367, 1.0, %v351
  %v384 = vsel %vm368, 1.0, %v352
  %v385 = vsel %vm369, 1.0, %v353
  %v386 = vsel %vm370, 1.0, %v354
  %v387 = vrcp.pop %v371
  %v388 = vrcp.pop %v372
  %v389 = vrcp.pop %v373
  %v390 = vrcp.pop %v374
  %v391 = vrcp.pop %v375
  %v392 = vrcp.pop %v376
  %v393 = vrcp.pop %v377
  %v394 = vrcp.pop %v378
  %v395 = vrcp.pop %v379
  %v396 = vrcp.pop %v380
  %v397 = vrcp.pop %v381
  %v398 = vrcp.pop %v382
  %v399 = vrcp.pop %v383
  %v400 = vrcp.pop %v384
  %v401 = vrcp.pop %v385
  %v402 = vrcp.pop %v386
  %404 = vset.pattern.permute.xlu0 0
  %405 = vperm.xlu0 %404, %v387
  %v406 = vpop.permute.xlu0 %405
  %409 = vset.pattern.permute.xlu0 0
  %410 = vperm.xlu0 %409, %v388
  %v411 = vpop.permute.xlu0 %410
  %414 = vset.pattern.permute.xlu0 0
  %415 = vperm.xlu0 %414, %v389
  %v416 = vpop.permute.xlu0 %415
  %419 = vset.pattern.permute.xlu0 0
  %420 = vperm.xlu0 %419, %v390
  %v421 = vpop.permute.xlu0 %420
  %424 = vset.pattern.permute.xlu0 0
  %425 = vperm.xlu0 %424, %v391
  %v426 = vpop.permute.xlu0 %425
  %429 = vset.pattern.permute.xlu0 0
  %430 = vperm.xlu0 %429, %v392
  %v431 = vpop.permute.xlu0 %430
  %434 = vset.pattern.permute.xlu0 0
  %435 = vperm.xlu0 %434, %v393
  %v436 = vpop.permute.xlu0 %435
  %439 = vset.pattern.permute.xlu0 0
  %440 = vperm.xlu0 %439, %v394
  %v441 = vpop.permute.xlu0 %440
  %444 = vset.pattern.permute.xlu0 0
  %445 = vperm.xlu0 %444, %v395
  %v446 = vpop.permute.xlu0 %445
  %449 = vset.pattern.permute.xlu0 0
  %450 = vperm.xlu0 %449, %v396
  %v451 = vpop.permute.xlu0 %450
  %454 = vset.pattern.permute.xlu0 0
  %455 = vperm.xlu0 %454, %v397
  %v456 = vpop.permute.xlu0 %455
  %459 = vset.pattern.permute.xlu0 0
  %460 = vperm.xlu0 %459, %v398
  %v461 = vpop.permute.xlu0 %460
  %464 = vset.pattern.permute.xlu0 0
  %465 = vperm.xlu0 %464, %v399
  %v466 = vpop.permute.xlu0 %465
  %469 = vset.pattern.permute.xlu0 0
  %470 = vperm.xlu0 %469, %v400
  %v471 = vpop.permute.xlu0 %470
  %474 = vset.pattern.permute.xlu0 0
  %475 = vperm.xlu0 %474, %v401
  %v476 = vpop.permute.xlu0 %475
  %479 = vset.pattern.permute.xlu0 0
  %480 = vperm.xlu0 %479, %v402
  %v481 = vpop.permute.xlu0 %480
  %v483 = vmul.f32 %v277, %v406
  %v484 = vmul.f32 %v280, %v411
  %v485 = vmul.f32 %v285, %v416
  %v486 = vmul.f32 %v288, %v421
  %v487 = vmul.f32 %v293, %v426
  %v488 = vmul.f32 %v296, %v431
  %v489 = vmul.f32 %v301, %v436
  %v490 = vmul.f32 %v304, %v441
  %v491 = vmul.f32 %v309, %v446
  %v492 = vmul.f32 %v312, %v451
  %v493 = vmul.f32 %v317, %v456
  %v494 = vmul.f32 %v320, %v461
  %v495 = vmul.f32 %v325, %v466
  %v496 = vmul.f32 %v328, %v471
  %v497 = vmul.f32 %v333, %v476
  %v498 = vmul.f32 %v336, %v481
  %v499 = vld [vmem:[%s3] sm:$0x1]
  %v501 = vlaneseq
  %v502 = vshrl.u32 %v501, 7
  %v503 = vsub.s32 0, %v502
  %v504 = vrot.slane %v499, %v503
  %v506 = vadd.f32 %v483, %v504
  %v507 = vadd.f32 %v484, %v504
  %v508 = vadd.f32 %v485, %v504
  %v509 = vadd.f32 %v486, %v504
  %v510 = vadd.f32 %v487, %v504
  %v511 = vadd.f32 %v488, %v504
  %v512 = vadd.f32 %v489, %v504
  %v513 = vadd.f32 %v490, %v504
  %v514 = vadd.f32 %v491, %v504
  %v515 = vadd.f32 %v492, %v504
  %v516 = vadd.f32 %v493, %v504
  %v517 = vadd.f32 %v494, %v504
  %v518 = vadd.f32 %v495, %v504
  %v519 = vadd.f32 %v496, %v504
  %v520 = vadd.f32 %v497, %v504
  %v521 = vadd.f32 %v498, %v504
  %v522 = vsel %vm355, 1, 0
  %v523 = vsel %vm356, 1, 0
  %v524 = vsel %vm357, 1, 0
  %v525 = vsel %vm358, 1, 0
  %v526 = vsel %vm359, 1, 0
  %v527 = vsel %vm360, 1, 0
  %v528 = vsel %vm361, 1, 0
  %v529 = vsel %vm362, 1, 0
  %v530 = vsel %vm363, 1, 0
  %v531 = vsel %vm364, 1, 0
  %v532 = vsel %vm365, 1, 0
  %v533 = vsel %vm366, 1, 0
  %v534 = vsel %vm367, 1, 0
  %v535 = vsel %vm368, 1, 0
  %v536 = vsel %vm369, 1, 0
  %v537 = vsel %vm370, 1, 0
  %538 = vset.pattern.permute.xlu0 0
  %539 = vperm.xlu0 %538, %v522
  %v540 = vpop.permute.xlu0 %539
  %541 = vset.pattern.permute.xlu0 0
  %542 = vperm.xlu0 %541, %v523
  %v543 = vpop.permute.xlu0 %542
  %544 = vset.pattern.permute.xlu0 0
  %545 = vperm.xlu0 %544, %v524
  %v546 = vpop.permute.xlu0 %545
  %547 = vset.pattern.permute.xlu0 0
  %548 = vperm.xlu0 %547, %v525
  %v549 = vpop.permute.xlu0 %548
  %550 = vset.pattern.permute.xlu0 0
  %551 = vperm.xlu0 %550, %v526
  %v552 = vpop.permute.xlu0 %551
  %553 = vset.pattern.permute.xlu0 0
  %554 = vperm.xlu0 %553, %v527
  %v555 = vpop.permute.xlu0 %554
  %556 = vset.pattern.permute.xlu0 0
  %557 = vperm.xlu0 %556, %v528
  %v558 = vpop.permute.xlu0 %557
  %559 = vset.pattern.permute.xlu0 0
  %560 = vperm.xlu0 %559, %v529
  %v561 = vpop.permute.xlu0 %560
  %562 = vset.pattern.permute.xlu0 0
  %563 = vperm.xlu0 %562, %v530
  %v564 = vpop.permute.xlu0 %563
  %565 = vset.pattern.permute.xlu0 0
  %566 = vperm.xlu0 %565, %v531
  %v567 = vpop.permute.xlu0 %566
  %568 = vset.pattern.permute.xlu0 0
  %569 = vperm.xlu0 %568, %v532
  %v570 = vpop.permute.xlu0 %569
  %571 = vset.pattern.permute.xlu0 0
  %572 = vperm.xlu0 %571, %v533
  %v573 = vpop.permute.xlu0 %572
  %574 = vset.pattern.permute.xlu0 0
  %575 = vperm.xlu0 %574, %v534
  %v576 = vpop.permute.xlu0 %575
  %577 = vset.pattern.permute.xlu0 0
  %578 = vperm.xlu0 %577, %v535
  %v579 = vpop.permute.xlu0 %578
  %580 = vset.pattern.permute.xlu0 0
  %581 = vperm.xlu0 %580, %v536
  %v582 = vpop.permute.xlu0 %581
  %583 = vset.pattern.permute.xlu0 0
  %584 = vperm.xlu0 %583, %v537
  %v585 = vpop.permute.xlu0 %584
  %vm586 = vcmp.eq.s32.totalorder %v540, 1
  %vm587 = vcmp.eq.s32.totalorder %v543, 1
  %vm588 = vcmp.eq.s32.totalorder %v546, 1
  %vm589 = vcmp.eq.s32.totalorder %v549, 1
  %vm590 = vcmp.eq.s32.totalorder %v552, 1
  %vm591 = vcmp.eq.s32.totalorder %v555, 1
  %vm592 = vcmp.eq.s32.totalorder %v558, 1
  %vm593 = vcmp.eq.s32.totalorder %v561, 1
  %vm594 = vcmp.eq.s32.totalorder %v564, 1
  %vm595 = vcmp.eq.s32.totalorder %v567, 1
  %vm596 = vcmp.eq.s32.totalorder %v570, 1
  %vm597 = vcmp.eq.s32.totalorder %v573, 1
  %vm598 = vcmp.eq.s32.totalorder %v576, 1
  %vm599 = vcmp.eq.s32.totalorder %v579, 1
  %vm600 = vcmp.eq.s32.totalorder %v582, 1
  %vm601 = vcmp.eq.s32.totalorder %v585, 1
  %v602 = vsel %vm586, 0.0, %v506
  %v603 = vsel %vm587, 0.0, %v507
  %v604 = vsel %vm588, 0.0, %v508
  %v605 = vsel %vm589, 0.0, %v509
  %v606 = vsel %vm590, 0.0, %v510
  %v607 = vsel %vm591, 0.0, %v511
  %v608 = vsel %vm592, 0.0, %v512
  %v609 = vsel %vm593, 0.0, %v513
  %v610 = vsel %vm594, 0.0, %v514
  %v611 = vsel %vm595, 0.0, %v515
  %v612 = vsel %vm596, 0.0, %v516
  %v613 = vsel %vm597, 0.0, %v517
  %v614 = vsel %vm598, 0.0, %v518
  %v615 = vsel %vm599, 0.0, %v519
  %v616 = vsel %vm600, 0.0, %v520
  %v617 = vsel %vm601, 0.0, %v521
  %v618 = vmax.f32 %v602, 0.0
  %v619 = vmax.f32 %v603, 0.0
  %v620 = vmax.f32 %v604, 0.0
  %v621 = vmax.f32 %v605, 0.0
  %v622 = vmax.f32 %v606, 0.0
  %v623 = vmax.f32 %v607, 0.0
  %v624 = vmax.f32 %v608, 0.0
  %v625 = vmax.f32 %v609, 0.0
  %v626 = vmax.f32 %v610, 0.0
  %v627 = vmax.f32 %v611, 0.0
  %v628 = vmax.f32 %v612, 0.0
  %v629 = vmax.f32 %v613, 0.0
  %v630 = vmax.f32 %v614, 0.0
  %v631 = vmax.f32 %v615, 0.0
  %v632 = vmax.f32 %v616, 0.0
  %v633 = vmax.f32 %v617, 0.0
  %v634 = vpack.c.bf16 %v619, %v618
  %v635 = vpack.c.bf16 %v621, %v620
  %v636 = vpack.c.bf16 %v623, %v622
  %v637 = vpack.c.bf16 %v625, %v624
  %v638 = vpack.c.bf16 %v627, %v626
  %v639 = vpack.c.bf16 %v629, %v628
  %v640 = vpack.c.bf16 %v631, %v630
  %v641 = vpack.c.bf16 %v633, %v632
  %v650 = vunpack.c.l.b16 %v634
  %v651 = vunpack.c.h.b16 %v634
  %v652 = vunpack.c.l.b16 %v635
  %v653 = vunpack.c.h.b16 %v635
  %v654 = vunpack.c.l.b16 %v636
  %v655 = vunpack.c.h.b16 %v636
  %v656 = vunpack.c.l.b16 %v637
  %v657 = vunpack.c.h.b16 %v637
  %v658 = vunpack.c.l.b16 %v638
  %v659 = vunpack.c.h.b16 %v638
  %v660 = vunpack.c.l.b16 %v639
  %v661 = vunpack.c.h.b16 %v639
  %v662 = vunpack.c.l.b16 %v640
  %v663 = vunpack.c.h.b16 %v640
  %v664 = vunpack.c.l.b16 %v641
  %v665 = vunpack.c.h.b16 %v641
  %v666 = vpack.c.b16 %v650, %v650
  %v667 = vpack.c.b16 %v651, %v651
  %v668 = vpack.c.b16 %v652, %v652
  %v669 = vpack.c.b16 %v653, %v653
  %v670 = vpack.c.b16 %v654, %v654
  %v671 = vpack.c.b16 %v655, %v655
  %v672 = vpack.c.b16 %v656, %v656
  %v673 = vpack.c.b16 %v657, %v657
  %v674 = vpack.c.b16 %v658, %v658
  %v675 = vpack.c.b16 %v659, %v659
  %v676 = vpack.c.b16 %v660, %v660
  %v677 = vpack.c.b16 %v661, %v661
  %v678 = vpack.c.b16 %v662, %v662
  %v679 = vpack.c.b16 %v663, %v663
  %v680 = vpack.c.b16 %v664, %v664
  %v681 = vpack.c.b16 %v665, %v665
  %698 = vst [vmem:[%s4] sm:$0xf] %v666
  %699 = vst [vmem:[%s4 + $0x4] sm:$0xf] %v667
  %700 = vst [vmem:[%s4 + $0x8] sm:$0xf] %v668
  %701 = vst [vmem:[%s4 + $0xc] sm:$0xf] %v669
  %702 = vst [vmem:[%s4 + $0x10] sm:$0xf] %v670
  %703 = vst [vmem:[%s4 + $0x14] sm:$0xf] %v671
  %704 = vst [vmem:[%s4 + $0x18] sm:$0xf] %v672
  %705 = vst [vmem:[%s4 + $0x1c] sm:$0xf] %v673
  %706 = vst [vmem:[%s4 + $0x20] sm:$0xf] %v674
  %707 = vst [vmem:[%s4 + $0x24] sm:$0xf] %v675
  %708 = vst [vmem:[%s4 + $0x28] sm:$0xf] %v676
  %709 = vst [vmem:[%s4 + $0x2c] sm:$0xf] %v677
  %710 = vst [vmem:[%s4 + $0x30] sm:$0xf] %v678
  %711 = vst [vmem:[%s4 + $0x34] sm:$0xf] %v679
  %712 = vst [vmem:[%s4 + $0x38] sm:$0xf] %v680
  %713 = vst [vmem:[%s4 + $0x3c] sm:$0xf] %v681
  // Predicated region
  $region18: #{partial_conv_net.10} parent=0 // pred_check
    _
  $region19: #{partial_conv_net.10} parent=0 // pred_check_branch
    %715 = sbr.rel (0) target = $region21
  $region20: #{partial_conv_net.10} parent=0 // pred_region
    _
  $region21: #{partial_conv_net.10} parent=0 // pred_fallthru
    _
  // Predicated region
  $region22: #{partial_conv_net.10} parent=0 // pred_check
    _
  $region23: #{partial_conv_net.10} parent=0 // pred_check_branch
    %717 = sbr.rel (0) target = $region25
  $region24: #{partial_conv_net.10} parent=0 // pred_region
    _
  $region25: #{partial_conv_net.10} parent=0 // pred_fallthru
    _

// kernel: partial_conv_net.12
$region0: #{partial_conv_net.12}
  #allocation0 [shape = 'u32[]', space=smem, size = 0x4, offset = 0x4, fixed_abs, tag = 'smem constant byte address 0x4 - core index']
  #allocation1 [shape = 'u32[144,128]{1,0:T(1,128)}', space=vmem, size = 0x12000, scoped, tag = 'internal scratch']
  %s0 = inlined_call_operand.vmem [shape: bf16[32,128], index: 0, kind: input, shape index: {}, may-alias: {0,2}]
  %s1 = inlined_call_operand.vmem [shape: f32[8,128], index: 1, kind: input, shape index: {}]
  %s2 = inlined_call_operand.vmem [shape: bf16[32,128], index: 2, kind: output, shape index: {}, may-alias: {0,2}]
  %s3 = sld [smem:[#allocation0]]
  $region18: #{partial_conv_net.12} parent=0
    _
  %s5 = ssub.s32 1, %s3
  %s6 = scalar_select 0, %s5, %s3
  // Predicated region
  $region2: #{partial_conv_net.12} parent=0 // pred_check
    _
  $region3: #{partial_conv_net.12} parent=0 // pred_check_branch
    %8 = sbr.rel (0) target = $region5
  $region4: #{partial_conv_net.12} parent=0 // pred_region
    _
  $region5: #{partial_conv_net.12} parent=0 // pred_fallthru
    _
  // Predicated region
  $region6: #{partial_conv_net.12} parent=0 // pred_check
    _
  $region7: #{partial_conv_net.12} parent=0 // pred_check_branch
    %10 = sbr.rel (0) target = $region9
  $region8: #{partial_conv_net.12} parent=0 // pred_region
    _
  $region9: #{partial_conv_net.12} parent=0 // pred_fallthru
    _
  %v11 = vld [vmem:[%s0] sm:$0xf]
  %v12 = vld [vmem:[%s0 + $0x4] sm:$0xf]
  %v13 = vld [vmem:[%s0 + $0x8] sm:$0xf]
  %v14 = vld [vmem:[%s0 + $0xc] sm:$0xf]
  %v15 = vunpack.c.l.bf16 %v11
  %v16 = vunpack.c.l.bf16 %v12
  %v17 = vunpack.c.l.bf16 %v13
  %v18 = vunpack.c.l.bf16 %v14
  %v19 = vld [vmem:[%s1] sm:$0x1]
  %v20 = vmul.f32 %v19, 0.03125
  %v21 = vld [vmem:[%s1 + $0x1] sm:$0x1]
  %v22 = vmul.f32 %v21, 0.03125
  %v23 = vmul.f32 %v20, %v20
  %v24 = vsub.f32 %v22, %v23
  %v25 = vmax.f32 %v24, 0.0
  %v26 = vlaneseq
  %v27 = vshrl.u32 %v26, 7
  %v28 = vsub.s32 0, %v27
  %v29 = vrot.slane %v20, %v28
  %v30 = vsub.f32 %v15, %v29
  %v31 = vsub.f32 %v16, %v29
  %v32 = vsub.f32 %v17, %v29
  %v33 = vsub.f32 %v18, %v29
  %v34 = vadd.f32 %v25, 1e-05
  %v35 = vrsqrt.pop %v34
  %v36 = vlaneseq
  %v37 = vshrl.u32 %v36, 7
  %v38 = vsub.s32 0, %v37
  %v39 = vrot.slane %v35, %v38
  %v40 = vmul.f32 %v30, %v39
  %v41 = vmul.f32 %v31, %v39
  %v42 = vmul.f32 %v32, %v39
  %v43 = vmul.f32 %v33, %v39
  %v44 = vmax.f32 %v40, 0.0
  %v45 = vmax.f32 %v41, 0.0
  %v46 = vmax.f32 %v42, 0.0
  %v47 = vmax.f32 %v43, 0.0
  %v48 = vpack.c.bf16 %v45, %v44
  %v49 = vpack.c.bf16 %v47, %v46
  %v52 = vunpack.c.l.b16 %v48
  %v53 = vunpack.c.h.b16 %v48
  %v54 = vunpack.c.l.b16 %v49
  %v55 = vunpack.c.h.b16 %v49
  %v56 = vpack.c.b16 %v52, %v52
  %v57 = vpack.c.b16 %v53, %v53
  %v58 = vpack.c.b16 %v54, %v54
  %v59 = vpack.c.b16 %v55, %v55
  %64 = vst [vmem:[%s2] sm:$0xf] %v56
  %65 = vst [vmem:[%s2 + $0x4] sm:$0xf] %v57
  %66 = vst [vmem:[%s2 + $0x8] sm:$0xf] %v58
  %67 = vst [vmem:[%s2 + $0xc] sm:$0xf] %v59
  // Predicated region
  $region10: #{partial_conv_net.12} parent=0 // pred_check
    _
  $region11: #{partial_conv_net.12} parent=0 // pred_check_branch
    %69 = sbr.rel (0) target = $region13
  $region12: #{partial_conv_net.12} parent=0 // pred_region
    _
  $region13: #{partial_conv_net.12} parent=0 // pred_fallthru
    _
  // Predicated region
  $region14: #{partial_conv_net.12} parent=0 // pred_check
    _
  $region15: #{partial_conv_net.12} parent=0 // pred_check_branch
    %71 = sbr.rel (0) target = $region17
  $region16: #{partial_conv_net.12} parent=0 // pred_region
    _
  $region17: #{partial_conv_net.12} parent=0 // pred_fallthru
    _

// kernel: partial_conv_net.11
$region0: #{partial_conv_net.11}
  #allocation0 [shape = 'u32[]', space=smem, size = 0x4, offset = 0x4, fixed_abs, tag = 'smem constant byte address 0x4 - core index']
  #allocation1 [shape = 'u32[144,128]{1,0:T(1,128)}', space=vmem, size = 0x12000, scoped, tag = 'internal scratch']
  %s0 = inlined_call_operand.vmem [shape: bf16[32,1664], index: 0, kind: input, shape index: {}]
  %s1 = inlined_call_operand.vmem [shape: f32[32,1], index: 1, kind: input, shape index: {}]
  %s2 = inlined_call_operand.vmem [shape: bf16[1664,128], index: 2, kind: input, shape index: {}]
  %s3 = inlined_call_operand.vmem [shape: f32[1,128], index: 3, kind: input, shape index: {}]
  %s4 = inlined_call_operand.vmem [shape: bf16[32,128], index: 4, kind: output, shape index: {0}]
  %s5 = inlined_call_operand.vmem [shape: f32[8,128], index: 5, kind: output, shape index: {1}]
  %6 = xla_tuple %s4, %s5
  %s7 = sld [smem:[#allocation0]]
  $region38: #{partial_conv_net.11} parent=0
    _
  %s9 = ssub.s32 1, %s7
  %s10 = scalar_select 0, %s9, %s7
  // Predicated region
  $region2: #{partial_conv_net.11} parent=0 // pred_check
    _
  $region3: #{partial_conv_net.11} parent=0 // pred_check_branch
    %12 = sbr.rel (0) target = $region5
  $region4: #{partial_conv_net.11} parent=0 // pred_region
    %s13 = sadd.s32 0, 0
    %s14 = smul.u32 4, %s13
    %p15 = scmp.lt.s32.totalorder %s14, 3
    %s16 = scalar_select %p15, %s14, 3
    %s17 = smul.addr %s16, 13
    %s18 = smul.addr %s17, 4
    %s19 = scalar_lea.vmem %s0, %s18
    %s20 = sadd.s32 0, 0
    %s21 = smul.u32 4, %s20
  $region5: #{partial_conv_net.11} parent=0 // pred_fallthru
    _
  // Predicated region
  $region6: #{partial_conv_net.11} parent=0 // pred_check
    _
  $region7: #{partial_conv_net.11} parent=0 // pred_check_branch
    %23 = sbr.rel (0) target = $region9
  $region8: #{partial_conv_net.11} parent=0 // pred_region
    %s24 = sadd.s32 0, 0
    %s25 = smul.u32 4, %s24
    %p26 = scmp.lt.s32.totalorder %s25, 3
    %s27 = scalar_select %p26, %s25, 3
    %s28 = smul.addr %s27, 8
    %s29 = scalar_lea.vmem %s1, %s28
    %s30 = sadd.s32 0, 0
    %s31 = smul.u32 4, %s30
  $region9: #{partial_conv_net.11} parent=0 // pred_fallthru
    _
  // Predicated region
  $region10: #{partial_conv_net.11} parent=0 // pred_check
    _
  $region11: #{partial_conv_net.11} parent=0 // pred_check_branch
    %33 = sbr.rel (0) target = $region13
  $region12: #{partial_conv_net.11} parent=0 // pred_region
    _
  $region13: #{partial_conv_net.11} parent=0 // pred_fallthru
    _
  // Predicated region
  $region14: #{partial_conv_net.11} parent=0 // pred_check
    _
  $region15: #{partial_conv_net.11} parent=0 // pred_check_branch
    %35 = sbr.rel (0) target = $region17
  $region16: #{partial_conv_net.11} parent=0 // pred_region
    _
  $region17: #{partial_conv_net.11} parent=0 // pred_fallthru
    _
  %s36 = sadd.s32 0, 0
  %s37 = smul.u32 4, %s36
  %p38 = scmp.lt.s32.totalorder %s37, 3
  %s39 = scalar_select %p38, %s37, 3
  %s40 = smul.addr %s39, 13
  %s41 = smul.addr %s40, 4
  %s42 = scalar_lea.vmem %s0, %s41
  %s43 = sadd.s32 0, 0
  %s44 = smul.u32 4, %s43
  %p45 = scmp.lt.s32.totalorder %s44, 3
  %s46 = scalar_select %p45, %s44, 3
  %s47 = smul.addr %s46, 8
  %s48 = scalar_lea.vmem %s1, %s47
  %s49 = sadd.s32 0, 0
  %s50 = smul.u32 4, %s49
  %p51 = scmp.lt.s32.totalorder %s50, 3
  %s52 = scalar_select %p51, %s50, 3
  %s53 = smul.addr %s52, 4
  %s54 = scalar_lea.vmem %s4, %s53
  %s55 = sadd.s32 0, 0
  %s56 = smul.u32 4, %s55
  %p57 = scmp.lt.s32.totalorder %s56, 3
  %s58 = scalar_select %p57, %s56, 3
  %s59 = smul.addr %s58, 13
  %s60 = smul.addr %s59, 4
  %s61 = scalar_lea.vmem %s0, %s60
  %s62 = sadd.s32 0, 0
  %s63 = smul.u32 4, %s62
  %s64 = sadd.s32 0, 0
  %s65 = smul.u32 4, %s64
  %p66 = scmp.lt.s32.totalorder %s65, 3
  %s67 = scalar_select %p66, %s65, 3
  %s68 = smul.addr %s67, 8
  %s69 = scalar_lea.vmem %s1, %s68
  %s70 = sadd.s32 0, 0
  %s71 = smul.u32 4, %s70
  %s72 = sadd.s32 0, 0
  %s73 = smul.u32 4, %s72
  %p74 = scmp.lt.s32.totalorder %s73, 3
  %s75 = scalar_select %p74, %s73, 3
  %s76 = smul.addr %s75, 4
  %s77 = scalar_lea.vmem %s4, %s76
  %s78 = sadd.s32 0, 0
  %s79 = smul.u32 4, %s78
  %v81 = vld [vmem:[%s61] sm:$0xff]
  %v82 = vld [vmem:[%s61 + $0x8] sm:$0xff]
  %v83 = vld [vmem:[%s61 + $0x10] sm:$0xff]
  %v84 = vld [vmem:[%s61 + $0x18] sm:$0xff]
  %v85 = vld [vmem:[%s61 + $0x20] sm:$0xff]
  %v86 = vld [vmem:[%s61 + $0x28] sm:$0xff]
  %v87 = vld [vmem:[%s61 + $0x30] sm:$0xf]
  %v88 = vld [vmem:[%s61 + $0x34] sm:$0xff]
  %v89 = vld [vmem:[%s61 + $0x3c] sm:$0xff]
  %v90 = vld [vmem:[%s61 + $0x44] sm:$0xff]
  %v91 = vld [vmem:[%s61 + $0x4c] sm:$0xff]
  %v92 = vld [vmem:[%s61 + $0x54] sm:$0xff]
  %v93 = vld [vmem:[%s61 + $0x5c] sm:$0xff]
  %v94 = vld [vmem:[%s61 + $0x64] sm:$0xf]
  %v95 = vld [vmem:[%s61 + $0x68] sm:$0xff]
  %v96 = vld [vmem:[%s61 + $0x70] sm:$0xff]
  %v97 = vld [vmem:[%s61 + $0x78] sm:$0xff]
  %v98 = vld [vmem:[%s61 + $0x80] sm:$0xff]
  %v99 = vld [vmem:[%s61 + $0x88] sm:$0xff]
  %v100 = vld [vmem:[%s61 + $0x90] sm:$0xff]
  %v101 = vld [vmem:[%s61 + $0x98] sm:$0xf]
  %v102 = vld [vmem:[%s61 + $0x9c] sm:$0xff]
  %v103 = vld [vmem:[%s61 + $0xa4] sm:$0xff]
  %v104 = vld [vmem:[%s61 + $0xac] sm:$0xff]
  %v105 = vld [vmem:[%s61 + $0xb4] sm:$0xff]
  %v106 = vld [vmem:[%s61 + $0xbc] sm:$0xff]
  %v107 = vld [vmem:[%s61 + $0xc4] sm:$0xff]
  %v108 = vld [vmem:[%s61 + $0xcc] sm:$0xf]
  %v109 = vld [vmem:[%s2] sm:$0xf]
  %v110 = vld [vmem:[%s2 + $0x4] sm:$0xf]
  %v111 = vld [vmem:[%s2 + $0x8] sm:$0xf]
  %v112 = vld [vmem:[%s2 + $0xc] sm:$0xf]
  %v113 = vld [vmem:[%s2 + $0x10] sm:$0xf]
  %v114 = vld [vmem:[%s2 + $0x14] sm:$0xf]
  %v115 = vld [vmem:[%s2 + $0x18] sm:$0xf]
  %v116 = vld [vmem:[%s2 + $0x1c] sm:$0xf]
  %v117 = vld [vmem:[%s2 + $0x20] sm:$0xf]
  %v118 = vld [vmem:[%s2 + $0x24] sm:$0xf]
  %v119 = vld [vmem:[%s2 + $0x28] sm:$0xf]
  %v120 = vld [vmem:[%s2 + $0x2c] sm:$0xf]
  %v121 = vld [vmem:[%s2 + $0x30] sm:$0xf]
  %v122 = vld [vmem:[%s2 + $0x34] sm:$0xf]
  %v123 = vld [vmem:[%s2 + $0x38] sm:$0xf]
  %v124 = vld [vmem:[%s2 + $0x3c] sm:$0xf]
  %v125 = vld [vmem:[%s2 + $0x40] sm:$0xf]
  %v126 = vld [vmem:[%s2 + $0x44] sm:$0xf]
  %v127 = vld [vmem:[%s2 + $0x48] sm:$0xf]
  %v128 = vld [vmem:[%s2 + $0x4c] sm:$0xf]
  %v129 = vld [vmem:[%s2 + $0x50] sm:$0xf]
  %v130 = vld [vmem:[%s2 + $0x54] sm:$0xf]
  %v131 = vld [vmem:[%s2 + $0x58] sm:$0xf]
  %v132 = vld [vmem:[%s2 + $0x5c] sm:$0xf]
  %v133 = vld [vmem:[%s2 + $0x60] sm:$0xf]
  %v134 = vld [vmem:[%s2 + $0x64] sm:$0xf]
  %v135 = vld [vmem:[%s2 + $0x68] sm:$0xf]
  %v136 = vld [vmem:[%s2 + $0x6c] sm:$0xf]
  %v137 = vld [vmem:[%s2 + $0x70] sm:$0xf]
  %v138 = vld [vmem:[%s2 + $0x74] sm:$0xf]
  %v139 = vld [vmem:[%s2 + $0x78] sm:$0xf]
  %v140 = vld [vmem:[%s2 + $0x7c] sm:$0xf]
  %v141 = vld [vmem:[%s2 + $0x80] sm:$0xf]
  %v142 = vld [vmem:[%s2 + $0x84] sm:$0xf]
  %v143 = vld [vmem:[%s2 + $0x88] sm:$0xf]
  %v144 = vld [vmem:[%s2 + $0x8c] sm:$0xf]
  %v145 = vld [vmem:[%s2 + $0x90] sm:$0xf]
  %v146 = vld [vmem:[%s2 + $0x94] sm:$0xf]
  %v147 = vld [vmem:[%s2 + $0x98] sm:$0xf]
  %v148 = vld [vmem:[%s2 + $0x9c] sm:$0xf]
  %v149 = vld [vmem:[%s2 + $0xa0] sm:$0xf]
  %v150 = vld [vmem:[%s2 + $0xa4] sm:$0xf]
  %v151 = vld [vmem:[%s2 + $0xa8] sm:$0xf]
  %v152 = vld [vmem:[%s2 + $0xac] sm:$0xf]
  %v153 = vld [vmem:[%s2 + $0xb0] sm:$0xf]
  %v154 = vld [vmem:[%s2 + $0xb4] sm:$0xf]
  %v155 = vld [vmem:[%s2 + $0xb8] sm:$0xf]
  %v156 = vld [vmem:[%s2 + $0xbc] sm:$0xf]
  %v157 = vld [vmem:[%s2 + $0xc0] sm:$0xf]
  %v158 = vld [vmem:[%s2 + $0xc4] sm:$0xf]
  %v159 = vld [vmem:[%s2 + $0xc8] sm:$0xf]
  %v160 = vld [vmem:[%s2 + $0xcc] sm:$0xf]
  %v161 = vld [vmem:[%s2 + $0xd0] sm:$0xf]
  %v162 = vld [vmem:[%s2 + $0xd4] sm:$0xf]
  %v163 = vld [vmem:[%s2 + $0xd8] sm:$0xf]
  %v164 = vld [vmem:[%s2 + $0xdc] sm:$0xf]
  %v165 = vld [vmem:[%s2 + $0xe0] sm:$0xf]
  %v166 = vld [vmem:[%s2 + $0xe4] sm:$0xf]
  %v167 = vld [vmem:[%s2 + $0xe8] sm:$0xf]
  %v168 = vld [vmem:[%s2 + $0xec] sm:$0xf]
  %v169 = vld [vmem:[%s2 + $0xf0] sm:$0xf]
  %v170 = vld [vmem:[%s2 + $0xf4] sm:$0xf]
  %v171 = vld [vmem:[%s2 + $0xf8] sm:$0xf]
  %v172 = vld [vmem:[%s2 + $0xfc] sm:$0xf]
  %v173 = vld [vmem:[%s2 + $0x100] sm:$0xf]
  %v174 = vld [vmem:[%s2 + $0x104] sm:$0xf]
  %v175 = vld [vmem:[%s2 + $0x108] sm:$0xf]
  %v176 = vld [vmem:[%s2 + $0x10c] sm:$0xf]
  %v177 = vld [vmem:[%s2 + $0x110] sm:$0xf]
  %v178 = vld [vmem:[%s2 + $0x114] sm:$0xf]
  %v179 = vld [vmem:[%s2 + $0x118] sm:$0xf]
  %v180 = vld [vmem:[%s2 + $0x11c] sm:$0xf]
  %v181 = vld [vmem:[%s2 + $0x120] sm:$0xf]
  %v182 = vld [vmem:[%s2 + $0x124] sm:$0xf]
  %v183 = vld [vmem:[%s2 + $0x128] sm:$0xf]
  %v184 = vld [vmem:[%s2 + $0x12c] sm:$0xf]
  %v185 = vld [vmem:[%s2 + $0x130] sm:$0xf]
  %v186 = vld [vmem:[%s2 + $0x134] sm:$0xf]
  %v187 = vld [vmem:[%s2 + $0x138] sm:$0xf]
  %v188 = vld [vmem:[%s2 + $0x13c] sm:$0xf]
  %v189 = vld [vmem:[%s2 + $0x140] sm:$0xf]
  %v190 = vld [vmem:[%s2 + $0x144] sm:$0xf]
  %v191 = vld [vmem:[%s2 + $0x148] sm:$0xf]
  %v192 = vld [vmem:[%s2 + $0x14c] sm:$0xf]
  %v193 = vld [vmem:[%s2 + $0x150] sm:$0xf]
  %v194 = vld [vmem:[%s2 + $0x154] sm:$0xf]
  %v195 = vld [vmem:[%s2 + $0x158] sm:$0xf]
  %v196 = vld [vmem:[%s2 + $0x15c] sm:$0xf]
  %v197 = vld [vmem:[%s2 + $0x160] sm:$0xf]
  %v198 = vld [vmem:[%s2 + $0x164] sm:$0xf]
  %v199 = vld [vmem:[%s2 + $0x168] sm:$0xf]
  %v200 = vld [vmem:[%s2 + $0x16c] sm:$0xf]
  %v201 = vld [vmem:[%s2 + $0x170] sm:$0xf]
  %v202 = vld [vmem:[%s2 + $0x174] sm:$0xf]
  %v203 = vld [vmem:[%s2 + $0x178] sm:$0xf]
  %v204 = vld [vmem:[%s2 + $0x17c] sm:$0xf]
  %v205 = vld [vmem:[%s2 + $0x180] sm:$0xf]
  %v206 = vld [vmem:[%s2 + $0x184] sm:$0xf]
  %v207 = vld [vmem:[%s2 + $0x188] sm:$0xf]
  %v208 = vld [vmem:[%s2 + $0x18c] sm:$0xf]
  %v209 = vld [vmem:[%s2 + $0x190] sm:$0xf]
  %v210 = vld [vmem:[%s2 + $0x194] sm:$0xf]
  %v211 = vld [vmem:[%s2 + $0x198] sm:$0xf]
  %v212 = vld [vmem:[%s2 + $0x19c] sm:$0xf]
  %v213 = vld [vmem:[%s2 + $0x1a0] sm:$0xf]
  %v214 = vld [vmem:[%s2 + $0x1a4] sm:$0xf]
  %v215 = vld [vmem:[%s2 + $0x1a8] sm:$0xf]
  %v216 = vld [vmem:[%s2 + $0x1ac] sm:$0xf]
  %v217 = vld [vmem:[%s2 + $0x1b0] sm:$0xf]
  %v218 = vld [vmem:[%s2 + $0x1b4] sm:$0xf]
  %v219 = vld [vmem:[%s2 + $0x1b8] sm:$0xf]
  %v220 = vld [vmem:[%s2 + $0x1bc] sm:$0xf]
  %v221 = vld [vmem:[%s2 + $0x1c0] sm:$0xf]
  %v222 = vld [vmem:[%s2 + $0x1c4] sm:$0xf]
  %v223 = vld [vmem:[%s2 + $0x1c8] sm:$0xf]
  %v224 = vld [vmem:[%s2 + $0x1cc] sm:$0xf]
  %v225 = vld [vmem:[%s2 + $0x1d0] sm:$0xf]
  %v226 = vld [vmem:[%s2 + $0x1d4] sm:$0xf]
  %v227 = vld [vmem:[%s2 + $0x1d8] sm:$0xf]
  %v228 = vld [vmem:[%s2 + $0x1dc] sm:$0xf]
  %v229 = vld [vmem:[%s2 + $0x1e0] sm:$0xf]
  %v230 = vld [vmem:[%s2 + $0x1e4] sm:$0xf]
  %v231 = vld [vmem:[%s2 + $0x1e8] sm:$0xf]
  %v232 = vld [vmem:[%s2 + $0x1ec] sm:$0xf]
  %v233 = vld [vmem:[%s2 + $0x1f0] sm:$0xf]
  %v234 = vld [vmem:[%s2 + $0x1f4] sm:$0xf]
  %v235 = vld [vmem:[%s2 + $0x1f8] sm:$0xf]
  %v236 = vld [vmem:[%s2 + $0x1fc] sm:$0xf]
  %v237 = vld [vmem:[%s2 + $0x200] sm:$0xf]
  %v238 = vld [vmem:[%s2 + $0x204] sm:$0xf]
  %v239 = vld [vmem:[%s2 + $0x208] sm:$0xf]
  %v240 = vld [vmem:[%s2 + $0x20c] sm:$0xf]
  %v241 = vld [vmem:[%s2 + $0x210] sm:$0xf]
  %v242 = vld [vmem:[%s2 + $0x214] sm:$0xf]
  %v243 = vld [vmem:[%s2 + $0x218] sm:$0xf]
  %v244 = vld [vmem:[%s2 + $0x21c] sm:$0xf]
  %v245 = vld [vmem:[%s2 + $0x220] sm:$0xf]
  %v246 = vld [vmem:[%s2 + $0x224] sm:$0xf]
  %v247 = vld [vmem:[%s2 + $0x228] sm:$0xf]
  %v248 = vld [vmem:[%s2 + $0x22c] sm:$0xf]
  %v249 = vld [vmem:[%s2 + $0x230] sm:$0xf]
  %v250 = vld [vmem:[%s2 + $0x234] sm:$0xf]
  %v251 = vld [vmem:[%s2 + $0x238] sm:$0xf]
  %v252 = vld [vmem:[%s2 + $0x23c] sm:$0xf]
  %v253 = vld [vmem:[%s2 + $0x240] sm:$0xf]
  %v254 = vld [vmem:[%s2 + $0x244] sm:$0xf]
  %v255 = vld [vmem:[%s2 + $0x248] sm:$0xf]
  %v256 = vld [vmem:[%s2 + $0x24c] sm:$0xf]
  %v257 = vld [vmem:[%s2 + $0x250] sm:$0xf]
  %v258 = vld [vmem:[%s2 + $0x254] sm:$0xf]
  %v259 = vld [vmem:[%s2 + $0x258] sm:$0xf]
  %v260 = vld [vmem:[%s2 + $0x25c] sm:$0xf]
  %v261 = vld [vmem:[%s2 + $0x260] sm:$0xf]
  %v262 = vld [vmem:[%s2 + $0x264] sm:$0xf]
  %v263 = vld [vmem:[%s2 + $0x268] sm:$0xf]
  %v264 = vld [vmem:[%s2 + $0x26c] sm:$0xf]
  %v265 = vld [vmem:[%s2 + $0x270] sm:$0xf]
  %v266 = vld [vmem:[%s2 + $0x274] sm:$0xf]
  %v267 = vld [vmem:[%s2 + $0x278] sm:$0xf]
  %v268 = vld [vmem:[%s2 + $0x27c] sm:$0xf]
  %v269 = vld [vmem:[%s2 + $0x280] sm:$0xf]
  %v270 = vld [vmem:[%s2 + $0x284] sm:$0xf]
  %v271 = vld [vmem:[%s2 + $0x288] sm:$0xf]
  %v272 = vld [vmem:[%s2 + $0x28c] sm:$0xf]
  %v273 = vld [vmem:[%s2 + $0x290] sm:$0xf]
  %v274 = vld [vmem:[%s2 + $0x294] sm:$0xf]
  %v275 = vld [vmem:[%s2 + $0x298] sm:$0xf]
  %v276 = vld [vmem:[%s2 + $0x29c] sm:$0xf]
  %v277 = vld [vmem:[%s2 + $0x2a0] sm:$0xf]
  %v278 = vld [vmem:[%s2 + $0x2a4] sm:$0xf]
  %v279 = vld [vmem:[%s2 + $0x2a8] sm:$0xf]
  %v280 = vld [vmem:[%s2 + $0x2ac] sm:$0xf]
  %v281 = vld [vmem:[%s2 + $0x2b0] sm:$0xf]
  %v282 = vld [vmem:[%s2 + $0x2b4] sm:$0xf]
  %v283 = vld [vmem:[%s2 + $0x2b8] sm:$0xf]
  %v284 = vld [vmem:[%s2 + $0x2bc] sm:$0xf]
  %v285 = vld [vmem:[%s2 + $0x2c0] sm:$0xf]
  %v286 = vld [vmem:[%s2 + $0x2c4] sm:$0xf]
  %v287 = vld [vmem:[%s2 + $0x2c8] sm:$0xf]
  %v288 = vld [vmem:[%s2 + $0x2cc] sm:$0xf]
  %v289 = vld [vmem:[%s2 + $0x2d0] sm:$0xf]
  %v290 = vld [vmem:[%s2 + $0x2d4] sm:$0xf]
  %v291 = vld [vmem:[%s2 + $0x2d8] sm:$0xf]
  %v292 = vld [vmem:[%s2 + $0x2dc] sm:$0xf]
  %v293 = vld [vmem:[%s2 + $0x2e0] sm:$0xf]
  %v294 = vld [vmem:[%s2 + $0x2e4] sm:$0xf]
  %v295 = vld [vmem:[%s2 + $0x2e8] sm:$0xf]
  %v296 = vld [vmem:[%s2 + $0x2ec] sm:$0xf]
  %v297 = vld [vmem:[%s2 + $0x2f0] sm:$0xf]
  %v298 = vld [vmem:[%s2 + $0x2f4] sm:$0xf]
  %v299 = vld [vmem:[%s2 + $0x2f8] sm:$0xf]
  %v300 = vld [vmem:[%s2 + $0x2fc] sm:$0xf]
  %v301 = vld [vmem:[%s2 + $0x300] sm:$0xf]
  %v302 = vld [vmem:[%s2 + $0x304] sm:$0xf]
  %v303 = vld [vmem:[%s2 + $0x308] sm:$0xf]
  %v304 = vld [vmem:[%s2 + $0x30c] sm:$0xf]
  %v305 = vld [vmem:[%s2 + $0x310] sm:$0xf]
  %v306 = vld [vmem:[%s2 + $0x314] sm:$0xf]
  %v307 = vld [vmem:[%s2 + $0x318] sm:$0xf]
  %v308 = vld [vmem:[%s2 + $0x31c] sm:$0xf]
  %v309 = vld [vmem:[%s2 + $0x320] sm:$0xf]
  %v310 = vld [vmem:[%s2 + $0x324] sm:$0xf]
  %v311 = vld [vmem:[%s2 + $0x328] sm:$0xf]
  %v312 = vld [vmem:[%s2 + $0x32c] sm:$0xf]
  %v313 = vld [vmem:[%s2 + $0x330] sm:$0xf]
  %v314 = vld [vmem:[%s2 + $0x334] sm:$0xf]
  %v315 = vld [vmem:[%s2 + $0x338] sm:$0xf]
  %v316 = vld [vmem:[%s2 + $0x33c] sm:$0xf]
  %v345 = vunpack.c.l.b16 %v81
  %v346 = vunpack.c.h.b16 %v81
  %v347 = vunpack.c.l.b16 %v82
  %v348 = vunpack.c.h.b16 %v82
  %v349 = vunpack.c.l.b16 %v83
  %v350 = vunpack.c.h.b16 %v83
  %v351 = vunpack.c.l.b16 %v84
  %v352 = vunpack.c.h.b16 %v84
  %v353 = vunpack.c.l.b16 %v85
  %v354 = vunpack.c.h.b16 %v85
  %v355 = vunpack.c.l.b16 %v86
  %v356 = vunpack.c.h.b16 %v86
  %v357 = vunpack.c.l.b16 %v87
  %v358 = vunpack.c.l.b16 %v88
  %v359 = vunpack.c.h.b16 %v88
  %v360 = vunpack.c.l.b16 %v89
  %v361 = vunpack.c.h.b16 %v89
  %v362 = vunpack.c.l.b16 %v90
  %v363 = vunpack.c.h.b16 %v90
  %v364 = vunpack.c.l.b16 %v91
  %v365 = vunpack.c.h.b16 %v91
  %v366 = vunpack.c.l.b16 %v92
  %v367 = vunpack.c.h.b16 %v92
  %v368 = vunpack.c.l.b16 %v93
  %v369 = vunpack.c.h.b16 %v93
  %v370 = vunpack.c.l.b16 %v94
  %v371 = vunpack.c.l.b16 %v95
  %v372 = vunpack.c.h.b16 %v95
  %v373 = vunpack.c.l.b16 %v96
  %v374 = vunpack.c.h.b16 %v96
  %v375 = vunpack.c.l.b16 %v97
  %v376 = vunpack.c.h.b16 %v97
  %v377 = vunpack.c.l.b16 %v98
  %v378 = vunpack.c.h.b16 %v98
  %v379 = vunpack.c.l.b16 %v99
  %v380 = vunpack.c.h.b16 %v99
  %v381 = vunpack.c.l.b16 %v100
  %v382 = vunpack.c.h.b16 %v100
  %v383 = vunpack.c.l.b16 %v101
  %v384 = vunpack.c.l.b16 %v102
  %v385 = vunpack.c.h.b16 %v102
  %v386 = vunpack.c.l.b16 %v103
  %v387 = vunpack.c.h.b16 %v103
  %v388 = vunpack.c.l.b16 %v104
  %v389 = vunpack.c.h.b16 %v104
  %v390 = vunpack.c.l.b16 %v105
  %v391 = vunpack.c.h.b16 %v105
  %v392 = vunpack.c.l.b16 %v106
  %v393 = vunpack.c.h.b16 %v106
  %v394 = vunpack.c.l.b16 %v107
  %v395 = vunpack.c.h.b16 %v107
  %v396 = vunpack.c.l.b16 %v108
  %v397 = vpack.c.b16 %v358, %v345
  %v398 = vpack.c.b16 %v359, %v346
  %v399 = vpack.c.b16 %v360, %v347
  %v400 = vpack.c.b16 %v361, %v348
  %v401 = vpack.c.b16 %v362, %v349
  %v402 = vpack.c.b16 %v363, %v350
  %v403 = vpack.c.b16 %v364, %v351
  %v404 = vpack.c.b16 %v365, %v352
  %v405 = vpack.c.b16 %v366, %v353
  %v406 = vpack.c.b16 %v367, %v354
  %v407 = vpack.c.b16 %v368, %v355
  %v408 = vpack.c.b16 %v369, %v356
  %v409 = vpack.c.b16 %v370, %v357
  %v410 = vpack.c.b16 %v384, %v371
  %v411 = vpack.c.b16 %v385, %v372
  %v412 = vpack.c.b16 %v386, %v373
  %v413 = vpack.c.b16 %v387, %v374
  %v414 = vpack.c.b16 %v388, %v375
  %v415 = vpack.c.b16 %v389, %v376
  %v416 = vpack.c.b16 %v390, %v377
  %v417 = vpack.c.b16 %v391, %v378
  %v418 = vpack.c.b16 %v392, %v379
  %v419 = vpack.c.b16 %v393, %v380
  %v420 = vpack.c.b16 %v394, %v381
  %v421 = vpack.c.b16 %v395, %v382
  %v422 = vpack.c.b16 %v396, %v383
  %v657 = vunpack.c.l.b16 %v109
  %v658 = vunpack.c.l.b16 %v110
  %v659 = vunpack.c.l.b16 %v111
  %v660 = vunpack.c.l.b16 %v112
  %v661 = vunpack.c.l.b16 %v113
  %v662 = vunpack.c.l.b16 %v114
  %v663 = vunpack.c.l.b16 %v115
  %v664 = vunpack.c.l.b16 %v116
  %v665 = vunpack.c.l.b16 %v117
  %v666 = vunpack.c.l.b16 %v118
  %v667 = vunpack.c.l.b16 %v119
  %v668 = vunpack.c.l.b16 %v120
  %v669 = vunpack.c.l.b16 %v121
  %v670 = vunpack.c.l.b16 %v122
  %v671 = vunpack.c.l.b16 %v123
  %v672 = vunpack.c.l.b16 %v124
  %v673 = vunpack.c.l.b16 %v125
  %v674 = vunpack.c.l.b16 %v126
  %v675 = vunpack.c.l.b16 %v127
  %v676 = vunpack.c.l.b16 %v128
  %v677 = vunpack.c.l.b16 %v129
  %v678 = vunpack.c.l.b16 %v130
  %v679 = vunpack.c.l.b16 %v131
  %v680 = vunpack.c.l.b16 %v132
  %v681 = vunpack.c.l.b16 %v133
  %v682 = vunpack.c.l.b16 %v134
  %v683 = vunpack.c.l.b16 %v135
  %v684 = vunpack.c.l.b16 %v136
  %v685 = vunpack.c.l.b16 %v137
  %v686 = vunpack.c.l.b16 %v138
  %v687 = vunpack.c.l.b16 %v139
  %v688 = vunpack.c.l.b16 %v140
  %v689 = vunpack.c.l.b16 %v141
  %v690 = vunpack.c.l.b16 %v142
  %v691 = vunpack.c.l.b16 %v143
  %v692 = vunpack.c.l.b16 %v144
  %v693 = vunpack.c.l.b16 %v145
  %v694 = vunpack.c.l.b16 %v146
  %v695 = vunpack.c.l.b16 %v147
  %v696 = vunpack.c.l.b16 %v148
  %v697 = vunpack.c.l.b16 %v149
  %v698 = vunpack.c.l.b16 %v150
  %v699 = vunpack.c.l.b16 %v151
  %v700 = vunpack.c.l.b16 %v152
  %v701 = vunpack.c.l.b16 %v153
  %v702 = vunpack.c.l.b16 %v154
  %v703 = vunpack.c.l.b16 %v155
  %v704 = vunpack.c.l.b16 %v156
  %v705 = vunpack.c.l.b16 %v157
  %v706 = vunpack.c.l.b16 %v158
  %v707 = vunpack.c.l.b16 %v159
  %v708 = vunpack.c.l.b16 %v160
  %v709 = vunpack.c.l.b16 %v161
  %v710 = vunpack.c.l.b16 %v162
  %v711 = vunpack.c.l.b16 %v163
  %v712 = vunpack.c.l.b16 %v164
  %v713 = vunpack.c.l.b16 %v165
  %v714 = vunpack.c.l.b16 %v166
  %v715 = vunpack.c.l.b16 %v167
  %v716 = vunpack.c.l.b16 %v168
  %v717 = vunpack.c.l.b16 %v169
  %v718 = vunpack.c.l.b16 %v170
  %v719 = vunpack.c.l.b16 %v171
  %v720 = vunpack.c.l.b16 %v172
  %v721 = vunpack.c.l.b16 %v173
  %v722 = vunpack.c.l.b16 %v174
  %v723 = vunpack.c.l.b16 %v175
  %v724 = vunpack.c.l.b16 %v176
  %v725 = vunpack.c.l.b16 %v177
  %v726 = vunpack.c.l.b16 %v178
  %v727 = vunpack.c.l.b16 %v179
  %v728 = vunpack.c.l.b16 %v180
  %v729 = vunpack.c.l.b16 %v181
  %v730 = vunpack.c.l.b16 %v182
  %v731 = vunpack.c.l.b16 %v183
  %v732 = vunpack.c.l.b16 %v184
  %v733 = vunpack.c.l.b16 %v185
  %v734 = vunpack.c.l.b16 %v186
  %v735 = vunpack.c.l.b16 %v187
  %v736 = vunpack.c.l.b16 %v188
  %v737 = vunpack.c.l.b16 %v189
  %v738 = vunpack.c.l.b16 %v190
  %v739 = vunpack.c.l.b16 %v191
  %v740 = vunpack.c.l.b16 %v192
  %v741 = vunpack.c.l.b16 %v193
  %v742 = vunpack.c.l.b16 %v194
  %v743 = vunpack.c.l.b16 %v195
  %v744 = vunpack.c.l.b16 %v196
  %v745 = vunpack.c.l.b16 %v197
  %v746 = vunpack.c.l.b16 %v198
  %v747 = vunpack.c.l.b16 %v199
  %v748 = vunpack.c.l.b16 %v200
  %v749 = vunpack.c.l.b16 %v201
  %v750 = vunpack.c.l.b16 %v202
  %v751 = vunpack.c.l.b16 %v203
  %v752 = vunpack.c.l.b16 %v204
  %v753 = vunpack.c.l.b16 %v205
  %v754 = vunpack.c.l.b16 %v206
  %v755 = vunpack.c.l.b16 %v207
  %v756 = vunpack.c.l.b16 %v208
  %v757 = vunpack.c.l.b16 %v209
  %v758 = vunpack.c.l.b16 %v210
  %v759 = vunpack.c.l.b16 %v211
  %v760 = vunpack.c.l.b16 %v212
  %v761 = vunpack.c.l.b16 %v213
  %v762 = vunpack.c.l.b16 %v214
  %v763 = vunpack.c.l.b16 %v215
  %v764 = vunpack.c.l.b16 %v216
  %v765 = vunpack.c.l.b16 %v217
  %v766 = vunpack.c.l.b16 %v218
  %v767 = vunpack.c.l.b16 %v219
  %v768 = vunpack.c.l.b16 %v220
  %v769 = vunpack.c.l.b16 %v221
  %v770 = vunpack.c.l.b16 %v222
  %v771 = vunpack.c.l.b16 %v223
  %v772 = vunpack.c.l.b16 %v224
  %v773 = vunpack.c.l.b16 %v225
  %v774 = vunpack.c.l.b16 %v226
  %v775 = vunpack.c.l.b16 %v227
  %v776 = vunpack.c.l.b16 %v228
  %v777 = vunpack.c.l.b16 %v229
  %v778 = vunpack.c.l.b16 %v230
  %v779 = vunpack.c.l.b16 %v231
  %v780 = vunpack.c.l.b16 %v232
  %v781 = vunpack.c.l.b16 %v233
  %v782 = vunpack.c.l.b16 %v234
  %v783 = vunpack.c.l.b16 %v235
  %v784 = vunpack.c.l.b16 %v236
  %v785 = vunpack.c.l.b16 %v237
  %v786 = vunpack.c.l.b16 %v238
  %v787 = vunpack.c.l.b16 %v239
  %v788 = vunpack.c.l.b16 %v240
  %v789 = vunpack.c.l.b16 %v241
  %v790 = vunpack.c.l.b16 %v242
  %v791 = vunpack.c.l.b16 %v243
  %v792 = vunpack.c.l.b16 %v244
  %v793 = vunpack.c.l.b16 %v245
  %v794 = vunpack.c.l.b16 %v246
  %v795 = vunpack.c.l.b16 %v247
  %v796 = vunpack.c.l.b16 %v248
  %v797 = vunpack.c.l.b16 %v249
  %v798 = vunpack.c.l.b16 %v250
  %v799 = vunpack.c.l.b16 %v251
  %v800 = vunpack.c.l.b16 %v252
  %v801 = vunpack.c.l.b16 %v253
  %v802 = vunpack.c.l.b16 %v254
  %v803 = vunpack.c.l.b16 %v255
  %v804 = vunpack.c.l.b16 %v256
  %v805 = vunpack.c.l.b16 %v257
  %v806 = vunpack.c.l.b16 %v258
  %v807 = vunpack.c.l.b16 %v259
  %v808 = vunpack.c.l.b16 %v260
  %v809 = vunpack.c.l.b16 %v261
  %v810 = vunpack.c.l.b16 %v262
  %v811 = vunpack.c.l.b16 %v263
  %v812 = vunpack.c.l.b16 %v264
  %v813 = vunpack.c.l.b16 %v265
  %v814 = vunpack.c.l.b16 %v266
  %v815 = vunpack.c.l.b16 %v267
  %v816 = vunpack.c.l.b16 %v268
  %v817 = vunpack.c.l.b16 %v269
  %v818 = vunpack.c.l.b16 %v270
  %v819 = vunpack.c.l.b16 %v271
  %v820 = vunpack.c.l.b16 %v272
  %v821 = vunpack.c.l.b16 %v273
  %v822 = vunpack.c.l.b16 %v274
  %v823 = vunpack.c.l.b16 %v275
  %v824 = vunpack.c.l.b16 %v276
  %v825 = vunpack.c.l.b16 %v277
  %v826 = vunpack.c.l.b16 %v278
  %v827 = vunpack.c.l.b16 %v279
  %v828 = vunpack.c.l.b16 %v280
  %v829 = vunpack.c.l.b16 %v281
  %v830 = vunpack.c.l.b16 %v282
  %v831 = vunpack.c.l.b16 %v283
  %v832 = vunpack.c.l.b16 %v284
  %v833 = vunpack.c.l.b16 %v285
  %v834 = vunpack.c.l.b16 %v286
  %v835 = vunpack.c.l.b16 %v287
  %v836 = vunpack.c.l.b16 %v288
  %v837 = vunpack.c.l.b16 %v289
  %v838 = vunpack.c.l.b16 %v290
  %v839 = vunpack.c.l.b16 %v291
  %v840 = vunpack.c.l.b16 %v292
  %v841 = vunpack.c.l.b16 %v293
  %v842 = vunpack.c.l.b16 %v294
  %v843 = vunpack.c.l.b16 %v295
  %v844 = vunpack.c.l.b16 %v296
  %v845 = vunpack.c.l.b16 %v297
  %v846 = vunpack.c.l.b16 %v298
  %v847 = vunpack.c.l.b16 %v299
  %v848 = vunpack.c.l.b16 %v300
  %v849 = vunpack.c.l.b16 %v301
  %v850 = vunpack.c.l.b16 %v302
  %v851 = vunpack.c.l.b16 %v303
  %v852 = vunpack.c.l.b16 %v304
  %v853 = vunpack.c.l.b16 %v305
  %v854 = vunpack.c.l.b16 %v306
  %v855 = vunpack.c.l.b16 %v307
  %v856 = vunpack.c.l.b16 %v308
  %v857 = vunpack.c.l.b16 %v309
  %v858 = vunpack.c.l.b16 %v310
  %v859 = vunpack.c.l.b16 %v311
  %v860 = vunpack.c.l.b16 %v312
  %v861 = vunpack.c.l.b16 %v313
  %v862 = vunpack.c.l.b16 %v314
  %v863 = vunpack.c.l.b16 %v315
  %v864 = vunpack.c.l.b16 %v316
  %v865 = vpack.c.b16 %v658, %v657
  %v866 = vpack.c.b16 %v660, %v659
  %v867 = vpack.c.b16 %v662, %v661
  %v868 = vpack.c.b16 %v664, %v663
  %v869 = vpack.c.b16 %v666, %v665
  %v870 = vpack.c.b16 %v668, %v667
  %v871 = vpack.c.b16 %v670, %v669
  %v872 = vpack.c.b16 %v672, %v671
  %v873 = vpack.c.b16 %v674, %v673
  %v874 = vpack.c.b16 %v676, %v675
  %v875 = vpack.c.b16 %v678, %v677
  %v876 = vpack.c.b16 %v680, %v679
  %v877 = vpack.c.b16 %v682, %v681
  %v878 = vpack.c.b16 %v684, %v683
  %v879 = vpack.c.b16 %v686, %v685
  %v880 = vpack.c.b16 %v688, %v687
  %v881 = vpack.c.b16 %v690, %v689
  %v882 = vpack.c.b16 %v692, %v691
  %v883 = vpack.c.b16 %v694, %v693
  %v884 = vpack.c.b16 %v696, %v695
  %v885 = vpack.c.b16 %v698, %v697
  %v886 = vpack.c.b16 %v700, %v699
  %v887 = vpack.c.b16 %v702, %v701
  %v888 = vpack.c.b16 %v704, %v703
  %v889 = vpack.c.b16 %v706, %v705
  %v890 = vpack.c.b16 %v708, %v707
  %v891 = vpack.c.b16 %v710, %v709
  %v892 = vpack.c.b16 %v712, %v711
  %v893 = vpack.c.b16 %v714, %v713
  %v894 = vpack.c.b16 %v716, %v715
  %v895 = vpack.c.b16 %v718, %v717
  %v896 = vpack.c.b16 %v720, %v719
  %v897 = vpack.c.b16 %v722, %v721
  %v898 = vpack.c.b16 %v724, %v723
  %v899 = vpack.c.b16 %v726, %v725
  %v900 = vpack.c.b16 %v728, %v727
  %v901 = vpack.c.b16 %v730, %v729
  %v902 = vpack.c.b16 %v732, %v731
  %v903 = vpack.c.b16 %v734, %v733
  %v904 = vpack.c.b16 %v736, %v735
  %v905 = vpack.c.b16 %v738, %v737
  %v906 = vpack.c.b16 %v740, %v739
  %v907 = vpack.c.b16 %v742, %v741
  %v908 = vpack.c.b16 %v744, %v743
  %v909 = vpack.c.b16 %v746, %v745
  %v910 = vpack.c.b16 %v748, %v747
  %v911 = vpack.c.b16 %v750, %v749
  %v912 = vpack.c.b16 %v752, %v751
  %v913 = vpack.c.b16 %v754, %v753
  %v914 = vpack.c.b16 %v756, %v755
  %v915 = vpack.c.b16 %v758, %v757
  %v916 = vpack.c.b16 %v760, %v759
  %v917 = vpack.c.b16 %v762, %v761
  %v918 = vpack.c.b16 %v764, %v763
  %v919 = vpack.c.b16 %v766, %v765
  %v920 = vpack.c.b16 %v768, %v767
  %v921 = vpack.c.b16 %v770, %v769
  %v922 = vpack.c.b16 %v772, %v771
  %v923 = vpack.c.b16 %v774, %v773
  %v924 = vpack.c.b16 %v776, %v775
  %v925 = vpack.c.b16 %v778, %v777
  %v926 = vpack.c.b16 %v780, %v779
  %v927 = vpack.c.b16 %v782, %v781
  %v928 = vpack.c.b16 %v784, %v783
  %v929 = vpack.c.b16 %v786, %v785
  %v930 = vpack.c.b16 %v788, %v787
  %v931 = vpack.c.b16 %v790, %v789
  %v932 = vpack.c.b16 %v792, %v791
  %v933 = vpack.c.b16 %v794, %v793
  %v934 = vpack.c.b16 %v796, %v795
  %v935 = vpack.c.b16 %v798, %v797
  %v936 = vpack.c.b16 %v800, %v799
  %v937 = vpack.c.b16 %v802, %v801
  %v938 = vpack.c.b16 %v804, %v803
  %v939 = vpack.c.b16 %v806, %v805
  %v940 = vpack.c.b16 %v808, %v807
  %v941 = vpack.c.b16 %v810, %v809
  %v942 = vpack.c.b16 %v812, %v811
  %v943 = vpack.c.b16 %v814, %v813
  %v944 = vpack.c.b16 %v816, %v815
  %v945 = vpack.c.b16 %v818, %v817
  %v946 = vpack.c.b16 %v820, %v819
  %v947 = vpack.c.b16 %v822, %v821
  %v948 = vpack.c.b16 %v824, %v823
  %v949 = vpack.c.b16 %v826, %v825
  %v950 = vpack.c.b16 %v828, %v827
  %v951 = vpack.c.b16 %v830, %v829
  %v952 = vpack.c.b16 %v832, %v831
  %v953 = vpack.c.b16 %v834, %v833
  %v954 = vpack.c.b16 %v836, %v835
  %v955 = vpack.c.b16 %v838, %v837
  %v956 = vpack.c.b16 %v840, %v839
  %v957 = vpack.c.b16 %v842, %v841
  %v958 = vpack.c.b16 %v844, %v843
  %v959 = vpack.c.b16 %v846, %v845
  %v960 = vpack.c.b16 %v848, %v847
  %v961 = vpack.c.b16 %v850, %v849
  %v962 = vpack.c.b16 %v852, %v851
  %v963 = vpack.c.b16 %v854, %v853
  %v964 = vpack.c.b16 %v856, %v855
  %v965 = vpack.c.b16 %v858, %v857
  %v966 = vpack.c.b16 %v860, %v859
  %v967 = vpack.c.b16 %v862, %v861
  %v968 = vpack.c.b16 %v864, %v863
  %1073 = vmatprep.subr.bf16.mxu0 0
  %1074 = vmatpush1.bf16.msra.mxu0 %v865
  %1075 = vmatprep.subr.bf16.mxu0 0
  %1076 = vmatpush1.bf16.msra.mxu0 %v866
  %1077 = vmatprep.subr.bf16.mxu0 0
  %1078 = vmatpush1.bf16.msra.mxu0 %v867
  %1079 = vmatprep.subr.bf16.mxu0 0
  %1080 = vmatpush1.bf16.msra.mxu0 %v868
  %1081 = vmatprep.subr.bf16.mxu0 0
  %1082 = vmatpush1.bf16.msra.mxu0 %v869
  %1083 = vmatprep.subr.bf16.mxu0 0
  %1084 = vmatpush1.bf16.msra.mxu0 %v870
  %1085 = vmatprep.subr.bf16.mxu0 0
  %1086 = vmatpush1.bf16.msra.mxu0 %v871
  %1087 = vmatprep.subr.bf16.mxu0 0
  %1088 = vmatpush1.bf16.msra.mxu0 %v872
  %1089 = vmatprep.subr.bf16.mxu0 0
  %1090 = vmatpush1.bf16.msra.mxu0 %v873
  %1091 = vmatprep.subr.bf16.mxu0 0
  %1092 = vmatpush1.bf16.msra.mxu0 %v874
  %1093 = vmatprep.subr.bf16.mxu0 0
  %1094 = vmatpush1.bf16.msra.mxu0 %v875
  %1095 = vmatprep.subr.bf16.mxu0 0
  %1096 = vmatpush1.bf16.msra.mxu0 %v876
  %1097 = vmatprep.subr.bf16.mxu0 0
  %1098 = vmatpush1.bf16.msra.mxu0 %v877
  %1099 = vmatprep.subr.bf16.mxu0 0
  %1100 = vmatpush1.bf16.msra.mxu0 %v878
  %1101 = vmatprep.subr.bf16.mxu0 0
  %1102 = vmatpush1.bf16.msra.mxu0 %v879
  %1103 = vmatprep.subr.bf16.mxu0 0
  %1104 = vmatpush1.bf16.msra.mxu0 %v880
  %1105 = vmatprep.mubr.bf16.mxu0 %v398
  %1106 = vmatmul.mubr.bf16.gmra.mrb[0].mxu0 %v397
  %v1107 = vpop.f32.mrb[0].mxu0
  %v1108 = vadd.f32 0.0, %v1107
  %v1109 = vpop.f32.mrb[0].mxu0
  %v1110 = vpop.f32.mrb[0].mxu0
  %v1111 = vadd.f32 0.0, %v1110
  %v1112 = vpop.f32.mrb[0].mxu0
  %1113 = vmatprep.mubr.bf16.mxu0 %v411
  %1114 = vmatmul.mubr.bf16.gmra.mrb[0].mxu0 %v410
  %v1115 = vpop.f32.mrb[0].mxu0
  %v1116 = vadd.f32 0.0, %v1115
  %v1117 = vpop.f32.mrb[0].mxu0
  %v1118 = vpop.f32.mrb[0].mxu0
  %v1119 = vadd.f32 0.0, %v1118
  %v1120 = vpop.f32.mrb[0].mxu0
  %1121 = vdwg.mxu0
  %1122 = vmatprep.subr.bf16.mxu0 0
  %1123 = vmatpush1.bf16.msra.mxu0 %v881
  %1124 = vmatprep.subr.bf16.mxu0 0
  %1125 = vmatpush1.bf16.msra.mxu0 %v882
  %1126 = vmatprep.subr.bf16.mxu0 0
  %1127 = vmatpush1.bf16.msra.mxu0 %v883
  %1128 = vmatprep.subr.bf16.mxu0 0
  %1129 = vmatpush1.bf16.msra.mxu0 %v884
  %1130 = vmatprep.subr.bf16.mxu0 0
  %1131 = vmatpush1.bf16.msra.mxu0 %v885
  %1132 = vmatprep.subr.bf16.mxu0 0
  %1133 = vmatpush1.bf16.msra.mxu0 %v886
  %1134 = vmatprep.subr.bf16.mxu0 0
  %1135 = vmatpush1.bf16.msra.mxu0 %v887
  %1136 = vmatprep.subr.bf16.mxu0 0
  %1137 = vmatpush1.bf16.msra.mxu0 %v888
  %1138 = vmatprep.subr.bf16.mxu0 0
  %1139 = vmatpush1.bf16.msra.mxu0 %v889
  %1140 = vmatprep.subr.bf16.mxu0 0
  %1141 = vmatpush1.bf16.msra.mxu0 %v890
  %1142 = vmatprep.subr.bf16.mxu0 0
  %1143 = vmatpush1.bf16.msra.mxu0 %v891
  %1144 = vmatprep.subr.bf16.mxu0 0
  %1145 = vmatpush1.bf16.msra.mxu0 %v892
  %1146 = vmatprep.subr.bf16.mxu0 0
  %1147 = vmatpush1.bf16.msra.mxu0 %v893
  %1148 = vmatprep.subr.bf16.mxu0 0
  %1149 = vmatpush1.bf16.msra.mxu0 %v894
  %1150 = vmatprep.subr.bf16.mxu0 0
  %1151 = vmatpush1.bf16.msra.mxu0 %v895
  %1152 = vmatprep.subr.bf16.mxu0 0
  %1153 = vmatpush1.bf16.msra.mxu0 %v896
  %1154 = vmatprep.mubr.bf16.mxu0 %v400
  %1155 = vmatmul.mubr.bf16.gmra.mrb[0].mxu0 %v399
  %v1156 = vpop.f32.mrb[0].mxu0
  %v1157 = vadd.f32 %v1108, %v1156
  %v1158 = vpop.f32.mrb[0].mxu0
  %v1159 = vpop.f32.mrb[0].mxu0
  %v1160 = vadd.f32 %v1111, %v1159
  %v1161 = vpop.f32.mrb[0].mxu0
  %1162 = vmatprep.mubr.bf16.mxu0 %v413
  %1163 = vmatmul.mubr.bf16.gmra.mrb[0].mxu0 %v412
  %v1164 = vpop.f32.mrb[0].mxu0
  %v1165 = vadd.f32 %v1116, %v1164
  %v1166 = vpop.f32.mrb[0].mxu0
  %v1167 = vpop.f32.mrb[0].mxu0
  %v1168 = vadd.f32 %v1119, %v1167
  %v1169 = vpop.f32.mrb[0].mxu0
  %1170 = vdwg.mxu0
  %1171 = vmatprep.subr.bf16.mxu0 0
  %1172 = vmatpush1.bf16.msra.mxu0 %v897
  %1173 = vmatprep.subr.bf16.mxu0 0
  %1174 = vmatpush1.bf16.msra.mxu0 %v898
  %1175 = vmatprep.subr.bf16.mxu0 0
  %1176 = vmatpush1.bf16.msra.mxu0 %v899
  %1177 = vmatprep.subr.bf16.mxu0 0
  %1178 = vmatpush1.bf16.msra.mxu0 %v900
  %1179 = vmatprep.subr.bf16.mxu0 0
  %1180 = vmatpush1.bf16.msra.mxu0 %v901
  %1181 = vmatprep.subr.bf16.mxu0 0
  %1182 = vmatpush1.bf16.msra.mxu0 %v902
  %1183 = vmatprep.subr.bf16.mxu0 0
  %1184 = vmatpush1.bf16.msra.mxu0 %v903
  %1185 = vmatprep.subr.bf16.mxu0 0
  %1186 = vmatpush1.bf16.msra.mxu0 %v904
  %1187 = vmatprep.subr.bf16.mxu0 0
  %1188 = vmatpush1.bf16.msra.mxu0 %v905
  %1189 = vmatprep.subr.bf16.mxu0 0
  %1190 = vmatpush1.bf16.msra.mxu0 %v906
  %1191 = vmatprep.subr.bf16.mxu0 0
  %1192 = vmatpush1.bf16.msra.mxu0 %v907
  %1193 = vmatprep.subr.bf16.mxu0 0
  %1194 = vmatpush1.bf16.msra.mxu0 %v908
  %1195 = vmatprep.subr.bf16.mxu0 0
  %1196 = vmatpush1.bf16.msra.mxu0 %v909
  %1197 = vmatprep.subr.bf16.mxu0 0
  %1198 = vmatpush1.bf16.msra.mxu0 %v910
  %1199 = vmatprep.subr.bf16.mxu0 0
  %1200 = vmatpush1.bf16.msra.mxu0 %v911
  %1201 = vmatprep.subr.bf16.mxu0 0
  %1202 = vmatpush1.bf16.msra.mxu0 %v912
  %1203 = vmatprep.mubr.bf16.mxu0 %v402
  %1204 = vmatmul.mubr.bf16.gmra.mrb[0].mxu0 %v401
  %v1205 = vpop.f32.mrb[0].mxu0
  %v1206 = vadd.f32 %v1157, %v1205
  %v1207 = vpop.f32.mrb[0].mxu0
  %v1208 = vpop.f32.mrb[0].mxu0
  %v1209 = vadd.f32 %v1160, %v1208
  %v1210 = vpop.f32.mrb[0].mxu0
  %1211 = vmatprep.mubr.bf16.mxu0 %v415
  %1212 = vmatmul.mubr.bf16.gmra.mrb[0].mxu0 %v414
  %v1213 = vpop.f32.mrb[0].mxu0
  %v1214 = vadd.f32 %v1165, %v1213
  %v1215 = vpop.f32.mrb[0].mxu0
  %v1216 = vpop.f32.mrb[0].mxu0
  %v1217 = vadd.f32 %v1168, %v1216
  %v1218 = vpop.f32.mrb[0].mxu0
  %1219 = vdwg.mxu0
  %1220 = vmatprep.subr.bf16.mxu0 0
  %1221 = vmatpush1.bf16.msra.mxu0 %v913
  %1222 = vmatprep.subr.bf16.mxu0 0
  %1223 = vmatpush1.bf16.msra.mxu0 %v914
  %1224 = vmatprep.subr.bf16.mxu0 0
  %1225 = vmatpush1.bf16.msra.mxu0 %v915
  %1226 = vmatprep.subr.bf16.mxu0 0
  %1227 = vmatpush1.bf16.msra.mxu0 %v916
  %1228 = vmatprep.subr.bf16.mxu0 0
  %1229 = vmatpush1.bf16.msra.mxu0 %v917
  %1230 = vmatprep.subr.bf16.mxu0 0
  %1231 = vmatpush1.bf16.msra.mxu0 %v918
  %1232 = vmatprep.subr.bf16.mxu0 0
  %1233 = vmatpush1.bf16.msra.mxu0 %v919
  %1234 = vmatprep.subr.bf16.mxu0 0
  %1235 = vmatpush1.bf16.msra.mxu0 %v920
  %1236 = vmatprep.subr.bf16.mxu0 0
  %1237 = vmatpush1.bf16.msra.mxu0 %v921
  %1238 = vmatprep.subr.bf16.mxu0 0
  %1239 = vmatpush1.bf16.msra.mxu0 %v922
  %1240 = vmatprep.subr.bf16.mxu0 0
  %1241 = vmatpush1.bf16.msra.mxu0 %v923
  %1242 = vmatprep.subr.bf16.mxu0 0
  %1243 = vmatpush1.bf16.msra.mxu0 %v924
  %1244 = vmatprep.subr.bf16.mxu0 0
  %1245 = vmatpush1.bf16.msra.mxu0 %v925
  %1246 = vmatprep.subr.bf16.mxu0 0
  %1247 = vmatpush1.bf16.msra.mxu0 %v926
  %1248 = vmatprep.subr.bf16.mxu0 0
  %1249 = vmatpush1.bf16.msra.mxu0 %v927
  %1250 = vmatprep.subr.bf16.mxu0 0
  %1251 = vmatpush1.bf16.msra.mxu0 %v928
  %1252 = vmatprep.mubr.bf16.mxu0 %v404
  %1253 = vmatmul.mubr.bf16.gmra.mrb[0].mxu0 %v403
  %v1254 = vpop.f32.mrb[0].mxu0
  %v1255 = vadd.f32 %v1206, %v1254
  %v1256 = vpop.f32.mrb[0].mxu0
  %v1257 = vpop.f32.mrb[0].mxu0
  %v1258 = vadd.f32 %v1209, %v1257
  %v1259 = vpop.f32.mrb[0].mxu0
  %1260 = vmatprep.mubr.bf16.mxu0 %v417
  %1261 = vmatmul.mubr.bf16.gmra.mrb[0].mxu0 %v416
  %v1262 = vpop.f32.mrb[0].mxu0
  %v1263 = vadd.f32 %v1214, %v1262
  %v1264 = vpop.f32.mrb[0].mxu0
  %v1265 = vpop.f32.mrb[0].mxu0
  %v1266 = vadd.f32 %v1217, %v1265
  %v1267 = vpop.f32.mrb[0].mxu0
  %1268 = vdwg.mxu0
  %1269 = vmatprep.subr.bf16.mxu0 0
  %1270 = vmatpush1.bf16.msra.mxu0 %v929
  %1271 = vmatprep.subr.bf16.mxu0 0
  %1272 = vmatpush1.bf16.msra.mxu0 %v930
  %1273 = vmatprep.subr.bf16.mxu0 0
  %1274 = vmatpush1.bf16.msra.mxu0 %v931
  %1275 = vmatprep.subr.bf16.mxu0 0
  %1276 = vmatpush1.bf16.msra.mxu0 %v932
  %1277 = vmatprep.subr.bf16.mxu0 0
  %1278 = vmatpush1.bf16.msra.mxu0 %v933
  %1279 = vmatprep.subr.bf16.mxu0 0
  %1280 = vmatpush1.bf16.msra.mxu0 %v934
  %1281 = vmatprep.subr.bf16.mxu0 0
  %1282 = vmatpush1.bf16.msra.mxu0 %v935
  %1283 = vmatprep.subr.bf16.mxu0 0
  %1284 = vmatpush1.bf16.msra.mxu0 %v936
  %1285 = vmatprep.subr.bf16.mxu0 0
  %1286 = vmatpush1.bf16.msra.mxu0 %v937
  %1287 = vmatprep.subr.bf16.mxu0 0
  %1288 = vmatpush1.bf16.msra.mxu0 %v938
  %1289 = vmatprep.subr.bf16.mxu0 0
  %1290 = vmatpush1.bf16.msra.mxu0 %v939
  %1291 = vmatprep.subr.bf16.mxu0 0
  %1292 = vmatpush1.bf16.msra.mxu0 %v940
  %1293 = vmatprep.subr.bf16.mxu0 0
  %1294 = vmatpush1.bf16.msra.mxu0 %v941
  %1295 = vmatprep.subr.bf16.mxu0 0
  %1296 = vmatpush1.bf16.msra.mxu0 %v942
  %1297 = vmatprep.subr.bf16.mxu0 0
  %1298 = vmatpush1.bf16.msra.mxu0 %v943
  %1299 = vmatprep.subr.bf16.mxu0 0
  %1300 = vmatpush1.bf16.msra.mxu0 %v944
  %1301 = vmatprep.mubr.bf16.mxu0 %v406
  %1302 = vmatmul.mubr.bf16.gmra.mrb[0].mxu0 %v405
  %v1303 = vpop.f32.mrb[0].mxu0
  %v1304 = vadd.f32 %v1255, %v1303
  %v1305 = vpop.f32.mrb[0].mxu0
  %v1306 = vpop.f32.mrb[0].mxu0
  %v1307 = vadd.f32 %v1258, %v1306
  %v1308 = vpop.f32.mrb[0].mxu0
  %1309 = vmatprep.mubr.bf16.mxu0 %v419
  %1310 = vmatmul.mubr.bf16.gmra.mrb[0].mxu0 %v418
  %v1311 = vpop.f32.mrb[0].mxu0
  %v1312 = vadd.f32 %v1263, %v1311
  %v1313 = vpop.f32.mrb[0].mxu0
  %v1314 = vpop.f32.mrb[0].mxu0
  %v1315 = vadd.f32 %v1266, %v1314
  %v1316 = vpop.f32.mrb[0].mxu0
  %1317 = vdwg.mxu0
  %1318 = vmatprep.subr.bf16.mxu0 0
  %1319 = vmatpush1.bf16.msra.mxu0 %v945
  %1320 = vmatprep.subr.bf16.mxu0 0
  %1321 = vmatpush1.bf16.msra.mxu0 %v946
  %1322 = vmatprep.subr.bf16.mxu0 0
  %1323 = vmatpush1.bf16.msra.mxu0 %v947
  %1324 = vmatprep.subr.bf16.mxu0 0
  %1325 = vmatpush1.bf16.msra.mxu0 %v948
  %1326 = vmatprep.subr.bf16.mxu0 0
  %1327 = vmatpush1.bf16.msra.mxu0 %v949
  %1328 = vmatprep.subr.bf16.mxu0 0
  %1329 = vmatpush1.bf16.msra.mxu0 %v950
  %1330 = vmatprep.subr.bf16.mxu0 0
  %1331 = vmatpush1.bf16.msra.mxu0 %v951
  %1332 = vmatprep.subr.bf16.mxu0 0
  %1333 = vmatpush1.bf16.msra.mxu0 %v952
  %1334 = vmatprep.subr.bf16.mxu0 0
  %1335 = vmatpush1.bf16.msra.mxu0 %v953
  %1336 = vmatprep.subr.bf16.mxu0 0
  %1337 = vmatpush1.bf16.msra.mxu0 %v954
  %1338 = vmatprep.subr.bf16.mxu0 0
  %1339 = vmatpush1.bf16.msra.mxu0 %v955
  %1340 = vmatprep.subr.bf16.mxu0 0
  %1341 = vmatpush1.bf16.msra.mxu0 %v956
  %1342 = vmatprep.subr.bf16.mxu0 0
  %1343 = vmatpush1.bf16.msra.mxu0 %v957
  %1344 = vmatprep.subr.bf16.mxu0 0
  %1345 = vmatpush1.bf16.msra.mxu0 %v958
  %1346 = vmatprep.subr.bf16.mxu0 0
  %1347 = vmatpush1.bf16.msra.mxu0 %v959
  %1348 = vmatprep.subr.bf16.mxu0 0
  %1349 = vmatpush1.bf16.msra.mxu0 %v960
  %1350 = vmatprep.mubr.bf16.mxu0 %v408
  %1351 = vmatmul.mubr.bf16.gmra.mrb[0].mxu0 %v407
  %v1352 = vpop.f32.mrb[0].mxu0
  %v1353 = vadd.f32 %v1304, %v1352
  %v1354 = vpop.f32.mrb[0].mxu0
  %v1355 = vpop.f32.mrb[0].mxu0
  %v1356 = vadd.f32 %v1307, %v1355
  %v1357 = vpop.f32.mrb[0].mxu0
  %1358 = vmatprep.mubr.bf16.mxu0 %v421
  %1359 = vmatmul.mubr.bf16.gmra.mrb[0].mxu0 %v420
  %v1360 = vpop.f32.mrb[0].mxu0
  %v1361 = vadd.f32 %v1312, %v1360
  %v1362 = vpop.f32.mrb[0].mxu0
  %v1363 = vpop.f32.mrb[0].mxu0
  %v1364 = vadd.f32 %v1315, %v1363
  %v1365 = vpop.f32.mrb[0].mxu0
  %1366 = vdwg.mxu0
  %1367 = vmatprep.subr.bf16.mxu0 0
  %1368 = vmatpush1.bf16.msra.mxu0 %v961
  %1369 = vmatprep.subr.bf16.mxu0 0
  %1370 = vmatpush1.bf16.msra.mxu0 %v962
  %1371 = vmatprep.subr.bf16.mxu0 0
  %1372 = vmatpush1.bf16.msra.mxu0 %v963
  %1373 = vmatprep.subr.bf16.mxu0 0
  %1374 = vmatpush1.bf16.msra.mxu0 %v964
  %1375 = vmatprep.subr.bf16.mxu0 0
  %1376 = vmatpush1.bf16.msra.mxu0 %v965
  %1377 = vmatprep.subr.bf16.mxu0 0
  %1378 = vmatpush1.bf16.msra.mxu0 %v966
  %1379 = vmatprep.subr.bf16.mxu0 0
  %1380 = vmatpush1.bf16.msra.mxu0 %v967
  %1381 = vmatprep.subr.bf16.mxu0 0
  %1382 = vmatpush1.bf16.msra.mxu0 %v968
  %1383 = vmatprep.subr.bf16.mxu0 0
  %1384 = vmatpush1.bf16.msra.mxu0 0
  %1385 = vmatprep.subr.bf16.mxu0 0
  %1386 = vmatpush1.bf16.msra.mxu0 0
  %1387 = vmatprep.subr.bf16.mxu0 0
  %1388 = vmatpush1.bf16.msra.mxu0 0
  %1389 = vmatprep.subr.bf16.mxu0 0
  %1390 = vmatpush1.bf16.msra.mxu0 0
  %1391 = vmatprep.subr.bf16.mxu0 0
  %1392 = vmatpush1.bf16.msra.mxu0 0
  %1393 = vmatprep.subr.bf16.mxu0 0
  %1394 = vmatpush1.bf16.msra.mxu0 0
  %1395 = vmatprep.subr.bf16.mxu0 0
  %1396 = vmatpush1.bf16.msra.mxu0 0
  %1397 = vmatprep.subr.bf16.mxu0 0
  %1398 = vmatpush1.bf16.msra.mxu0 0
  %1399 = vmatprep.mubr.bf16.mxu0 0
  %1400 = vmatmul.mubr.bf16.gmra.mrb[0].mxu0 %v409
  %v1401 = vpop.f32.mrb[0].mxu0
  %v1402 = vadd.f32 %v1353, %v1401
  %v1403 = vpop.f32.mrb[0].mxu0
  %v1404 = vpop.f32.mrb[0].mxu0
  %v1405 = vadd.f32 %v1356, %v1404
  %v1406 = vpop.f32.mrb[0].mxu0
  %1407 = vmatprep.mubr.bf16.mxu0 0
  %1408 = vmatmul.mubr.bf16.gmra.mrb[0].mxu0 %v422
  %v1409 = vpop.f32.mrb[0].mxu0
  %v1410 = vadd.f32 %v1361, %v1409
  %v1411 = vpop.f32.mrb[0].mxu0
  %v1412 = vpop.f32.mrb[0].mxu0
  %v1413 = vadd.f32 %v1364, %v1412
  %v1414 = vpop.f32.mrb[0].mxu0
  %1415 = vdwg.mxu0
  %v1416 = vld [vmem:[%s69] sm:$0xff]
  %v1417 = vld [vmem:[%s69 + $0x8] sm:$0xff]
  %v1418 = vld [vmem:[%s69 + $0x10] sm:$0xff]
  %v1419 = vld [vmem:[%s69 + $0x18] sm:$0xff]
  %vm1420 = vcmp.eq.f32.partialorder %v1416, 0.0
  %vm1421 = vcmp.eq.f32.partialorder %v1417, 0.0
  %vm1422 = vcmp.eq.f32.partialorder %v1418, 0.0
  %vm1423 = vcmp.eq.f32.partialorder %v1419, 0.0
  %v1424 = vsel %vm1420, 1.0, %v1416
  %v1425 = vsel %vm1421, 1.0, %v1417
  %v1426 = vsel %vm1422, 1.0, %v1418
  %v1427 = vsel %vm1423, 1.0, %v1419
  %v1428 = vrcp.pop %v1424
  %v1429 = vrcp.pop %v1425
  %v1430 = vrcp.pop %v1426
  %v1431 = vrcp.pop %v1427
  %1433 = vset.pattern.permute.xlu0 0
  %1434 = vperm.xlu0 %1433, %v1428
  %v1435 = vpop.permute.xlu0 %1434
  %1438 = vset.pattern.permute.xlu0 0
  %1439 = vperm.xlu0 %1438, %v1429
  %v1440 = vpop.permute.xlu0 %1439
  %1443 = vset.pattern.permute.xlu0 0
  %1444 = vperm.xlu0 %1443, %v1430
  %v1445 = vpop.permute.xlu0 %1444
  %1448 = vset.pattern.permute.xlu0 0
  %1449 = vperm.xlu0 %1448, %v1431
  %v1450 = vpop.permute.xlu0 %1449
  %v1452 = vmul.f32 %v1402, %v1435
  %v1453 = vmul.f32 %v1405, %v1440
  %v1454 = vmul.f32 %v1410, %v1445
  %v1455 = vmul.f32 %v1413, %v1450
  %v1456 = vld [vmem:[%s3] sm:$0x1]
  %v1458 = vlaneseq
  %v1459 = vshrl.u32 %v1458, 7
  %v1460 = vsub.s32 0, %v1459
  %v1461 = vrot.slane %v1456, %v1460
  %v1463 = vadd.f32 %v1452, %v1461
  %v1464 = vadd.f32 %v1453, %v1461
  %v1465 = vadd.f32 %v1454, %v1461
  %v1466 = vadd.f32 %v1455, %v1461
  %v1467 = vsel %vm1420, 1, 0
  %v1468 = vsel %vm1421, 1, 0
  %v1469 = vsel %vm1422, 1, 0
  %v1470 = vsel %vm1423, 1, 0
  %1471 = vset.pattern.permute.xlu0 0
  %1472 = vperm.xlu0 %1471, %v1467
  %v1473 = vpop.permute.xlu0 %1472
  %1474 = vset.pattern.permute.xlu0 0
  %1475 = vperm.xlu0 %1474, %v1468
  %v1476 = vpop.permute.xlu0 %1475
  %1477 = vset.pattern.permute.xlu0 0
  %1478 = vperm.xlu0 %1477, %v1469
  %v1479 = vpop.permute.xlu0 %1478
  %1480 = vset.pattern.permute.xlu0 0
  %1481 = vperm.xlu0 %1480, %v1470
  %v1482 = vpop.permute.xlu0 %1481
  %vm1483 = vcmp.eq.s32.totalorder %v1473, 1
  %vm1484 = vcmp.eq.s32.totalorder %v1476, 1
  %vm1485 = vcmp.eq.s32.totalorder %v1479, 1
  %vm1486 = vcmp.eq.s32.totalorder %v1482, 1
  %v1487 = vsel %vm1483, 0.0, %v1463
  %v1488 = vsel %vm1484, 0.0, %v1464
  %v1489 = vsel %vm1485, 0.0, %v1465
  %v1490 = vsel %vm1486, 0.0, %v1466
  %v1491 = vpack.c.bf16 %v1488, %v1487
  %v1492 = vpack.c.bf16 %v1490, %v1489
  %v1495 = vunpack.c.l.b16 %v1491
  %v1496 = vunpack.c.h.b16 %v1491
  %v1497 = vunpack.c.l.b16 %v1492
  %v1498 = vunpack.c.h.b16 %v1492
  %v1499 = vpack.c.b16 %v1495, %v1495
  %v1500 = vpack.c.b16 %v1496, %v1496
  %v1501 = vpack.c.b16 %v1497, %v1497
  %v1502 = vpack.c.b16 %v1498, %v1498
  %1507 = vst [vmem:[%s77] sm:$0xf] %v1499
  %1508 = vst [vmem:[%s77 + $0x4] sm:$0xf] %v1500
  %1509 = vst [vmem:[%s77 + $0x8] sm:$0xf] %v1501
  %1510 = vst [vmem:[%s77 + $0xc] sm:$0xf] %v1502
  %p1511 = scmp.eq.s32.totalorder 0, 0
  // Predicated region
  $region18: #{partial_conv_net.11} parent=0 // pred_check
    %p1512 = pneg %p1511
  $region19: #{partial_conv_net.11} parent=0 // pred_check_branch
    %1514 = sbr.rel (%p1512) target = $region21
  $region20: #{partial_conv_net.11} parent=0 // pred_region
    %1515 = vst [vmem:[%s5] sm:$0xff] 0.0
  $region21: #{partial_conv_net.11} parent=0 // pred_fallthru
    _
  %v1516 = vadd.f32 %v1487, %v1488
  %v1517 = vadd.f32 %v1516, %v1489
  %v1518 = vadd.f32 %v1517, %v1490
  %v1519 = vrot.slane %v1518, 4
  %v1520 = vadd.f32 %v1518, %v1519
  %v1521 = vrot.slane %v1520, 2
  %v1522 = vadd.f32 %v1520, %v1521
  %v1523 = vrot.slane %v1522, 1
  %v1524 = vadd.f32 %v1522, %v1523
  %v1525 = vmul.f32 %v1487, %v1487
  %v1526 = vmul.f32 %v1488, %v1488
  %v1527 = vmul.f32 %v1489, %v1489
  %v1528 = vmul.f32 %v1490, %v1490
  %v1529 = vadd.f32 %v1525, %v1526
  %v1530 = vadd.f32 %v1529, %v1527
  %v1531 = vadd.f32 %v1530, %v1528
  %v1532 = vrot.slane %v1531, 4
  %v1533 = vadd.f32 %v1531, %v1532
  %v1534 = vrot.slane %v1533, 2
  %v1535 = vadd.f32 %v1533, %v1534
  %v1536 = vrot.slane %v1535, 1
  %v1537 = vadd.f32 %v1535, %v1536
  %v1538 = vld [vmem:[%s5] sm:$0xff]
  %vm1539 = vcmask 1040384
  %v1540 = vsel %vm1539, %v1524, %v1537
  %vm1541 = vcmask 1041408
  %v1542 = vsel %vm1541, %v1540, 0.0
  %v1543 = vadd.f32 %v1538, %v1542
  %1544 = vst [vmem:[%s5] sm:$0xff] %v1543
  %s1545 = sadd.s32 0, 0
  %s1546 = smul.u32 4, %s1545
  %p1547 = scmp.lt.s32.totalorder %s1546, 3
  %s1548 = scalar_select %p1547, %s1546, 3
  %s1549 = smul.addr %s1548, 4
  %s1550 = scalar_lea.vmem %s4, %s1549
  // Predicated region
  $region22: #{partial_conv_net.11} parent=0 // pred_check
    _
  $region23: #{partial_conv_net.11} parent=0 // pred_check_branch
    %1552 = sbr.rel (0) target = $region25
  $region24: #{partial_conv_net.11} parent=0 // pred_region
    %s1553 = sadd.s32 0, 0
    %s1554 = smul.u32 4, %s1553
  $region25: #{partial_conv_net.11} parent=0 // pred_fallthru
    _
  // Predicated region
  $region26: #{partial_conv_net.11} parent=0 // pred_check
    _
  $region27: #{partial_conv_net.11} parent=0 // pred_check_branch
    %1556 = sbr.rel (0) target = $region29
  $region28: #{partial_conv_net.11} parent=0 // pred_region
    _
  $region29: #{partial_conv_net.11} parent=0 // pred_fallthru
    _
  // Predicated region
  $region30: #{partial_conv_net.11} parent=0 // pred_check
    _
  $region31: #{partial_conv_net.11} parent=0 // pred_check_branch
    %1558 = sbr.rel (0) target = $region33
  $region32: #{partial_conv_net.11} parent=0 // pred_region
    %s1559 = sadd.s32 0, 0
    %s1560 = smul.u32 4, %s1559
    %p1561 = scmp.lt.s32.totalorder %s1560, 3
    %s1562 = scalar_select %p1561, %s1560, 3
    %s1563 = smul.addr %s1562, 4
    %s1564 = scalar_lea.vmem %s4, %s1563
  $region33: #{partial_conv_net.11} parent=0 // pred_fallthru
    _
  // Predicated region
  $region34: #{partial_conv_net.11} parent=0 // pred_check
    _
  $region35: #{partial_conv_net.11} parent=0 // pred_check_branch
    %1566 = sbr.rel (0) target = $region37
  $region36: #{partial_conv_net.11} parent=0 // pred_region
    _
  $region37: #{partial_conv_net.11} parent=0 // pred_fallthru
    _

// kernel: partial_conv_net.14
$region0: #{partial_conv_net.14}
  #allocation0 [shape = 'u32[]', space=smem, size = 0x4, offset = 0x4, fixed_abs, tag = 'smem constant byte address 0x4 - core index']
  #allocation1 [shape = 'u32[144,128]{1,0:T(1,128)}', space=vmem, size = 0x12000, scoped, tag = 'internal scratch']
  %s0 = inlined_call_operand.vmem [shape: bf16[8,256], index: 0, kind: input, shape index: {}, may-alias: {0,2}]
  %s1 = inlined_call_operand.vmem [shape: f32[8,256], index: 1, kind: input, shape index: {}]
  %s2 = inlined_call_operand.vmem [shape: bf16[8,256], index: 2, kind: output, shape index: {}, may-alias: {0,2}]
  %s3 = sld [smem:[#allocation0]]
  $region18: #{partial_conv_net.14} parent=0
    _
  %s5 = ssub.s32 1, %s3
  %s6 = scalar_select 0, %s5, %s3
  // Predicated region
  $region2: #{partial_conv_net.14} parent=0 // pred_check
    _
  $region3: #{partial_conv_net.14} parent=0 // pred_check_branch
    %8 = sbr.rel (0) target = $region5
  $region4: #{partial_conv_net.14} parent=0 // pred_region
    _
  $region5: #{partial_conv_net.14} parent=0 // pred_fallthru
    _
  // Predicated region
  $region6: #{partial_conv_net.14} parent=0 // pred_check
    _
  $region7: #{partial_conv_net.14} parent=0 // pred_check_branch
    %10 = sbr.rel (0) target = $region9
  $region8: #{partial_conv_net.14} parent=0 // pred_region
    _
  $region9: #{partial_conv_net.14} parent=0 // pred_fallthru
    _
  %v11 = vld [vmem:[%s0] sm:$0xff]
  %v12 = vunpack.c.l.bf16 %v11
  %v13 = vunpack.c.h.bf16 %v11
  %v14 = vld [vmem:[%s1] ss:$8 sm:$0x3]
  %v15 = vmul.f32 %v14, 0.125
  %s16 = scalar_lea.vmem %s1, 1
  %v17 = vld [vmem:[%s16] ss:$8 sm:$0x3]
  %v18 = vmul.f32 %v17, 0.125
  %v19 = vmul.f32 %v15, %v15
  %v20 = vsub.f32 %v18, %v19
  %v21 = vmax.f32 %v20, 0.0
  %v23 = vlaneseq
  %v24 = vshrl.u32 %v23, 7
  %v25 = vsub.s32 0, %v24
  %v26 = vrot.slane %v15, %v25
  %v27 = vlaneseq
  %v28 = vshrl.u32 %v27, 7
  %v29 = vsub.s32 1, %v28
  %v30 = vrot.slane %v15, %v29
  %v33 = vsub.f32 %v12, %v26
  %v34 = vsub.f32 %v13, %v30
  %v35 = vadd.f32 %v21, 1e-05
  %v36 = vrsqrt.pop %v35
  %v38 = vlaneseq
  %v39 = vshrl.u32 %v38, 7
  %v40 = vsub.s32 0, %v39
  %v41 = vrot.slane %v36, %v40
  %v42 = vlaneseq
  %v43 = vshrl.u32 %v42, 7
  %v44 = vsub.s32 1, %v43
  %v45 = vrot.slane %v36, %v44
  %v48 = vmul.f32 %v33, %v41
  %v49 = vmul.f32 %v34, %v45
  %v50 = vmax.f32 %v48, 0.0
  %v51 = vmax.f32 %v49, 0.0
  %v52 = vpack.c.bf16 %v50, %v50
  %v53 = vpack.c.bf16 %v51, %v51
  %v56 = vunpack.c.l.b16 %v52
  %v57 = vunpack.c.l.b16 %v53
  %v58 = vpack.c.b16 %v57, %v56
  %60 = vst [vmem:[%s2] sm:$0xff] %v58
  // Predicated region
  $region10: #{partial_conv_net.14} parent=0 // pred_check
    _
  $region11: #{partial_conv_net.14} parent=0 // pred_check_branch
    %62 = sbr.rel (0) target = $region13
  $region12: #{partial_conv_net.14} parent=0 // pred_region
    _
  $region13: #{partial_conv_net.14} parent=0 // pred_fallthru
    _
  // Predicated region
  $region14: #{partial_conv_net.14} parent=0 // pred_check
    _
  $region15: #{partial_conv_net.14} parent=0 // pred_check_branch
    %64 = sbr.rel (0) target = $region17
  $region16: #{partial_conv_net.14} parent=0 // pred_region
    _
  $region17: #{partial_conv_net.14} parent=0 // pred_fallthru
    _

// kernel: partial_conv_net.13
$region0: #{partial_conv_net.13}
  #allocation0 [shape = 'u32[]', space=smem, size = 0x4, offset = 0x4, fixed_abs, tag = 'smem constant byte address 0x4 - core index']
  #allocation1 [shape = 'u32[144,128]{1,0:T(1,128)}', space=vmem, size = 0x12000, scoped, tag = 'internal scratch']
  %s0 = inlined_call_operand.vmem [shape: bf16[8,1152], index: 0, kind: input, shape index: {}]
  %s1 = inlined_call_operand.vmem [shape: f32[8,1], index: 1, kind: input, shape index: {}]
  %s2 = inlined_call_operand.vmem [shape: bf16[1152,256], index: 2, kind: input, shape index: {}]
  %s3 = inlined_call_operand.vmem [shape: f32[1,256], index: 3, kind: input, shape index: {}]
  %s4 = inlined_call_operand.vmem [shape: bf16[8,256], index: 4, kind: output, shape index: {0}]
  %s5 = inlined_call_operand.vmem [shape: f32[8,256], index: 5, kind: output, shape index: {1}]
  %6 = xla_tuple %s4, %s5
  %s7 = sld [smem:[#allocation0]]
  $region38: #{partial_conv_net.13} parent=0
    _
  %s9 = ssub.s32 1, %s7
  %s10 = scalar_select 0, %s9, %s7
  // Predicated region
  $region2: #{partial_conv_net.13} parent=0 // pred_check
    _
  $region3: #{partial_conv_net.13} parent=0 // pred_check_branch
    %12 = sbr.rel (0) target = $region5
  $region4: #{partial_conv_net.13} parent=0 // pred_region
    %s13 = sadd.s32 0, 0
    %p14 = scmp.lt.s32.totalorder %s13, 0
    %s15 = scalar_select %p14, %s13, 0
    %s16 = smul.addr %s15, 9
    %s17 = smul.addr %s16, 4
    %s18 = scalar_lea.vmem %s0, %s17
    %s19 = sadd.s32 0, 0
  $region5: #{partial_conv_net.13} parent=0 // pred_fallthru
    _
  // Predicated region
  $region6: #{partial_conv_net.13} parent=0 // pred_check
    _
  $region7: #{partial_conv_net.13} parent=0 // pred_check_branch
    %21 = sbr.rel (0) target = $region9
  $region8: #{partial_conv_net.13} parent=0 // pred_region
    %s22 = sadd.s32 0, 0
    %p23 = scmp.lt.s32.totalorder %s22, 0
    %s24 = scalar_select %p23, %s22, 0
    %s25 = smul.addr %s24, 8
    %s26 = scalar_lea.vmem %s1, %s25
    %s27 = sadd.s32 0, 0
  $region9: #{partial_conv_net.13} parent=0 // pred_fallthru
    _
  // Predicated region
  $region10: #{partial_conv_net.13} parent=0 // pred_check
    _
  $region11: #{partial_conv_net.13} parent=0 // pred_check_branch
    %29 = sbr.rel (0) target = $region13
  $region12: #{partial_conv_net.13} parent=0 // pred_region
    _
  $region13: #{partial_conv_net.13} parent=0 // pred_fallthru
    _
  // Predicated region
  $region14: #{partial_conv_net.13} parent=0 // pred_check
    _
  $region15: #{partial_conv_net.13} parent=0 // pred_check_branch
    %31 = sbr.rel (0) target = $region17
  $region16: #{partial_conv_net.13} parent=0 // pred_region
    _
  $region17: #{partial_conv_net.13} parent=0 // pred_fallthru
    _
  %s32 = sadd.s32 0, 0
  %p33 = scmp.lt.s32.totalorder %s32, 0
  %s34 = scalar_select %p33, %s32, 0
  %s35 = smul.addr %s34, 9
  %s36 = smul.addr %s35, 4
  %s37 = scalar_lea.vmem %s0, %s36
  %s38 = sadd.s32 0, 0
  %p39 = scmp.lt.s32.totalorder %s38, 0
  %s40 = scalar_select %p39, %s38, 0
  %s41 = smul.addr %s40, 8
  %s42 = scalar_lea.vmem %s1, %s41
  %s43 = sadd.s32 0, 0
  %p44 = scmp.lt.s32.totalorder %s43, 0
  %s45 = scalar_select %p44, %s43, 0
  %s46 = smul.addr %s45, 2
  %s47 = smul.addr %s46, 4
  %s48 = scalar_lea.vmem %s4, %s47
  %s49 = sadd.s32 0, 0
  %p50 = scmp.lt.s32.totalorder %s49, 0
  %s51 = scalar_select %p50, %s49, 0
  %s52 = smul.addr %s51, 9
  %s53 = smul.addr %s52, 4
  %s54 = scalar_lea.vmem %s0, %s53
  %s55 = sadd.s32 0, 0
  %s56 = sadd.s32 0, 0
  %p57 = scmp.lt.s32.totalorder %s56, 0
  %s58 = scalar_select %p57, %s56, 0
  %s59 = smul.addr %s58, 8
  %s60 = scalar_lea.vmem %s1, %s59
  %s61 = sadd.s32 0, 0
  %s62 = sadd.s32 0, 0
  %p63 = scmp.lt.s32.totalorder %s62, 0
  %s64 = scalar_select %p63, %s62, 0
  %s65 = smul.addr %s64, 2
  %s66 = smul.addr %s65, 4
  %s67 = scalar_lea.vmem %s4, %s66
  %s68 = sadd.s32 0, 0
  %v70 = vld [vmem:[%s54] sm:$0xff]
  %v71 = vld [vmem:[%s54 + $0x8] sm:$0xff]
  %v72 = vld [vmem:[%s54 + $0x10] sm:$0xff]
  %v73 = vld [vmem:[%s54 + $0x18] sm:$0xff]
  %v74 = vld [vmem:[%s54 + $0x20] sm:$0xf]
  %v75 = vld [vmem:[%s2] sm:$0xff]
  %v76 = vld [vmem:[%s2 + $0x8] sm:$0xff]
  %v77 = vld [vmem:[%s2 + $0x10] sm:$0xff]
  %v78 = vld [vmem:[%s2 + $0x18] sm:$0xff]
  %v79 = vld [vmem:[%s2 + $0x20] sm:$0xff]
  %v80 = vld [vmem:[%s2 + $0x28] sm:$0xff]
  %v81 = vld [vmem:[%s2 + $0x30] sm:$0xff]
  %v82 = vld [vmem:[%s2 + $0x38] sm:$0xff]
  %v83 = vld [vmem:[%s2 + $0x40] sm:$0xff]
  %v84 = vld [vmem:[%s2 + $0x48] sm:$0xff]
  %v85 = vld [vmem:[%s2 + $0x50] sm:$0xff]
  %v86 = vld [vmem:[%s2 + $0x58] sm:$0xff]
  %v87 = vld [vmem:[%s2 + $0x60] sm:$0xff]
  %v88 = vld [vmem:[%s2 + $0x68] sm:$0xff]
  %v89 = vld [vmem:[%s2 + $0x70] sm:$0xff]
  %v90 = vld [vmem:[%s2 + $0x78] sm:$0xff]
  %v91 = vld [vmem:[%s2 + $0x80] sm:$0xff]
  %v92 = vld [vmem:[%s2 + $0x88] sm:$0xff]
  %v93 = vld [vmem:[%s2 + $0x90] sm:$0xff]
  %v94 = vld [vmem:[%s2 + $0x98] sm:$0xff]
  %v95 = vld [vmem:[%s2 + $0xa0] sm:$0xff]
  %v96 = vld [vmem:[%s2 + $0xa8] sm:$0xff]
  %v97 = vld [vmem:[%s2 + $0xb0] sm:$0xff]
  %v98 = vld [vmem:[%s2 + $0xb8] sm:$0xff]
  %v99 = vld [vmem:[%s2 + $0xc0] sm:$0xff]
  %v100 = vld [vmem:[%s2 + $0xc8] sm:$0xff]
  %v101 = vld [vmem:[%s2 + $0xd0] sm:$0xff]
  %v102 = vld [vmem:[%s2 + $0xd8] sm:$0xff]
  %v103 = vld [vmem:[%s2 + $0xe0] sm:$0xff]
  %v104 = vld [vmem:[%s2 + $0xe8] sm:$0xff]
  %v105 = vld [vmem:[%s2 + $0xf0] sm:$0xff]
  %v106 = vld [vmem:[%s2 + $0xf8] sm:$0xff]
  %v107 = vld [vmem:[%s2 + $0x100] sm:$0xff]
  %v108 = vld [vmem:[%s2 + $0x108] sm:$0xff]
  %v109 = vld [vmem:[%s2 + $0x110] sm:$0xff]
  %v110 = vld [vmem:[%s2 + $0x118] sm:$0xff]
  %v111 = vld [vmem:[%s2 + $0x120] sm:$0xff]
  %v112 = vld [vmem:[%s2 + $0x128] sm:$0xff]
  %v113 = vld [vmem:[%s2 + $0x130] sm:$0xff]
  %v114 = vld [vmem:[%s2 + $0x138] sm:$0xff]
  %v115 = vld [vmem:[%s2 + $0x140] sm:$0xff]
  %v116 = vld [vmem:[%s2 + $0x148] sm:$0xff]
  %v117 = vld [vmem:[%s2 + $0x150] sm:$0xff]
  %v118 = vld [vmem:[%s2 + $0x158] sm:$0xff]
  %v119 = vld [vmem:[%s2 + $0x160] sm:$0xff]
  %v120 = vld [vmem:[%s2 + $0x168] sm:$0xff]
  %v121 = vld [vmem:[%s2 + $0x170] sm:$0xff]
  %v122 = vld [vmem:[%s2 + $0x178] sm:$0xff]
  %v123 = vld [vmem:[%s2 + $0x180] sm:$0xff]
  %v124 = vld [vmem:[%s2 + $0x188] sm:$0xff]
  %v125 = vld [vmem:[%s2 + $0x190] sm:$0xff]
  %v126 = vld [vmem:[%s2 + $0x198] sm:$0xff]
  %v127 = vld [vmem:[%s2 + $0x1a0] sm:$0xff]
  %v128 = vld [vmem:[%s2 + $0x1a8] sm:$0xff]
  %v129 = vld [vmem:[%s2 + $0x1b0] sm:$0xff]
  %v130 = vld [vmem:[%s2 + $0x1b8] sm:$0xff]
  %v131 = vld [vmem:[%s2 + $0x1c0] sm:$0xff]
  %v132 = vld [vmem:[%s2 + $0x1c8] sm:$0xff]
  %v133 = vld [vmem:[%s2 + $0x1d0] sm:$0xff]
  %v134 = vld [vmem:[%s2 + $0x1d8] sm:$0xff]
  %v135 = vld [vmem:[%s2 + $0x1e0] sm:$0xff]
  %v136 = vld [vmem:[%s2 + $0x1e8] sm:$0xff]
  %v137 = vld [vmem:[%s2 + $0x1f0] sm:$0xff]
  %v138 = vld [vmem:[%s2 + $0x1f8] sm:$0xff]
  %v139 = vld [vmem:[%s2 + $0x200] sm:$0xff]
  %v140 = vld [vmem:[%s2 + $0x208] sm:$0xff]
  %v141 = vld [vmem:[%s2 + $0x210] sm:$0xff]
  %v142 = vld [vmem:[%s2 + $0x218] sm:$0xff]
  %v143 = vld [vmem:[%s2 + $0x220] sm:$0xff]
  %v144 = vld [vmem:[%s2 + $0x228] sm:$0xff]
  %v145 = vld [vmem:[%s2 + $0x230] sm:$0xff]
  %v146 = vld [vmem:[%s2 + $0x238] sm:$0xff]
  %v147 = vld [vmem:[%s2 + $0x240] sm:$0xff]
  %v148 = vld [vmem:[%s2 + $0x248] sm:$0xff]
  %v149 = vld [vmem:[%s2 + $0x250] sm:$0xff]
  %v150 = vld [vmem:[%s2 + $0x258] sm:$0xff]
  %v151 = vld [vmem:[%s2 + $0x260] sm:$0xff]
  %v152 = vld [vmem:[%s2 + $0x268] sm:$0xff]
  %v153 = vld [vmem:[%s2 + $0x270] sm:$0xff]
  %v154 = vld [vmem:[%s2 + $0x278] sm:$0xff]
  %v155 = vld [vmem:[%s2 + $0x280] sm:$0xff]
  %v156 = vld [vmem:[%s2 + $0x288] sm:$0xff]
  %v157 = vld [vmem:[%s2 + $0x290] sm:$0xff]
  %v158 = vld [vmem:[%s2 + $0x298] sm:$0xff]
  %v159 = vld [vmem:[%s2 + $0x2a0] sm:$0xff]
  %v160 = vld [vmem:[%s2 + $0x2a8] sm:$0xff]
  %v161 = vld [vmem:[%s2 + $0x2b0] sm:$0xff]
  %v162 = vld [vmem:[%s2 + $0x2b8] sm:$0xff]
  %v163 = vld [vmem:[%s2 + $0x2c0] sm:$0xff]
  %v164 = vld [vmem:[%s2 + $0x2c8] sm:$0xff]
  %v165 = vld [vmem:[%s2 + $0x2d0] sm:$0xff]
  %v166 = vld [vmem:[%s2 + $0x2d8] sm:$0xff]
  %v167 = vld [vmem:[%s2 + $0x2e0] sm:$0xff]
  %v168 = vld [vmem:[%s2 + $0x2e8] sm:$0xff]
  %v169 = vld [vmem:[%s2 + $0x2f0] sm:$0xff]
  %v170 = vld [vmem:[%s2 + $0x2f8] sm:$0xff]
  %v171 = vld [vmem:[%s2 + $0x300] sm:$0xff]
  %v172 = vld [vmem:[%s2 + $0x308] sm:$0xff]
  %v173 = vld [vmem:[%s2 + $0x310] sm:$0xff]
  %v174 = vld [vmem:[%s2 + $0x318] sm:$0xff]
  %v175 = vld [vmem:[%s2 + $0x320] sm:$0xff]
  %v176 = vld [vmem:[%s2 + $0x328] sm:$0xff]
  %v177 = vld [vmem:[%s2 + $0x330] sm:$0xff]
  %v178 = vld [vmem:[%s2 + $0x338] sm:$0xff]
  %v179 = vld [vmem:[%s2 + $0x340] sm:$0xff]
  %v180 = vld [vmem:[%s2 + $0x348] sm:$0xff]
  %v181 = vld [vmem:[%s2 + $0x350] sm:$0xff]
  %v182 = vld [vmem:[%s2 + $0x358] sm:$0xff]
  %v183 = vld [vmem:[%s2 + $0x360] sm:$0xff]
  %v184 = vld [vmem:[%s2 + $0x368] sm:$0xff]
  %v185 = vld [vmem:[%s2 + $0x370] sm:$0xff]
  %v186 = vld [vmem:[%s2 + $0x378] sm:$0xff]
  %v187 = vld [vmem:[%s2 + $0x380] sm:$0xff]
  %v188 = vld [vmem:[%s2 + $0x388] sm:$0xff]
  %v189 = vld [vmem:[%s2 + $0x390] sm:$0xff]
  %v190 = vld [vmem:[%s2 + $0x398] sm:$0xff]
  %v191 = vld [vmem:[%s2 + $0x3a0] sm:$0xff]
  %v192 = vld [vmem:[%s2 + $0x3a8] sm:$0xff]
  %v193 = vld [vmem:[%s2 + $0x3b0] sm:$0xff]
  %v194 = vld [vmem:[%s2 + $0x3b8] sm:$0xff]
  %v195 = vld [vmem:[%s2 + $0x3c0] sm:$0xff]
  %v196 = vld [vmem:[%s2 + $0x3c8] sm:$0xff]
  %v197 = vld [vmem:[%s2 + $0x3d0] sm:$0xff]
  %v198 = vld [vmem:[%s2 + $0x3d8] sm:$0xff]
  %v199 = vld [vmem:[%s2 + $0x3e0] sm:$0xff]
  %v200 = vld [vmem:[%s2 + $0x3e8] sm:$0xff]
  %v201 = vld [vmem:[%s2 + $0x3f0] sm:$0xff]
  %v202 = vld [vmem:[%s2 + $0x3f8] sm:$0xff]
  %v203 = vld [vmem:[%s2 + $0x400] sm:$0xff]
  %v204 = vld [vmem:[%s2 + $0x408] sm:$0xff]
  %v205 = vld [vmem:[%s2 + $0x410] sm:$0xff]
  %v206 = vld [vmem:[%s2 + $0x418] sm:$0xff]
  %v207 = vld [vmem:[%s2 + $0x420] sm:$0xff]
  %v208 = vld [vmem:[%s2 + $0x428] sm:$0xff]
  %v209 = vld [vmem:[%s2 + $0x430] sm:$0xff]
  %v210 = vld [vmem:[%s2 + $0x438] sm:$0xff]
  %v211 = vld [vmem:[%s2 + $0x440] sm:$0xff]
  %v212 = vld [vmem:[%s2 + $0x448] sm:$0xff]
  %v213 = vld [vmem:[%s2 + $0x450] sm:$0xff]
  %v214 = vld [vmem:[%s2 + $0x458] sm:$0xff]
  %v215 = vld [vmem:[%s2 + $0x460] sm:$0xff]
  %v216 = vld [vmem:[%s2 + $0x468] sm:$0xff]
  %v217 = vld [vmem:[%s2 + $0x470] sm:$0xff]
  %v218 = vld [vmem:[%s2 + $0x478] sm:$0xff]
  %v224 = vunpack.c.l.b16 %v70
  %v225 = vunpack.c.h.b16 %v70
  %v226 = vunpack.c.l.b16 %v71
  %v227 = vunpack.c.h.b16 %v71
  %v228 = vunpack.c.l.b16 %v72
  %v229 = vunpack.c.h.b16 %v72
  %v230 = vunpack.c.l.b16 %v73
  %v231 = vunpack.c.h.b16 %v73
  %v232 = vunpack.c.l.b16 %v74
  %v233 = vpack.c.b16 %v224, %v224
  %v234 = vpack.c.b16 %v225, %v225
  %v235 = vpack.c.b16 %v226, %v226
  %v236 = vpack.c.b16 %v227, %v227
  %v237 = vpack.c.b16 %v228, %v228
  %v238 = vpack.c.b16 %v229, %v229
  %v239 = vpack.c.b16 %v230, %v230
  %v240 = vpack.c.b16 %v231, %v231
  %v241 = vpack.c.b16 %v232, %v232
  %v395 = vunpack.c.l.b16 %v75
  %v396 = vunpack.c.h.b16 %v75
  %v397 = vunpack.c.l.b16 %v76
  %v398 = vunpack.c.h.b16 %v76
  %v399 = vunpack.c.l.b16 %v77
  %v400 = vunpack.c.h.b16 %v77
  %v401 = vunpack.c.l.b16 %v78
  %v402 = vunpack.c.h.b16 %v78
  %v403 = vunpack.c.l.b16 %v79
  %v404 = vunpack.c.h.b16 %v79
  %v405 = vunpack.c.l.b16 %v80
  %v406 = vunpack.c.h.b16 %v80
  %v407 = vunpack.c.l.b16 %v81
  %v408 = vunpack.c.h.b16 %v81
  %v409 = vunpack.c.l.b16 %v82
  %v410 = vunpack.c.h.b16 %v82
  %v411 = vunpack.c.l.b16 %v83
  %v412 = vunpack.c.h.b16 %v83
  %v413 = vunpack.c.l.b16 %v84
  %v414 = vunpack.c.h.b16 %v84
  %v415 = vunpack.c.l.b16 %v85
  %v416 = vunpack.c.h.b16 %v85
  %v417 = vunpack.c.l.b16 %v86
  %v418 = vunpack.c.h.b16 %v86
  %v419 = vunpack.c.l.b16 %v87
  %v420 = vunpack.c.h.b16 %v87
  %v421 = vunpack.c.l.b16 %v88
  %v422 = vunpack.c.h.b16 %v88
  %v423 = vunpack.c.l.b16 %v89
  %v424 = vunpack.c.h.b16 %v89
  %v425 = vunpack.c.l.b16 %v90
  %v426 = vunpack.c.h.b16 %v90
  %v427 = vunpack.c.l.b16 %v91
  %v428 = vunpack.c.h.b16 %v91
  %v429 = vunpack.c.l.b16 %v92
  %v430 = vunpack.c.h.b16 %v92
  %v431 = vunpack.c.l.b16 %v93
  %v432 = vunpack.c.h.b16 %v93
  %v433 = vunpack.c.l.b16 %v94
  %v434 = vunpack.c.h.b16 %v94
  %v435 = vunpack.c.l.b16 %v95
  %v436 = vunpack.c.h.b16 %v95
  %v437 = vunpack.c.l.b16 %v96
  %v438 = vunpack.c.h.b16 %v96
  %v439 = vunpack.c.l.b16 %v97
  %v440 = vunpack.c.h.b16 %v97
  %v441 = vunpack.c.l.b16 %v98
  %v442 = vunpack.c.h.b16 %v98
  %v443 = vunpack.c.l.b16 %v99
  %v444 = vunpack.c.h.b16 %v99
  %v445 = vunpack.c.l.b16 %v100
  %v446 = vunpack.c.h.b16 %v100
  %v447 = vunpack.c.l.b16 %v101
  %v448 = vunpack.c.h.b16 %v101
  %v449 = vunpack.c.l.b16 %v102
  %v450 = vunpack.c.h.b16 %v102
  %v451 = vunpack.c.l.b16 %v103
  %v452 = vunpack.c.h.b16 %v103
  %v453 = vunpack.c.l.b16 %v104
  %v454 = vunpack.c.h.b16 %v104
  %v455 = vunpack.c.l.b16 %v105
  %v456 = vunpack.c.h.b16 %v105
  %v457 = vunpack.c.l.b16 %v106
  %v458 = vunpack.c.h.b16 %v106
  %v459 = vunpack.c.l.b16 %v107
  %v460 = vunpack.c.h.b16 %v107
  %v461 = vunpack.c.l.b16 %v108
  %v462 = vunpack.c.h.b16 %v108
  %v463 = vunpack.c.l.b16 %v109
  %v464 = vunpack.c.h.b16 %v109
  %v465 = vunpack.c.l.b16 %v110
  %v466 = vunpack.c.h.b16 %v110
  %v467 = vunpack.c.l.b16 %v111
  %v468 = vunpack.c.h.b16 %v111
  %v469 = vunpack.c.l.b16 %v112
  %v470 = vunpack.c.h.b16 %v112
  %v471 = vunpack.c.l.b16 %v113
  %v472 = vunpack.c.h.b16 %v113
  %v473 = vunpack.c.l.b16 %v114
  %v474 = vunpack.c.h.b16 %v114
  %v475 = vunpack.c.l.b16 %v115
  %v476 = vunpack.c.h.b16 %v115
  %v477 = vunpack.c.l.b16 %v116
  %v478 = vunpack.c.h.b16 %v116
  %v479 = vunpack.c.l.b16 %v117
  %v480 = vunpack.c.h.b16 %v117
  %v481 = vunpack.c.l.b16 %v118
  %v482 = vunpack.c.h.b16 %v118
  %v483 = vunpack.c.l.b16 %v119
  %v484 = vunpack.c.h.b16 %v119
  %v485 = vunpack.c.l.b16 %v120
  %v486 = vunpack.c.h.b16 %v120
  %v487 = vunpack.c.l.b16 %v121
  %v488 = vunpack.c.h.b16 %v121
  %v489 = vunpack.c.l.b16 %v122
  %v490 = vunpack.c.h.b16 %v122
  %v491 = vunpack.c.l.b16 %v123
  %v492 = vunpack.c.h.b16 %v123
  %v493 = vunpack.c.l.b16 %v124
  %v494 = vunpack.c.h.b16 %v124
  %v495 = vunpack.c.l.b16 %v125
  %v496 = vunpack.c.h.b16 %v125
  %v497 = vunpack.c.l.b16 %v126
  %v498 = vunpack.c.h.b16 %v126
  %v499 = vunpack.c.l.b16 %v127
  %v500 = vunpack.c.h.b16 %v127
  %v501 = vunpack.c.l.b16 %v128
  %v502 = vunpack.c.h.b16 %v128
  %v503 = vunpack.c.l.b16 %v129
  %v504 = vunpack.c.h.b16 %v129
  %v505 = vunpack.c.l.b16 %v130
  %v506 = vunpack.c.h.b16 %v130
  %v507 = vunpack.c.l.b16 %v131
  %v508 = vunpack.c.h.b16 %v131
  %v509 = vunpack.c.l.b16 %v132
  %v510 = vunpack.c.h.b16 %v132
  %v511 = vunpack.c.l.b16 %v133
  %v512 = vunpack.c.h.b16 %v133
  %v513 = vunpack.c.l.b16 %v134
  %v514 = vunpack.c.h.b16 %v134
  %v515 = vunpack.c.l.b16 %v135
  %v516 = vunpack.c.h.b16 %v135
  %v517 = vunpack.c.l.b16 %v136
  %v518 = vunpack.c.h.b16 %v136
  %v519 = vunpack.c.l.b16 %v137
  %v520 = vunpack.c.h.b16 %v137
  %v521 = vunpack.c.l.b16 %v138
  %v522 = vunpack.c.h.b16 %v138
  %v523 = vunpack.c.l.b16 %v139
  %v524 = vunpack.c.h.b16 %v139
  %v525 = vunpack.c.l.b16 %v140
  %v526 = vunpack.c.h.b16 %v140
  %v527 = vunpack.c.l.b16 %v141
  %v528 = vunpack.c.h.b16 %v141
  %v529 = vunpack.c.l.b16 %v142
  %v530 = vunpack.c.h.b16 %v142
  %v531 = vunpack.c.l.b16 %v143
  %v532 = vunpack.c.h.b16 %v143
  %v533 = vunpack.c.l.b16 %v144
  %v534 = vunpack.c.h.b16 %v144
  %v535 = vunpack.c.l.b16 %v145
  %v536 = vunpack.c.h.b16 %v145
  %v537 = vunpack.c.l.b16 %v146
  %v538 = vunpack.c.h.b16 %v146
  %v539 = vunpack.c.l.b16 %v147
  %v540 = vunpack.c.h.b16 %v147
  %v541 = vunpack.c.l.b16 %v148
  %v542 = vunpack.c.h.b16 %v148
  %v543 = vunpack.c.l.b16 %v149
  %v544 = vunpack.c.h.b16 %v149
  %v545 = vunpack.c.l.b16 %v150
  %v546 = vunpack.c.h.b16 %v150
  %v547 = vunpack.c.l.b16 %v151
  %v548 = vunpack.c.h.b16 %v151
  %v549 = vunpack.c.l.b16 %v152
  %v550 = vunpack.c.h.b16 %v152
  %v551 = vunpack.c.l.b16 %v153
  %v552 = vunpack.c.h.b16 %v153
  %v553 = vunpack.c.l.b16 %v154
  %v554 = vunpack.c.h.b16 %v154
  %v555 = vunpack.c.l.b16 %v155
  %v556 = vunpack.c.h.b16 %v155
  %v557 = vunpack.c.l.b16 %v156
  %v558 = vunpack.c.h.b16 %v156
  %v559 = vunpack.c.l.b16 %v157
  %v560 = vunpack.c.h.b16 %v157
  %v561 = vunpack.c.l.b16 %v158
  %v562 = vunpack.c.h.b16 %v158
  %v563 = vunpack.c.l.b16 %v159
  %v564 = vunpack.c.h.b16 %v159
  %v565 = vunpack.c.l.b16 %v160
  %v566 = vunpack.c.h.b16 %v160
  %v567 = vunpack.c.l.b16 %v161
  %v568 = vunpack.c.h.b16 %v161
  %v569 = vunpack.c.l.b16 %v162
  %v570 = vunpack.c.h.b16 %v162
  %v571 = vunpack.c.l.b16 %v163
  %v572 = vunpack.c.h.b16 %v163
  %v573 = vunpack.c.l.b16 %v164
  %v574 = vunpack.c.h.b16 %v164
  %v575 = vunpack.c.l.b16 %v165
  %v576 = vunpack.c.h.b16 %v165
  %v577 = vunpack.c.l.b16 %v166
  %v578 = vunpack.c.h.b16 %v166
  %v579 = vunpack.c.l.b16 %v167
  %v580 = vunpack.c.h.b16 %v167
  %v581 = vunpack.c.l.b16 %v168
  %v582 = vunpack.c.h.b16 %v168
  %v583 = vunpack.c.l.b16 %v169
  %v584 = vunpack.c.h.b16 %v169
  %v585 = vunpack.c.l.b16 %v170
  %v586 = vunpack.c.h.b16 %v170
  %v587 = vunpack.c.l.b16 %v171
  %v588 = vunpack.c.h.b16 %v171
  %v589 = vunpack.c.l.b16 %v172
  %v590 = vunpack.c.h.b16 %v172
  %v591 = vunpack.c.l.b16 %v173
  %v592 = vunpack.c.h.b16 %v173
  %v593 = vunpack.c.l.b16 %v174
  %v594 = vunpack.c.h.b16 %v174
  %v595 = vunpack.c.l.b16 %v175
  %v596 = vunpack.c.h.b16 %v175
  %v597 = vunpack.c.l.b16 %v176
  %v598 = vunpack.c.h.b16 %v176
  %v599 = vunpack.c.l.b16 %v177
  %v600 = vunpack.c.h.b16 %v177
  %v601 = vunpack.c.l.b16 %v178
  %v602 = vunpack.c.h.b16 %v178
  %v603 = vunpack.c.l.b16 %v179
  %v604 = vunpack.c.h.b16 %v179
  %v605 = vunpack.c.l.b16 %v180
  %v606 = vunpack.c.h.b16 %v180
  %v607 = vunpack.c.l.b16 %v181
  %v608 = vunpack.c.h.b16 %v181
  %v609 = vunpack.c.l.b16 %v182
  %v610 = vunpack.c.h.b16 %v182
  %v611 = vunpack.c.l.b16 %v183
  %v612 = vunpack.c.h.b16 %v183
  %v613 = vunpack.c.l.b16 %v184
  %v614 = vunpack.c.h.b16 %v184
  %v615 = vunpack.c.l.b16 %v185
  %v616 = vunpack.c.h.b16 %v185
  %v617 = vunpack.c.l.b16 %v186
  %v618 = vunpack.c.h.b16 %v186
  %v619 = vunpack.c.l.b16 %v187
  %v620 = vunpack.c.h.b16 %v187
  %v621 = vunpack.c.l.b16 %v188
  %v622 = vunpack.c.h.b16 %v188
  %v623 = vunpack.c.l.b16 %v189
  %v624 = vunpack.c.h.b16 %v189
  %v625 = vunpack.c.l.b16 %v190
  %v626 = vunpack.c.h.b16 %v190
  %v627 = vunpack.c.l.b16 %v191
  %v628 = vunpack.c.h.b16 %v191
  %v629 = vunpack.c.l.b16 %v192
  %v630 = vunpack.c.h.b16 %v192
  %v631 = vunpack.c.l.b16 %v193
  %v632 = vunpack.c.h.b16 %v193
  %v633 = vunpack.c.l.b16 %v194
  %v634 = vunpack.c.h.b16 %v194
  %v635 = vunpack.c.l.b16 %v195
  %v636 = vunpack.c.h.b16 %v195
  %v637 = vunpack.c.l.b16 %v196
  %v638 = vunpack.c.h.b16 %v196
  %v639 = vunpack.c.l.b16 %v197
  %v640 = vunpack.c.h.b16 %v197
  %v641 = vunpack.c.l.b16 %v198
  %v642 = vunpack.c.h.b16 %v198
  %v643 = vunpack.c.l.b16 %v199
  %v644 = vunpack.c.h.b16 %v199
  %v645 = vunpack.c.l.b16 %v200
  %v646 = vunpack.c.h.b16 %v200
  %v647 = vunpack.c.l.b16 %v201
  %v648 = vunpack.c.h.b16 %v201
  %v649 = vunpack.c.l.b16 %v202
  %v650 = vunpack.c.h.b16 %v202
  %v651 = vunpack.c.l.b16 %v203
  %v652 = vunpack.c.h.b16 %v203
  %v653 = vunpack.c.l.b16 %v204
  %v654 = vunpack.c.h.b16 %v204
  %v655 = vunpack.c.l.b16 %v205
  %v656 = vunpack.c.h.b16 %v205
  %v657 = vunpack.c.l.b16 %v206
  %v658 = vunpack.c.h.b16 %v206
  %v659 = vunpack.c.l.b16 %v207
  %v660 = vunpack.c.h.b16 %v207
  %v661 = vunpack.c.l.b16 %v208
  %v662 = vunpack.c.h.b16 %v208
  %v663 = vunpack.c.l.b16 %v209
  %v664 = vunpack.c.h.b16 %v209
  %v665 = vunpack.c.l.b16 %v210
  %v666 = vunpack.c.h.b16 %v210
  %v667 = vunpack.c.l.b16 %v211
  %v668 = vunpack.c.h.b16 %v211
  %v669 = vunpack.c.l.b16 %v212
  %v670 = vunpack.c.h.b16 %v212
  %v671 = vunpack.c.l.b16 %v213
  %v672 = vunpack.c.h.b16 %v213
  %v673 = vunpack.c.l.b16 %v214
  %v674 = vunpack.c.h.b16 %v214
  %v675 = vunpack.c.l.b16 %v215
  %v676 = vunpack.c.h.b16 %v215
  %v677 = vunpack.c.l.b16 %v216
  %v678 = vunpack.c.h.b16 %v216
  %v679 = vunpack.c.l.b16 %v217
  %v680 = vunpack.c.h.b16 %v217
  %v681 = vunpack.c.l.b16 %v218
  %v682 = vunpack.c.h.b16 %v218
  %v683 = vpack.c.b16 %v397, %v395
  %v684 = vpack.c.b16 %v398, %v396
  %v685 = vpack.c.b16 %v401, %v399
  %v686 = vpack.c.b16 %v402, %v400
  %v687 = vpack.c.b16 %v405, %v403
  %v688 = vpack.c.b16 %v406, %v404
  %v689 = vpack.c.b16 %v409, %v407
  %v690 = vpack.c.b16 %v410, %v408
  %v691 = vpack.c.b16 %v413, %v411
  %v692 = vpack.c.b16 %v414, %v412
  %v693 = vpack.c.b16 %v417, %v415
  %v694 = vpack.c.b16 %v418, %v416
  %v695 = vpack.c.b16 %v421, %v419
  %v696 = vpack.c.b16 %v422, %v420
  %v697 = vpack.c.b16 %v425, %v423
  %v698 = vpack.c.b16 %v426, %v424
  %v699 = vpack.c.b16 %v429, %v427
  %v700 = vpack.c.b16 %v430, %v428
  %v701 = vpack.c.b16 %v433, %v431
  %v702 = vpack.c.b16 %v434, %v432
  %v703 = vpack.c.b16 %v437, %v435
  %v704 = vpack.c.b16 %v438, %v436
  %v705 = vpack.c.b16 %v441, %v439
  %v706 = vpack.c.b16 %v442, %v440
  %v707 = vpack.c.b16 %v445, %v443
  %v708 = vpack.c.b16 %v446, %v444
  %v709 = vpack.c.b16 %v449, %v447
  %v710 = vpack.c.b16 %v450, %v448
  %v711 = vpack.c.b16 %v453, %v451
  %v712 = vpack.c.b16 %v454, %v452
  %v713 = vpack.c.b16 %v457, %v455
  %v714 = vpack.c.b16 %v458, %v456
  %v715 = vpack.c.b16 %v461, %v459
  %v716 = vpack.c.b16 %v462, %v460
  %v717 = vpack.c.b16 %v465, %v463
  %v718 = vpack.c.b16 %v466, %v464
  %v719 = vpack.c.b16 %v469, %v467
  %v720 = vpack.c.b16 %v470, %v468
  %v721 = vpack.c.b16 %v473, %v471
  %v722 = vpack.c.b16 %v474, %v472
  %v723 = vpack.c.b16 %v477, %v475
  %v724 = vpack.c.b16 %v478, %v476
  %v725 = vpack.c.b16 %v481, %v479
  %v726 = vpack.c.b16 %v482, %v480
  %v727 = vpack.c.b16 %v485, %v483
  %v728 = vpack.c.b16 %v486, %v484
  %v729 = vpack.c.b16 %v489, %v487
  %v730 = vpack.c.b16 %v490, %v488
  %v731 = vpack.c.b16 %v493, %v491
  %v732 = vpack.c.b16 %v494, %v492
  %v733 = vpack.c.b16 %v497, %v495
  %v734 = vpack.c.b16 %v498, %v496
  %v735 = vpack.c.b16 %v501, %v499
  %v736 = vpack.c.b16 %v502, %v500
  %v737 = vpack.c.b16 %v505, %v503
  %v738 = vpack.c.b16 %v506, %v504
  %v739 = vpack.c.b16 %v509, %v507
  %v740 = vpack.c.b16 %v510, %v508
  %v741 = vpack.c.b16 %v513, %v511
  %v742 = vpack.c.b16 %v514, %v512
  %v743 = vpack.c.b16 %v517, %v515
  %v744 = vpack.c.b16 %v518, %v516
  %v745 = vpack.c.b16 %v521, %v519
  %v746 = vpack.c.b16 %v522, %v520
  %v747 = vpack.c.b16 %v525, %v523
  %v748 = vpack.c.b16 %v526, %v524
  %v749 = vpack.c.b16 %v529, %v527
  %v750 = vpack.c.b16 %v530, %v528
  %v751 = vpack.c.b16 %v533, %v531
  %v752 = vpack.c.b16 %v534, %v532
  %v753 = vpack.c.b16 %v537, %v535
  %v754 = vpack.c.b16 %v538, %v536
  %v755 = vpack.c.b16 %v541, %v539
  %v756 = vpack.c.b16 %v542, %v540
  %v757 = vpack.c.b16 %v545, %v543
  %v758 = vpack.c.b16 %v546, %v544
  %v759 = vpack.c.b16 %v549, %v547
  %v760 = vpack.c.b16 %v550, %v548
  %v761 = vpack.c.b16 %v553, %v551
  %v762 = vpack.c.b16 %v554, %v552
  %v763 = vpack.c.b16 %v557, %v555
  %v764 = vpack.c.b16 %v558, %v556
  %v765 = vpack.c.b16 %v561, %v559
  %v766 = vpack.c.b16 %v562, %v560
  %v767 = vpack.c.b16 %v565, %v563
  %v768 = vpack.c.b16 %v566, %v564
  %v769 = vpack.c.b16 %v569, %v567
  %v770 = vpack.c.b16 %v570, %v568
  %v771 = vpack.c.b16 %v573, %v571
  %v772 = vpack.c.b16 %v574, %v572
  %v773 = vpack.c.b16 %v577, %v575
  %v774 = vpack.c.b16 %v578, %v576
  %v775 = vpack.c.b16 %v581, %v579
  %v776 = vpack.c.b16 %v582, %v580
  %v777 = vpack.c.b16 %v585, %v583
  %v778 = vpack.c.b16 %v586, %v584
  %v779 = vpack.c.b16 %v589, %v587
  %v780 = vpack.c.b16 %v590, %v588
  %v781 = vpack.c.b16 %v593, %v591
  %v782 = vpack.c.b16 %v594, %v592
  %v783 = vpack.c.b16 %v597, %v595
  %v784 = vpack.c.b16 %v598, %v596
  %v785 = vpack.c.b16 %v601, %v599
  %v786 = vpack.c.b16 %v602, %v600
  %v787 = vpack.c.b16 %v605, %v603
  %v788 = vpack.c.b16 %v606, %v604
  %v789 = vpack.c.b16 %v609, %v607
  %v790 = vpack.c.b16 %v610, %v608
  %v791 = vpack.c.b16 %v613, %v611
  %v792 = vpack.c.b16 %v614, %v612
  %v793 = vpack.c.b16 %v617, %v615
  %v794 = vpack.c.b16 %v618, %v616
  %v795 = vpack.c.b16 %v621, %v619
  %v796 = vpack.c.b16 %v622, %v620
  %v797 = vpack.c.b16 %v625, %v623
  %v798 = vpack.c.b16 %v626, %v624
  %v799 = vpack.c.b16 %v629, %v627
  %v800 = vpack.c.b16 %v630, %v628
  %v801 = vpack.c.b16 %v633, %v631
  %v802 = vpack.c.b16 %v634, %v632
  %v803 = vpack.c.b16 %v637, %v635
  %v804 = vpack.c.b16 %v638, %v636
  %v805 = vpack.c.b16 %v641, %v639
  %v806 = vpack.c.b16 %v642, %v640
  %v807 = vpack.c.b16 %v645, %v643
  %v808 = vpack.c.b16 %v646, %v644
  %v809 = vpack.c.b16 %v649, %v647
  %v810 = vpack.c.b16 %v650, %v648
  %v811 = vpack.c.b16 %v653, %v651
  %v812 = vpack.c.b16 %v654, %v652
  %v813 = vpack.c.b16 %v657, %v655
  %v814 = vpack.c.b16 %v658, %v656
  %v815 = vpack.c.b16 %v661, %v659
  %v816 = vpack.c.b16 %v662, %v660
  %v817 = vpack.c.b16 %v665, %v663
  %v818 = vpack.c.b16 %v666, %v664
  %v819 = vpack.c.b16 %v669, %v667
  %v820 = vpack.c.b16 %v670, %v668
  %v821 = vpack.c.b16 %v673, %v671
  %v822 = vpack.c.b16 %v674, %v672
  %v823 = vpack.c.b16 %v677, %v675
  %v824 = vpack.c.b16 %v678, %v676
  %v825 = vpack.c.b16 %v681, %v679
  %v826 = vpack.c.b16 %v682, %v680
  %971 = vmatprep.subr.bf16.mxu0 %v684
  %972 = vmatpush1.bf16.msra.mxu0 %v683
  %973 = vmatprep.subr.bf16.mxu0 %v686
  %974 = vmatpush1.bf16.msra.mxu0 %v685
  %975 = vmatprep.subr.bf16.mxu0 %v688
  %976 = vmatpush1.bf16.msra.mxu0 %v687
  %977 = vmatprep.subr.bf16.mxu0 %v690
  %978 = vmatpush1.bf16.msra.mxu0 %v689
  %979 = vmatprep.subr.bf16.mxu0 %v692
  %980 = vmatpush1.bf16.msra.mxu0 %v691
  %981 = vmatprep.subr.bf16.mxu0 %v694
  %982 = vmatpush1.bf16.msra.mxu0 %v693
  %983 = vmatprep.subr.bf16.mxu0 %v696
  %984 = vmatpush1.bf16.msra.mxu0 %v695
  %985 = vmatprep.subr.bf16.mxu0 %v698
  %986 = vmatpush1.bf16.msra.mxu0 %v697
  %987 = vmatprep.subr.bf16.mxu0 %v700
  %988 = vmatpush1.bf16.msra.mxu0 %v699
  %989 = vmatprep.subr.bf16.mxu0 %v702
  %990 = vmatpush1.bf16.msra.mxu0 %v701
  %991 = vmatprep.subr.bf16.mxu0 %v704
  %992 = vmatpush1.bf16.msra.mxu0 %v703
  %993 = vmatprep.subr.bf16.mxu0 %v706
  %994 = vmatpush1.bf16.msra.mxu0 %v705
  %995 = vmatprep.subr.bf16.mxu0 %v708
  %996 = vmatpush1.bf16.msra.mxu0 %v707
  %997 = vmatprep.subr.bf16.mxu0 %v710
  %998 = vmatpush1.bf16.msra.mxu0 %v709
  %999 = vmatprep.subr.bf16.mxu0 %v712
  %1000 = vmatpush1.bf16.msra.mxu0 %v711
  %1001 = vmatprep.subr.bf16.mxu0 %v714
  %1002 = vmatpush1.bf16.msra.mxu0 %v713
  %1003 = vmatprep.mubr.bf16.mxu0 %v234
  %1004 = vmatmul.mubr.bf16.gmra.mrb[0].mxu0 %v233
  %v1005 = vpop.f32.mrb[0].mxu0
  %v1006 = vadd.f32 0.0, %v1005
  %v1007 = vpop.f32.mrb[0].mxu0
  %v1008 = vadd.f32 0.0, %v1007
  %v1009 = vpop.f32.mrb[0].mxu0
  %v1010 = vpop.f32.mrb[0].mxu0
  %1011 = vdwg.mxu0
  %1012 = vmatprep.subr.bf16.mxu0 %v716
  %1013 = vmatpush1.bf16.msra.mxu0 %v715
  %1014 = vmatprep.subr.bf16.mxu0 %v718
  %1015 = vmatpush1.bf16.msra.mxu0 %v717
  %1016 = vmatprep.subr.bf16.mxu0 %v720
  %1017 = vmatpush1.bf16.msra.mxu0 %v719
  %1018 = vmatprep.subr.bf16.mxu0 %v722
  %1019 = vmatpush1.bf16.msra.mxu0 %v721
  %1020 = vmatprep.subr.bf16.mxu0 %v724
  %1021 = vmatpush1.bf16.msra.mxu0 %v723
  %1022 = vmatprep.subr.bf16.mxu0 %v726
  %1023 = vmatpush1.bf16.msra.mxu0 %v725
  %1024 = vmatprep.subr.bf16.mxu0 %v728
  %1025 = vmatpush1.bf16.msra.mxu0 %v727
  %1026 = vmatprep.subr.bf16.mxu0 %v730
  %1027 = vmatpush1.bf16.msra.mxu0 %v729
  %1028 = vmatprep.subr.bf16.mxu0 %v732
  %1029 = vmatpush1.bf16.msra.mxu0 %v731
  %1030 = vmatprep.subr.bf16.mxu0 %v734
  %1031 = vmatpush1.bf16.msra.mxu0 %v733
  %1032 = vmatprep.subr.bf16.mxu0 %v736
  %1033 = vmatpush1.bf16.msra.mxu0 %v735
  %1034 = vmatprep.subr.bf16.mxu0 %v738
  %1035 = vmatpush1.bf16.msra.mxu0 %v737
  %1036 = vmatprep.subr.bf16.mxu0 %v740
  %1037 = vmatpush1.bf16.msra.mxu0 %v739
  %1038 = vmatprep.subr.bf16.mxu0 %v742
  %1039 = vmatpush1.bf16.msra.mxu0 %v741
  %1040 = vmatprep.subr.bf16.mxu0 %v744
  %1041 = vmatpush1.bf16.msra.mxu0 %v743
  %1042 = vmatprep.subr.bf16.mxu0 %v746
  %1043 = vmatpush1.bf16.msra.mxu0 %v745
  %1044 = vmatprep.mubr.bf16.mxu0 %v236
  %1045 = vmatmul.mubr.bf16.gmra.mrb[0].mxu0 %v235
  %v1046 = vpop.f32.mrb[0].mxu0
  %v1047 = vadd.f32 %v1006, %v1046
  %v1048 = vpop.f32.mrb[0].mxu0
  %v1049 = vadd.f32 %v1008, %v1048
  %v1050 = vpop.f32.mrb[0].mxu0
  %v1051 = vpop.f32.mrb[0].mxu0
  %1052 = vdwg.mxu0
  %1053 = vmatprep.subr.bf16.mxu0 %v748
  %1054 = vmatpush1.bf16.msra.mxu0 %v747
  %1055 = vmatprep.subr.bf16.mxu0 %v750
  %1056 = vmatpush1.bf16.msra.mxu0 %v749
  %1057 = vmatprep.subr.bf16.mxu0 %v752
  %1058 = vmatpush1.bf16.msra.mxu0 %v751
  %1059 = vmatprep.subr.bf16.mxu0 %v754
  %1060 = vmatpush1.bf16.msra.mxu0 %v753
  %1061 = vmatprep.subr.bf16.mxu0 %v756
  %1062 = vmatpush1.bf16.msra.mxu0 %v755
  %1063 = vmatprep.subr.bf16.mxu0 %v758
  %1064 = vmatpush1.bf16.msra.mxu0 %v757
  %1065 = vmatprep.subr.bf16.mxu0 %v760
  %1066 = vmatpush1.bf16.msra.mxu0 %v759
  %1067 = vmatprep.subr.bf16.mxu0 %v762
  %1068 = vmatpush1.bf16.msra.mxu0 %v761
  %1069 = vmatprep.subr.bf16.mxu0 %v764
  %1070 = vmatpush1.bf16.msra.mxu0 %v763
  %1071 = vmatprep.subr.bf16.mxu0 %v766
  %1072 = vmatpush1.bf16.msra.mxu0 %v765
  %1073 = vmatprep.subr.bf16.mxu0 %v768
  %1074 = vmatpush1.bf16.msra.mxu0 %v767
  %1075 = vmatprep.subr.bf16.mxu0 %v770
  %1076 = vmatpush1.bf16.msra.mxu0 %v769
  %1077 = vmatprep.subr.bf16.mxu0 %v772
  %1078 = vmatpush1.bf16.msra.mxu0 %v771
  %1079 = vmatprep.subr.bf16.mxu0 %v774
  %1080 = vmatpush1.bf16.msra.mxu0 %v773
  %1081 = vmatprep.subr.bf16.mxu0 %v776
  %1082 = vmatpush1.bf16.msra.mxu0 %v775
  %1083 = vmatprep.subr.bf16.mxu0 %v778
  %1084 = vmatpush1.bf16.msra.mxu0 %v777
  %1085 = vmatprep.mubr.bf16.mxu0 %v238
  %1086 = vmatmul.mubr.bf16.gmra.mrb[0].mxu0 %v237
  %v1087 = vpop.f32.mrb[0].mxu0
  %v1088 = vadd.f32 %v1047, %v1087
  %v1089 = vpop.f32.mrb[0].mxu0
  %v1090 = vadd.f32 %v1049, %v1089
  %v1091 = vpop.f32.mrb[0].mxu0
  %v1092 = vpop.f32.mrb[0].mxu0
  %1093 = vdwg.mxu0
  %1094 = vmatprep.subr.bf16.mxu0 %v780
  %1095 = vmatpush1.bf16.msra.mxu0 %v779
  %1096 = vmatprep.subr.bf16.mxu0 %v782
  %1097 = vmatpush1.bf16.msra.mxu0 %v781
  %1098 = vmatprep.subr.bf16.mxu0 %v784
  %1099 = vmatpush1.bf16.msra.mxu0 %v783
  %1100 = vmatprep.subr.bf16.mxu0 %v786
  %1101 = vmatpush1.bf16.msra.mxu0 %v785
  %1102 = vmatprep.subr.bf16.mxu0 %v788
  %1103 = vmatpush1.bf16.msra.mxu0 %v787
  %1104 = vmatprep.subr.bf16.mxu0 %v790
  %1105 = vmatpush1.bf16.msra.mxu0 %v789
  %1106 = vmatprep.subr.bf16.mxu0 %v792
  %1107 = vmatpush1.bf16.msra.mxu0 %v791
  %1108 = vmatprep.subr.bf16.mxu0 %v794
  %1109 = vmatpush1.bf16.msra.mxu0 %v793
  %1110 = vmatprep.subr.bf16.mxu0 %v796
  %1111 = vmatpush1.bf16.msra.mxu0 %v795
  %1112 = vmatprep.subr.bf16.mxu0 %v798
  %1113 = vmatpush1.bf16.msra.mxu0 %v797
  %1114 = vmatprep.subr.bf16.mxu0 %v800
  %1115 = vmatpush1.bf16.msra.mxu0 %v799
  %1116 = vmatprep.subr.bf16.mxu0 %v802
  %1117 = vmatpush1.bf16.msra.mxu0 %v801
  %1118 = vmatprep.subr.bf16.mxu0 %v804
  %1119 = vmatpush1.bf16.msra.mxu0 %v803
  %1120 = vmatprep.subr.bf16.mxu0 %v806
  %1121 = vmatpush1.bf16.msra.mxu0 %v805
  %1122 = vmatprep.subr.bf16.mxu0 %v808
  %1123 = vmatpush1.bf16.msra.mxu0 %v807
  %1124 = vmatprep.subr.bf16.mxu0 %v810
  %1125 = vmatpush1.bf16.msra.mxu0 %v809
  %1126 = vmatprep.mubr.bf16.mxu0 %v240
  %1127 = vmatmul.mubr.bf16.gmra.mrb[0].mxu0 %v239
  %v1128 = vpop.f32.mrb[0].mxu0
  %v1129 = vadd.f32 %v1088, %v1128
  %v1130 = vpop.f32.mrb[0].mxu0
  %v1131 = vadd.f32 %v1090, %v1130
  %v1132 = vpop.f32.mrb[0].mxu0
  %v1133 = vpop.f32.mrb[0].mxu0
  %1134 = vdwg.mxu0
  %1135 = vmatprep.subr.bf16.mxu0 %v812
  %1136 = vmatpush1.bf16.msra.mxu0 %v811
  %1137 = vmatprep.subr.bf16.mxu0 %v814
  %1138 = vmatpush1.bf16.msra.mxu0 %v813
  %1139 = vmatprep.subr.bf16.mxu0 %v816
  %1140 = vmatpush1.bf16.msra.mxu0 %v815
  %1141 = vmatprep.subr.bf16.mxu0 %v818
  %1142 = vmatpush1.bf16.msra.mxu0 %v817
  %1143 = vmatprep.subr.bf16.mxu0 %v820
  %1144 = vmatpush1.bf16.msra.mxu0 %v819
  %1145 = vmatprep.subr.bf16.mxu0 %v822
  %1146 = vmatpush1.bf16.msra.mxu0 %v821
  %1147 = vmatprep.subr.bf16.mxu0 %v824
  %1148 = vmatpush1.bf16.msra.mxu0 %v823
  %1149 = vmatprep.subr.bf16.mxu0 %v826
  %1150 = vmatpush1.bf16.msra.mxu0 %v825
  %1151 = vmatprep.subr.bf16.mxu0 0
  %1152 = vmatpush1.bf16.msra.mxu0 0
  %1153 = vmatprep.subr.bf16.mxu0 0
  %1154 = vmatpush1.bf16.msra.mxu0 0
  %1155 = vmatprep.subr.bf16.mxu0 0
  %1156 = vmatpush1.bf16.msra.mxu0 0
  %1157 = vmatprep.subr.bf16.mxu0 0
  %1158 = vmatpush1.bf16.msra.mxu0 0
  %1159 = vmatprep.subr.bf16.mxu0 0
  %1160 = vmatpush1.bf16.msra.mxu0 0
  %1161 = vmatprep.subr.bf16.mxu0 0
  %1162 = vmatpush1.bf16.msra.mxu0 0
  %1163 = vmatprep.subr.bf16.mxu0 0
  %1164 = vmatpush1.bf16.msra.mxu0 0
  %1165 = vmatprep.subr.bf16.mxu0 0
  %1166 = vmatpush1.bf16.msra.mxu0 0
  %1167 = vmatprep.mubr.bf16.mxu0 0
  %1168 = vmatmul.mubr.bf16.gmra.mrb[0].mxu0 %v241
  %v1169 = vpop.f32.mrb[0].mxu0
  %v1170 = vadd.f32 %v1129, %v1169
  %v1171 = vpop.f32.mrb[0].mxu0
  %v1172 = vadd.f32 %v1131, %v1171
  %v1173 = vpop.f32.mrb[0].mxu0
  %v1174 = vpop.f32.mrb[0].mxu0
  %1175 = vdwg.mxu0
  %v1176 = vld [vmem:[%s60] sm:$0xff]
  %vm1177 = vcmp.eq.f32.partialorder %v1176, 0.0
  %v1178 = vsel %vm1177, 1.0, %v1176
  %v1179 = vrcp.pop %v1178
  %1181 = vset.pattern.permute.xlu0 0
  %1182 = vperm.xlu0 %1181, %v1179
  %v1183 = vpop.permute.xlu0 %1182
  %v1185 = vmul.f32 %v1170, %v1183
  %v1186 = vmul.f32 %v1172, %v1183
  %v1187 = vld [vmem:[%s3] sm:$0x3]
  %v1189 = vlaneseq
  %v1190 = vshrl.u32 %v1189, 7
  %v1191 = vsub.s32 0, %v1190
  %v1192 = vrot.slane %v1187, %v1191
  %v1193 = vlaneseq
  %v1194 = vshrl.u32 %v1193, 7
  %v1195 = vsub.s32 1, %v1194
  %v1196 = vrot.slane %v1187, %v1195
  %v1199 = vadd.f32 %v1185, %v1192
  %v1200 = vadd.f32 %v1186, %v1196
  %v1201 = vsel %vm1177, 1, 0
  %1202 = vset.pattern.permute.xlu0 0
  %1203 = vperm.xlu0 %1202, %v1201
  %v1204 = vpop.permute.xlu0 %1203
  %vm1205 = vcmp.eq.s32.totalorder %v1204, 1
  %v1206 = vsel %vm1205, 0.0, %v1199
  %v1207 = vsel %vm1205, 0.0, %v1200
  %v1208 = vpack.c.bf16 %v1206, %v1206
  %v1209 = vpack.c.bf16 %v1207, %v1207
  %v1212 = vunpack.c.l.b16 %v1208
  %v1213 = vunpack.c.l.b16 %v1209
  %v1214 = vpack.c.b16 %v1213, %v1212
  %1216 = vst [vmem:[%s67] sm:$0xff] %v1214
  %p1217 = scmp.eq.s32.totalorder 0, 0
  // Predicated region
  $region18: #{partial_conv_net.13} parent=0 // pred_check
    %p1218 = pneg %p1217
  $region19: #{partial_conv_net.13} parent=0 // pred_check_branch
    %1220 = sbr.rel (%p1218) target = $region21
  $region20: #{partial_conv_net.13} parent=0 // pred_region
    %1221 = vst [vmem:[%s5] sm:$0xff] 0.0
    %1222 = vst [vmem:[%s5 + $0x8] sm:$0xff] 0.0
  $region21: #{partial_conv_net.13} parent=0 // pred_fallthru
    _
  %v1223 = vrot.slane %v1206, 4
  %v1224 = vadd.f32 %v1206, %v1223
  %v1225 = vrot.slane %v1224, 2
  %v1226 = vadd.f32 %v1224, %v1225
  %v1227 = vrot.slane %v1226, 1
  %v1228 = vadd.f32 %v1226, %v1227
  %v1229 = vrot.slane %v1207, 4
  %v1230 = vadd.f32 %v1207, %v1229
  %v1231 = vrot.slane %v1230, 2
  %v1232 = vadd.f32 %v1230, %v1231
  %v1233 = vrot.slane %v1232, 1
  %v1234 = vadd.f32 %v1232, %v1233
  %v1235 = vmul.f32 %v1206, %v1206
  %v1236 = vmul.f32 %v1207, %v1207
  %v1237 = vrot.slane %v1235, 4
  %v1238 = vadd.f32 %v1235, %v1237
  %v1239 = vrot.slane %v1238, 2
  %v1240 = vadd.f32 %v1238, %v1239
  %v1241 = vrot.slane %v1240, 1
  %v1242 = vadd.f32 %v1240, %v1241
  %v1243 = vrot.slane %v1236, 4
  %v1244 = vadd.f32 %v1236, %v1243
  %v1245 = vrot.slane %v1244, 2
  %v1246 = vadd.f32 %v1244, %v1245
  %v1247 = vrot.slane %v1246, 1
  %v1248 = vadd.f32 %v1246, %v1247
  %v1249 = vld [vmem:[%s5] sm:$0xff]
  %v1250 = vld [vmem:[%s5 + $0x8] sm:$0xff]
  %vm1251 = vcmask 1040384
  %v1252 = vsel %vm1251, %v1228, %v1242
  %v1253 = vsel %vm1251, %v1234, %v1248
  %vm1254 = vcmask 1041408
  %v1255 = vsel %vm1254, %v1252, 0.0
  %v1256 = vsel %vm1254, %v1253, 0.0
  %v1257 = vadd.f32 %v1249, %v1255
  %v1258 = vadd.f32 %v1250, %v1256
  %1259 = vst [vmem:[%s5] sm:$0xff] %v1257
  %1260 = vst [vmem:[%s5 + $0x8] sm:$0xff] %v1258
  %s1261 = sadd.s32 0, 0
  %p1262 = scmp.lt.s32.totalorder %s1261, 0
  %s1263 = scalar_select %p1262, %s1261, 0
  %s1264 = smul.addr %s1263, 2
  %s1265 = smul.addr %s1264, 4
  %s1266 = scalar_lea.vmem %s4, %s1265
  // Predicated region
  $region22: #{partial_conv_net.13} parent=0 // pred_check
    _
  $region23: #{partial_conv_net.13} parent=0 // pred_check_branch
    %1268 = sbr.rel (0) target = $region25
  $region24: #{partial_conv_net.13} parent=0 // pred_region
    %s1269 = sadd.s32 0, 0
  $region25: #{partial_conv_net.13} parent=0 // pred_fallthru
    _
  // Predicated region
  $region26: #{partial_conv_net.13} parent=0 // pred_check
    _
  $region27: #{partial_conv_net.13} parent=0 // pred_check_branch
    %1271 = sbr.rel (0) target = $region29
  $region28: #{partial_conv_net.13} parent=0 // pred_region
    _
  $region29: #{partial_conv_net.13} parent=0 // pred_fallthru
    _
  // Predicated region
  $region30: #{partial_conv_net.13} parent=0 // pred_check
    _
  $region31: #{partial_conv_net.13} parent=0 // pred_check_branch
    %1273 = sbr.rel (0) target = $region33
  $region32: #{partial_conv_net.13} parent=0 // pred_region
    %s1274 = sadd.s32 0, 0
    %p1275 = scmp.lt.s32.totalorder %s1274, 0
    %s1276 = scalar_select %p1275, %s1274, 0
    %s1277 = smul.addr %s1276, 2
    %s1278 = smul.addr %s1277, 4
    %s1279 = scalar_lea.vmem %s4, %s1278
  $region33: #{partial_conv_net.13} parent=0 // pred_fallthru
    _
  // Predicated region
  $region34: #{partial_conv_net.13} parent=0 // pred_check
    _
  $region35: #{partial_conv_net.13} parent=0 // pred_check_branch
    %1281 = sbr.rel (0) target = $region37
  $region36: #{partial_conv_net.13} parent=0 // pred_region
    _
  $region37: #{partial_conv_net.13} parent=0 // pred_fallthru
    _

// kernel: partial_conv_net.16
$region0: #{partial_conv_net.16}
  #allocation0 [shape = 'u32[]', space=smem, size = 0x4, offset = 0x4, fixed_abs, tag = 'smem constant byte address 0x4 - core index']
  #allocation1 [shape = 'u32[144,128]{1,0:T(1,128)}', space=vmem, size = 0x12000, scoped, tag = 'internal scratch']
  %s0 = inlined_call_operand.vmem [shape: bf16[32,128], index: 0, kind: input, shape index: {}, may-alias: {0,2}]
  %s1 = inlined_call_operand.vmem [shape: f32[8,128], index: 1, kind: input, shape index: {}]
  %s2 = inlined_call_operand.vmem [shape: bf16[32,128], index: 2, kind: output, shape index: {}, may-alias: {0,2}]
  %s3 = sld [smem:[#allocation0]]
  $region18: #{partial_conv_net.16} parent=0
    _
  %s5 = ssub.s32 1, %s3
  %s6 = scalar_select 0, %s5, %s3
  // Predicated region
  $region2: #{partial_conv_net.16} parent=0 // pred_check
    _
  $region3: #{partial_conv_net.16} parent=0 // pred_check_branch
    %8 = sbr.rel (0) target = $region5
  $region4: #{partial_conv_net.16} parent=0 // pred_region
    _
  $region5: #{partial_conv_net.16} parent=0 // pred_fallthru
    _
  // Predicated region
  $region6: #{partial_conv_net.16} parent=0 // pred_check
    _
  $region7: #{partial_conv_net.16} parent=0 // pred_check_branch
    %10 = sbr.rel (0) target = $region9
  $region8: #{partial_conv_net.16} parent=0 // pred_region
    _
  $region9: #{partial_conv_net.16} parent=0 // pred_fallthru
    _
  %v11 = vld [vmem:[%s0] sm:$0xf]
  %v12 = vld [vmem:[%s0 + $0x4] sm:$0xf]
  %v13 = vld [vmem:[%s0 + $0x8] sm:$0xf]
  %v14 = vld [vmem:[%s0 + $0xc] sm:$0xf]
  %v15 = vunpack.c.l.bf16 %v11
  %v16 = vunpack.c.l.bf16 %v12
  %v17 = vunpack.c.l.bf16 %v13
  %v18 = vunpack.c.l.bf16 %v14
  %v19 = vld [vmem:[%s1] sm:$0x1]
  %v20 = vmul.f32 %v19, 0.03125
  %v21 = vld [vmem:[%s1 + $0x1] sm:$0x1]
  %v22 = vmul.f32 %v21, 0.03125
  %v23 = vmul.f32 %v20, %v20
  %v24 = vsub.f32 %v22, %v23
  %v25 = vmax.f32 %v24, 0.0
  %v26 = vlaneseq
  %v27 = vshrl.u32 %v26, 7
  %v28 = vsub.s32 0, %v27
  %v29 = vrot.slane %v20, %v28
  %v30 = vsub.f32 %v15, %v29
  %v31 = vsub.f32 %v16, %v29
  %v32 = vsub.f32 %v17, %v29
  %v33 = vsub.f32 %v18, %v29
  %v34 = vadd.f32 %v25, 1e-05
  %v35 = vrsqrt.pop %v34
  %v36 = vlaneseq
  %v37 = vshrl.u32 %v36, 7
  %v38 = vsub.s32 0, %v37
  %v39 = vrot.slane %v35, %v38
  %v40 = vmul.f32 %v30, %v39
  %v41 = vmul.f32 %v31, %v39
  %v42 = vmul.f32 %v32, %v39
  %v43 = vmul.f32 %v33, %v39
  %vm44 = vcmp.ge.f32.partialorder %v40, 0.0
  %vm45 = vcmp.ge.f32.partialorder %v41, 0.0
  %vm46 = vcmp.ge.f32.partialorder %v42, 0.0
  %vm47 = vcmp.ge.f32.partialorder %v43, 0.0
  %v48 = vmul.f32 %v40, 0.2
  %v49 = vmul.f32 %v41, 0.2
  %v50 = vmul.f32 %v42, 0.2
  %v51 = vmul.f32 %v43, 0.2
  %v52 = vsel %vm44, %v40, %v48
  %v53 = vsel %vm45, %v41, %v49
  %v54 = vsel %vm46, %v42, %v50
  %v55 = vsel %vm47, %v43, %v51
  %v56 = vpack.c.bf16 %v53, %v52
  %v57 = vpack.c.bf16 %v55, %v54
  %v60 = vunpack.c.l.b16 %v56
  %v61 = vunpack.c.h.b16 %v56
  %v62 = vunpack.c.l.b16 %v57
  %v63 = vunpack.c.h.b16 %v57
  %v64 = vpack.c.b16 %v60, %v60
  %v65 = vpack.c.b16 %v61, %v61
  %v66 = vpack.c.b16 %v62, %v62
  %v67 = vpack.c.b16 %v63, %v63
  %72 = vst [vmem:[%s2] sm:$0xf] %v64
  %73 = vst [vmem:[%s2 + $0x4] sm:$0xf] %v65
  %74 = vst [vmem:[%s2 + $0x8] sm:$0xf] %v66
  %75 = vst [vmem:[%s2 + $0xc] sm:$0xf] %v67
  // Predicated region
  $region10: #{partial_conv_net.16} parent=0 // pred_check
    _
  $region11: #{partial_conv_net.16} parent=0 // pred_check_branch
    %77 = sbr.rel (0) target = $region13
  $region12: #{partial_conv_net.16} parent=0 // pred_region
    _
  $region13: #{partial_conv_net.16} parent=0 // pred_fallthru
    _
  // Predicated region
  $region14: #{partial_conv_net.16} parent=0 // pred_check
    _
  $region15: #{partial_conv_net.16} parent=0 // pred_check_branch
    %79 = sbr.rel (0) target = $region17
  $region16: #{partial_conv_net.16} parent=0 // pred_region
    _
  $region17: #{partial_conv_net.16} parent=0 // pred_fallthru
    _

// kernel: partial_conv_net.15
$region0: #{partial_conv_net.15}
  #allocation0 [shape = 'u32[]', space=smem, size = 0x4, offset = 0x4, fixed_abs, tag = 'smem constant byte address 0x4 - core index']
  #allocation1 [shape = 'u32[144,128]{1,0:T(1,128)}', space=vmem, size = 0x12000, scoped, tag = 'internal scratch']
  %s0 = inlined_call_operand.vmem [shape: bf16[32,3456], index: 0, kind: input, shape index: {}]
  %s1 = inlined_call_operand.vmem [shape: f32[32,1], index: 1, kind: input, shape index: {}]
  %s2 = inlined_call_operand.vmem [shape: bf16[3456,128], index: 2, kind: input, shape index: {}]
  %s3 = inlined_call_operand.vmem [shape: f32[1,128], index: 3, kind: input, shape index: {}]
  %s4 = inlined_call_operand.vmem [shape: bf16[32,128], index: 4, kind: output, shape index: {0}]
  %s5 = inlined_call_operand.vmem [shape: f32[8,128], index: 5, kind: output, shape index: {1}]
  %6 = xla_tuple %s4, %s5
  %s7 = sld [smem:[#allocation0]]
  $region38: #{partial_conv_net.15} parent=0
    _
  %s9 = ssub.s32 1, %s7
  %s10 = scalar_select 0, %s9, %s7
  // Predicated region
  $region2: #{partial_conv_net.15} parent=0 // pred_check
    _
  $region3: #{partial_conv_net.15} parent=0 // pred_check_branch
    %12 = sbr.rel (0) target = $region5
  $region4: #{partial_conv_net.15} parent=0 // pred_region
    %s13 = sadd.s32 0, 0
    %s14 = smul.u32 4, %s13
    %p15 = scmp.lt.s32.totalorder %s14, 3
    %s16 = scalar_select %p15, %s14, 3
    %s17 = smul.addr %s16, 27
    %s18 = smul.addr %s17, 4
    %s19 = scalar_lea.vmem %s0, %s18
    %s20 = sadd.s32 0, 0
    %s21 = smul.u32 4, %s20
  $region5: #{partial_conv_net.15} parent=0 // pred_fallthru
    _
  // Predicated region
  $region6: #{partial_conv_net.15} parent=0 // pred_check
    _
  $region7: #{partial_conv_net.15} parent=0 // pred_check_branch
    %23 = sbr.rel (0) target = $region9
  $region8: #{partial_conv_net.15} parent=0 // pred_region
    %s24 = sadd.s32 0, 0
    %s25 = smul.u32 4, %s24
    %p26 = scmp.lt.s32.totalorder %s25, 3
    %s27 = scalar_select %p26, %s25, 3
    %s28 = smul.addr %s27, 8
    %s29 = scalar_lea.vmem %s1, %s28
    %s30 = sadd.s32 0, 0
    %s31 = smul.u32 4, %s30
  $region9: #{partial_conv_net.15} parent=0 // pred_fallthru
    _
  // Predicated region
  $region10: #{partial_conv_net.15} parent=0 // pred_check
    _
  $region11: #{partial_conv_net.15} parent=0 // pred_check_branch
    %33 = sbr.rel (0) target = $region13
  $region12: #{partial_conv_net.15} parent=0 // pred_region
    _
  $region13: #{partial_conv_net.15} parent=0 // pred_fallthru
    _
  // Predicated region
  $region14: #{partial_conv_net.15} parent=0 // pred_check
    _
  $region15: #{partial_conv_net.15} parent=0 // pred_check_branch
    %35 = sbr.rel (0) target = $region17
  $region16: #{partial_conv_net.15} parent=0 // pred_region
    _
  $region17: #{partial_conv_net.15} parent=0 // pred_fallthru
    _
  %s36 = sadd.s32 0, 0
  %s37 = smul.u32 4, %s36
  %p38 = scmp.lt.s32.totalorder %s37, 3
  %s39 = scalar_select %p38, %s37, 3
  %s40 = smul.addr %s39, 27
  %s41 = smul.addr %s40, 4
  %s42 = scalar_lea.vmem %s0, %s41
  %s43 = sadd.s32 0, 0
  %s44 = smul.u32 4, %s43
  %p45 = scmp.lt.s32.totalorder %s44, 3
  %s46 = scalar_select %p45, %s44, 3
  %s47 = smul.addr %s46, 8
  %s48 = scalar_lea.vmem %s1, %s47
  %s49 = sadd.s32 0, 0
  %s50 = smul.u32 4, %s49
  %p51 = scmp.lt.s32.totalorder %s50, 3
  %s52 = scalar_select %p51, %s50, 3
  %s53 = smul.addr %s52, 4
  %s54 = scalar_lea.vmem %s4, %s53
  %s55 = sadd.s32 0, 0
  %s56 = smul.u32 4, %s55
  %p57 = scmp.lt.s32.totalorder %s56, 3
  %s58 = scalar_select %p57, %s56, 3
  %s59 = smul.addr %s58, 27
  %s60 = smul.addr %s59, 4
  %s61 = scalar_lea.vmem %s0, %s60
  %s62 = sadd.s32 0, 0
  %s63 = smul.u32 4, %s62
  %s64 = sadd.s32 0, 0
  %s65 = smul.u32 4, %s64
  %p66 = scmp.lt.s32.totalorder %s65, 3
  %s67 = scalar_select %p66, %s65, 3
  %s68 = smul.addr %s67, 8
  %s69 = scalar_lea.vmem %s1, %s68
  %s70 = sadd.s32 0, 0
  %s71 = smul.u32 4, %s70
  %s72 = sadd.s32 0, 0
  %s73 = smul.u32 4, %s72
  %p74 = scmp.lt.s32.totalorder %s73, 3
  %s75 = scalar_select %p74, %s73, 3
  %s76 = smul.addr %s75, 4
  %s77 = scalar_lea.vmem %s4, %s76
  %s78 = sadd.s32 0, 0
  %s79 = smul.u32 4, %s78
  %v81 = vld [vmem:[%s61] sm:$0xff]
  %v82 = vld [vmem:[%s61 + $0x8] sm:$0xff]
  %v83 = vld [vmem:[%s61 + $0x10] sm:$0xff]
  %v84 = vld [vmem:[%s61 + $0x18] sm:$0xff]
  %v85 = vld [vmem:[%s61 + $0x20] sm:$0xff]
  %v86 = vld [vmem:[%s61 + $0x28] sm:$0xff]
  %v87 = vld [vmem:[%s61 + $0x30] sm:$0xff]
  %v88 = vld [vmem:[%s61 + $0x38] sm:$0xff]
  %v89 = vld [vmem:[%s61 + $0x40] sm:$0xff]
  %v90 = vld [vmem:[%s61 + $0x48] sm:$0xff]
  %v91 = vld [vmem:[%s61 + $0x50] sm:$0xff]
  %v92 = vld [vmem:[%s61 + $0x58] sm:$0xff]
  %v93 = vld [vmem:[%s61 + $0x60] sm:$0xff]
  %v94 = vld [vmem:[%s61 + $0x68] sm:$0xf]
  %v95 = vld [vmem:[%s61 + $0x6c] sm:$0xff]
  %v96 = vld [vmem:[%s61 + $0x74] sm:$0xff]
  %v97 = vld [vmem:[%s61 + $0x7c] sm:$0xff]
  %v98 = vld [vmem:[%s61 + $0x84] sm:$0xff]
  %v99 = vld [vmem:[%s61 + $0x8c] sm:$0xff]
  %v100 = vld [vmem:[%s61 + $0x94] sm:$0xff]
  %v101 = vld [vmem:[%s61 + $0x9c] sm:$0xff]
  %v102 = vld [vmem:[%s61 + $0xa4] sm:$0xff]
  %v103 = vld [vmem:[%s61 + $0xac] sm:$0xff]
  %v104 = vld [vmem:[%s61 + $0xb4] sm:$0xff]
  %v105 = vld [vmem:[%s61 + $0xbc] sm:$0xff]
  %v106 = vld [vmem:[%s61 + $0xc4] sm:$0xff]
  %v107 = vld [vmem:[%s61 + $0xcc] sm:$0xff]
  %v108 = vld [vmem:[%s61 + $0xd4] sm:$0xf]
  %v109 = vld [vmem:[%s61 + $0xd8] sm:$0xff]
  %v110 = vld [vmem:[%s61 + $0xe0] sm:$0xff]
  %v111 = vld [vmem:[%s61 + $0xe8] sm:$0xff]
  %v112 = vld [vmem:[%s61 + $0xf0] sm:$0xff]
  %v113 = vld [vmem:[%s61 + $0xf8] sm:$0xff]
  %v114 = vld [vmem:[%s61 + $0x100] sm:$0xff]
  %v115 = vld [vmem:[%s61 + $0x108] sm:$0xff]
  %v116 = vld [vmem:[%s61 + $0x110] sm:$0xff]
  %v117 = vld [vmem:[%s61 + $0x118] sm:$0xff]
  %v118 = vld [vmem:[%s61 + $0x120] sm:$0xff]
  %v119 = vld [vmem:[%s61 + $0x128] sm:$0xff]
  %v120 = vld [vmem:[%s61 + $0x130] sm:$0xff]
  %v121 = vld [vmem:[%s61 + $0x138] sm:$0xff]
  %v122 = vld [vmem:[%s61 + $0x140] sm:$0xf]
  %v123 = vld [vmem:[%s61 + $0x144] sm:$0xff]
  %v124 = vld [vmem:[%s61 + $0x14c] sm:$0xff]
  %v125 = vld [vmem:[%s61 + $0x154] sm:$0xff]
  %v126 = vld [vmem:[%s61 + $0x15c] sm:$0xff]
  %v127 = vld [vmem:[%s61 + $0x164] sm:$0xff]
  %v128 = vld [vmem:[%s61 + $0x16c] sm:$0xff]
  %v129 = vld [vmem:[%s61 + $0x174] sm:$0xff]
  %v130 = vld [vmem:[%s61 + $0x17c] sm:$0xff]
  %v131 = vld [vmem:[%s61 + $0x184] sm:$0xff]
  %v132 = vld [vmem:[%s61 + $0x18c] sm:$0xff]
  %v133 = vld [vmem:[%s61 + $0x194] sm:$0xff]
  %v134 = vld [vmem:[%s61 + $0x19c] sm:$0xff]
  %v135 = vld [vmem:[%s61 + $0x1a4] sm:$0xff]
  %v136 = vld [vmem:[%s61 + $0x1ac] sm:$0xf]
  %v137 = vld [vmem:[%s2] sm:$0xf]
  %v138 = vld [vmem:[%s2 + $0x4] sm:$0xf]
  %v139 = vld [vmem:[%s2 + $0x8] sm:$0xf]
  %v140 = vld [vmem:[%s2 + $0xc] sm:$0xf]
  %v141 = vld [vmem:[%s2 + $0x10] sm:$0xf]
  %v142 = vld [vmem:[%s2 + $0x14] sm:$0xf]
  %v143 = vld [vmem:[%s2 + $0x18] sm:$0xf]
  %v144 = vld [vmem:[%s2 + $0x1c] sm:$0xf]
  %v145 = vld [vmem:[%s2 + $0x20] sm:$0xf]
  %v146 = vld [vmem:[%s2 + $0x24] sm:$0xf]
  %v147 = vld [vmem:[%s2 + $0x28] sm:$0xf]
  %v148 = vld [vmem:[%s2 + $0x2c] sm:$0xf]
  %v149 = vld [vmem:[%s2 + $0x30] sm:$0xf]
  %v150 = vld [vmem:[%s2 + $0x34] sm:$0xf]
  %v151 = vld [vmem:[%s2 + $0x38] sm:$0xf]
  %v152 = vld [vmem:[%s2 + $0x3c] sm:$0xf]
  %v153 = vld [vmem:[%s2 + $0x40] sm:$0xf]
  %v154 = vld [vmem:[%s2 + $0x44] sm:$0xf]
  %v155 = vld [vmem:[%s2 + $0x48] sm:$0xf]
  %v156 = vld [vmem:[%s2 + $0x4c] sm:$0xf]
  %v157 = vld [vmem:[%s2 + $0x50] sm:$0xf]
  %v158 = vld [vmem:[%s2 + $0x54] sm:$0xf]
  %v159 = vld [vmem:[%s2 + $0x58] sm:$0xf]
  %v160 = vld [vmem:[%s2 + $0x5c] sm:$0xf]
  %v161 = vld [vmem:[%s2 + $0x60] sm:$0xf]
  %v162 = vld [vmem:[%s2 + $0x64] sm:$0xf]
  %v163 = vld [vmem:[%s2 + $0x68] sm:$0xf]
  %v164 = vld [vmem:[%s2 + $0x6c] sm:$0xf]
  %v165 = vld [vmem:[%s2 + $0x70] sm:$0xf]
  %v166 = vld [vmem:[%s2 + $0x74] sm:$0xf]
  %v167 = vld [vmem:[%s2 + $0x78] sm:$0xf]
  %v168 = vld [vmem:[%s2 + $0x7c] sm:$0xf]
  %v169 = vld [vmem:[%s2 + $0x80] sm:$0xf]
  %v170 = vld [vmem:[%s2 + $0x84] sm:$0xf]
  %v171 = vld [vmem:[%s2 + $0x88] sm:$0xf]
  %v172 = vld [vmem:[%s2 + $0x8c] sm:$0xf]
  %v173 = vld [vmem:[%s2 + $0x90] sm:$0xf]
  %v174 = vld [vmem:[%s2 + $0x94] sm:$0xf]
  %v175 = vld [vmem:[%s2 + $0x98] sm:$0xf]
  %v176 = vld [vmem:[%s2 + $0x9c] sm:$0xf]
  %v177 = vld [vmem:[%s2 + $0xa0] sm:$0xf]
  %v178 = vld [vmem:[%s2 + $0xa4] sm:$0xf]
  %v179 = vld [vmem:[%s2 + $0xa8] sm:$0xf]
  %v180 = vld [vmem:[%s2 + $0xac] sm:$0xf]
  %v181 = vld [vmem:[%s2 + $0xb0] sm:$0xf]
  %v182 = vld [vmem:[%s2 + $0xb4] sm:$0xf]
  %v183 = vld [vmem:[%s2 + $0xb8] sm:$0xf]
  %v184 = vld [vmem:[%s2 + $0xbc] sm:$0xf]
  %v185 = vld [vmem:[%s2 + $0xc0] sm:$0xf]
  %v186 = vld [vmem:[%s2 + $0xc4] sm:$0xf]
  %v187 = vld [vmem:[%s2 + $0xc8] sm:$0xf]
  %v188 = vld [vmem:[%s2 + $0xcc] sm:$0xf]
  %v189 = vld [vmem:[%s2 + $0xd0] sm:$0xf]
  %v190 = vld [vmem:[%s2 + $0xd4] sm:$0xf]
  %v191 = vld [vmem:[%s2 + $0xd8] sm:$0xf]
  %v192 = vld [vmem:[%s2 + $0xdc] sm:$0xf]
  %v193 = vld [vmem:[%s2 + $0xe0] sm:$0xf]
  %v194 = vld [vmem:[%s2 + $0xe4] sm:$0xf]
  %v195 = vld [vmem:[%s2 + $0xe8] sm:$0xf]
  %v196 = vld [vmem:[%s2 + $0xec] sm:$0xf]
  %v197 = vld [vmem:[%s2 + $0xf0] sm:$0xf]
  %v198 = vld [vmem:[%s2 + $0xf4] sm:$0xf]
  %v199 = vld [vmem:[%s2 + $0xf8] sm:$0xf]
  %v200 = vld [vmem:[%s2 + $0xfc] sm:$0xf]
  %v201 = vld [vmem:[%s2 + $0x100] sm:$0xf]
  %v202 = vld [vmem:[%s2 + $0x104] sm:$0xf]
  %v203 = vld [vmem:[%s2 + $0x108] sm:$0xf]
  %v204 = vld [vmem:[%s2 + $0x10c] sm:$0xf]
  %v205 = vld [vmem:[%s2 + $0x110] sm:$0xf]
  %v206 = vld [vmem:[%s2 + $0x114] sm:$0xf]
  %v207 = vld [vmem:[%s2 + $0x118] sm:$0xf]
  %v208 = vld [vmem:[%s2 + $0x11c] sm:$0xf]
  %v209 = vld [vmem:[%s2 + $0x120] sm:$0xf]
  %v210 = vld [vmem:[%s2 + $0x124] sm:$0xf]
  %v211 = vld [vmem:[%s2 + $0x128] sm:$0xf]
  %v212 = vld [vmem:[%s2 + $0x12c] sm:$0xf]
  %v213 = vld [vmem:[%s2 + $0x130] sm:$0xf]
  %v214 = vld [vmem:[%s2 + $0x134] sm:$0xf]
  %v215 = vld [vmem:[%s2 + $0x138] sm:$0xf]
  %v216 = vld [vmem:[%s2 + $0x13c] sm:$0xf]
  %v217 = vld [vmem:[%s2 + $0x140] sm:$0xf]
  %v218 = vld [vmem:[%s2 + $0x144] sm:$0xf]
  %v219 = vld [vmem:[%s2 + $0x148] sm:$0xf]
  %v220 = vld [vmem:[%s2 + $0x14c] sm:$0xf]
  %v221 = vld [vmem:[%s2 + $0x150] sm:$0xf]
  %v222 = vld [vmem:[%s2 + $0x154] sm:$0xf]
  %v223 = vld [vmem:[%s2 + $0x158] sm:$0xf]
  %v224 = vld [vmem:[%s2 + $0x15c] sm:$0xf]
  %v225 = vld [vmem:[%s2 + $0x160] sm:$0xf]
  %v226 = vld [vmem:[%s2 + $0x164] sm:$0xf]
  %v227 = vld [vmem:[%s2 + $0x168] sm:$0xf]
  %v228 = vld [vmem:[%s2 + $0x16c] sm:$0xf]
  %v229 = vld [vmem:[%s2 + $0x170] sm:$0xf]
  %v230 = vld [vmem:[%s2 + $0x174] sm:$0xf]
  %v231 = vld [vmem:[%s2 + $0x178] sm:$0xf]
  %v232 = vld [vmem:[%s2 + $0x17c] sm:$0xf]
  %v233 = vld [vmem:[%s2 + $0x180] sm:$0xf]
  %v234 = vld [vmem:[%s2 + $0x184] sm:$0xf]
  %v235 = vld [vmem:[%s2 + $0x188] sm:$0xf]
  %v236 = vld [vmem:[%s2 + $0x18c] sm:$0xf]
  %v237 = vld [vmem:[%s2 + $0x190] sm:$0xf]
  %v238 = vld [vmem:[%s2 + $0x194] sm:$0xf]
  %v239 = vld [vmem:[%s2 + $0x198] sm:$0xf]
  %v240 = vld [vmem:[%s2 + $0x19c] sm:$0xf]
  %v241 = vld [vmem:[%s2 + $0x1a0] sm:$0xf]
  %v242 = vld [vmem:[%s2 + $0x1a4] sm:$0xf]
  %v243 = vld [vmem:[%s2 + $0x1a8] sm:$0xf]
  %v244 = vld [vmem:[%s2 + $0x1ac] sm:$0xf]
  %v245 = vld [vmem:[%s2 + $0x1b0] sm:$0xf]
  %v246 = vld [vmem:[%s2 + $0x1b4] sm:$0xf]
  %v247 = vld [vmem:[%s2 + $0x1b8] sm:$0xf]
  %v248 = vld [vmem:[%s2 + $0x1bc] sm:$0xf]
  %v249 = vld [vmem:[%s2 + $0x1c0] sm:$0xf]
  %v250 = vld [vmem:[%s2 + $0x1c4] sm:$0xf]
  %v251 = vld [vmem:[%s2 + $0x1c8] sm:$0xf]
  %v252 = vld [vmem:[%s2 + $0x1cc] sm:$0xf]
  %v253 = vld [vmem:[%s2 + $0x1d0] sm:$0xf]
  %v254 = vld [vmem:[%s2 + $0x1d4] sm:$0xf]
  %v255 = vld [vmem:[%s2 + $0x1d8] sm:$0xf]
  %v256 = vld [vmem:[%s2 + $0x1dc] sm:$0xf]
  %v257 = vld [vmem:[%s2 + $0x1e0] sm:$0xf]
  %v258 = vld [vmem:[%s2 + $0x1e4] sm:$0xf]
  %v259 = vld [vmem:[%s2 + $0x1e8] sm:$0xf]
  %v260 = vld [vmem:[%s2 + $0x1ec] sm:$0xf]
  %v261 = vld [vmem:[%s2 + $0x1f0] sm:$0xf]
  %v262 = vld [vmem:[%s2 + $0x1f4] sm:$0xf]
  %v263 = vld [vmem:[%s2 + $0x1f8] sm:$0xf]
  %v264 = vld [vmem:[%s2 + $0x1fc] sm:$0xf]
  %v265 = vld [vmem:[%s2 + $0x200] sm:$0xf]
  %v266 = vld [vmem:[%s2 + $0x204] sm:$0xf]
  %v267 = vld [vmem:[%s2 + $0x208] sm:$0xf]
  %v268 = vld [vmem:[%s2 + $0x20c] sm:$0xf]
  %v269 = vld [vmem:[%s2 + $0x210] sm:$0xf]
  %v270 = vld [vmem:[%s2 + $0x214] sm:$0xf]
  %v271 = vld [vmem:[%s2 + $0x218] sm:$0xf]
  %v272 = vld [vmem:[%s2 + $0x21c] sm:$0xf]
  %v273 = vld [vmem:[%s2 + $0x220] sm:$0xf]
  %v274 = vld [vmem:[%s2 + $0x224] sm:$0xf]
  %v275 = vld [vmem:[%s2 + $0x228] sm:$0xf]
  %v276 = vld [vmem:[%s2 + $0x22c] sm:$0xf]
  %v277 = vld [vmem:[%s2 + $0x230] sm:$0xf]
  %v278 = vld [vmem:[%s2 + $0x234] sm:$0xf]
  %v279 = vld [vmem:[%s2 + $0x238] sm:$0xf]
  %v280 = vld [vmem:[%s2 + $0x23c] sm:$0xf]
  %v281 = vld [vmem:[%s2 + $0x240] sm:$0xf]
  %v282 = vld [vmem:[%s2 + $0x244] sm:$0xf]
  %v283 = vld [vmem:[%s2 + $0x248] sm:$0xf]
  %v284 = vld [vmem:[%s2 + $0x24c] sm:$0xf]
  %v285 = vld [vmem:[%s2 + $0x250] sm:$0xf]
  %v286 = vld [vmem:[%s2 + $0x254] sm:$0xf]
  %v287 = vld [vmem:[%s2 + $0x258] sm:$0xf]
  %v288 = vld [vmem:[%s2 + $0x25c] sm:$0xf]
  %v289 = vld [vmem:[%s2 + $0x260] sm:$0xf]
  %v290 = vld [vmem:[%s2 + $0x264] sm:$0xf]
  %v291 = vld [vmem:[%s2 + $0x268] sm:$0xf]
  %v292 = vld [vmem:[%s2 + $0x26c] sm:$0xf]
  %v293 = vld [vmem:[%s2 + $0x270] sm:$0xf]
  %v294 = vld [vmem:[%s2 + $0x274] sm:$0xf]
  %v295 = vld [vmem:[%s2 + $0x278] sm:$0xf]
  %v296 = vld [vmem:[%s2 + $0x27c] sm:$0xf]
  %v297 = vld [vmem:[%s2 + $0x280] sm:$0xf]
  %v298 = vld [vmem:[%s2 + $0x284] sm:$0xf]
  %v299 = vld [vmem:[%s2 + $0x288] sm:$0xf]
  %v300 = vld [vmem:[%s2 + $0x28c] sm:$0xf]
  %v301 = vld [vmem:[%s2 + $0x290] sm:$0xf]
  %v302 = vld [vmem:[%s2 + $0x294] sm:$0xf]
  %v303 = vld [vmem:[%s2 + $0x298] sm:$0xf]
  %v304 = vld [vmem:[%s2 + $0x29c] sm:$0xf]
  %v305 = vld [vmem:[%s2 + $0x2a0] sm:$0xf]
  %v306 = vld [vmem:[%s2 + $0x2a4] sm:$0xf]
  %v307 = vld [vmem:[%s2 + $0x2a8] sm:$0xf]
  %v308 = vld [vmem:[%s2 + $0x2ac] sm:$0xf]
  %v309 = vld [vmem:[%s2 + $0x2b0] sm:$0xf]
  %v310 = vld [vmem:[%s2 + $0x2b4] sm:$0xf]
  %v311 = vld [vmem:[%s2 + $0x2b8] sm:$0xf]
  %v312 = vld [vmem:[%s2 + $0x2bc] sm:$0xf]
  %v313 = vld [vmem:[%s2 + $0x2c0] sm:$0xf]
  %v314 = vld [vmem:[%s2 + $0x2c4] sm:$0xf]
  %v315 = vld [vmem:[%s2 + $0x2c8] sm:$0xf]
  %v316 = vld [vmem:[%s2 + $0x2cc] sm:$0xf]
  %v317 = vld [vmem:[%s2 + $0x2d0] sm:$0xf]
  %v318 = vld [vmem:[%s2 + $0x2d4] sm:$0xf]
  %v319 = vld [vmem:[%s2 + $0x2d8] sm:$0xf]
  %v320 = vld [vmem:[%s2 + $0x2dc] sm:$0xf]
  %v321 = vld [vmem:[%s2 + $0x2e0] sm:$0xf]
  %v322 = vld [vmem:[%s2 + $0x2e4] sm:$0xf]
  %v323 = vld [vmem:[%s2 + $0x2e8] sm:$0xf]
  %v324 = vld [vmem:[%s2 + $0x2ec] sm:$0xf]
  %v325 = vld [vmem:[%s2 + $0x2f0] sm:$0xf]
  %v326 = vld [vmem:[%s2 + $0x2f4] sm:$0xf]
  %v327 = vld [vmem:[%s2 + $0x2f8] sm:$0xf]
  %v328 = vld [vmem:[%s2 + $0x2fc] sm:$0xf]
  %v329 = vld [vmem:[%s2 + $0x300] sm:$0xf]
  %v330 = vld [vmem:[%s2 + $0x304] sm:$0xf]
  %v331 = vld [vmem:[%s2 + $0x308] sm:$0xf]
  %v332 = vld [vmem:[%s2 + $0x30c] sm:$0xf]
  %v333 = vld [vmem:[%s2 + $0x310] sm:$0xf]
  %v334 = vld [vmem:[%s2 + $0x314] sm:$0xf]
  %v335 = vld [vmem:[%s2 + $0x318] sm:$0xf]
  %v336 = vld [vmem:[%s2 + $0x31c] sm:$0xf]
  %v337 = vld [vmem:[%s2 + $0x320] sm:$0xf]
  %v338 = vld [vmem:[%s2 + $0x324] sm:$0xf]
  %v339 = vld [vmem:[%s2 + $0x328] sm:$0xf]
  %v340 = vld [vmem:[%s2 + $0x32c] sm:$0xf]
  %v341 = vld [vmem:[%s2 + $0x330] sm:$0xf]
  %v342 = vld [vmem:[%s2 + $0x334] sm:$0xf]
  %v343 = vld [vmem:[%s2 + $0x338] sm:$0xf]
  %v344 = vld [vmem:[%s2 + $0x33c] sm:$0xf]
  %v345 = vld [vmem:[%s2 + $0x340] sm:$0xf]
  %v346 = vld [vmem:[%s2 + $0x344] sm:$0xf]
  %v347 = vld [vmem:[%s2 + $0x348] sm:$0xf]
  %v348 = vld [vmem:[%s2 + $0x34c] sm:$0xf]
  %v349 = vld [vmem:[%s2 + $0x350] sm:$0xf]
  %v350 = vld [vmem:[%s2 + $0x354] sm:$0xf]
  %v351 = vld [vmem:[%s2 + $0x358] sm:$0xf]
  %v352 = vld [vmem:[%s2 + $0x35c] sm:$0xf]
  %v353 = vld [vmem:[%s2 + $0x360] sm:$0xf]
  %v354 = vld [vmem:[%s2 + $0x364] sm:$0xf]
  %v355 = vld [vmem:[%s2 + $0x368] sm:$0xf]
  %v356 = vld [vmem:[%s2 + $0x36c] sm:$0xf]
  %v357 = vld [vmem:[%s2 + $0x370] sm:$0xf]
  %v358 = vld [vmem:[%s2 + $0x374] sm:$0xf]
  %v359 = vld [vmem:[%s2 + $0x378] sm:$0xf]
  %v360 = vld [vmem:[%s2 + $0x37c] sm:$0xf]
  %v361 = vld [vmem:[%s2 + $0x380] sm:$0xf]
  %v362 = vld [vmem:[%s2 + $0x384] sm:$0xf]
  %v363 = vld [vmem:[%s2 + $0x388] sm:$0xf]
  %v364 = vld [vmem:[%s2 + $0x38c] sm:$0xf]
  %v365 = vld [vmem:[%s2 + $0x390] sm:$0xf]
  %v366 = vld [vmem:[%s2 + $0x394] sm:$0xf]
  %v367 = vld [vmem:[%s2 + $0x398] sm:$0xf]
  %v368 = vld [vmem:[%s2 + $0x39c] sm:$0xf]
  %v369 = vld [vmem:[%s2 + $0x3a0] sm:$0xf]
  %v370 = vld [vmem:[%s2 + $0x3a4] sm:$0xf]
  %v371 = vld [vmem:[%s2 + $0x3a8] sm:$0xf]
  %v372 = vld [vmem:[%s2 + $0x3ac] sm:$0xf]
  %v373 = vld [vmem:[%s2 + $0x3b0] sm:$0xf]
  %v374 = vld [vmem:[%s2 + $0x3b4] sm:$0xf]
  %v375 = vld [vmem:[%s2 + $0x3b8] sm:$0xf]
  %v376 = vld [vmem:[%s2 + $0x3bc] sm:$0xf]
  %v377 = vld [vmem:[%s2 + $0x3c0] sm:$0xf]
  %v378 = vld [vmem:[%s2 + $0x3c4] sm:$0xf]
  %v379 = vld [vmem:[%s2 + $0x3c8] sm:$0xf]
  %v380 = vld [vmem:[%s2 + $0x3cc] sm:$0xf]
  %v381 = vld [vmem:[%s2 + $0x3d0] sm:$0xf]
  %v382 = vld [vmem:[%s2 + $0x3d4] sm:$0xf]
  %v383 = vld [vmem:[%s2 + $0x3d8] sm:$0xf]
  %v384 = vld [vmem:[%s2 + $0x3dc] sm:$0xf]
  %v385 = vld [vmem:[%s2 + $0x3e0] sm:$0xf]
  %v386 = vld [vmem:[%s2 + $0x3e4] sm:$0xf]
  %v387 = vld [vmem:[%s2 + $0x3e8] sm:$0xf]
  %v388 = vld [vmem:[%s2 + $0x3ec] sm:$0xf]
  %v389 = vld [vmem:[%s2 + $0x3f0] sm:$0xf]
  %v390 = vld [vmem:[%s2 + $0x3f4] sm:$0xf]
  %v391 = vld [vmem:[%s2 + $0x3f8] sm:$0xf]
  %v392 = vld [vmem:[%s2 + $0x3fc] sm:$0xf]
  %v393 = vld [vmem:[%s2 + $0x400] sm:$0xf]
  %v394 = vld [vmem:[%s2 + $0x404] sm:$0xf]
  %v395 = vld [vmem:[%s2 + $0x408] sm:$0xf]
  %v396 = vld [vmem:[%s2 + $0x40c] sm:$0xf]
  %v397 = vld [vmem:[%s2 + $0x410] sm:$0xf]
  %v398 = vld [vmem:[%s2 + $0x414] sm:$0xf]
  %v399 = vld [vmem:[%s2 + $0x418] sm:$0xf]
  %v400 = vld [vmem:[%s2 + $0x41c] sm:$0xf]
  %v401 = vld [vmem:[%s2 + $0x420] sm:$0xf]
  %v402 = vld [vmem:[%s2 + $0x424] sm:$0xf]
  %v403 = vld [vmem:[%s2 + $0x428] sm:$0xf]
  %v404 = vld [vmem:[%s2 + $0x42c] sm:$0xf]
  %v405 = vld [vmem:[%s2 + $0x430] sm:$0xf]
  %v406 = vld [vmem:[%s2 + $0x434] sm:$0xf]
  %v407 = vld [vmem:[%s2 + $0x438] sm:$0xf]
  %v408 = vld [vmem:[%s2 + $0x43c] sm:$0xf]
  %v409 = vld [vmem:[%s2 + $0x440] sm:$0xf]
  %v410 = vld [vmem:[%s2 + $0x444] sm:$0xf]
  %v411 = vld [vmem:[%s2 + $0x448] sm:$0xf]
  %v412 = vld [vmem:[%s2 + $0x44c] sm:$0xf]
  %v413 = vld [vmem:[%s2 + $0x450] sm:$0xf]
  %v414 = vld [vmem:[%s2 + $0x454] sm:$0xf]
  %v415 = vld [vmem:[%s2 + $0x458] sm:$0xf]
  %v416 = vld [vmem:[%s2 + $0x45c] sm:$0xf]
  %v417 = vld [vmem:[%s2 + $0x460] sm:$0xf]
  %v418 = vld [vmem:[%s2 + $0x464] sm:$0xf]
  %v419 = vld [vmem:[%s2 + $0x468] sm:$0xf]
  %v420 = vld [vmem:[%s2 + $0x46c] sm:$0xf]
  %v421 = vld [vmem:[%s2 + $0x470] sm:$0xf]
  %v422 = vld [vmem:[%s2 + $0x474] sm:$0xf]
  %v423 = vld [vmem:[%s2 + $0x478] sm:$0xf]
  %v424 = vld [vmem:[%s2 + $0x47c] sm:$0xf]
  %v425 = vld [vmem:[%s2 + $0x480] sm:$0xf]
  %v426 = vld [vmem:[%s2 + $0x484] sm:$0xf]
  %v427 = vld [vmem:[%s2 + $0x488] sm:$0xf]
  %v428 = vld [vmem:[%s2 + $0x48c] sm:$0xf]
  %v429 = vld [vmem:[%s2 + $0x490] sm:$0xf]
  %v430 = vld [vmem:[%s2 + $0x494] sm:$0xf]
  %v431 = vld [vmem:[%s2 + $0x498] sm:$0xf]
  %v432 = vld [vmem:[%s2 + $0x49c] sm:$0xf]
  %v433 = vld [vmem:[%s2 + $0x4a0] sm:$0xf]
  %v434 = vld [vmem:[%s2 + $0x4a4] sm:$0xf]
  %v435 = vld [vmem:[%s2 + $0x4a8] sm:$0xf]
  %v436 = vld [vmem:[%s2 + $0x4ac] sm:$0xf]
  %v437 = vld [vmem:[%s2 + $0x4b0] sm:$0xf]
  %v438 = vld [vmem:[%s2 + $0x4b4] sm:$0xf]
  %v439 = vld [vmem:[%s2 + $0x4b8] sm:$0xf]
  %v440 = vld [vmem:[%s2 + $0x4bc] sm:$0xf]
  %v441 = vld [vmem:[%s2 + $0x4c0] sm:$0xf]
  %v442 = vld [vmem:[%s2 + $0x4c4] sm:$0xf]
  %v443 = vld [vmem:[%s2 + $0x4c8] sm:$0xf]
  %v444 = vld [vmem:[%s2 + $0x4cc] sm:$0xf]
  %v445 = vld [vmem:[%s2 + $0x4d0] sm:$0xf]
  %v446 = vld [vmem:[%s2 + $0x4d4] sm:$0xf]
  %v447 = vld [vmem:[%s2 + $0x4d8] sm:$0xf]
  %v448 = vld [vmem:[%s2 + $0x4dc] sm:$0xf]
  %v449 = vld [vmem:[%s2 + $0x4e0] sm:$0xf]
  %v450 = vld [vmem:[%s2 + $0x4e4] sm:$0xf]
  %v451 = vld [vmem:[%s2 + $0x4e8] sm:$0xf]
  %v452 = vld [vmem:[%s2 + $0x4ec] sm:$0xf]
  %v453 = vld [vmem:[%s2 + $0x4f0] sm:$0xf]
  %v454 = vld [vmem:[%s2 + $0x4f4] sm:$0xf]
  %v455 = vld [vmem:[%s2 + $0x4f8] sm:$0xf]
  %v456 = vld [vmem:[%s2 + $0x4fc] sm:$0xf]
  %v457 = vld [vmem:[%s2 + $0x500] sm:$0xf]
  %v458 = vld [vmem:[%s2 + $0x504] sm:$0xf]
  %v459 = vld [vmem:[%s2 + $0x508] sm:$0xf]
  %v460 = vld [vmem:[%s2 + $0x50c] sm:$0xf]
  %v461 = vld [vmem:[%s2 + $0x510] sm:$0xf]
  %v462 = vld [vmem:[%s2 + $0x514] sm:$0xf]
  %v463 = vld [vmem:[%s2 + $0x518] sm:$0xf]
  %v464 = vld [vmem:[%s2 + $0x51c] sm:$0xf]
  %v465 = vld [vmem:[%s2 + $0x520] sm:$0xf]
  %v466 = vld [vmem:[%s2 + $0x524] sm:$0xf]
  %v467 = vld [vmem:[%s2 + $0x528] sm:$0xf]
  %v468 = vld [vmem:[%s2 + $0x52c] sm:$0xf]
  %v469 = vld [vmem:[%s2 + $0x530] sm:$0xf]
  %v470 = vld [vmem:[%s2 + $0x534] sm:$0xf]
  %v471 = vld [vmem:[%s2 + $0x538] sm:$0xf]
  %v472 = vld [vmem:[%s2 + $0x53c] sm:$0xf]
  %v473 = vld [vmem:[%s2 + $0x540] sm:$0xf]
  %v474 = vld [vmem:[%s2 + $0x544] sm:$0xf]
  %v475 = vld [vmem:[%s2 + $0x548] sm:$0xf]
  %v476 = vld [vmem:[%s2 + $0x54c] sm:$0xf]
  %v477 = vld [vmem:[%s2 + $0x550] sm:$0xf]
  %v478 = vld [vmem:[%s2 + $0x554] sm:$0xf]
  %v479 = vld [vmem:[%s2 + $0x558] sm:$0xf]
  %v480 = vld [vmem:[%s2 + $0x55c] sm:$0xf]
  %v481 = vld [vmem:[%s2 + $0x560] sm:$0xf]
  %v482 = vld [vmem:[%s2 + $0x564] sm:$0xf]
  %v483 = vld [vmem:[%s2 + $0x568] sm:$0xf]
  %v484 = vld [vmem:[%s2 + $0x56c] sm:$0xf]
  %v485 = vld [vmem:[%s2 + $0x570] sm:$0xf]
  %v486 = vld [vmem:[%s2 + $0x574] sm:$0xf]
  %v487 = vld [vmem:[%s2 + $0x578] sm:$0xf]
  %v488 = vld [vmem:[%s2 + $0x57c] sm:$0xf]
  %v489 = vld [vmem:[%s2 + $0x580] sm:$0xf]
  %v490 = vld [vmem:[%s2 + $0x584] sm:$0xf]
  %v491 = vld [vmem:[%s2 + $0x588] sm:$0xf]
  %v492 = vld [vmem:[%s2 + $0x58c] sm:$0xf]
  %v493 = vld [vmem:[%s2 + $0x590] sm:$0xf]
  %v494 = vld [vmem:[%s2 + $0x594] sm:$0xf]
  %v495 = vld [vmem:[%s2 + $0x598] sm:$0xf]
  %v496 = vld [vmem:[%s2 + $0x59c] sm:$0xf]
  %v497 = vld [vmem:[%s2 + $0x5a0] sm:$0xf]
  %v498 = vld [vmem:[%s2 + $0x5a4] sm:$0xf]
  %v499 = vld [vmem:[%s2 + $0x5a8] sm:$0xf]
  %v500 = vld [vmem:[%s2 + $0x5ac] sm:$0xf]
  %v501 = vld [vmem:[%s2 + $0x5b0] sm:$0xf]
  %v502 = vld [vmem:[%s2 + $0x5b4] sm:$0xf]
  %v503 = vld [vmem:[%s2 + $0x5b8] sm:$0xf]
  %v504 = vld [vmem:[%s2 + $0x5bc] sm:$0xf]
  %v505 = vld [vmem:[%s2 + $0x5c0] sm:$0xf]
  %v506 = vld [vmem:[%s2 + $0x5c4] sm:$0xf]
  %v507 = vld [vmem:[%s2 + $0x5c8] sm:$0xf]
  %v508 = vld [vmem:[%s2 + $0x5cc] sm:$0xf]
  %v509 = vld [vmem:[%s2 + $0x5d0] sm:$0xf]
  %v510 = vld [vmem:[%s2 + $0x5d4] sm:$0xf]
  %v511 = vld [vmem:[%s2 + $0x5d8] sm:$0xf]
  %v512 = vld [vmem:[%s2 + $0x5dc] sm:$0xf]
  %v513 = vld [vmem:[%s2 + $0x5e0] sm:$0xf]
  %v514 = vld [vmem:[%s2 + $0x5e4] sm:$0xf]
  %v515 = vld [vmem:[%s2 + $0x5e8] sm:$0xf]
  %v516 = vld [vmem:[%s2 + $0x5ec] sm:$0xf]
  %v517 = vld [vmem:[%s2 + $0x5f0] sm:$0xf]
  %v518 = vld [vmem:[%s2 + $0x5f4] sm:$0xf]
  %v519 = vld [vmem:[%s2 + $0x5f8] sm:$0xf]
  %v520 = vld [vmem:[%s2 + $0x5fc] sm:$0xf]
  %v521 = vld [vmem:[%s2 + $0x600] sm:$0xf]
  %v522 = vld [vmem:[%s2 + $0x604] sm:$0xf]
  %v523 = vld [vmem:[%s2 + $0x608] sm:$0xf]
  %v524 = vld [vmem:[%s2 + $0x60c] sm:$0xf]
  %v525 = vld [vmem:[%s2 + $0x610] sm:$0xf]
  %v526 = vld [vmem:[%s2 + $0x614] sm:$0xf]
  %v527 = vld [vmem:[%s2 + $0x618] sm:$0xf]
  %v528 = vld [vmem:[%s2 + $0x61c] sm:$0xf]
  %v529 = vld [vmem:[%s2 + $0x620] sm:$0xf]
  %v530 = vld [vmem:[%s2 + $0x624] sm:$0xf]
  %v531 = vld [vmem:[%s2 + $0x628] sm:$0xf]
  %v532 = vld [vmem:[%s2 + $0x62c] sm:$0xf]
  %v533 = vld [vmem:[%s2 + $0x630] sm:$0xf]
  %v534 = vld [vmem:[%s2 + $0x634] sm:$0xf]
  %v535 = vld [vmem:[%s2 + $0x638] sm:$0xf]
  %v536 = vld [vmem:[%s2 + $0x63c] sm:$0xf]
  %v537 = vld [vmem:[%s2 + $0x640] sm:$0xf]
  %v538 = vld [vmem:[%s2 + $0x644] sm:$0xf]
  %v539 = vld [vmem:[%s2 + $0x648] sm:$0xf]
  %v540 = vld [vmem:[%s2 + $0x64c] sm:$0xf]
  %v541 = vld [vmem:[%s2 + $0x650] sm:$0xf]
  %v542 = vld [vmem:[%s2 + $0x654] sm:$0xf]
  %v543 = vld [vmem:[%s2 + $0x658] sm:$0xf]
  %v544 = vld [vmem:[%s2 + $0x65c] sm:$0xf]
  %v545 = vld [vmem:[%s2 + $0x660] sm:$0xf]
  %v546 = vld [vmem:[%s2 + $0x664] sm:$0xf]
  %v547 = vld [vmem:[%s2 + $0x668] sm:$0xf]
  %v548 = vld [vmem:[%s2 + $0x66c] sm:$0xf]
  %v549 = vld [vmem:[%s2 + $0x670] sm:$0xf]
  %v550 = vld [vmem:[%s2 + $0x674] sm:$0xf]
  %v551 = vld [vmem:[%s2 + $0x678] sm:$0xf]
  %v552 = vld [vmem:[%s2 + $0x67c] sm:$0xf]
  %v553 = vld [vmem:[%s2 + $0x680] sm:$0xf]
  %v554 = vld [vmem:[%s2 + $0x684] sm:$0xf]
  %v555 = vld [vmem:[%s2 + $0x688] sm:$0xf]
  %v556 = vld [vmem:[%s2 + $0x68c] sm:$0xf]
  %v557 = vld [vmem:[%s2 + $0x690] sm:$0xf]
  %v558 = vld [vmem:[%s2 + $0x694] sm:$0xf]
  %v559 = vld [vmem:[%s2 + $0x698] sm:$0xf]
  %v560 = vld [vmem:[%s2 + $0x69c] sm:$0xf]
  %v561 = vld [vmem:[%s2 + $0x6a0] sm:$0xf]
  %v562 = vld [vmem:[%s2 + $0x6a4] sm:$0xf]
  %v563 = vld [vmem:[%s2 + $0x6a8] sm:$0xf]
  %v564 = vld [vmem:[%s2 + $0x6ac] sm:$0xf]
  %v565 = vld [vmem:[%s2 + $0x6b0] sm:$0xf]
  %v566 = vld [vmem:[%s2 + $0x6b4] sm:$0xf]
  %v567 = vld [vmem:[%s2 + $0x6b8] sm:$0xf]
  %v568 = vld [vmem:[%s2 + $0x6bc] sm:$0xf]
  %v625 = vunpack.c.l.b16 %v81
  %v626 = vunpack.c.h.b16 %v81
  %v627 = vunpack.c.l.b16 %v82
  %v628 = vunpack.c.h.b16 %v82
  %v629 = vunpack.c.l.b16 %v83
  %v630 = vunpack.c.h.b16 %v83
  %v631 = vunpack.c.l.b16 %v84
  %v632 = vunpack.c.h.b16 %v84
  %v633 = vunpack.c.l.b16 %v85
  %v634 = vunpack.c.h.b16 %v85
  %v635 = vunpack.c.l.b16 %v86
  %v636 = vunpack.c.h.b16 %v86
  %v637 = vunpack.c.l.b16 %v87
  %v638 = vunpack.c.h.b16 %v87
  %v639 = vunpack.c.l.b16 %v88
  %v640 = vunpack.c.h.b16 %v88
  %v641 = vunpack.c.l.b16 %v89
  %v642 = vunpack.c.h.b16 %v89
  %v643 = vunpack.c.l.b16 %v90
  %v644 = vunpack.c.h.b16 %v90
  %v645 = vunpack.c.l.b16 %v91
  %v646 = vunpack.c.h.b16 %v91
  %v647 = vunpack.c.l.b16 %v92
  %v648 = vunpack.c.h.b16 %v92
  %v649 = vunpack.c.l.b16 %v93
  %v650 = vunpack.c.h.b16 %v93
  %v651 = vunpack.c.l.b16 %v94
  %v652 = vunpack.c.l.b16 %v95
  %v653 = vunpack.c.h.b16 %v95
  %v654 = vunpack.c.l.b16 %v96
  %v655 = vunpack.c.h.b16 %v96
  %v656 = vunpack.c.l.b16 %v97
  %v657 = vunpack.c.h.b16 %v97
  %v658 = vunpack.c.l.b16 %v98
  %v659 = vunpack.c.h.b16 %v98
  %v660 = vunpack.c.l.b16 %v99
  %v661 = vunpack.c.h.b16 %v99
  %v662 = vunpack.c.l.b16 %v100
  %v663 = vunpack.c.h.b16 %v100
  %v664 = vunpack.c.l.b16 %v101
  %v665 = vunpack.c.h.b16 %v101
  %v666 = vunpack.c.l.b16 %v102
  %v667 = vunpack.c.h.b16 %v102
  %v668 = vunpack.c.l.b16 %v103
  %v669 = vunpack.c.h.b16 %v103
  %v670 = vunpack.c.l.b16 %v104
  %v671 = vunpack.c.h.b16 %v104
  %v672 = vunpack.c.l.b16 %v105
  %v673 = vunpack.c.h.b16 %v105
  %v674 = vunpack.c.l.b16 %v106
  %v675 = vunpack.c.h.b16 %v106
  %v676 = vunpack.c.l.b16 %v107
  %v677 = vunpack.c.h.b16 %v107
  %v678 = vunpack.c.l.b16 %v108
  %v679 = vunpack.c.l.b16 %v109
  %v680 = vunpack.c.h.b16 %v109
  %v681 = vunpack.c.l.b16 %v110
  %v682 = vunpack.c.h.b16 %v110
  %v683 = vunpack.c.l.b16 %v111
  %v684 = vunpack.c.h.b16 %v111
  %v685 = vunpack.c.l.b16 %v112
  %v686 = vunpack.c.h.b16 %v112
  %v687 = vunpack.c.l.b16 %v113
  %v688 = vunpack.c.h.b16 %v113
  %v689 = vunpack.c.l.b16 %v114
  %v690 = vunpack.c.h.b16 %v114
  %v691 = vunpack.c.l.b16 %v115
  %v692 = vunpack.c.h.b16 %v115
  %v693 = vunpack.c.l.b16 %v116
  %v694 = vunpack.c.h.b16 %v116
  %v695 = vunpack.c.l.b16 %v117
  %v696 = vunpack.c.h.b16 %v117
  %v697 = vunpack.c.l.b16 %v118
  %v698 = vunpack.c.h.b16 %v118
  %v699 = vunpack.c.l.b16 %v119
  %v700 = vunpack.c.h.b16 %v119
  %v701 = vunpack.c.l.b16 %v120
  %v702 = vunpack.c.h.b16 %v120
  %v703 = vunpack.c.l.b16 %v121
  %v704 = vunpack.c.h.b16 %v121
  %v705 = vunpack.c.l.b16 %v122
  %v706 = vunpack.c.l.b16 %v123
  %v707 = vunpack.c.h.b16 %v123
  %v708 = vunpack.c.l.b16 %v124
  %v709 = vunpack.c.h.b16 %v124
  %v710 = vunpack.c.l.b16 %v125
  %v711 = vunpack.c.h.b16 %v125
  %v712 = vunpack.c.l.b16 %v126
  %v713 = vunpack.c.h.b16 %v126
  %v714 = vunpack.c.l.b16 %v127
  %v715 = vunpack.c.h.b16 %v127
  %v716 = vunpack.c.l.b16 %v128
  %v717 = vunpack.c.h.b16 %v128
  %v718 = vunpack.c.l.b16 %v129
  %v719 = vunpack.c.h.b16 %v129
  %v720 = vunpack.c.l.b16 %v130
  %v721 = vunpack.c.h.b16 %v130
  %v722 = vunpack.c.l.b16 %v131
  %v723 = vunpack.c.h.b16 %v131
  %v724 = vunpack.c.l.b16 %v132
  %v725 = vunpack.c.h.b16 %v132
  %v726 = vunpack.c.l.b16 %v133
  %v727 = vunpack.c.h.b16 %v133
  %v728 = vunpack.c.l.b16 %v134
  %v729 = vunpack.c.h.b16 %v134
  %v730 = vunpack.c.l.b16 %v135
  %v731 = vunpack.c.h.b16 %v135
  %v732 = vunpack.c.l.b16 %v136
  %v733 = vpack.c.b16 %v652, %v625
  %v734 = vpack.c.b16 %v653, %v626
  %v735 = vpack.c.b16 %v654, %v627
  %v736 = vpack.c.b16 %v655, %v628
  %v737 = vpack.c.b16 %v656, %v629
  %v738 = vpack.c.b16 %v657, %v630
  %v739 = vpack.c.b16 %v658, %v631
  %v740 = vpack.c.b16 %v659, %v632
  %v741 = vpack.c.b16 %v660, %v633
  %v742 = vpack.c.b16 %v661, %v634
  %v743 = vpack.c.b16 %v662, %v635
  %v744 = vpack.c.b16 %v663, %v636
  %v745 = vpack.c.b16 %v664, %v637
  %v746 = vpack.c.b16 %v665, %v638
  %v747 = vpack.c.b16 %v666, %v639
  %v748 = vpack.c.b16 %v667, %v640
  %v749 = vpack.c.b16 %v668, %v641
  %v750 = vpack.c.b16 %v669, %v642
  %v751 = vpack.c.b16 %v670, %v643
  %v752 = vpack.c.b16 %v671, %v644
  %v753 = vpack.c.b16 %v672, %v645
  %v754 = vpack.c.b16 %v673, %v646
  %v755 = vpack.c.b16 %v674, %v647
  %v756 = vpack.c.b16 %v675, %v648
  %v757 = vpack.c.b16 %v676, %v649
  %v758 = vpack.c.b16 %v677, %v650
  %v759 = vpack.c.b16 %v678, %v651
  %v760 = vpack.c.b16 %v706, %v679
  %v761 = vpack.c.b16 %v707, %v680
  %v762 = vpack.c.b16 %v708, %v681
  %v763 = vpack.c.b16 %v709, %v682
  %v764 = vpack.c.b16 %v710, %v683
  %v765 = vpack.c.b16 %v711, %v684
  %v766 = vpack.c.b16 %v712, %v685
  %v767 = vpack.c.b16 %v713, %v686
  %v768 = vpack.c.b16 %v714, %v687
  %v769 = vpack.c.b16 %v715, %v688
  %v770 = vpack.c.b16 %v716, %v689
  %v771 = vpack.c.b16 %v717, %v690
  %v772 = vpack.c.b16 %v718, %v691
  %v773 = vpack.c.b16 %v719, %v692
  %v774 = vpack.c.b16 %v720, %v693
  %v775 = vpack.c.b16 %v721, %v694
  %v776 = vpack.c.b16 %v722, %v695
  %v777 = vpack.c.b16 %v723, %v696
  %v778 = vpack.c.b16 %v724, %v697
  %v779 = vpack.c.b16 %v725, %v698
  %v780 = vpack.c.b16 %v726, %v699
  %v781 = vpack.c.b16 %v727, %v700
  %v782 = vpack.c.b16 %v728, %v701
  %v783 = vpack.c.b16 %v729, %v702
  %v784 = vpack.c.b16 %v730, %v703
  %v785 = vpack.c.b16 %v731, %v704
  %v786 = vpack.c.b16 %v732, %v705
  %v1273 = vunpack.c.l.b16 %v137
  %v1274 = vunpack.c.l.b16 %v138
  %v1275 = vunpack.c.l.b16 %v139
  %v1276 = vunpack.c.l.b16 %v140
  %v1277 = vunpack.c.l.b16 %v141
  %v1278 = vunpack.c.l.b16 %v142
  %v1279 = vunpack.c.l.b16 %v143
  %v1280 = vunpack.c.l.b16 %v144
  %v1281 = vunpack.c.l.b16 %v145
  %v1282 = vunpack.c.l.b16 %v146
  %v1283 = vunpack.c.l.b16 %v147
  %v1284 = vunpack.c.l.b16 %v148
  %v1285 = vunpack.c.l.b16 %v149
  %v1286 = vunpack.c.l.b16 %v150
  %v1287 = vunpack.c.l.b16 %v151
  %v1288 = vunpack.c.l.b16 %v152
  %v1289 = vunpack.c.l.b16 %v153
  %v1290 = vunpack.c.l.b16 %v154
  %v1291 = vunpack.c.l.b16 %v155
  %v1292 = vunpack.c.l.b16 %v156
  %v1293 = vunpack.c.l.b16 %v157
  %v1294 = vunpack.c.l.b16 %v158
  %v1295 = vunpack.c.l.b16 %v159
  %v1296 = vunpack.c.l.b16 %v160
  %v1297 = vunpack.c.l.b16 %v161
  %v1298 = vunpack.c.l.b16 %v162
  %v1299 = vunpack.c.l.b16 %v163
  %v1300 = vunpack.c.l.b16 %v164
  %v1301 = vunpack.c.l.b16 %v165
  %v1302 = vunpack.c.l.b16 %v166
  %v1303 = vunpack.c.l.b16 %v167
  %v1304 = vunpack.c.l.b16 %v168
  %v1305 = vunpack.c.l.b16 %v169
  %v1306 = vunpack.c.l.b16 %v170
  %v1307 = vunpack.c.l.b16 %v171
  %v1308 = vunpack.c.l.b16 %v172
  %v1309 = vunpack.c.l.b16 %v173
  %v1310 = vunpack.c.l.b16 %v174
  %v1311 = vunpack.c.l.b16 %v175
  %v1312 = vunpack.c.l.b16 %v176
  %v1313 = vunpack.c.l.b16 %v177
  %v1314 = vunpack.c.l.b16 %v178
  %v1315 = vunpack.c.l.b16 %v179
  %v1316 = vunpack.c.l.b16 %v180
  %v1317 = vunpack.c.l.b16 %v181
  %v1318 = vunpack.c.l.b16 %v182
  %v1319 = vunpack.c.l.b16 %v183
  %v1320 = vunpack.c.l.b16 %v184
  %v1321 = vunpack.c.l.b16 %v185
  %v1322 = vunpack.c.l.b16 %v186
  %v1323 = vunpack.c.l.b16 %v187
  %v1324 = vunpack.c.l.b16 %v188
  %v1325 = vunpack.c.l.b16 %v189
  %v1326 = vunpack.c.l.b16 %v190
  %v1327 = vunpack.c.l.b16 %v191
  %v1328 = vunpack.c.l.b16 %v192
  %v1329 = vunpack.c.l.b16 %v193
  %v1330 = vunpack.c.l.b16 %v194
  %v1331 = vunpack.c.l.b16 %v195
  %v1332 = vunpack.c.l.b16 %v196
  %v1333 = vunpack.c.l.b16 %v197
  %v1334 = vunpack.c.l.b16 %v198
  %v1335 = vunpack.c.l.b16 %v199
  %v1336 = vunpack.c.l.b16 %v200
  %v1337 = vunpack.c.l.b16 %v201
  %v1338 = vunpack.c.l.b16 %v202
  %v1339 = vunpack.c.l.b16 %v203
  %v1340 = vunpack.c.l.b16 %v204
  %v1341 = vunpack.c.l.b16 %v205
  %v1342 = vunpack.c.l.b16 %v206
  %v1343 = vunpack.c.l.b16 %v207
  %v1344 = vunpack.c.l.b16 %v208
  %v1345 = vunpack.c.l.b16 %v209
  %v1346 = vunpack.c.l.b16 %v210
  %v1347 = vunpack.c.l.b16 %v211
  %v1348 = vunpack.c.l.b16 %v212
  %v1349 = vunpack.c.l.b16 %v213
  %v1350 = vunpack.c.l.b16 %v214
  %v1351 = vunpack.c.l.b16 %v215
  %v1352 = vunpack.c.l.b16 %v216
  %v1353 = vunpack.c.l.b16 %v217
  %v1354 = vunpack.c.l.b16 %v218
  %v1355 = vunpack.c.l.b16 %v219
  %v1356 = vunpack.c.l.b16 %v220
  %v1357 = vunpack.c.l.b16 %v221
  %v1358 = vunpack.c.l.b16 %v222
  %v1359 = vunpack.c.l.b16 %v223
  %v1360 = vunpack.c.l.b16 %v224
  %v1361 = vunpack.c.l.b16 %v225
  %v1362 = vunpack.c.l.b16 %v226
  %v1363 = vunpack.c.l.b16 %v227
  %v1364 = vunpack.c.l.b16 %v228
  %v1365 = vunpack.c.l.b16 %v229
  %v1366 = vunpack.c.l.b16 %v230
  %v1367 = vunpack.c.l.b16 %v231
  %v1368 = vunpack.c.l.b16 %v232
  %v1369 = vunpack.c.l.b16 %v233
  %v1370 = vunpack.c.l.b16 %v234
  %v1371 = vunpack.c.l.b16 %v235
  %v1372 = vunpack.c.l.b16 %v236
  %v1373 = vunpack.c.l.b16 %v237
  %v1374 = vunpack.c.l.b16 %v238
  %v1375 = vunpack.c.l.b16 %v239
  %v1376 = vunpack.c.l.b16 %v240
  %v1377 = vunpack.c.l.b16 %v241
  %v1378 = vunpack.c.l.b16 %v242
  %v1379 = vunpack.c.l.b16 %v243
  %v1380 = vunpack.c.l.b16 %v244
  %v1381 = vunpack.c.l.b16 %v245
  %v1382 = vunpack.c.l.b16 %v246
  %v1383 = vunpack.c.l.b16 %v247
  %v1384 = vunpack.c.l.b16 %v248
  %v1385 = vunpack.c.l.b16 %v249
  %v1386 = vunpack.c.l.b16 %v250
  %v1387 = vunpack.c.l.b16 %v251
  %v1388 = vunpack.c.l.b16 %v252
  %v1389 = vunpack.c.l.b16 %v253
  %v1390 = vunpack.c.l.b16 %v254
  %v1391 = vunpack.c.l.b16 %v255
  %v1392 = vunpack.c.l.b16 %v256
  %v1393 = vunpack.c.l.b16 %v257
  %v1394 = vunpack.c.l.b16 %v258
  %v1395 = vunpack.c.l.b16 %v259
  %v1396 = vunpack.c.l.b16 %v260
  %v1397 = vunpack.c.l.b16 %v261
  %v1398 = vunpack.c.l.b16 %v262
  %v1399 = vunpack.c.l.b16 %v263
  %v1400 = vunpack.c.l.b16 %v264
  %v1401 = vunpack.c.l.b16 %v265
  %v1402 = vunpack.c.l.b16 %v266
  %v1403 = vunpack.c.l.b16 %v267
  %v1404 = vunpack.c.l.b16 %v268
  %v1405 = vunpack.c.l.b16 %v269
  %v1406 = vunpack.c.l.b16 %v270
  %v1407 = vunpack.c.l.b16 %v271
  %v1408 = vunpack.c.l.b16 %v272
  %v1409 = vunpack.c.l.b16 %v273
  %v1410 = vunpack.c.l.b16 %v274
  %v1411 = vunpack.c.l.b16 %v275
  %v1412 = vunpack.c.l.b16 %v276
  %v1413 = vunpack.c.l.b16 %v277
  %v1414 = vunpack.c.l.b16 %v278
  %v1415 = vunpack.c.l.b16 %v279
  %v1416 = vunpack.c.l.b16 %v280
  %v1417 = vunpack.c.l.b16 %v281
  %v1418 = vunpack.c.l.b16 %v282
  %v1419 = vunpack.c.l.b16 %v283
  %v1420 = vunpack.c.l.b16 %v284
  %v1421 = vunpack.c.l.b16 %v285
  %v1422 = vunpack.c.l.b16 %v286
  %v1423 = vunpack.c.l.b16 %v287
  %v1424 = vunpack.c.l.b16 %v288
  %v1425 = vunpack.c.l.b16 %v289
  %v1426 = vunpack.c.l.b16 %v290
  %v1427 = vunpack.c.l.b16 %v291
  %v1428 = vunpack.c.l.b16 %v292
  %v1429 = vunpack.c.l.b16 %v293
  %v1430 = vunpack.c.l.b16 %v294
  %v1431 = vunpack.c.l.b16 %v295
  %v1432 = vunpack.c.l.b16 %v296
  %v1433 = vunpack.c.l.b16 %v297
  %v1434 = vunpack.c.l.b16 %v298
  %v1435 = vunpack.c.l.b16 %v299
  %v1436 = vunpack.c.l.b16 %v300
  %v1437 = vunpack.c.l.b16 %v301
  %v1438 = vunpack.c.l.b16 %v302
  %v1439 = vunpack.c.l.b16 %v303
  %v1440 = vunpack.c.l.b16 %v304
  %v1441 = vunpack.c.l.b16 %v305
  %v1442 = vunpack.c.l.b16 %v306
  %v1443 = vunpack.c.l.b16 %v307
  %v1444 = vunpack.c.l.b16 %v308
  %v1445 = vunpack.c.l.b16 %v309
  %v1446 = vunpack.c.l.b16 %v310
  %v1447 = vunpack.c.l.b16 %v311
  %v1448 = vunpack.c.l.b16 %v312
  %v1449 = vunpack.c.l.b16 %v313
  %v1450 = vunpack.c.l.b16 %v314
  %v1451 = vunpack.c.l.b16 %v315
  %v1452 = vunpack.c.l.b16 %v316
  %v1453 = vunpack.c.l.b16 %v317
  %v1454 = vunpack.c.l.b16 %v318
  %v1455 = vunpack.c.l.b16 %v319
  %v1456 = vunpack.c.l.b16 %v320
  %v1457 = vunpack.c.l.b16 %v321
  %v1458 = vunpack.c.l.b16 %v322
  %v1459 = vunpack.c.l.b16 %v323
  %v1460 = vunpack.c.l.b16 %v324
  %v1461 = vunpack.c.l.b16 %v325
  %v1462 = vunpack.c.l.b16 %v326
  %v1463 = vunpack.c.l.b16 %v327
  %v1464 = vunpack.c.l.b16 %v328
  %v1465 = vunpack.c.l.b16 %v329
  %v1466 = vunpack.c.l.b16 %v330
  %v1467 = vunpack.c.l.b16 %v331
  %v1468 = vunpack.c.l.b16 %v332
  %v1469 = vunpack.c.l.b16 %v333
  %v1470 = vunpack.c.l.b16 %v334
  %v1471 = vunpack.c.l.b16 %v335
  %v1472 = vunpack.c.l.b16 %v336
  %v1473 = vunpack.c.l.b16 %v337
  %v1474 = vunpack.c.l.b16 %v338
  %v1475 = vunpack.c.l.b16 %v339
  %v1476 = vunpack.c.l.b16 %v340
  %v1477 = vunpack.c.l.b16 %v341
  %v1478 = vunpack.c.l.b16 %v342
  %v1479 = vunpack.c.l.b16 %v343
  %v1480 = vunpack.c.l.b16 %v344
  %v1481 = vunpack.c.l.b16 %v345
  %v1482 = vunpack.c.l.b16 %v346
  %v1483 = vunpack.c.l.b16 %v347
  %v1484 = vunpack.c.l.b16 %v348
  %v1485 = vunpack.c.l.b16 %v349
  %v1486 = vunpack.c.l.b16 %v350
  %v1487 = vunpack.c.l.b16 %v351
  %v1488 = vunpack.c.l.b16 %v352
  %v1489 = vunpack.c.l.b16 %v353
  %v1490 = vunpack.c.l.b16 %v354
  %v1491 = vunpack.c.l.b16 %v355
  %v1492 = vunpack.c.l.b16 %v356
  %v1493 = vunpack.c.l.b16 %v357
  %v1494 = vunpack.c.l.b16 %v358
  %v1495 = vunpack.c.l.b16 %v359
  %v1496 = vunpack.c.l.b16 %v360
  %v1497 = vunpack.c.l.b16 %v361
  %v1498 = vunpack.c.l.b16 %v362
  %v1499 = vunpack.c.l.b16 %v363
  %v1500 = vunpack.c.l.b16 %v364
  %v1501 = vunpack.c.l.b16 %v365
  %v1502 = vunpack.c.l.b16 %v366
  %v1503 = vunpack.c.l.b16 %v367
  %v1504 = vunpack.c.l.b16 %v368
  %v1505 = vunpack.c.l.b16 %v369
  %v1506 = vunpack.c.l.b16 %v370
  %v1507 = vunpack.c.l.b16 %v371
  %v1508 = vunpack.c.l.b16 %v372
  %v1509 = vunpack.c.l.b16 %v373
  %v1510 = vunpack.c.l.b16 %v374
  %v1511 = vunpack.c.l.b16 %v375
  %v1512 = vunpack.c.l.b16 %v376
  %v1513 = vunpack.c.l.b16 %v377
  %v1514 = vunpack.c.l.b16 %v378
  %v1515 = vunpack.c.l.b16 %v379
  %v1516 = vunpack.c.l.b16 %v380
  %v1517 = vunpack.c.l.b16 %v381
  %v1518 = vunpack.c.l.b16 %v382
  %v1519 = vunpack.c.l.b16 %v383
  %v1520 = vunpack.c.l.b16 %v384
  %v1521 = vunpack.c.l.b16 %v385
  %v1522 = vunpack.c.l.b16 %v386
  %v1523 = vunpack.c.l.b16 %v387
  %v1524 = vunpack.c.l.b16 %v388
  %v1525 = vunpack.c.l.b16 %v389
  %v1526 = vunpack.c.l.b16 %v390
  %v1527 = vunpack.c.l.b16 %v391
  %v1528 = vunpack.c.l.b16 %v392
  %v1529 = vunpack.c.l.b16 %v393
  %v1530 = vunpack.c.l.b16 %v394
  %v1531 = vunpack.c.l.b16 %v395
  %v1532 = vunpack.c.l.b16 %v396
  %v1533 = vunpack.c.l.b16 %v397
  %v1534 = vunpack.c.l.b16 %v398
  %v1535 = vunpack.c.l.b16 %v399
  %v1536 = vunpack.c.l.b16 %v400
  %v1537 = vunpack.c.l.b16 %v401
  %v1538 = vunpack.c.l.b16 %v402
  %v1539 = vunpack.c.l.b16 %v403
  %v1540 = vunpack.c.l.b16 %v404
  %v1541 = vunpack.c.l.b16 %v405
  %v1542 = vunpack.c.l.b16 %v406
  %v1543 = vunpack.c.l.b16 %v407
  %v1544 = vunpack.c.l.b16 %v408
  %v1545 = vunpack.c.l.b16 %v409
  %v1546 = vunpack.c.l.b16 %v410
  %v1547 = vunpack.c.l.b16 %v411
  %v1548 = vunpack.c.l.b16 %v412
  %v1549 = vunpack.c.l.b16 %v413
  %v1550 = vunpack.c.l.b16 %v414
  %v1551 = vunpack.c.l.b16 %v415
  %v1552 = vunpack.c.l.b16 %v416
  %v1553 = vunpack.c.l.b16 %v417
  %v1554 = vunpack.c.l.b16 %v418
  %v1555 = vunpack.c.l.b16 %v419
  %v1556 = vunpack.c.l.b16 %v420
  %v1557 = vunpack.c.l.b16 %v421
  %v1558 = vunpack.c.l.b16 %v422
  %v1559 = vunpack.c.l.b16 %v423
  %v1560 = vunpack.c.l.b16 %v424
  %v1561 = vunpack.c.l.b16 %v425
  %v1562 = vunpack.c.l.b16 %v426
  %v1563 = vunpack.c.l.b16 %v427
  %v1564 = vunpack.c.l.b16 %v428
  %v1565 = vunpack.c.l.b16 %v429
  %v1566 = vunpack.c.l.b16 %v430
  %v1567 = vunpack.c.l.b16 %v431
  %v1568 = vunpack.c.l.b16 %v432
  %v1569 = vunpack.c.l.b16 %v433
  %v1570 = vunpack.c.l.b16 %v434
  %v1571 = vunpack.c.l.b16 %v435
  %v1572 = vunpack.c.l.b16 %v436
  %v1573 = vunpack.c.l.b16 %v437
  %v1574 = vunpack.c.l.b16 %v438
  %v1575 = vunpack.c.l.b16 %v439
  %v1576 = vunpack.c.l.b16 %v440
  %v1577 = vunpack.c.l.b16 %v441
  %v1578 = vunpack.c.l.b16 %v442
  %v1579 = vunpack.c.l.b16 %v443
  %v1580 = vunpack.c.l.b16 %v444
  %v1581 = vunpack.c.l.b16 %v445
  %v1582 = vunpack.c.l.b16 %v446
  %v1583 = vunpack.c.l.b16 %v447
  %v1584 = vunpack.c.l.b16 %v448
  %v1585 = vunpack.c.l.b16 %v449
  %v1586 = vunpack.c.l.b16 %v450
  %v1587 = vunpack.c.l.b16 %v451
  %v1588 = vunpack.c.l.b16 %v452
  %v1589 = vunpack.c.l.b16 %v453
  %v1590 = vunpack.c.l.b16 %v454
  %v1591 = vunpack.c.l.b16 %v455
  %v1592 = vunpack.c.l.b16 %v456
  %v1593 = vunpack.c.l.b16 %v457
  %v1594 = vunpack.c.l.b16 %v458
  %v1595 = vunpack.c.l.b16 %v459
  %v1596 = vunpack.c.l.b16 %v460
  %v1597 = vunpack.c.l.b16 %v461
  %v1598 = vunpack.c.l.b16 %v462
  %v1599 = vunpack.c.l.b16 %v463
  %v1600 = vunpack.c.l.b16 %v464
  %v1601 = vunpack.c.l.b16 %v465
  %v1602 = vunpack.c.l.b16 %v466
  %v1603 = vunpack.c.l.b16 %v467
  %v1604 = vunpack.c.l.b16 %v468
  %v1605 = vunpack.c.l.b16 %v469
  %v1606 = vunpack.c.l.b16 %v470
  %v1607 = vunpack.c.l.b16 %v471
  %v1608 = vunpack.c.l.b16 %v472
  %v1609 = vunpack.c.l.b16 %v473
  %v1610 = vunpack.c.l.b16 %v474
  %v1611 = vunpack.c.l.b16 %v475
  %v1612 = vunpack.c.l.b16 %v476
  %v1613 = vunpack.c.l.b16 %v477
  %v1614 = vunpack.c.l.b16 %v478
  %v1615 = vunpack.c.l.b16 %v479
  %v1616 = vunpack.c.l.b16 %v480
  %v1617 = vunpack.c.l.b16 %v481
  %v1618 = vunpack.c.l.b16 %v482
  %v1619 = vunpack.c.l.b16 %v483
  %v1620 = vunpack.c.l.b16 %v484
  %v1621 = vunpack.c.l.b16 %v485
  %v1622 = vunpack.c.l.b16 %v486
  %v1623 = vunpack.c.l.b16 %v487
  %v1624 = vunpack.c.l.b16 %v488
  %v1625 = vunpack.c.l.b16 %v489
  %v1626 = vunpack.c.l.b16 %v490
  %v1627 = vunpack.c.l.b16 %v491
  %v1628 = vunpack.c.l.b16 %v492
  %v1629 = vunpack.c.l.b16 %v493
  %v1630 = vunpack.c.l.b16 %v494
  %v1631 = vunpack.c.l.b16 %v495
  %v1632 = vunpack.c.l.b16 %v496
  %v1633 = vunpack.c.l.b16 %v497
  %v1634 = vunpack.c.l.b16 %v498
  %v1635 = vunpack.c.l.b16 %v499
  %v1636 = vunpack.c.l.b16 %v500
  %v1637 = vunpack.c.l.b16 %v501
  %v1638 = vunpack.c.l.b16 %v502
  %v1639 = vunpack.c.l.b16 %v503
  %v1640 = vunpack.c.l.b16 %v504
  %v1641 = vunpack.c.l.b16 %v505
  %v1642 = vunpack.c.l.b16 %v506
  %v1643 = vunpack.c.l.b16 %v507
  %v1644 = vunpack.c.l.b16 %v508
  %v1645 = vunpack.c.l.b16 %v509
  %v1646 = vunpack.c.l.b16 %v510
  %v1647 = vunpack.c.l.b16 %v511
  %v1648 = vunpack.c.l.b16 %v512
  %v1649 = vunpack.c.l.b16 %v513
  %v1650 = vunpack.c.l.b16 %v514
  %v1651 = vunpack.c.l.b16 %v515
  %v1652 = vunpack.c.l.b16 %v516
  %v1653 = vunpack.c.l.b16 %v517
  %v1654 = vunpack.c.l.b16 %v518
  %v1655 = vunpack.c.l.b16 %v519
  %v1656 = vunpack.c.l.b16 %v520
  %v1657 = vunpack.c.l.b16 %v521
  %v1658 = vunpack.c.l.b16 %v522
  %v1659 = vunpack.c.l.b16 %v523
  %v1660 = vunpack.c.l.b16 %v524
  %v1661 = vunpack.c.l.b16 %v525
  %v1662 = vunpack.c.l.b16 %v526
  %v1663 = vunpack.c.l.b16 %v527
  %v1664 = vunpack.c.l.b16 %v528
  %v1665 = vunpack.c.l.b16 %v529
  %v1666 = vunpack.c.l.b16 %v530
  %v1667 = vunpack.c.l.b16 %v531
  %v1668 = vunpack.c.l.b16 %v532
  %v1669 = vunpack.c.l.b16 %v533
  %v1670 = vunpack.c.l.b16 %v534
  %v1671 = vunpack.c.l.b16 %v535
  %v1672 = vunpack.c.l.b16 %v536
  %v1673 = vunpack.c.l.b16 %v537
  %v1674 = vunpack.c.l.b16 %v538
  %v1675 = vunpack.c.l.b16 %v539
  %v1676 = vunpack.c.l.b16 %v540
  %v1677 = vunpack.c.l.b16 %v541
  %v1678 = vunpack.c.l.b16 %v542
  %v1679 = vunpack.c.l.b16 %v543
  %v1680 = vunpack.c.l.b16 %v544
  %v1681 = vunpack.c.l.b16 %v545
  %v1682 = vunpack.c.l.b16 %v546
  %v1683 = vunpack.c.l.b16 %v547
  %v1684 = vunpack.c.l.b16 %v548
  %v1685 = vunpack.c.l.b16 %v549
  %v1686 = vunpack.c.l.b16 %v550
  %v1687 = vunpack.c.l.b16 %v551
  %v1688 = vunpack.c.l.b16 %v552
  %v1689 = vunpack.c.l.b16 %v553
  %v1690 = vunpack.c.l.b16 %v554
  %v1691 = vunpack.c.l.b16 %v555
  %v1692 = vunpack.c.l.b16 %v556
  %v1693 = vunpack.c.l.b16 %v557
  %v1694 = vunpack.c.l.b16 %v558
  %v1695 = vunpack.c.l.b16 %v559
  %v1696 = vunpack.c.l.b16 %v560
  %v1697 = vunpack.c.l.b16 %v561
  %v1698 = vunpack.c.l.b16 %v562
  %v1699 = vunpack.c.l.b16 %v563
  %v1700 = vunpack.c.l.b16 %v564
  %v1701 = vunpack.c.l.b16 %v565
  %v1702 = vunpack.c.l.b16 %v566
  %v1703 = vunpack.c.l.b16 %v567
  %v1704 = vunpack.c.l.b16 %v568
  %v1705 = vpack.c.b16 %v1274, %v1273
  %v1706 = vpack.c.b16 %v1276, %v1275
  %v1707 = vpack.c.b16 %v1278, %v1277
  %v1708 = vpack.c.b16 %v1280, %v1279
  %v1709 = vpack.c.b16 %v1282, %v1281
  %v1710 = vpack.c.b16 %v1284, %v1283
  %v1711 = vpack.c.b16 %v1286, %v1285
  %v1712 = vpack.c.b16 %v1288, %v1287
  %v1713 = vpack.c.b16 %v1290, %v1289
  %v1714 = vpack.c.b16 %v1292, %v1291
  %v1715 = vpack.c.b16 %v1294, %v1293
  %v1716 = vpack.c.b16 %v1296, %v1295
  %v1717 = vpack.c.b16 %v1298, %v1297
  %v1718 = vpack.c.b16 %v1300, %v1299
  %v1719 = vpack.c.b16 %v1302, %v1301
  %v1720 = vpack.c.b16 %v1304, %v1303
  %v1721 = vpack.c.b16 %v1306, %v1305
  %v1722 = vpack.c.b16 %v1308, %v1307
  %v1723 = vpack.c.b16 %v1310, %v1309
  %v1724 = vpack.c.b16 %v1312, %v1311
  %v1725 = vpack.c.b16 %v1314, %v1313
  %v1726 = vpack.c.b16 %v1316, %v1315
  %v1727 = vpack.c.b16 %v1318, %v1317
  %v1728 = vpack.c.b16 %v1320, %v1319
  %v1729 = vpack.c.b16 %v1322, %v1321
  %v1730 = vpack.c.b16 %v1324, %v1323
  %v1731 = vpack.c.b16 %v1326, %v1325
  %v1732 = vpack.c.b16 %v1328, %v1327
  %v1733 = vpack.c.b16 %v1330, %v1329
  %v1734 = vpack.c.b16 %v1332, %v1331
  %v1735 = vpack.c.b16 %v1334, %v1333
  %v1736 = vpack.c.b16 %v1336, %v1335
  %v1737 = vpack.c.b16 %v1338, %v1337
  %v1738 = vpack.c.b16 %v1340, %v1339
  %v1739 = vpack.c.b16 %v1342, %v1341
  %v1740 = vpack.c.b16 %v1344, %v1343
  %v1741 = vpack.c.b16 %v1346, %v1345
  %v1742 = vpack.c.b16 %v1348, %v1347
  %v1743 = vpack.c.b16 %v1350, %v1349
  %v1744 = vpack.c.b16 %v1352, %v1351
  %v1745 = vpack.c.b16 %v1354, %v1353
  %v1746 = vpack.c.b16 %v1356, %v1355
  %v1747 = vpack.c.b16 %v1358, %v1357
  %v1748 = vpack.c.b16 %v1360, %v1359
  %v1749 = vpack.c.b16 %v1362, %v1361
  %v1750 = vpack.c.b16 %v1364, %v1363
  %v1751 = vpack.c.b16 %v1366, %v1365
  %v1752 = vpack.c.b16 %v1368, %v1367
  %v1753 = vpack.c.b16 %v1370, %v1369
  %v1754 = vpack.c.b16 %v1372, %v1371
  %v1755 = vpack.c.b16 %v1374, %v1373
  %v1756 = vpack.c.b16 %v1376, %v1375
  %v1757 = vpack.c.b16 %v1378, %v1377
  %v1758 = vpack.c.b16 %v1380, %v1379
  %v1759 = vpack.c.b16 %v1382, %v1381
  %v1760 = vpack.c.b16 %v1384, %v1383
  %v1761 = vpack.c.b16 %v1386, %v1385
  %v1762 = vpack.c.b16 %v1388, %v1387
  %v1763 = vpack.c.b16 %v1390, %v1389
  %v1764 = vpack.c.b16 %v1392, %v1391
  %v1765 = vpack.c.b16 %v1394, %v1393
  %v1766 = vpack.c.b16 %v1396, %v1395
  %v1767 = vpack.c.b16 %v1398, %v1397
  %v1768 = vpack.c.b16 %v1400, %v1399
  %v1769 = vpack.c.b16 %v1402, %v1401
  %v1770 = vpack.c.b16 %v1404, %v1403
  %v1771 = vpack.c.b16 %v1406, %v1405
  %v1772 = vpack.c.b16 %v1408, %v1407
  %v1773 = vpack.c.b16 %v1410, %v1409
  %v1774 = vpack.c.b16 %v1412, %v1411
  %v1775 = vpack.c.b16 %v1414, %v1413
  %v1776 = vpack.c.b16 %v1416, %v1415
  %v1777 = vpack.c.b16 %v1418, %v1417
  %v1778 = vpack.c.b16 %v1420, %v1419
  %v1779 = vpack.c.b16 %v1422, %v1421
  %v1780 = vpack.c.b16 %v1424, %v1423
  %v1781 = vpack.c.b16 %v1426, %v1425
  %v1782 = vpack.c.b16 %v1428, %v1427
  %v1783 = vpack.c.b16 %v1430, %v1429
  %v1784 = vpack.c.b16 %v1432, %v1431
  %v1785 = vpack.c.b16 %v1434, %v1433
  %v1786 = vpack.c.b16 %v1436, %v1435
  %v1787 = vpack.c.b16 %v1438, %v1437
  %v1788 = vpack.c.b16 %v1440, %v1439
  %v1789 = vpack.c.b16 %v1442, %v1441
  %v1790 = vpack.c.b16 %v1444, %v1443
  %v1791 = vpack.c.b16 %v1446, %v1445
  %v1792 = vpack.c.b16 %v1448, %v1447
  %v1793 = vpack.c.b16 %v1450, %v1449
  %v1794 = vpack.c.b16 %v1452, %v1451
  %v1795 = vpack.c.b16 %v1454, %v1453
  %v1796 = vpack.c.b16 %v1456, %v1455
  %v1797 = vpack.c.b16 %v1458, %v1457
  %v1798 = vpack.c.b16 %v1460, %v1459
  %v1799 = vpack.c.b16 %v1462, %v1461
  %v1800 = vpack.c.b16 %v1464, %v1463
  %v1801 = vpack.c.b16 %v1466, %v1465
  %v1802 = vpack.c.b16 %v1468, %v1467
  %v1803 = vpack.c.b16 %v1470, %v1469
  %v1804 = vpack.c.b16 %v1472, %v1471
  %v1805 = vpack.c.b16 %v1474, %v1473
  %v1806 = vpack.c.b16 %v1476, %v1475
  %v1807 = vpack.c.b16 %v1478, %v1477
  %v1808 = vpack.c.b16 %v1480, %v1479
  %v1809 = vpack.c.b16 %v1482, %v1481
  %v1810 = vpack.c.b16 %v1484, %v1483
  %v1811 = vpack.c.b16 %v1486, %v1485
  %v1812 = vpack.c.b16 %v1488, %v1487
  %v1813 = vpack.c.b16 %v1490, %v1489
  %v1814 = vpack.c.b16 %v1492, %v1491
  %v1815 = vpack.c.b16 %v1494, %v1493
  %v1816 = vpack.c.b16 %v1496, %v1495
  %v1817 = vpack.c.b16 %v1498, %v1497
  %v1818 = vpack.c.b16 %v1500, %v1499
  %v1819 = vpack.c.b16 %v1502, %v1501
  %v1820 = vpack.c.b16 %v1504, %v1503
  %v1821 = vpack.c.b16 %v1506, %v1505
  %v1822 = vpack.c.b16 %v1508, %v1507
  %v1823 = vpack.c.b16 %v1510, %v1509
  %v1824 = vpack.c.b16 %v1512, %v1511
  %v1825 = vpack.c.b16 %v1514, %v1513
  %v1826 = vpack.c.b16 %v1516, %v1515
  %v1827 = vpack.c.b16 %v1518, %v1517
  %v1828 = vpack.c.b16 %v1520, %v1519
  %v1829 = vpack.c.b16 %v1522, %v1521
  %v1830 = vpack.c.b16 %v1524, %v1523
  %v1831 = vpack.c.b16 %v1526, %v1525
  %v1832 = vpack.c.b16 %v1528, %v1527
  %v1833 = vpack.c.b16 %v1530, %v1529
  %v1834 = vpack.c.b16 %v1532, %v1531
  %v1835 = vpack.c.b16 %v1534, %v1533
  %v1836 = vpack.c.b16 %v1536, %v1535
  %v1837 = vpack.c.b16 %v1538, %v1537
  %v1838 = vpack.c.b16 %v1540, %v1539
  %v1839 = vpack.c.b16 %v1542, %v1541
  %v1840 = vpack.c.b16 %v1544, %v1543
  %v1841 = vpack.c.b16 %v1546, %v1545
  %v1842 = vpack.c.b16 %v1548, %v1547
  %v1843 = vpack.c.b16 %v1550, %v1549
  %v1844 = vpack.c.b16 %v1552, %v1551
  %v1845 = vpack.c.b16 %v1554, %v1553
  %v1846 = vpack.c.b16 %v1556, %v1555
  %v1847 = vpack.c.b16 %v1558, %v1557
  %v1848 = vpack.c.b16 %v1560, %v1559
  %v1849 = vpack.c.b16 %v1562, %v1561
  %v1850 = vpack.c.b16 %v1564, %v1563
  %v1851 = vpack.c.b16 %v1566, %v1565
  %v1852 = vpack.c.b16 %v1568, %v1567
  %v1853 = vpack.c.b16 %v1570, %v1569
  %v1854 = vpack.c.b16 %v1572, %v1571
  %v1855 = vpack.c.b16 %v1574, %v1573
  %v1856 = vpack.c.b16 %v1576, %v1575
  %v1857 = vpack.c.b16 %v1578, %v1577
  %v1858 = vpack.c.b16 %v1580, %v1579
  %v1859 = vpack.c.b16 %v1582, %v1581
  %v1860 = vpack.c.b16 %v1584, %v1583
  %v1861 = vpack.c.b16 %v1586, %v1585
  %v1862 = vpack.c.b16 %v1588, %v1587
  %v1863 = vpack.c.b16 %v1590, %v1589
  %v1864 = vpack.c.b16 %v1592, %v1591
  %v1865 = vpack.c.b16 %v1594, %v1593
  %v1866 = vpack.c.b16 %v1596, %v1595
  %v1867 = vpack.c.b16 %v1598, %v1597
  %v1868 = vpack.c.b16 %v1600, %v1599
  %v1869 = vpack.c.b16 %v1602, %v1601
  %v1870 = vpack.c.b16 %v1604, %v1603
  %v1871 = vpack.c.b16 %v1606, %v1605
  %v1872 = vpack.c.b16 %v1608, %v1607
  %v1873 = vpack.c.b16 %v1610, %v1609
  %v1874 = vpack.c.b16 %v1612, %v1611
  %v1875 = vpack.c.b16 %v1614, %v1613
  %v1876 = vpack.c.b16 %v1616, %v1615
  %v1877 = vpack.c.b16 %v1618, %v1617
  %v1878 = vpack.c.b16 %v1620, %v1619
  %v1879 = vpack.c.b16 %v1622, %v1621
  %v1880 = vpack.c.b16 %v1624, %v1623
  %v1881 = vpack.c.b16 %v1626, %v1625
  %v1882 = vpack.c.b16 %v1628, %v1627
  %v1883 = vpack.c.b16 %v1630, %v1629
  %v1884 = vpack.c.b16 %v1632, %v1631
  %v1885 = vpack.c.b16 %v1634, %v1633
  %v1886 = vpack.c.b16 %v1636, %v1635
  %v1887 = vpack.c.b16 %v1638, %v1637
  %v1888 = vpack.c.b16 %v1640, %v1639
  %v1889 = vpack.c.b16 %v1642, %v1641
  %v1890 = vpack.c.b16 %v1644, %v1643
  %v1891 = vpack.c.b16 %v1646, %v1645
  %v1892 = vpack.c.b16 %v1648, %v1647
  %v1893 = vpack.c.b16 %v1650, %v1649
  %v1894 = vpack.c.b16 %v1652, %v1651
  %v1895 = vpack.c.b16 %v1654, %v1653
  %v1896 = vpack.c.b16 %v1656, %v1655
  %v1897 = vpack.c.b16 %v1658, %v1657
  %v1898 = vpack.c.b16 %v1660, %v1659
  %v1899 = vpack.c.b16 %v1662, %v1661
  %v1900 = vpack.c.b16 %v1664, %v1663
  %v1901 = vpack.c.b16 %v1666, %v1665
  %v1902 = vpack.c.b16 %v1668, %v1667
  %v1903 = vpack.c.b16 %v1670, %v1669
  %v1904 = vpack.c.b16 %v1672, %v1671
  %v1905 = vpack.c.b16 %v1674, %v1673
  %v1906 = vpack.c.b16 %v1676, %v1675
  %v1907 = vpack.c.b16 %v1678, %v1677
  %v1908 = vpack.c.b16 %v1680, %v1679
  %v1909 = vpack.c.b16 %v1682, %v1681
  %v1910 = vpack.c.b16 %v1684, %v1683
  %v1911 = vpack.c.b16 %v1686, %v1685
  %v1912 = vpack.c.b16 %v1688, %v1687
  %v1913 = vpack.c.b16 %v1690, %v1689
  %v1914 = vpack.c.b16 %v1692, %v1691
  %v1915 = vpack.c.b16 %v1694, %v1693
  %v1916 = vpack.c.b16 %v1696, %v1695
  %v1917 = vpack.c.b16 %v1698, %v1697
  %v1918 = vpack.c.b16 %v1700, %v1699
  %v1919 = vpack.c.b16 %v1702, %v1701
  %v1920 = vpack.c.b16 %v1704, %v1703
  %2137 = vmatprep.subr.bf16.mxu0 0
  %2138 = vmatpush1.bf16.msra.mxu0 %v1705
  %2139 = vmatprep.subr.bf16.mxu0 0
  %2140 = vmatpush1.bf16.msra.mxu0 %v1706
  %2141 = vmatprep.subr.bf16.mxu0 0
  %2142 = vmatpush1.bf16.msra.mxu0 %v1707
  %2143 = vmatprep.subr.bf16.mxu0 0
  %2144 = vmatpush1.bf16.msra.mxu0 %v1708
  %2145 = vmatprep.subr.bf16.mxu0 0
  %2146 = vmatpush1.bf16.msra.mxu0 %v1709
  %2147 = vmatprep.subr.bf16.mxu0 0
  %2148 = vmatpush1.bf16.msra.mxu0 %v1710
  %2149 = vmatprep.subr.bf16.mxu0 0
  %2150 = vmatpush1.bf16.msra.mxu0 %v1711
  %2151 = vmatprep.subr.bf16.mxu0 0
  %2152 = vmatpush1.bf16.msra.mxu0 %v1712
  %2153 = vmatprep.subr.bf16.mxu0 0
  %2154 = vmatpush1.bf16.msra.mxu0 %v1713
  %2155 = vmatprep.subr.bf16.mxu0 0
  %2156 = vmatpush1.bf16.msra.mxu0 %v1714
  %2157 = vmatprep.subr.bf16.mxu0 0
  %2158 = vmatpush1.bf16.msra.mxu0 %v1715
  %2159 = vmatprep.subr.bf16.mxu0 0
  %2160 = vmatpush1.bf16.msra.mxu0 %v1716
  %2161 = vmatprep.subr.bf16.mxu0 0
  %2162 = vmatpush1.bf16.msra.mxu0 %v1717
  %2163 = vmatprep.subr.bf16.mxu0 0
  %2164 = vmatpush1.bf16.msra.mxu0 %v1718
  %2165 = vmatprep.subr.bf16.mxu0 0
  %2166 = vmatpush1.bf16.msra.mxu0 %v1719
  %2167 = vmatprep.subr.bf16.mxu0 0
  %2168 = vmatpush1.bf16.msra.mxu0 %v1720
  %2169 = vmatprep.mubr.bf16.mxu0 %v734
  %2170 = vmatmul.mubr.bf16.gmra.mrb[0].mxu0 %v733
  %v2171 = vpop.f32.mrb[0].mxu0
  %v2172 = vadd.f32 0.0, %v2171
  %v2173 = vpop.f32.mrb[0].mxu0
  %v2174 = vpop.f32.mrb[0].mxu0
  %v2175 = vadd.f32 0.0, %v2174
  %v2176 = vpop.f32.mrb[0].mxu0
  %2177 = vmatprep.mubr.bf16.mxu0 %v761
  %2178 = vmatmul.mubr.bf16.gmra.mrb[0].mxu0 %v760
  %v2179 = vpop.f32.mrb[0].mxu0
  %v2180 = vadd.f32 0.0, %v2179
  %v2181 = vpop.f32.mrb[0].mxu0
  %v2182 = vpop.f32.mrb[0].mxu0
  %v2183 = vadd.f32 0.0, %v2182
  %v2184 = vpop.f32.mrb[0].mxu0
  %2185 = vdwg.mxu0
  %2186 = vmatprep.subr.bf16.mxu0 0
  %2187 = vmatpush1.bf16.msra.mxu0 %v1721
  %2188 = vmatprep.subr.bf16.mxu0 0
  %2189 = vmatpush1.bf16.msra.mxu0 %v1722
  %2190 = vmatprep.subr.bf16.mxu0 0
  %2191 = vmatpush1.bf16.msra.mxu0 %v1723
  %2192 = vmatprep.subr.bf16.mxu0 0
  %2193 = vmatpush1.bf16.msra.mxu0 %v1724
  %2194 = vmatprep.subr.bf16.mxu0 0
  %2195 = vmatpush1.bf16.msra.mxu0 %v1725
  %2196 = vmatprep.subr.bf16.mxu0 0
  %2197 = vmatpush1.bf16.msra.mxu0 %v1726
  %2198 = vmatprep.subr.bf16.mxu0 0
  %2199 = vmatpush1.bf16.msra.mxu0 %v1727
  %2200 = vmatprep.subr.bf16.mxu0 0
  %2201 = vmatpush1.bf16.msra.mxu0 %v1728
  %2202 = vmatprep.subr.bf16.mxu0 0
  %2203 = vmatpush1.bf16.msra.mxu0 %v1729
  %2204 = vmatprep.subr.bf16.mxu0 0
  %2205 = vmatpush1.bf16.msra.mxu0 %v1730
  %2206 = vmatprep.subr.bf16.mxu0 0
  %2207 = vmatpush1.bf16.msra.mxu0 %v1731
  %2208 = vmatprep.subr.bf16.mxu0 0
  %2209 = vmatpush1.bf16.msra.mxu0 %v1732
  %2210 = vmatprep.subr.bf16.mxu0 0
  %2211 = vmatpush1.bf16.msra.mxu0 %v1733
  %2212 = vmatprep.subr.bf16.mxu0 0
  %2213 = vmatpush1.bf16.msra.mxu0 %v1734
  %2214 = vmatprep.subr.bf16.mxu0 0
  %2215 = vmatpush1.bf16.msra.mxu0 %v1735
  %2216 = vmatprep.subr.bf16.mxu0 0
  %2217 = vmatpush1.bf16.msra.mxu0 %v1736
  %2218 = vmatprep.mubr.bf16.mxu0 %v736
  %2219 = vmatmul.mubr.bf16.gmra.mrb[0].mxu0 %v735
  %v2220 = vpop.f32.mrb[0].mxu0
  %v2221 = vadd.f32 %v2172, %v2220
  %v2222 = vpop.f32.mrb[0].mxu0
  %v2223 = vpop.f32.mrb[0].mxu0
  %v2224 = vadd.f32 %v2175, %v2223
  %v2225 = vpop.f32.mrb[0].mxu0
  %2226 = vmatprep.mubr.bf16.mxu0 %v763
  %2227 = vmatmul.mubr.bf16.gmra.mrb[0].mxu0 %v762
  %v2228 = vpop.f32.mrb[0].mxu0
  %v2229 = vadd.f32 %v2180, %v2228
  %v2230 = vpop.f32.mrb[0].mxu0
  %v2231 = vpop.f32.mrb[0].mxu0
  %v2232 = vadd.f32 %v2183, %v2231
  %v2233 = vpop.f32.mrb[0].mxu0
  %2234 = vdwg.mxu0
  %2235 = vmatprep.subr.bf16.mxu0 0
  %2236 = vmatpush1.bf16.msra.mxu0 %v1737
  %2237 = vmatprep.subr.bf16.mxu0 0
  %2238 = vmatpush1.bf16.msra.mxu0 %v1738
  %2239 = vmatprep.subr.bf16.mxu0 0
  %2240 = vmatpush1.bf16.msra.mxu0 %v1739
  %2241 = vmatprep.subr.bf16.mxu0 0
  %2242 = vmatpush1.bf16.msra.mxu0 %v1740
  %2243 = vmatprep.subr.bf16.mxu0 0
  %2244 = vmatpush1.bf16.msra.mxu0 %v1741
  %2245 = vmatprep.subr.bf16.mxu0 0
  %2246 = vmatpush1.bf16.msra.mxu0 %v1742
  %2247 = vmatprep.subr.bf16.mxu0 0
  %2248 = vmatpush1.bf16.msra.mxu0 %v1743
  %2249 = vmatprep.subr.bf16.mxu0 0
  %2250 = vmatpush1.bf16.msra.mxu0 %v1744
  %2251 = vmatprep.subr.bf16.mxu0 0
  %2252 = vmatpush1.bf16.msra.mxu0 %v1745
  %2253 = vmatprep.subr.bf16.mxu0 0
  %2254 = vmatpush1.bf16.msra.mxu0 %v1746
  %2255 = vmatprep.subr.bf16.mxu0 0
  %2256 = vmatpush1.bf16.msra.mxu0 %v1747
  %2257 = vmatprep.subr.bf16.mxu0 0
  %2258 = vmatpush1.bf16.msra.mxu0 %v1748
  %2259 = vmatprep.subr.bf16.mxu0 0
  %2260 = vmatpush1.bf16.msra.mxu0 %v1749
  %2261 = vmatprep.subr.bf16.mxu0 0
  %2262 = vmatpush1.bf16.msra.mxu0 %v1750
  %2263 = vmatprep.subr.bf16.mxu0 0
  %2264 = vmatpush1.bf16.msra.mxu0 %v1751
  %2265 = vmatprep.subr.bf16.mxu0 0
  %2266 = vmatpush1.bf16.msra.mxu0 %v1752
  %2267 = vmatprep.mubr.bf16.mxu0 %v738
  %2268 = vmatmul.mubr.bf16.gmra.mrb[0].mxu0 %v737
  %v2269 = vpop.f32.mrb[0].mxu0
  %v2270 = vadd.f32 %v2221, %v2269
  %v2271 = vpop.f32.mrb[0].mxu0
  %v2272 = vpop.f32.mrb[0].mxu0
  %v2273 = vadd.f32 %v2224, %v2272
  %v2274 = vpop.f32.mrb[0].mxu0
  %2275 = vmatprep.mubr.bf16.mxu0 %v765
  %2276 = vmatmul.mubr.bf16.gmra.mrb[0].mxu0 %v764
  %v2277 = vpop.f32.mrb[0].mxu0
  %v2278 = vadd.f32 %v2229, %v2277
  %v2279 = vpop.f32.mrb[0].mxu0
  %v2280 = vpop.f32.mrb[0].mxu0
  %v2281 = vadd.f32 %v2232, %v2280
  %v2282 = vpop.f32.mrb[0].mxu0
  %2283 = vdwg.mxu0
  %2284 = vmatprep.subr.bf16.mxu0 0
  %2285 = vmatpush1.bf16.msra.mxu0 %v1753
  %2286 = vmatprep.subr.bf16.mxu0 0
  %2287 = vmatpush1.bf16.msra.mxu0 %v1754
  %2288 = vmatprep.subr.bf16.mxu0 0
  %2289 = vmatpush1.bf16.msra.mxu0 %v1755
  %2290 = vmatprep.subr.bf16.mxu0 0
  %2291 = vmatpush1.bf16.msra.mxu0 %v1756
  %2292 = vmatprep.subr.bf16.mxu0 0
  %2293 = vmatpush1.bf16.msra.mxu0 %v1757
  %2294 = vmatprep.subr.bf16.mxu0 0
  %2295 = vmatpush1.bf16.msra.mxu0 %v1758
  %2296 = vmatprep.subr.bf16.mxu0 0
  %2297 = vmatpush1.bf16.msra.mxu0 %v1759
  %2298 = vmatprep.subr.bf16.mxu0 0
  %2299 = vmatpush1.bf16.msra.mxu0 %v1760
  %2300 = vmatprep.subr.bf16.mxu0 0
  %2301 = vmatpush1.bf16.msra.mxu0 %v1761
  %2302 = vmatprep.subr.bf16.mxu0 0
  %2303 = vmatpush1.bf16.msra.mxu0 %v1762
  %2304 = vmatprep.subr.bf16.mxu0 0
  %2305 = vmatpush1.bf16.msra.mxu0 %v1763
  %2306 = vmatprep.subr.bf16.mxu0 0
  %2307 = vmatpush1.bf16.msra.mxu0 %v1764
  %2308 = vmatprep.subr.bf16.mxu0 0
  %2309 = vmatpush1.bf16.msra.mxu0 %v1765
  %2310 = vmatprep.subr.bf16.mxu0 0
  %2311 = vmatpush1.bf16.msra.mxu0 %v1766
  %2312 = vmatprep.subr.bf16.mxu0 0
  %2313 = vmatpush1.bf16.msra.mxu0 %v1767
  %2314 = vmatprep.subr.bf16.mxu0 0
  %2315 = vmatpush1.bf16.msra.mxu0 %v1768
  %2316 = vmatprep.mubr.bf16.mxu0 %v740
  %2317 = vmatmul.mubr.bf16.gmra.mrb[0].mxu0 %v739
  %v2318 = vpop.f32.mrb[0].mxu0
  %v2319 = vadd.f32 %v2270, %v2318
  %v2320 = vpop.f32.mrb[0].mxu0
  %v2321 = vpop.f32.mrb[0].mxu0
  %v2322 = vadd.f32 %v2273, %v2321
  %v2323 = vpop.f32.mrb[0].mxu0
  %2324 = vmatprep.mubr.bf16.mxu0 %v767
  %2325 = vmatmul.mubr.bf16.gmra.mrb[0].mxu0 %v766
  %v2326 = vpop.f32.mrb[0].mxu0
  %v2327 = vadd.f32 %v2278, %v2326
  %v2328 = vpop.f32.mrb[0].mxu0
  %v2329 = vpop.f32.mrb[0].mxu0
  %v2330 = vadd.f32 %v2281, %v2329
  %v2331 = vpop.f32.mrb[0].mxu0
  %2332 = vdwg.mxu0
  %2333 = vmatprep.subr.bf16.mxu0 0
  %2334 = vmatpush1.bf16.msra.mxu0 %v1769
  %2335 = vmatprep.subr.bf16.mxu0 0
  %2336 = vmatpush1.bf16.msra.mxu0 %v1770
  %2337 = vmatprep.subr.bf16.mxu0 0
  %2338 = vmatpush1.bf16.msra.mxu0 %v1771
  %2339 = vmatprep.subr.bf16.mxu0 0
  %2340 = vmatpush1.bf16.msra.mxu0 %v1772
  %2341 = vmatprep.subr.bf16.mxu0 0
  %2342 = vmatpush1.bf16.msra.mxu0 %v1773
  %2343 = vmatprep.subr.bf16.mxu0 0
  %2344 = vmatpush1.bf16.msra.mxu0 %v1774
  %2345 = vmatprep.subr.bf16.mxu0 0
  %2346 = vmatpush1.bf16.msra.mxu0 %v1775
  %2347 = vmatprep.subr.bf16.mxu0 0
  %2348 = vmatpush1.bf16.msra.mxu0 %v1776
  %2349 = vmatprep.subr.bf16.mxu0 0
  %2350 = vmatpush1.bf16.msra.mxu0 %v1777
  %2351 = vmatprep.subr.bf16.mxu0 0
  %2352 = vmatpush1.bf16.msra.mxu0 %v1778
  %2353 = vmatprep.subr.bf16.mxu0 0
  %2354 = vmatpush1.bf16.msra.mxu0 %v1779
  %2355 = vmatprep.subr.bf16.mxu0 0
  %2356 = vmatpush1.bf16.msra.mxu0 %v1780
  %2357 = vmatprep.subr.bf16.mxu0 0
  %2358 = vmatpush1.bf16.msra.mxu0 %v1781
  %2359 = vmatprep.subr.bf16.mxu0 0
  %2360 = vmatpush1.bf16.msra.mxu0 %v1782
  %2361 = vmatprep.subr.bf16.mxu0 0
  %2362 = vmatpush1.bf16.msra.mxu0 %v1783
  %2363 = vmatprep.subr.bf16.mxu0 0
  %2364 = vmatpush1.bf16.msra.mxu0 %v1784
  %2365 = vmatprep.mubr.bf16.mxu0 %v742
  %2366 = vmatmul.mubr.bf16.gmra.mrb[0].mxu0 %v741
  %v2367 = vpop.f32.mrb[0].mxu0
  %v2368 = vadd.f32 %v2319, %v2367
  %v2369 = vpop.f32.mrb[0].mxu0
  %v2370 = vpop.f32.mrb[0].mxu0
  %v2371 = vadd.f32 %v2322, %v2370
  %v2372 = vpop.f32.mrb[0].mxu0
  %2373 = vmatprep.mubr.bf16.mxu0 %v769
  %2374 = vmatmul.mubr.bf16.gmra.mrb[0].mxu0 %v768
  %v2375 = vpop.f32.mrb[0].mxu0
  %v2376 = vadd.f32 %v2327, %v2375
  %v2377 = vpop.f32.mrb[0].mxu0
  %v2378 = vpop.f32.mrb[0].mxu0
  %v2379 = vadd.f32 %v2330, %v2378
  %v2380 = vpop.f32.mrb[0].mxu0
  %2381 = vdwg.mxu0
  %2382 = vmatprep.subr.bf16.mxu0 0
  %2383 = vmatpush1.bf16.msra.mxu0 %v1785
  %2384 = vmatprep.subr.bf16.mxu0 0
  %2385 = vmatpush1.bf16.msra.mxu0 %v1786
  %2386 = vmatprep.subr.bf16.mxu0 0
  %2387 = vmatpush1.bf16.msra.mxu0 %v1787
  %2388 = vmatprep.subr.bf16.mxu0 0
  %2389 = vmatpush1.bf16.msra.mxu0 %v1788
  %2390 = vmatprep.subr.bf16.mxu0 0
  %2391 = vmatpush1.bf16.msra.mxu0 %v1789
  %2392 = vmatprep.subr.bf16.mxu0 0
  %2393 = vmatpush1.bf16.msra.mxu0 %v1790
  %2394 = vmatprep.subr.bf16.mxu0 0
  %2395 = vmatpush1.bf16.msra.mxu0 %v1791
  %2396 = vmatprep.subr.bf16.mxu0 0
  %2397 = vmatpush1.bf16.msra.mxu0 %v1792
  %2398 = vmatprep.subr.bf16.mxu0 0
  %2399 = vmatpush1.bf16.msra.mxu0 %v1793
  %2400 = vmatprep.subr.bf16.mxu0 0
  %2401 = vmatpush1.bf16.msra.mxu0 %v1794
  %2402 = vmatprep.subr.bf16.mxu0 0
  %2403 = vmatpush1.bf16.msra.mxu0 %v1795
  %2404 = vmatprep.subr.bf16.mxu0 0
  %2405 = vmatpush1.bf16.msra.mxu0 %v1796
  %2406 = vmatprep.subr.bf16.mxu0 0
  %2407 = vmatpush1.bf16.msra.mxu0 %v1797
  %2408 = vmatprep.subr.bf16.mxu0 0
  %2409 = vmatpush1.bf16.msra.mxu0 %v1798
  %2410 = vmatprep.subr.bf16.mxu0 0
  %2411 = vmatpush1.bf16.msra.mxu0 %v1799
  %2412 = vmatprep.subr.bf16.mxu0 0
  %2413 = vmatpush1.bf16.msra.mxu0 %v1800
  %2414 = vmatprep.mubr.bf16.mxu0 %v744
  %2415 = vmatmul.mubr.bf16.gmra.mrb[0].mxu0 %v743
  %v2416 = vpop.f32.mrb[0].mxu0
  %v2417 = vadd.f32 %v2368, %v2416
  %v2418 = vpop.f32.mrb[0].mxu0
  %v2419 = vpop.f32.mrb[0].mxu0
  %v2420 = vadd.f32 %v2371, %v2419
  %v2421 = vpop.f32.mrb[0].mxu0
  %2422 = vmatprep.mubr.bf16.mxu0 %v771
  %2423 = vmatmul.mubr.bf16.gmra.mrb[0].mxu0 %v770
  %v2424 = vpop.f32.mrb[0].mxu0
  %v2425 = vadd.f32 %v2376, %v2424
  %v2426 = vpop.f32.mrb[0].mxu0
  %v2427 = vpop.f32.mrb[0].mxu0
  %v2428 = vadd.f32 %v2379, %v2427
  %v2429 = vpop.f32.mrb[0].mxu0
  %2430 = vdwg.mxu0
  %2431 = vmatprep.subr.bf16.mxu0 0
  %2432 = vmatpush1.bf16.msra.mxu0 %v1801
  %2433 = vmatprep.subr.bf16.mxu0 0
  %2434 = vmatpush1.bf16.msra.mxu0 %v1802
  %2435 = vmatprep.subr.bf16.mxu0 0
  %2436 = vmatpush1.bf16.msra.mxu0 %v1803
  %2437 = vmatprep.subr.bf16.mxu0 0
  %2438 = vmatpush1.bf16.msra.mxu0 %v1804
  %2439 = vmatprep.subr.bf16.mxu0 0
  %2440 = vmatpush1.bf16.msra.mxu0 %v1805
  %2441 = vmatprep.subr.bf16.mxu0 0
  %2442 = vmatpush1.bf16.msra.mxu0 %v1806
  %2443 = vmatprep.subr.bf16.mxu0 0
  %2444 = vmatpush1.bf16.msra.mxu0 %v1807
  %2445 = vmatprep.subr.bf16.mxu0 0
  %2446 = vmatpush1.bf16.msra.mxu0 %v1808
  %2447 = vmatprep.subr.bf16.mxu0 0
  %2448 = vmatpush1.bf16.msra.mxu0 %v1809
  %2449 = vmatprep.subr.bf16.mxu0 0
  %2450 = vmatpush1.bf16.msra.mxu0 %v1810
  %2451 = vmatprep.subr.bf16.mxu0 0
  %2452 = vmatpush1.bf16.msra.mxu0 %v1811
  %2453 = vmatprep.subr.bf16.mxu0 0
  %2454 = vmatpush1.bf16.msra.mxu0 %v1812
  %2455 = vmatprep.subr.bf16.mxu0 0
  %2456 = vmatpush1.bf16.msra.mxu0 %v1813
  %2457 = vmatprep.subr.bf16.mxu0 0
  %2458 = vmatpush1.bf16.msra.mxu0 %v1814
  %2459 = vmatprep.subr.bf16.mxu0 0
  %2460 = vmatpush1.bf16.msra.mxu0 %v1815
  %2461 = vmatprep.subr.bf16.mxu0 0
  %2462 = vmatpush1.bf16.msra.mxu0 %v1816
  %2463 = vmatprep.mubr.bf16.mxu0 %v746
  %2464 = vmatmul.mubr.bf16.gmra.mrb[0].mxu0 %v745
  %v2465 = vpop.f32.mrb[0].mxu0
  %v2466 = vadd.f32 %v2417, %v2465
  %v2467 = vpop.f32.mrb[0].mxu0
  %v2468 = vpop.f32.mrb[0].mxu0
  %v2469 = vadd.f32 %v2420, %v2468
  %v2470 = vpop.f32.mrb[0].mxu0
  %2471 = vmatprep.mubr.bf16.mxu0 %v773
  %2472 = vmatmul.mubr.bf16.gmra.mrb[0].mxu0 %v772
  %v2473 = vpop.f32.mrb[0].mxu0
  %v2474 = vadd.f32 %v2425, %v2473
  %v2475 = vpop.f32.mrb[0].mxu0
  %v2476 = vpop.f32.mrb[0].mxu0
  %v2477 = vadd.f32 %v2428, %v2476
  %v2478 = vpop.f32.mrb[0].mxu0
  %2479 = vdwg.mxu0
  %2480 = vmatprep.subr.bf16.mxu0 0
  %2481 = vmatpush1.bf16.msra.mxu0 %v1817
  %2482 = vmatprep.subr.bf16.mxu0 0
  %2483 = vmatpush1.bf16.msra.mxu0 %v1818
  %2484 = vmatprep.subr.bf16.mxu0 0
  %2485 = vmatpush1.bf16.msra.mxu0 %v1819
  %2486 = vmatprep.subr.bf16.mxu0 0
  %2487 = vmatpush1.bf16.msra.mxu0 %v1820
  %2488 = vmatprep.subr.bf16.mxu0 0
  %2489 = vmatpush1.bf16.msra.mxu0 %v1821
  %2490 = vmatprep.subr.bf16.mxu0 0
  %2491 = vmatpush1.bf16.msra.mxu0 %v1822
  %2492 = vmatprep.subr.bf16.mxu0 0
  %2493 = vmatpush1.bf16.msra.mxu0 %v1823
  %2494 = vmatprep.subr.bf16.mxu0 0
  %2495 = vmatpush1.bf16.msra.mxu0 %v1824
  %2496 = vmatprep.subr.bf16.mxu0 0
  %2497 = vmatpush1.bf16.msra.mxu0 %v1825
  %2498 = vmatprep.subr.bf16.mxu0 0
  %2499 = vmatpush1.bf16.msra.mxu0 %v1826
  %2500 = vmatprep.subr.bf16.mxu0 0
  %2501 = vmatpush1.bf16.msra.mxu0 %v1827
  %2502 = vmatprep.subr.bf16.mxu0 0
  %2503 = vmatpush1.bf16.msra.mxu0 %v1828
  %2504 = vmatprep.subr.bf16.mxu0 0
  %2505 = vmatpush1.bf16.msra.mxu0 %v1829
  %2506 = vmatprep.subr.bf16.mxu0 0
  %2507 = vmatpush1.bf16.msra.mxu0 %v1830
  %2508 = vmatprep.subr.bf16.mxu0 0
  %2509 = vmatpush1.bf16.msra.mxu0 %v1831
  %2510 = vmatprep.subr.bf16.mxu0 0
  %2511 = vmatpush1.bf16.msra.mxu0 %v1832
  %2512 = vmatprep.mubr.bf16.mxu0 %v748
  %2513 = vmatmul.mubr.bf16.gmra.mrb[0].mxu0 %v747
  %v2514 = vpop.f32.mrb[0].mxu0
  %v2515 = vadd.f32 %v2466, %v2514
  %v2516 = vpop.f32.mrb[0].mxu0
  %v2517 = vpop.f32.mrb[0].mxu0
  %v2518 = vadd.f32 %v2469, %v2517
  %v2519 = vpop.f32.mrb[0].mxu0
  %2520 = vmatprep.mubr.bf16.mxu0 %v775
  %2521 = vmatmul.mubr.bf16.gmra.mrb[0].mxu0 %v774
  %v2522 = vpop.f32.mrb[0].mxu0
  %v2523 = vadd.f32 %v2474, %v2522
  %v2524 = vpop.f32.mrb[0].mxu0
  %v2525 = vpop.f32.mrb[0].mxu0
  %v2526 = vadd.f32 %v2477, %v2525
  %v2527 = vpop.f32.mrb[0].mxu0
  %2528 = vdwg.mxu0
  %2529 = vmatprep.subr.bf16.mxu0 0
  %2530 = vmatpush1.bf16.msra.mxu0 %v1833
  %2531 = vmatprep.subr.bf16.mxu0 0
  %2532 = vmatpush1.bf16.msra.mxu0 %v1834
  %2533 = vmatprep.subr.bf16.mxu0 0
  %2534 = vmatpush1.bf16.msra.mxu0 %v1835
  %2535 = vmatprep.subr.bf16.mxu0 0
  %2536 = vmatpush1.bf16.msra.mxu0 %v1836
  %2537 = vmatprep.subr.bf16.mxu0 0
  %2538 = vmatpush1.bf16.msra.mxu0 %v1837
  %2539 = vmatprep.subr.bf16.mxu0 0
  %2540 = vmatpush1.bf16.msra.mxu0 %v1838
  %2541 = vmatprep.subr.bf16.mxu0 0
  %2542 = vmatpush1.bf16.msra.mxu0 %v1839
  %2543 = vmatprep.subr.bf16.mxu0 0
  %2544 = vmatpush1.bf16.msra.mxu0 %v1840
  %2545 = vmatprep.subr.bf16.mxu0 0
  %2546 = vmatpush1.bf16.msra.mxu0 %v1841
  %2547 = vmatprep.subr.bf16.mxu0 0
  %2548 = vmatpush1.bf16.msra.mxu0 %v1842
  %2549 = vmatprep.subr.bf16.mxu0 0
  %2550 = vmatpush1.bf16.msra.mxu0 %v1843
  %2551 = vmatprep.subr.bf16.mxu0 0
  %2552 = vmatpush1.bf16.msra.mxu0 %v1844
  %2553 = vmatprep.subr.bf16.mxu0 0
  %2554 = vmatpush1.bf16.msra.mxu0 %v1845
  %2555 = vmatprep.subr.bf16.mxu0 0
  %2556 = vmatpush1.bf16.msra.mxu0 %v1846
  %2557 = vmatprep.subr.bf16.mxu0 0
  %2558 = vmatpush1.bf16.msra.mxu0 %v1847
  %2559 = vmatprep.subr.bf16.mxu0 0
  %2560 = vmatpush1.bf16.msra.mxu0 %v1848
  %2561 = vmatprep.mubr.bf16.mxu0 %v750
  %2562 = vmatmul.mubr.bf16.gmra.mrb[0].mxu0 %v749
  %v2563 = vpop.f32.mrb[0].mxu0
  %v2564 = vadd.f32 %v2515, %v2563
  %v2565 = vpop.f32.mrb[0].mxu0
  %v2566 = vpop.f32.mrb[0].mxu0
  %v2567 = vadd.f32 %v2518, %v2566
  %v2568 = vpop.f32.mrb[0].mxu0
  %2569 = vmatprep.mubr.bf16.mxu0 %v777
  %2570 = vmatmul.mubr.bf16.gmra.mrb[0].mxu0 %v776
  %v2571 = vpop.f32.mrb[0].mxu0
  %v2572 = vadd.f32 %v2523, %v2571
  %v2573 = vpop.f32.mrb[0].mxu0
  %v2574 = vpop.f32.mrb[0].mxu0
  %v2575 = vadd.f32 %v2526, %v2574
  %v2576 = vpop.f32.mrb[0].mxu0
  %2577 = vdwg.mxu0
  %2578 = vmatprep.subr.bf16.mxu0 0
  %2579 = vmatpush1.bf16.msra.mxu0 %v1849
  %2580 = vmatprep.subr.bf16.mxu0 0
  %2581 = vmatpush1.bf16.msra.mxu0 %v1850
  %2582 = vmatprep.subr.bf16.mxu0 0
  %2583 = vmatpush1.bf16.msra.mxu0 %v1851
  %2584 = vmatprep.subr.bf16.mxu0 0
  %2585 = vmatpush1.bf16.msra.mxu0 %v1852
  %2586 = vmatprep.subr.bf16.mxu0 0
  %2587 = vmatpush1.bf16.msra.mxu0 %v1853
  %2588 = vmatprep.subr.bf16.mxu0 0
  %2589 = vmatpush1.bf16.msra.mxu0 %v1854
  %2590 = vmatprep.subr.bf16.mxu0 0
  %2591 = vmatpush1.bf16.msra.mxu0 %v1855
  %2592 = vmatprep.subr.bf16.mxu0 0
  %2593 = vmatpush1.bf16.msra.mxu0 %v1856
  %2594 = vmatprep.subr.bf16.mxu0 0
  %2595 = vmatpush1.bf16.msra.mxu0 %v1857
  %2596 = vmatprep.subr.bf16.mxu0 0
  %2597 = vmatpush1.bf16.msra.mxu0 %v1858
  %2598 = vmatprep.subr.bf16.mxu0 0
  %2599 = vmatpush1.bf16.msra.mxu0 %v1859
  %2600 = vmatprep.subr.bf16.mxu0 0
  %2601 = vmatpush1.bf16.msra.mxu0 %v1860
  %2602 = vmatprep.subr.bf16.mxu0 0
  %2603 = vmatpush1.bf16.msra.mxu0 %v1861
  %2604 = vmatprep.subr.bf16.mxu0 0
  %2605 = vmatpush1.bf16.msra.mxu0 %v1862
  %2606 = vmatprep.subr.bf16.mxu0 0
  %2607 = vmatpush1.bf16.msra.mxu0 %v1863
  %2608 = vmatprep.subr.bf16.mxu0 0
  %2609 = vmatpush1.bf16.msra.mxu0 %v1864
  %2610 = vmatprep.mubr.bf16.mxu0 %v752
  %2611 = vmatmul.mubr.bf16.gmra.mrb[0].mxu0 %v751
  %v2612 = vpop.f32.mrb[0].mxu0
  %v2613 = vadd.f32 %v2564, %v2612
  %v2614 = vpop.f32.mrb[0].mxu0
  %v2615 = vpop.f32.mrb[0].mxu0
  %v2616 = vadd.f32 %v2567, %v2615
  %v2617 = vpop.f32.mrb[0].mxu0
  %2618 = vmatprep.mubr.bf16.mxu0 %v779
  %2619 = vmatmul.mubr.bf16.gmra.mrb[0].mxu0 %v778
  %v2620 = vpop.f32.mrb[0].mxu0
  %v2621 = vadd.f32 %v2572, %v2620
  %v2622 = vpop.f32.mrb[0].mxu0
  %v2623 = vpop.f32.mrb[0].mxu0
  %v2624 = vadd.f32 %v2575, %v2623
  %v2625 = vpop.f32.mrb[0].mxu0
  %2626 = vdwg.mxu0
  %2627 = vmatprep.subr.bf16.mxu0 0
  %2628 = vmatpush1.bf16.msra.mxu0 %v1865
  %2629 = vmatprep.subr.bf16.mxu0 0
  %2630 = vmatpush1.bf16.msra.mxu0 %v1866
  %2631 = vmatprep.subr.bf16.mxu0 0
  %2632 = vmatpush1.bf16.msra.mxu0 %v1867
  %2633 = vmatprep.subr.bf16.mxu0 0
  %2634 = vmatpush1.bf16.msra.mxu0 %v1868
  %2635 = vmatprep.subr.bf16.mxu0 0
  %2636 = vmatpush1.bf16.msra.mxu0 %v1869
  %2637 = vmatprep.subr.bf16.mxu0 0
  %2638 = vmatpush1.bf16.msra.mxu0 %v1870
  %2639 = vmatprep.subr.bf16.mxu0 0
  %2640 = vmatpush1.bf16.msra.mxu0 %v1871
  %2641 = vmatprep.subr.bf16.mxu0 0
  %2642 = vmatpush1.bf16.msra.mxu0 %v1872
  %2643 = vmatprep.subr.bf16.mxu0 0
  %2644 = vmatpush1.bf16.msra.mxu0 %v1873
  %2645 = vmatprep.subr.bf16.mxu0 0
  %2646 = vmatpush1.bf16.msra.mxu0 %v1874
  %2647 = vmatprep.subr.bf16.mxu0 0
  %2648 = vmatpush1.bf16.msra.mxu0 %v1875
  %2649 = vmatprep.subr.bf16.mxu0 0
  %2650 = vmatpush1.bf16.msra.mxu0 %v1876
  %2651 = vmatprep.subr.bf16.mxu0 0
  %2652 = vmatpush1.bf16.msra.mxu0 %v1877
  %2653 = vmatprep.subr.bf16.mxu0 0
  %2654 = vmatpush1.bf16.msra.mxu0 %v1878
  %2655 = vmatprep.subr.bf16.mxu0 0
  %2656 = vmatpush1.bf16.msra.mxu0 %v1879
  %2657 = vmatprep.subr.bf16.mxu0 0
  %2658 = vmatpush1.bf16.msra.mxu0 %v1880
  %2659 = vmatprep.mubr.bf16.mxu0 %v754
  %2660 = vmatmul.mubr.bf16.gmra.mrb[0].mxu0 %v753
  %v2661 = vpop.f32.mrb[0].mxu0
  %v2662 = vadd.f32 %v2613, %v2661
  %v2663 = vpop.f32.mrb[0].mxu0
  %v2664 = vpop.f32.mrb[0].mxu0
  %v2665 = vadd.f32 %v2616, %v2664
  %v2666 = vpop.f32.mrb[0].mxu0
  %2667 = vmatprep.mubr.bf16.mxu0 %v781
  %2668 = vmatmul.mubr.bf16.gmra.mrb[0].mxu0 %v780
  %v2669 = vpop.f32.mrb[0].mxu0
  %v2670 = vadd.f32 %v2621, %v2669
  %v2671 = vpop.f32.mrb[0].mxu0
  %v2672 = vpop.f32.mrb[0].mxu0
  %v2673 = vadd.f32 %v2624, %v2672
  %v2674 = vpop.f32.mrb[0].mxu0
  %2675 = vdwg.mxu0
  %2676 = vmatprep.subr.bf16.mxu0 0
  %2677 = vmatpush1.bf16.msra.mxu0 %v1881
  %2678 = vmatprep.subr.bf16.mxu0 0
  %2679 = vmatpush1.bf16.msra.mxu0 %v1882
  %2680 = vmatprep.subr.bf16.mxu0 0
  %2681 = vmatpush1.bf16.msra.mxu0 %v1883
  %2682 = vmatprep.subr.bf16.mxu0 0
  %2683 = vmatpush1.bf16.msra.mxu0 %v1884
  %2684 = vmatprep.subr.bf16.mxu0 0
  %2685 = vmatpush1.bf16.msra.mxu0 %v1885
  %2686 = vmatprep.subr.bf16.mxu0 0
  %2687 = vmatpush1.bf16.msra.mxu0 %v1886
  %2688 = vmatprep.subr.bf16.mxu0 0
  %2689 = vmatpush1.bf16.msra.mxu0 %v1887
  %2690 = vmatprep.subr.bf16.mxu0 0
  %2691 = vmatpush1.bf16.msra.mxu0 %v1888
  %2692 = vmatprep.subr.bf16.mxu0 0
  %2693 = vmatpush1.bf16.msra.mxu0 %v1889
  %2694 = vmatprep.subr.bf16.mxu0 0
  %2695 = vmatpush1.bf16.msra.mxu0 %v1890
  %2696 = vmatprep.subr.bf16.mxu0 0
  %2697 = vmatpush1.bf16.msra.mxu0 %v1891
  %2698 = vmatprep.subr.bf16.mxu0 0
  %2699 = vmatpush1.bf16.msra.mxu0 %v1892
  %2700 = vmatprep.subr.bf16.mxu0 0
  %2701 = vmatpush1.bf16.msra.mxu0 %v1893
  %2702 = vmatprep.subr.bf16.mxu0 0
  %2703 = vmatpush1.bf16.msra.mxu0 %v1894
  %2704 = vmatprep.subr.bf16.mxu0 0
  %2705 = vmatpush1.bf16.msra.mxu0 %v1895
  %2706 = vmatprep.subr.bf16.mxu0 0
  %2707 = vmatpush1.bf16.msra.mxu0 %v1896
  %2708 = vmatprep.mubr.bf16.mxu0 %v756
  %2709 = vmatmul.mubr.bf16.gmra.mrb[0].mxu0 %v755
  %v2710 = vpop.f32.mrb[0].mxu0
  %v2711 = vadd.f32 %v2662, %v2710
  %v2712 = vpop.f32.mrb[0].mxu0
  %v2713 = vpop.f32.mrb[0].mxu0
  %v2714 = vadd.f32 %v2665, %v2713
  %v2715 = vpop.f32.mrb[0].mxu0
  %2716 = vmatprep.mubr.bf16.mxu0 %v783
  %2717 = vmatmul.mubr.bf16.gmra.mrb[0].mxu0 %v782
  %v2718 = vpop.f32.mrb[0].mxu0
  %v2719 = vadd.f32 %v2670, %v2718
  %v2720 = vpop.f32.mrb[0].mxu0
  %v2721 = vpop.f32.mrb[0].mxu0
  %v2722 = vadd.f32 %v2673, %v2721
  %v2723 = vpop.f32.mrb[0].mxu0
  %2724 = vdwg.mxu0
  %2725 = vmatprep.subr.bf16.mxu0 0
  %2726 = vmatpush1.bf16.msra.mxu0 %v1897
  %2727 = vmatprep.subr.bf16.mxu0 0
  %2728 = vmatpush1.bf16.msra.mxu0 %v1898
  %2729 = vmatprep.subr.bf16.mxu0 0
  %2730 = vmatpush1.bf16.msra.mxu0 %v1899
  %2731 = vmatprep.subr.bf16.mxu0 0
  %2732 = vmatpush1.bf16.msra.mxu0 %v1900
  %2733 = vmatprep.subr.bf16.mxu0 0
  %2734 = vmatpush1.bf16.msra.mxu0 %v1901
  %2735 = vmatprep.subr.bf16.mxu0 0
  %2736 = vmatpush1.bf16.msra.mxu0 %v1902
  %2737 = vmatprep.subr.bf16.mxu0 0
  %2738 = vmatpush1.bf16.msra.mxu0 %v1903
  %2739 = vmatprep.subr.bf16.mxu0 0
  %2740 = vmatpush1.bf16.msra.mxu0 %v1904
  %2741 = vmatprep.subr.bf16.mxu0 0
  %2742 = vmatpush1.bf16.msra.mxu0 %v1905
  %2743 = vmatprep.subr.bf16.mxu0 0
  %2744 = vmatpush1.bf16.msra.mxu0 %v1906
  %2745 = vmatprep.subr.bf16.mxu0 0
  %2746 = vmatpush1.bf16.msra.mxu0 %v1907
  %2747 = vmatprep.subr.bf16.mxu0 0
  %2748 = vmatpush1.bf16.msra.mxu0 %v1908
  %2749 = vmatprep.subr.bf16.mxu0 0
  %2750 = vmatpush1.bf16.msra.mxu0 %v1909
  %2751 = vmatprep.subr.bf16.mxu0 0
  %2752 = vmatpush1.bf16.msra.mxu0 %v1910
  %2753 = vmatprep.subr.bf16.mxu0 0
  %2754 = vmatpush1.bf16.msra.mxu0 %v1911
  %2755 = vmatprep.subr.bf16.mxu0 0
  %2756 = vmatpush1.bf16.msra.mxu0 %v1912
  %2757 = vmatprep.mubr.bf16.mxu0 %v758
  %2758 = vmatmul.mubr.bf16.gmra.mrb[0].mxu0 %v757
  %v2759 = vpop.f32.mrb[0].mxu0
  %v2760 = vadd.f32 %v2711, %v2759
  %v2761 = vpop.f32.mrb[0].mxu0
  %v2762 = vpop.f32.mrb[0].mxu0
  %v2763 = vadd.f32 %v2714, %v2762
  %v2764 = vpop.f32.mrb[0].mxu0
  %2765 = vmatprep.mubr.bf16.mxu0 %v785
  %2766 = vmatmul.mubr.bf16.gmra.mrb[0].mxu0 %v784
  %v2767 = vpop.f32.mrb[0].mxu0
  %v2768 = vadd.f32 %v2719, %v2767
  %v2769 = vpop.f32.mrb[0].mxu0
  %v2770 = vpop.f32.mrb[0].mxu0
  %v2771 = vadd.f32 %v2722, %v2770
  %v2772 = vpop.f32.mrb[0].mxu0
  %2773 = vdwg.mxu0
  %2774 = vmatprep.subr.bf16.mxu0 0
  %2775 = vmatpush1.bf16.msra.mxu0 %v1913
  %2776 = vmatprep.subr.bf16.mxu0 0
  %2777 = vmatpush1.bf16.msra.mxu0 %v1914
  %2778 = vmatprep.subr.bf16.mxu0 0
  %2779 = vmatpush1.bf16.msra.mxu0 %v1915
  %2780 = vmatprep.subr.bf16.mxu0 0
  %2781 = vmatpush1.bf16.msra.mxu0 %v1916
  %2782 = vmatprep.subr.bf16.mxu0 0
  %2783 = vmatpush1.bf16.msra.mxu0 %v1917
  %2784 = vmatprep.subr.bf16.mxu0 0
  %2785 = vmatpush1.bf16.msra.mxu0 %v1918
  %2786 = vmatprep.subr.bf16.mxu0 0
  %2787 = vmatpush1.bf16.msra.mxu0 %v1919
  %2788 = vmatprep.subr.bf16.mxu0 0
  %2789 = vmatpush1.bf16.msra.mxu0 %v1920
  %2790 = vmatprep.subr.bf16.mxu0 0
  %2791 = vmatpush1.bf16.msra.mxu0 0
  %2792 = vmatprep.subr.bf16.mxu0 0
  %2793 = vmatpush1.bf16.msra.mxu0 0
  %2794 = vmatprep.subr.bf16.mxu0 0
  %2795 = vmatpush1.bf16.msra.mxu0 0
  %2796 = vmatprep.subr.bf16.mxu0 0
  %2797 = vmatpush1.bf16.msra.mxu0 0
  %2798 = vmatprep.subr.bf16.mxu0 0
  %2799 = vmatpush1.bf16.msra.mxu0 0
  %2800 = vmatprep.subr.bf16.mxu0 0
  %2801 = vmatpush1.bf16.msra.mxu0 0
  %2802 = vmatprep.subr.bf16.mxu0 0
  %2803 = vmatpush1.bf16.msra.mxu0 0
  %2804 = vmatprep.subr.bf16.mxu0 0
  %2805 = vmatpush1.bf16.msra.mxu0 0
  %2806 = vmatprep.mubr.bf16.mxu0 0
  %2807 = vmatmul.mubr.bf16.gmra.mrb[0].mxu0 %v759
  %v2808 = vpop.f32.mrb[0].mxu0
  %v2809 = vadd.f32 %v2760, %v2808
  %v2810 = vpop.f32.mrb[0].mxu0
  %v2811 = vpop.f32.mrb[0].mxu0
  %v2812 = vadd.f32 %v2763, %v2811
  %v2813 = vpop.f32.mrb[0].mxu0
  %2814 = vmatprep.mubr.bf16.mxu0 0
  %2815 = vmatmul.mubr.bf16.gmra.mrb[0].mxu0 %v786
  %v2816 = vpop.f32.mrb[0].mxu0
  %v2817 = vadd.f32 %v2768, %v2816
  %v2818 = vpop.f32.mrb[0].mxu0
  %v2819 = vpop.f32.mrb[0].mxu0
  %v2820 = vadd.f32 %v2771, %v2819
  %v2821 = vpop.f32.mrb[0].mxu0
  %2822 = vdwg.mxu0
  %v2823 = vld [vmem:[%s69] sm:$0xff]
  %v2824 = vld [vmem:[%s69 + $0x8] sm:$0xff]
  %v2825 = vld [vmem:[%s69 + $0x10] sm:$0xff]
  %v2826 = vld [vmem:[%s69 + $0x18] sm:$0xff]
  %vm2827 = vcmp.eq.f32.partialorder %v2823, 0.0
  %vm2828 = vcmp.eq.f32.partialorder %v2824, 0.0
  %vm2829 = vcmp.eq.f32.partialorder %v2825, 0.0
  %vm2830 = vcmp.eq.f32.partialorder %v2826, 0.0
  %v2831 = vsel %vm2827, 1.0, %v2823
  %v2832 = vsel %vm2828, 1.0, %v2824
  %v2833 = vsel %vm2829, 1.0, %v2825
  %v2834 = vsel %vm2830, 1.0, %v2826
  %v2835 = vrcp.pop %v2831
  %v2836 = vrcp.pop %v2832
  %v2837 = vrcp.pop %v2833
  %v2838 = vrcp.pop %v2834
  %2840 = vset.pattern.permute.xlu0 0
  %2841 = vperm.xlu0 %2840, %v2835
  %v2842 = vpop.permute.xlu0 %2841
  %2845 = vset.pattern.permute.xlu0 0
  %2846 = vperm.xlu0 %2845, %v2836
  %v2847 = vpop.permute.xlu0 %2846
  %2850 = vset.pattern.permute.xlu0 0
  %2851 = vperm.xlu0 %2850, %v2837
  %v2852 = vpop.permute.xlu0 %2851
  %2855 = vset.pattern.permute.xlu0 0
  %2856 = vperm.xlu0 %2855, %v2838
  %v2857 = vpop.permute.xlu0 %2856
  %v2859 = vmul.f32 %v2809, %v2842
  %v2860 = vmul.f32 %v2812, %v2847
  %v2861 = vmul.f32 %v2817, %v2852
  %v2862 = vmul.f32 %v2820, %v2857
  %v2863 = vld [vmem:[%s3] sm:$0x1]
  %v2865 = vlaneseq
  %v2866 = vshrl.u32 %v2865, 7
  %v2867 = vsub.s32 0, %v2866
  %v2868 = vrot.slane %v2863, %v2867
  %v2870 = vadd.f32 %v2859, %v2868
  %v2871 = vadd.f32 %v2860, %v2868
  %v2872 = vadd.f32 %v2861, %v2868
  %v2873 = vadd.f32 %v2862, %v2868
  %v2874 = vsel %vm2827, 1, 0
  %v2875 = vsel %vm2828, 1, 0
  %v2876 = vsel %vm2829, 1, 0
  %v2877 = vsel %vm2830, 1, 0
  %2878 = vset.pattern.permute.xlu0 0
  %2879 = vperm.xlu0 %2878, %v2874
  %v2880 = vpop.permute.xlu0 %2879
  %2881 = vset.pattern.permute.xlu0 0
  %2882 = vperm.xlu0 %2881, %v2875
  %v2883 = vpop.permute.xlu0 %2882
  %2884 = vset.pattern.permute.xlu0 0
  %2885 = vperm.xlu0 %2884, %v2876
  %v2886 = vpop.permute.xlu0 %2885
  %2887 = vset.pattern.permute.xlu0 0
  %2888 = vperm.xlu0 %2887, %v2877
  %v2889 = vpop.permute.xlu0 %2888
  %vm2890 = vcmp.eq.s32.totalorder %v2880, 1
  %vm2891 = vcmp.eq.s32.totalorder %v2883, 1
  %vm2892 = vcmp.eq.s32.totalorder %v2886, 1
  %vm2893 = vcmp.eq.s32.totalorder %v2889, 1
  %v2894 = vsel %vm2890, 0.0, %v2870
  %v2895 = vsel %vm2891, 0.0, %v2871
  %v2896 = vsel %vm2892, 0.0, %v2872
  %v2897 = vsel %vm2893, 0.0, %v2873
  %v2898 = vpack.c.bf16 %v2895, %v2894
  %v2899 = vpack.c.bf16 %v2897, %v2896
  %v2902 = vunpack.c.l.b16 %v2898
  %v2903 = vunpack.c.h.b16 %v2898
  %v2904 = vunpack.c.l.b16 %v2899
  %v2905 = vunpack.c.h.b16 %v2899
  %v2906 = vpack.c.b16 %v2902, %v2902
  %v2907 = vpack.c.b16 %v2903, %v2903
  %v2908 = vpack.c.b16 %v2904, %v2904
  %v2909 = vpack.c.b16 %v2905, %v2905
  %2914 = vst [vmem:[%s77] sm:$0xf] %v2906
  %2915 = vst [vmem:[%s77 + $0x4] sm:$0xf] %v2907
  %2916 = vst [vmem:[%s77 + $0x8] sm:$0xf] %v2908
  %2917 = vst [vmem:[%s77 + $0xc] sm:$0xf] %v2909
  %p2918 = scmp.eq.s32.totalorder 0, 0
  // Predicated region
  $region18: #{partial_conv_net.15} parent=0 // pred_check
    %p2919 = pneg %p2918
  $region19: #{partial_conv_net.15} parent=0 // pred_check_branch
    %2921 = sbr.rel (%p2919) target = $region21
  $region20: #{partial_conv_net.15} parent=0 // pred_region
    %2922 = vst [vmem:[%s5] sm:$0xff] 0.0
  $region21: #{partial_conv_net.15} parent=0 // pred_fallthru
    _
  %v2923 = vadd.f32 %v2894, %v2895
  %v2924 = vadd.f32 %v2923, %v2896
  %v2925 = vadd.f32 %v2924, %v2897
  %v2926 = vrot.slane %v2925, 4
  %v2927 = vadd.f32 %v2925, %v2926
  %v2928 = vrot.slane %v2927, 2
  %v2929 = vadd.f32 %v2927, %v2928
  %v2930 = vrot.slane %v2929, 1
  %v2931 = vadd.f32 %v2929, %v2930
  %v2932 = vmul.f32 %v2894, %v2894
  %v2933 = vmul.f32 %v2895, %v2895
  %v2934 = vmul.f32 %v2896, %v2896
  %v2935 = vmul.f32 %v2897, %v2897
  %v2936 = vadd.f32 %v2932, %v2933
  %v2937 = vadd.f32 %v2936, %v2934
  %v2938 = vadd.f32 %v2937, %v2935
  %v2939 = vrot.slane %v2938, 4
  %v2940 = vadd.f32 %v2938, %v2939
  %v2941 = vrot.slane %v2940, 2
  %v2942 = vadd.f32 %v2940, %v2941
  %v2943 = vrot.slane %v2942, 1
  %v2944 = vadd.f32 %v2942, %v2943
  %v2945 = vld [vmem:[%s5] sm:$0xff]
  %vm2946 = vcmask 1040384
  %v2947 = vsel %vm2946, %v2931, %v2944
  %vm2948 = vcmask 1041408
  %v2949 = vsel %vm2948, %v2947, 0.0
  %v2950 = vadd.f32 %v2945, %v2949
  %2951 = vst [vmem:[%s5] sm:$0xff] %v2950
  %s2952 = sadd.s32 0, 0
  %s2953 = smul.u32 4, %s2952
  %p2954 = scmp.lt.s32.totalorder %s2953, 3
  %s2955 = scalar_select %p2954, %s2953, 3
  %s2956 = smul.addr %s2955, 4
  %s2957 = scalar_lea.vmem %s4, %s2956
  // Predicated region
  $region22: #{partial_conv_net.15} parent=0 // pred_check
    _
  $region23: #{partial_conv_net.15} parent=0 // pred_check_branch
    %2959 = sbr.rel (0) target = $region25
  $region24: #{partial_conv_net.15} parent=0 // pred_region
    %s2960 = sadd.s32 0, 0
    %s2961 = smul.u32 4, %s2960
  $region25: #{partial_conv_net.15} parent=0 // pred_fallthru
    _
  // Predicated region
  $region26: #{partial_conv_net.15} parent=0 // pred_check
    _
  $region27: #{partial_conv_net.15} parent=0 // pred_check_branch
    %2963 = sbr.rel (0) target = $region29
  $region28: #{partial_conv_net.15} parent=0 // pred_region
    _
  $region29: #{partial_conv_net.15} parent=0 // pred_fallthru
    _
  // Predicated region
  $region30: #{partial_conv_net.15} parent=0 // pred_check
    _
  $region31: #{partial_conv_net.15} parent=0 // pred_check_branch
    %2965 = sbr.rel (0) target = $region33
  $region32: #{partial_conv_net.15} parent=0 // pred_region
    %s2966 = sadd.s32 0, 0
    %s2967 = smul.u32 4, %s2966
    %p2968 = scmp.lt.s32.totalorder %s2967, 3
    %s2969 = scalar_select %p2968, %s2967, 3
    %s2970 = smul.addr %s2969, 4
    %s2971 = scalar_lea.vmem %s4, %s2970
  $region33: #{partial_conv_net.15} parent=0 // pred_fallthru
    _
  // Predicated region
  $region34: #{partial_conv_net.15} parent=0 // pred_check
    _
  $region35: #{partial_conv_net.15} parent=0 // pred_check_branch
    %2973 = sbr.rel (0) target = $region37
  $region36: #{partial_conv_net.15} parent=0 // pred_region
    _
  $region37: #{partial_conv_net.15} parent=0 // pred_fallthru
    _

// kernel: partial_conv_net.18
$region0: #{partial_conv_net.18}
  #allocation0 [shape = 'u32[]', space=smem, size = 0x4, offset = 0x4, fixed_abs, tag = 'smem constant byte address 0x4 - core index']
  #allocation1 [shape = 'u32[144,128]{1,0:T(1,128)}', space=vmem, size = 0x12000, scoped, tag = 'internal scratch']
  %s0 = inlined_call_operand.vmem [shape: bf16[128,128], index: 0, kind: input, shape index: {}, may-alias: {0,2}]
  %s1 = inlined_call_operand.vmem [shape: f32[8,128], index: 1, kind: input, shape index: {}]
  %s2 = inlined_call_operand.vmem [shape: bf16[128,128], index: 2, kind: output, shape index: {}, may-alias: {0,2}]
  %s3 = sld [smem:[#allocation0]]
  $region18: #{partial_conv_net.18} parent=0
    _
  %s5 = ssub.s32 1, %s3
  %s6 = scalar_select 0, %s5, %s3
  // Predicated region
  $region2: #{partial_conv_net.18} parent=0 // pred_check
    _
  $region3: #{partial_conv_net.18} parent=0 // pred_check_branch
    %8 = sbr.rel (0) target = $region5
  $region4: #{partial_conv_net.18} parent=0 // pred_region
    _
  $region5: #{partial_conv_net.18} parent=0 // pred_fallthru
    _
  // Predicated region
  $region6: #{partial_conv_net.18} parent=0 // pred_check
    _
  $region7: #{partial_conv_net.18} parent=0 // pred_check_branch
    %10 = sbr.rel (0) target = $region9
  $region8: #{partial_conv_net.18} parent=0 // pred_region
    _
  $region9: #{partial_conv_net.18} parent=0 // pred_fallthru
    _
  %v11 = vld [vmem:[%s0] sm:$0xf]
  %v12 = vld [vmem:[%s0 + $0x4] sm:$0xf]
  %v13 = vld [vmem:[%s0 + $0x8] sm:$0xf]
  %v14 = vld [vmem:[%s0 + $0xc] sm:$0xf]
  %v15 = vld [vmem:[%s0 + $0x10] sm:$0xf]
  %v16 = vld [vmem:[%s0 + $0x14] sm:$0xf]
  %v17 = vld [vmem:[%s0 + $0x18] sm:$0xf]
  %v18 = vld [vmem:[%s0 + $0x1c] sm:$0xf]
  %v19 = vld [vmem:[%s0 + $0x20] sm:$0xf]
  %v20 = vld [vmem:[%s0 + $0x24] sm:$0xf]
  %v21 = vld [vmem:[%s0 + $0x28] sm:$0xf]
  %v22 = vld [vmem:[%s0 + $0x2c] sm:$0xf]
  %v23 = vld [vmem:[%s0 + $0x30] sm:$0xf]
  %v24 = vld [vmem:[%s0 + $0x34] sm:$0xf]
  %v25 = vld [vmem:[%s0 + $0x38] sm:$0xf]
  %v26 = vld [vmem:[%s0 + $0x3c] sm:$0xf]
  %v27 = vunpack.c.l.bf16 %v11
  %v28 = vunpack.c.l.bf16 %v12
  %v29 = vunpack.c.l.bf16 %v13
  %v30 = vunpack.c.l.bf16 %v14
  %v31 = vunpack.c.l.bf16 %v15
  %v32 = vunpack.c.l.bf16 %v16
  %v33 = vunpack.c.l.bf16 %v17
  %v34 = vunpack.c.l.bf16 %v18
  %v35 = vunpack.c.l.bf16 %v19
  %v36 = vunpack.c.l.bf16 %v20
  %v37 = vunpack.c.l.bf16 %v21
  %v38 = vunpack.c.l.bf16 %v22
  %v39 = vunpack.c.l.bf16 %v23
  %v40 = vunpack.c.l.bf16 %v24
  %v41 = vunpack.c.l.bf16 %v25
  %v42 = vunpack.c.l.bf16 %v26
  %v43 = vld [vmem:[%s1] sm:$0x1]
  %v44 = vmul.f32 %v43, 0.0078125
  %v45 = vld [vmem:[%s1 + $0x1] sm:$0x1]
  %v46 = vmul.f32 %v45, 0.0078125
  %v47 = vmul.f32 %v44, %v44
  %v48 = vsub.f32 %v46, %v47
  %v49 = vmax.f32 %v48, 0.0
  %v50 = vlaneseq
  %v51 = vshrl.u32 %v50, 7
  %v52 = vsub.s32 0, %v51
  %v53 = vrot.slane %v44, %v52
  %v54 = vsub.f32 %v27, %v53
  %v55 = vsub.f32 %v28, %v53
  %v56 = vsub.f32 %v29, %v53
  %v57 = vsub.f32 %v30, %v53
  %v58 = vsub.f32 %v31, %v53
  %v59 = vsub.f32 %v32, %v53
  %v60 = vsub.f32 %v33, %v53
  %v61 = vsub.f32 %v34, %v53
  %v62 = vsub.f32 %v35, %v53
  %v63 = vsub.f32 %v36, %v53
  %v64 = vsub.f32 %v37, %v53
  %v65 = vsub.f32 %v38, %v53
  %v66 = vsub.f32 %v39, %v53
  %v67 = vsub.f32 %v40, %v53
  %v68 = vsub.f32 %v41, %v53
  %v69 = vsub.f32 %v42, %v53
  %v70 = vadd.f32 %v49, 1e-05
  %v71 = vrsqrt.pop %v70
  %v72 = vlaneseq
  %v73 = vshrl.u32 %v72, 7
  %v74 = vsub.s32 0, %v73
  %v75 = vrot.slane %v71, %v74
  %v76 = vmul.f32 %v54, %v75
  %v77 = vmul.f32 %v55, %v75
  %v78 = vmul.f32 %v56, %v75
  %v79 = vmul.f32 %v57, %v75
  %v80 = vmul.f32 %v58, %v75
  %v81 = vmul.f32 %v59, %v75
  %v82 = vmul.f32 %v60, %v75
  %v83 = vmul.f32 %v61, %v75
  %v84 = vmul.f32 %v62, %v75
  %v85 = vmul.f32 %v63, %v75
  %v86 = vmul.f32 %v64, %v75
  %v87 = vmul.f32 %v65, %v75
  %v88 = vmul.f32 %v66, %v75
  %v89 = vmul.f32 %v67, %v75
  %v90 = vmul.f32 %v68, %v75
  %v91 = vmul.f32 %v69, %v75
  %vm92 = vcmp.ge.f32.partialorder %v76, 0.0
  %vm93 = vcmp.ge.f32.partialorder %v77, 0.0
  %vm94 = vcmp.ge.f32.partialorder %v78, 0.0
  %vm95 = vcmp.ge.f32.partialorder %v79, 0.0
  %vm96 = vcmp.ge.f32.partialorder %v80, 0.0
  %vm97 = vcmp.ge.f32.partialorder %v81, 0.0
  %vm98 = vcmp.ge.f32.partialorder %v82, 0.0
  %vm99 = vcmp.ge.f32.partialorder %v83, 0.0
  %vm100 = vcmp.ge.f32.partialorder %v84, 0.0
  %vm101 = vcmp.ge.f32.partialorder %v85, 0.0
  %vm102 = vcmp.ge.f32.partialorder %v86, 0.0
  %vm103 = vcmp.ge.f32.partialorder %v87, 0.0
  %vm104 = vcmp.ge.f32.partialorder %v88, 0.0
  %vm105 = vcmp.ge.f32.partialorder %v89, 0.0
  %vm106 = vcmp.ge.f32.partialorder %v90, 0.0
  %vm107 = vcmp.ge.f32.partialorder %v91, 0.0
  %v108 = vmul.f32 %v76, 0.2
  %v109 = vmul.f32 %v77, 0.2
  %v110 = vmul.f32 %v78, 0.2
  %v111 = vmul.f32 %v79, 0.2
  %v112 = vmul.f32 %v80, 0.2
  %v113 = vmul.f32 %v81, 0.2
  %v114 = vmul.f32 %v82, 0.2
  %v115 = vmul.f32 %v83, 0.2
  %v116 = vmul.f32 %v84, 0.2
  %v117 = vmul.f32 %v85, 0.2
  %v118 = vmul.f32 %v86, 0.2
  %v119 = vmul.f32 %v87, 0.2
  %v120 = vmul.f32 %v88, 0.2
  %v121 = vmul.f32 %v89, 0.2
  %v122 = vmul.f32 %v90, 0.2
  %v123 = vmul.f32 %v91, 0.2
  %v124 = vsel %vm92, %v76, %v108
  %v125 = vsel %vm93, %v77, %v109
  %v126 = vsel %vm94, %v78, %v110
  %v127 = vsel %vm95, %v79, %v111
  %v128 = vsel %vm96, %v80, %v112
  %v129 = vsel %vm97, %v81, %v113
  %v130 = vsel %vm98, %v82, %v114
  %v131 = vsel %vm99, %v83, %v115
  %v132 = vsel %vm100, %v84, %v116
  %v133 = vsel %vm101, %v85, %v117
  %v134 = vsel %vm102, %v86, %v118
  %v135 = vsel %vm103, %v87, %v119
  %v136 = vsel %vm104, %v88, %v120
  %v137 = vsel %vm105, %v89, %v121
  %v138 = vsel %vm106, %v90, %v122
  %v139 = vsel %vm107, %v91, %v123
  %v140 = vpack.c.bf16 %v125, %v124
  %v141 = vpack.c.bf16 %v127, %v126
  %v142 = vpack.c.bf16 %v129, %v128
  %v143 = vpack.c.bf16 %v131, %v130
  %v144 = vpack.c.bf16 %v133, %v132
  %v145 = vpack.c.bf16 %v135, %v134
  %v146 = vpack.c.bf16 %v137, %v136
  %v147 = vpack.c.bf16 %v139, %v138
  %v156 = vunpack.c.l.b16 %v140
  %v157 = vunpack.c.h.b16 %v140
  %v158 = vunpack.c.l.b16 %v141
  %v159 = vunpack.c.h.b16 %v141
  %v160 = vunpack.c.l.b16 %v142
  %v161 = vunpack.c.h.b16 %v142
  %v162 = vunpack.c.l.b16 %v143
  %v163 = vunpack.c.h.b16 %v143
  %v164 = vunpack.c.l.b16 %v144
  %v165 = vunpack.c.h.b16 %v144
  %v166 = vunpack.c.l.b16 %v145
  %v167 = vunpack.c.h.b16 %v145
  %v168 = vunpack.c.l.b16 %v146
  %v169 = vunpack.c.h.b16 %v146
  %v170 = vunpack.c.l.b16 %v147
  %v171 = vunpack.c.h.b16 %v147
  %v172 = vpack.c.b16 %v156, %v156
  %v173 = vpack.c.b16 %v157, %v157
  %v174 = vpack.c.b16 %v158, %v158
  %v175 = vpack.c.b16 %v159, %v159
  %v176 = vpack.c.b16 %v160, %v160
  %v177 = vpack.c.b16 %v161, %v161
  %v178 = vpack.c.b16 %v162, %v162
  %v179 = vpack.c.b16 %v163, %v163
  %v180 = vpack.c.b16 %v164, %v164
  %v181 = vpack.c.b16 %v165, %v165
  %v182 = vpack.c.b16 %v166, %v166
  %v183 = vpack.c.b16 %v167, %v167
  %v184 = vpack.c.b16 %v168, %v168
  %v185 = vpack.c.b16 %v169, %v169
  %v186 = vpack.c.b16 %v170, %v170
  %v187 = vpack.c.b16 %v171, %v171
  %204 = vst [vmem:[%s2] sm:$0xf] %v172
  %205 = vst [vmem:[%s2 + $0x4] sm:$0xf] %v173
  %206 = vst [vmem:[%s2 + $0x8] sm:$0xf] %v174
  %207 = vst [vmem:[%s2 + $0xc] sm:$0xf] %v175
  %208 = vst [vmem:[%s2 + $0x10] sm:$0xf] %v176
  %209 = vst [vmem:[%s2 + $0x14] sm:$0xf] %v177
  %210 = vst [vmem:[%s2 + $0x18] sm:$0xf] %v178
  %211 = vst [vmem:[%s2 + $0x1c] sm:$0xf] %v179
  %212 = vst [vmem:[%s2 + $0x20] sm:$0xf] %v180
  %213 = vst [vmem:[%s2 + $0x24] sm:$0xf] %v181
  %214 = vst [vmem:[%s2 + $0x28] sm:$0xf] %v182
  %215 = vst [vmem:[%s2 + $0x2c] sm:$0xf] %v183
  %216 = vst [vmem:[%s2 + $0x30] sm:$0xf] %v184
  %217 = vst [vmem:[%s2 + $0x34] sm:$0xf] %v185
  %218 = vst [vmem:[%s2 + $0x38] sm:$0xf] %v186
  %219 = vst [vmem:[%s2 + $0x3c] sm:$0xf] %v187
  // Predicated region
  $region10: #{partial_conv_net.18} parent=0 // pred_check
    _
  $region11: #{partial_conv_net.18} parent=0 // pred_check_branch
    %221 = sbr.rel (0) target = $region13
  $region12: #{partial_conv_net.18} parent=0 // pred_region
    _
  $region13: #{partial_conv_net.18} parent=0 // pred_fallthru
    _
  // Predicated region
  $region14: #{partial_conv_net.18} parent=0 // pred_check
    _
  $region15: #{partial_conv_net.18} parent=0 // pred_check_branch
    %223 = sbr.rel (0) target = $region17
  $region16: #{partial_conv_net.18} parent=0 // pred_region
    _
  $region17: #{partial_conv_net.18} parent=0 // pred_fallthru
    _

// kernel: partial_conv_net.17
$region0: #{partial_conv_net.17}
  #allocation0 [shape = 'u32[]', space=smem, size = 0x4, offset = 0x4, fixed_abs, tag = 'smem constant byte address 0x4 - core index']
  #allocation1 [shape = 'u32[144,128]{1,0:T(1,128)}', space=vmem, size = 0x12000, scoped, tag = 'internal scratch']
  %s0 = inlined_call_operand.vmem [shape: bf16[128,1792], index: 0, kind: input, shape index: {}]
  %s1 = inlined_call_operand.vmem [shape: f32[128,1], index: 1, kind: input, shape index: {}]
  %s2 = inlined_call_operand.vmem [shape: bf16[1792,128], index: 2, kind: input, shape index: {}]
  %s3 = inlined_call_operand.vmem [shape: f32[1,128], index: 3, kind: input, shape index: {}]
  %s4 = inlined_call_operand.vmem [shape: bf16[128,128], index: 4, kind: output, shape index: {0}]
  %s5 = inlined_call_operand.vmem [shape: f32[8,128], index: 5, kind: output, shape index: {1}]
  %6 = xla_tuple %s4, %s5
  %s7 = sld [smem:[#allocation0]]
  $region38: #{partial_conv_net.17} parent=0
    _
  %s9 = ssub.s32 1, %s7
  %s10 = scalar_select 0, %s9, %s7
  // Predicated region
  $region2: #{partial_conv_net.17} parent=0 // pred_check
    _
  $region3: #{partial_conv_net.17} parent=0 // pred_check_branch
    %12 = sbr.rel (0) target = $region5
  $region4: #{partial_conv_net.17} parent=0 // pred_region
    %s13 = sadd.s32 0, 0
    %s14 = smul.u32 16, %s13
    %p15 = scmp.lt.s32.totalorder %s14, 15
    %s16 = scalar_select %p15, %s14, 15
    %s17 = smul.addr %s16, 14
    %s18 = smul.addr %s17, 4
    %s19 = scalar_lea.vmem %s0, %s18
    %s20 = sadd.s32 0, 0
    %s21 = smul.u32 16, %s20
  $region5: #{partial_conv_net.17} parent=0 // pred_fallthru
    _
  // Predicated region
  $region6: #{partial_conv_net.17} parent=0 // pred_check
    _
  $region7: #{partial_conv_net.17} parent=0 // pred_check_branch
    %23 = sbr.rel (0) target = $region9
  $region8: #{partial_conv_net.17} parent=0 // pred_region
    %s24 = sadd.s32 0, 0
    %s25 = smul.u32 16, %s24
    %p26 = scmp.lt.s32.totalorder %s25, 15
    %s27 = scalar_select %p26, %s25, 15
    %s28 = smul.addr %s27, 8
    %s29 = scalar_lea.vmem %s1, %s28
    %s30 = sadd.s32 0, 0
    %s31 = smul.u32 16, %s30
  $region9: #{partial_conv_net.17} parent=0 // pred_fallthru
    _
  // Predicated region
  $region10: #{partial_conv_net.17} parent=0 // pred_check
    _
  $region11: #{partial_conv_net.17} parent=0 // pred_check_branch
    %33 = sbr.rel (0) target = $region13
  $region12: #{partial_conv_net.17} parent=0 // pred_region
    _
  $region13: #{partial_conv_net.17} parent=0 // pred_fallthru
    _
  // Predicated region
  $region14: #{partial_conv_net.17} parent=0 // pred_check
    _
  $region15: #{partial_conv_net.17} parent=0 // pred_check_branch
    %35 = sbr.rel (0) target = $region17
  $region16: #{partial_conv_net.17} parent=0 // pred_region
    _
  $region17: #{partial_conv_net.17} parent=0 // pred_fallthru
    _
  %s36 = sadd.s32 0, 0
  %s37 = smul.u32 16, %s36
  %p38 = scmp.lt.s32.totalorder %s37, 15
  %s39 = scalar_select %p38, %s37, 15
  %s40 = smul.addr %s39, 14
  %s41 = smul.addr %s40, 4
  %s42 = scalar_lea.vmem %s0, %s41
  %s43 = sadd.s32 0, 0
  %s44 = smul.u32 16, %s43
  %p45 = scmp.lt.s32.totalorder %s44, 15
  %s46 = scalar_select %p45, %s44, 15
  %s47 = smul.addr %s46, 8
  %s48 = scalar_lea.vmem %s1, %s47
  %s49 = sadd.s32 0, 0
  %s50 = smul.u32 16, %s49
  %p51 = scmp.lt.s32.totalorder %s50, 15
  %s52 = scalar_select %p51, %s50, 15
  %s53 = smul.addr %s52, 4
  %s54 = scalar_lea.vmem %s4, %s53
  %s55 = sadd.s32 0, 0
  %s56 = smul.u32 16, %s55
  %p57 = scmp.lt.s32.totalorder %s56, 15
  %s58 = scalar_select %p57, %s56, 15
  %s59 = smul.addr %s58, 14
  %s60 = smul.addr %s59, 4
  %s61 = scalar_lea.vmem %s0, %s60
  %s62 = sadd.s32 0, 0
  %s63 = smul.u32 16, %s62
  %s64 = sadd.s32 0, 0
  %s65 = smul.u32 16, %s64
  %p66 = scmp.lt.s32.totalorder %s65, 15
  %s67 = scalar_select %p66, %s65, 15
  %s68 = smul.addr %s67, 8
  %s69 = scalar_lea.vmem %s1, %s68
  %s70 = sadd.s32 0, 0
  %s71 = smul.u32 16, %s70
  %s72 = sadd.s32 0, 0
  %s73 = smul.u32 16, %s72
  %p74 = scmp.lt.s32.totalorder %s73, 15
  %s75 = scalar_select %p74, %s73, 15
  %s76 = smul.addr %s75, 4
  %s77 = scalar_lea.vmem %s4, %s76
  %s78 = sadd.s32 0, 0
  %s79 = smul.u32 16, %s78
  %v81 = vld [vmem:[%s61] sm:$0xff]
  %v82 = vld [vmem:[%s61 + $0x8] sm:$0xff]
  %v83 = vld [vmem:[%s61 + $0x10] sm:$0xff]
  %v84 = vld [vmem:[%s61 + $0x18] sm:$0xff]
  %v85 = vld [vmem:[%s61 + $0x20] sm:$0xff]
  %v86 = vld [vmem:[%s61 + $0x28] sm:$0xff]
  %v87 = vld [vmem:[%s61 + $0x30] sm:$0xff]
  %v88 = vld [vmem:[%s61 + $0x38] sm:$0xff]
  %v89 = vld [vmem:[%s61 + $0x40] sm:$0xff]
  %v90 = vld [vmem:[%s61 + $0x48] sm:$0xff]
  %v91 = vld [vmem:[%s61 + $0x50] sm:$0xff]
  %v92 = vld [vmem:[%s61 + $0x58] sm:$0xff]
  %v93 = vld [vmem:[%s61 + $0x60] sm:$0xff]
  %v94 = vld [vmem:[%s61 + $0x68] sm:$0xff]
  %v95 = vld [vmem:[%s61 + $0x70] sm:$0xff]
  %v96 = vld [vmem:[%s61 + $0x78] sm:$0xff]
  %v97 = vld [vmem:[%s61 + $0x80] sm:$0xff]
  %v98 = vld [vmem:[%s61 + $0x88] sm:$0xff]
  %v99 = vld [vmem:[%s61 + $0x90] sm:$0xff]
  %v100 = vld [vmem:[%s61 + $0x98] sm:$0xff]
  %v101 = vld [vmem:[%s61 + $0xa0] sm:$0xff]
  %v102 = vld [vmem:[%s61 + $0xa8] sm:$0xff]
  %v103 = vld [vmem:[%s61 + $0xb0] sm:$0xff]
  %v104 = vld [vmem:[%s61 + $0xb8] sm:$0xff]
  %v105 = vld [vmem:[%s61 + $0xc0] sm:$0xff]
  %v106 = vld [vmem:[%s61 + $0xc8] sm:$0xff]
  %v107 = vld [vmem:[%s61 + $0xd0] sm:$0xff]
  %v108 = vld [vmem:[%s61 + $0xd8] sm:$0xff]
  %v109 = vld [vmem:[%s61 + $0xe0] sm:$0xff]
  %v110 = vld [vmem:[%s61 + $0xe8] sm:$0xff]
  %v111 = vld [vmem:[%s61 + $0xf0] sm:$0xff]
  %v112 = vld [vmem:[%s61 + $0xf8] sm:$0xff]
  %v113 = vld [vmem:[%s61 + $0x100] sm:$0xff]
  %v114 = vld [vmem:[%s61 + $0x108] sm:$0xff]
  %v115 = vld [vmem:[%s61 + $0x110] sm:$0xff]
  %v116 = vld [vmem:[%s61 + $0x118] sm:$0xff]
  %v117 = vld [vmem:[%s61 + $0x120] sm:$0xff]
  %v118 = vld [vmem:[%s61 + $0x128] sm:$0xff]
  %v119 = vld [vmem:[%s61 + $0x130] sm:$0xff]
  %v120 = vld [vmem:[%s61 + $0x138] sm:$0xff]
  %v121 = vld [vmem:[%s61 + $0x140] sm:$0xff]
  %v122 = vld [vmem:[%s61 + $0x148] sm:$0xff]
  %v123 = vld [vmem:[%s61 + $0x150] sm:$0xff]
  %v124 = vld [vmem:[%s61 + $0x158] sm:$0xff]
  %v125 = vld [vmem:[%s61 + $0x160] sm:$0xff]
  %v126 = vld [vmem:[%s61 + $0x168] sm:$0xff]
  %v127 = vld [vmem:[%s61 + $0x170] sm:$0xff]
  %v128 = vld [vmem:[%s61 + $0x178] sm:$0xff]
  %v129 = vld [vmem:[%s61 + $0x180] sm:$0xff]
  %v130 = vld [vmem:[%s61 + $0x188] sm:$0xff]
  %v131 = vld [vmem:[%s61 + $0x190] sm:$0xff]
  %v132 = vld [vmem:[%s61 + $0x198] sm:$0xff]
  %v133 = vld [vmem:[%s61 + $0x1a0] sm:$0xff]
  %v134 = vld [vmem:[%s61 + $0x1a8] sm:$0xff]
  %v135 = vld [vmem:[%s61 + $0x1b0] sm:$0xff]
  %v136 = vld [vmem:[%s61 + $0x1b8] sm:$0xff]
  %v137 = vld [vmem:[%s61 + $0x1c0] sm:$0xff]
  %v138 = vld [vmem:[%s61 + $0x1c8] sm:$0xff]
  %v139 = vld [vmem:[%s61 + $0x1d0] sm:$0xff]
  %v140 = vld [vmem:[%s61 + $0x1d8] sm:$0xff]
  %v141 = vld [vmem:[%s61 + $0x1e0] sm:$0xff]
  %v142 = vld [vmem:[%s61 + $0x1e8] sm:$0xff]
  %v143 = vld [vmem:[%s61 + $0x1f0] sm:$0xff]
  %v144 = vld [vmem:[%s61 + $0x1f8] sm:$0xff]
  %v145 = vld [vmem:[%s61 + $0x200] sm:$0xff]
  %v146 = vld [vmem:[%s61 + $0x208] sm:$0xff]
  %v147 = vld [vmem:[%s61 + $0x210] sm:$0xff]
  %v148 = vld [vmem:[%s61 + $0x218] sm:$0xff]
  %v149 = vld [vmem:[%s61 + $0x220] sm:$0xff]
  %v150 = vld [vmem:[%s61 + $0x228] sm:$0xff]
  %v151 = vld [vmem:[%s61 + $0x230] sm:$0xff]
  %v152 = vld [vmem:[%s61 + $0x238] sm:$0xff]
  %v153 = vld [vmem:[%s61 + $0x240] sm:$0xff]
  %v154 = vld [vmem:[%s61 + $0x248] sm:$0xff]
  %v155 = vld [vmem:[%s61 + $0x250] sm:$0xff]
  %v156 = vld [vmem:[%s61 + $0x258] sm:$0xff]
  %v157 = vld [vmem:[%s61 + $0x260] sm:$0xff]
  %v158 = vld [vmem:[%s61 + $0x268] sm:$0xff]
  %v159 = vld [vmem:[%s61 + $0x270] sm:$0xff]
  %v160 = vld [vmem:[%s61 + $0x278] sm:$0xff]
  %v161 = vld [vmem:[%s61 + $0x280] sm:$0xff]
  %v162 = vld [vmem:[%s61 + $0x288] sm:$0xff]
  %v163 = vld [vmem:[%s61 + $0x290] sm:$0xff]
  %v164 = vld [vmem:[%s61 + $0x298] sm:$0xff]
  %v165 = vld [vmem:[%s61 + $0x2a0] sm:$0xff]
  %v166 = vld [vmem:[%s61 + $0x2a8] sm:$0xff]
  %v167 = vld [vmem:[%s61 + $0x2b0] sm:$0xff]
  %v168 = vld [vmem:[%s61 + $0x2b8] sm:$0xff]
  %v169 = vld [vmem:[%s61 + $0x2c0] sm:$0xff]
  %v170 = vld [vmem:[%s61 + $0x2c8] sm:$0xff]
  %v171 = vld [vmem:[%s61 + $0x2d0] sm:$0xff]
  %v172 = vld [vmem:[%s61 + $0x2d8] sm:$0xff]
  %v173 = vld [vmem:[%s61 + $0x2e0] sm:$0xff]
  %v174 = vld [vmem:[%s61 + $0x2e8] sm:$0xff]
  %v175 = vld [vmem:[%s61 + $0x2f0] sm:$0xff]
  %v176 = vld [vmem:[%s61 + $0x2f8] sm:$0xff]
  %v177 = vld [vmem:[%s61 + $0x300] sm:$0xff]
  %v178 = vld [vmem:[%s61 + $0x308] sm:$0xff]
  %v179 = vld [vmem:[%s61 + $0x310] sm:$0xff]
  %v180 = vld [vmem:[%s61 + $0x318] sm:$0xff]
  %v181 = vld [vmem:[%s61 + $0x320] sm:$0xff]
  %v182 = vld [vmem:[%s61 + $0x328] sm:$0xff]
  %v183 = vld [vmem:[%s61 + $0x330] sm:$0xff]
  %v184 = vld [vmem:[%s61 + $0x338] sm:$0xff]
  %v185 = vld [vmem:[%s61 + $0x340] sm:$0xff]
  %v186 = vld [vmem:[%s61 + $0x348] sm:$0xff]
  %v187 = vld [vmem:[%s61 + $0x350] sm:$0xff]
  %v188 = vld [vmem:[%s61 + $0x358] sm:$0xff]
  %v189 = vld [vmem:[%s61 + $0x360] sm:$0xff]
  %v190 = vld [vmem:[%s61 + $0x368] sm:$0xff]
  %v191 = vld [vmem:[%s61 + $0x370] sm:$0xff]
  %v192 = vld [vmem:[%s61 + $0x378] sm:$0xff]
  %v193 = vld [vmem:[%s2] sm:$0xf]
  %v194 = vld [vmem:[%s2 + $0x4] sm:$0xf]
  %v195 = vld [vmem:[%s2 + $0x8] sm:$0xf]
  %v196 = vld [vmem:[%s2 + $0xc] sm:$0xf]
  %v197 = vld [vmem:[%s2 + $0x10] sm:$0xf]
  %v198 = vld [vmem:[%s2 + $0x14] sm:$0xf]
  %v199 = vld [vmem:[%s2 + $0x18] sm:$0xf]
  %v200 = vld [vmem:[%s2 + $0x1c] sm:$0xf]
  %v201 = vld [vmem:[%s2 + $0x20] sm:$0xf]
  %v202 = vld [vmem:[%s2 + $0x24] sm:$0xf]
  %v203 = vld [vmem:[%s2 + $0x28] sm:$0xf]
  %v204 = vld [vmem:[%s2 + $0x2c] sm:$0xf]
  %v205 = vld [vmem:[%s2 + $0x30] sm:$0xf]
  %v206 = vld [vmem:[%s2 + $0x34] sm:$0xf]
  %v207 = vld [vmem:[%s2 + $0x38] sm:$0xf]
  %v208 = vld [vmem:[%s2 + $0x3c] sm:$0xf]
  %v209 = vld [vmem:[%s2 + $0x40] sm:$0xf]
  %v210 = vld [vmem:[%s2 + $0x44] sm:$0xf]
  %v211 = vld [vmem:[%s2 + $0x48] sm:$0xf]
  %v212 = vld [vmem:[%s2 + $0x4c] sm:$0xf]
  %v213 = vld [vmem:[%s2 + $0x50] sm:$0xf]
  %v214 = vld [vmem:[%s2 + $0x54] sm:$0xf]
  %v215 = vld [vmem:[%s2 + $0x58] sm:$0xf]
  %v216 = vld [vmem:[%s2 + $0x5c] sm:$0xf]
  %v217 = vld [vmem:[%s2 + $0x60] sm:$0xf]
  %v218 = vld [vmem:[%s2 + $0x64] sm:$0xf]
  %v219 = vld [vmem:[%s2 + $0x68] sm:$0xf]
  %v220 = vld [vmem:[%s2 + $0x6c] sm:$0xf]
  %v221 = vld [vmem:[%s2 + $0x70] sm:$0xf]
  %v222 = vld [vmem:[%s2 + $0x74] sm:$0xf]
  %v223 = vld [vmem:[%s2 + $0x78] sm:$0xf]
  %v224 = vld [vmem:[%s2 + $0x7c] sm:$0xf]
  %v225 = vld [vmem:[%s2 + $0x80] sm:$0xf]
  %v226 = vld [vmem:[%s2 + $0x84] sm:$0xf]
  %v227 = vld [vmem:[%s2 + $0x88] sm:$0xf]
  %v228 = vld [vmem:[%s2 + $0x8c] sm:$0xf]
  %v229 = vld [vmem:[%s2 + $0x90] sm:$0xf]
  %v230 = vld [vmem:[%s2 + $0x94] sm:$0xf]
  %v231 = vld [vmem:[%s2 + $0x98] sm:$0xf]
  %v232 = vld [vmem:[%s2 + $0x9c] sm:$0xf]
  %v233 = vld [vmem:[%s2 + $0xa0] sm:$0xf]
  %v234 = vld [vmem:[%s2 + $0xa4] sm:$0xf]
  %v235 = vld [vmem:[%s2 + $0xa8] sm:$0xf]
  %v236 = vld [vmem:[%s2 + $0xac] sm:$0xf]
  %v237 = vld [vmem:[%s2 + $0xb0] sm:$0xf]
  %v238 = vld [vmem:[%s2 + $0xb4] sm:$0xf]
  %v239 = vld [vmem:[%s2 + $0xb8] sm:$0xf]
  %v240 = vld [vmem:[%s2 + $0xbc] sm:$0xf]
  %v241 = vld [vmem:[%s2 + $0xc0] sm:$0xf]
  %v242 = vld [vmem:[%s2 + $0xc4] sm:$0xf]
  %v243 = vld [vmem:[%s2 + $0xc8] sm:$0xf]
  %v244 = vld [vmem:[%s2 + $0xcc] sm:$0xf]
  %v245 = vld [vmem:[%s2 + $0xd0] sm:$0xf]
  %v246 = vld [vmem:[%s2 + $0xd4] sm:$0xf]
  %v247 = vld [vmem:[%s2 + $0xd8] sm:$0xf]
  %v248 = vld [vmem:[%s2 + $0xdc] sm:$0xf]
  %v249 = vld [vmem:[%s2 + $0xe0] sm:$0xf]
  %v250 = vld [vmem:[%s2 + $0xe4] sm:$0xf]
  %v251 = vld [vmem:[%s2 + $0xe8] sm:$0xf]
  %v252 = vld [vmem:[%s2 + $0xec] sm:$0xf]
  %v253 = vld [vmem:[%s2 + $0xf0] sm:$0xf]
  %v254 = vld [vmem:[%s2 + $0xf4] sm:$0xf]
  %v255 = vld [vmem:[%s2 + $0xf8] sm:$0xf]
  %v256 = vld [vmem:[%s2 + $0xfc] sm:$0xf]
  %v257 = vld [vmem:[%s2 + $0x100] sm:$0xf]
  %v258 = vld [vmem:[%s2 + $0x104] sm:$0xf]
  %v259 = vld [vmem:[%s2 + $0x108] sm:$0xf]
  %v260 = vld [vmem:[%s2 + $0x10c] sm:$0xf]
  %v261 = vld [vmem:[%s2 + $0x110] sm:$0xf]
  %v262 = vld [vmem:[%s2 + $0x114] sm:$0xf]
  %v263 = vld [vmem:[%s2 + $0x118] sm:$0xf]
  %v264 = vld [vmem:[%s2 + $0x11c] sm:$0xf]
  %v265 = vld [vmem:[%s2 + $0x120] sm:$0xf]
  %v266 = vld [vmem:[%s2 + $0x124] sm:$0xf]
  %v267 = vld [vmem:[%s2 + $0x128] sm:$0xf]
  %v268 = vld [vmem:[%s2 + $0x12c] sm:$0xf]
  %v269 = vld [vmem:[%s2 + $0x130] sm:$0xf]
  %v270 = vld [vmem:[%s2 + $0x134] sm:$0xf]
  %v271 = vld [vmem:[%s2 + $0x138] sm:$0xf]
  %v272 = vld [vmem:[%s2 + $0x13c] sm:$0xf]
  %v273 = vld [vmem:[%s2 + $0x140] sm:$0xf]
  %v274 = vld [vmem:[%s2 + $0x144] sm:$0xf]
  %v275 = vld [vmem:[%s2 + $0x148] sm:$0xf]
  %v276 = vld [vmem:[%s2 + $0x14c] sm:$0xf]
  %v277 = vld [vmem:[%s2 + $0x150] sm:$0xf]
  %v278 = vld [vmem:[%s2 + $0x154] sm:$0xf]
  %v279 = vld [vmem:[%s2 + $0x158] sm:$0xf]
  %v280 = vld [vmem:[%s2 + $0x15c] sm:$0xf]
  %v281 = vld [vmem:[%s2 + $0x160] sm:$0xf]
  %v282 = vld [vmem:[%s2 + $0x164] sm:$0xf]
  %v283 = vld [vmem:[%s2 + $0x168] sm:$0xf]
  %v284 = vld [vmem:[%s2 + $0x16c] sm:$0xf]
  %v285 = vld [vmem:[%s2 + $0x170] sm:$0xf]
  %v286 = vld [vmem:[%s2 + $0x174] sm:$0xf]
  %v287 = vld [vmem:[%s2 + $0x178] sm:$0xf]
  %v288 = vld [vmem:[%s2 + $0x17c] sm:$0xf]
  %v289 = vld [vmem:[%s2 + $0x180] sm:$0xf]
  %v290 = vld [vmem:[%s2 + $0x184] sm:$0xf]
  %v291 = vld [vmem:[%s2 + $0x188] sm:$0xf]
  %v292 = vld [vmem:[%s2 + $0x18c] sm:$0xf]
  %v293 = vld [vmem:[%s2 + $0x190] sm:$0xf]
  %v294 = vld [vmem:[%s2 + $0x194] sm:$0xf]
  %v295 = vld [vmem:[%s2 + $0x198] sm:$0xf]
  %v296 = vld [vmem:[%s2 + $0x19c] sm:$0xf]
  %v297 = vld [vmem:[%s2 + $0x1a0] sm:$0xf]
  %v298 = vld [vmem:[%s2 + $0x1a4] sm:$0xf]
  %v299 = vld [vmem:[%s2 + $0x1a8] sm:$0xf]
  %v300 = vld [vmem:[%s2 + $0x1ac] sm:$0xf]
  %v301 = vld [vmem:[%s2 + $0x1b0] sm:$0xf]
  %v302 = vld [vmem:[%s2 + $0x1b4] sm:$0xf]
  %v303 = vld [vmem:[%s2 + $0x1b8] sm:$0xf]
  %v304 = vld [vmem:[%s2 + $0x1bc] sm:$0xf]
  %v305 = vld [vmem:[%s2 + $0x1c0] sm:$0xf]
  %v306 = vld [vmem:[%s2 + $0x1c4] sm:$0xf]
  %v307 = vld [vmem:[%s2 + $0x1c8] sm:$0xf]
  %v308 = vld [vmem:[%s2 + $0x1cc] sm:$0xf]
  %v309 = vld [vmem:[%s2 + $0x1d0] sm:$0xf]
  %v310 = vld [vmem:[%s2 + $0x1d4] sm:$0xf]
  %v311 = vld [vmem:[%s2 + $0x1d8] sm:$0xf]
  %v312 = vld [vmem:[%s2 + $0x1dc] sm:$0xf]
  %v313 = vld [vmem:[%s2 + $0x1e0] sm:$0xf]
  %v314 = vld [vmem:[%s2 + $0x1e4] sm:$0xf]
  %v315 = vld [vmem:[%s2 + $0x1e8] sm:$0xf]
  %v316 = vld [vmem:[%s2 + $0x1ec] sm:$0xf]
  %v317 = vld [vmem:[%s2 + $0x1f0] sm:$0xf]
  %v318 = vld [vmem:[%s2 + $0x1f4] sm:$0xf]
  %v319 = vld [vmem:[%s2 + $0x1f8] sm:$0xf]
  %v320 = vld [vmem:[%s2 + $0x1fc] sm:$0xf]
  %v321 = vld [vmem:[%s2 + $0x200] sm:$0xf]
  %v322 = vld [vmem:[%s2 + $0x204] sm:$0xf]
  %v323 = vld [vmem:[%s2 + $0x208] sm:$0xf]
  %v324 = vld [vmem:[%s2 + $0x20c] sm:$0xf]
  %v325 = vld [vmem:[%s2 + $0x210] sm:$0xf]
  %v326 = vld [vmem:[%s2 + $0x214] sm:$0xf]
  %v327 = vld [vmem:[%s2 + $0x218] sm:$0xf]
  %v328 = vld [vmem:[%s2 + $0x21c] sm:$0xf]
  %v329 = vld [vmem:[%s2 + $0x220] sm:$0xf]
  %v330 = vld [vmem:[%s2 + $0x224] sm:$0xf]
  %v331 = vld [vmem:[%s2 + $0x228] sm:$0xf]
  %v332 = vld [vmem:[%s2 + $0x22c] sm:$0xf]
  %v333 = vld [vmem:[%s2 + $0x230] sm:$0xf]
  %v334 = vld [vmem:[%s2 + $0x234] sm:$0xf]
  %v335 = vld [vmem:[%s2 + $0x238] sm:$0xf]
  %v336 = vld [vmem:[%s2 + $0x23c] sm:$0xf]
  %v337 = vld [vmem:[%s2 + $0x240] sm:$0xf]
  %v338 = vld [vmem:[%s2 + $0x244] sm:$0xf]
  %v339 = vld [vmem:[%s2 + $0x248] sm:$0xf]
  %v340 = vld [vmem:[%s2 + $0x24c] sm:$0xf]
  %v341 = vld [vmem:[%s2 + $0x250] sm:$0xf]
  %v342 = vld [vmem:[%s2 + $0x254] sm:$0xf]
  %v343 = vld [vmem:[%s2 + $0x258] sm:$0xf]
  %v344 = vld [vmem:[%s2 + $0x25c] sm:$0xf]
  %v345 = vld [vmem:[%s2 + $0x260] sm:$0xf]
  %v346 = vld [vmem:[%s2 + $0x264] sm:$0xf]
  %v347 = vld [vmem:[%s2 + $0x268] sm:$0xf]
  %v348 = vld [vmem:[%s2 + $0x26c] sm:$0xf]
  %v349 = vld [vmem:[%s2 + $0x270] sm:$0xf]
  %v350 = vld [vmem:[%s2 + $0x274] sm:$0xf]
  %v351 = vld [vmem:[%s2 + $0x278] sm:$0xf]
  %v352 = vld [vmem:[%s2 + $0x27c] sm:$0xf]
  %v353 = vld [vmem:[%s2 + $0x280] sm:$0xf]
  %v354 = vld [vmem:[%s2 + $0x284] sm:$0xf]
  %v355 = vld [vmem:[%s2 + $0x288] sm:$0xf]
  %v356 = vld [vmem:[%s2 + $0x28c] sm:$0xf]
  %v357 = vld [vmem:[%s2 + $0x290] sm:$0xf]
  %v358 = vld [vmem:[%s2 + $0x294] sm:$0xf]
  %v359 = vld [vmem:[%s2 + $0x298] sm:$0xf]
  %v360 = vld [vmem:[%s2 + $0x29c] sm:$0xf]
  %v361 = vld [vmem:[%s2 + $0x2a0] sm:$0xf]
  %v362 = vld [vmem:[%s2 + $0x2a4] sm:$0xf]
  %v363 = vld [vmem:[%s2 + $0x2a8] sm:$0xf]
  %v364 = vld [vmem:[%s2 + $0x2ac] sm:$0xf]
  %v365 = vld [vmem:[%s2 + $0x2b0] sm:$0xf]
  %v366 = vld [vmem:[%s2 + $0x2b4] sm:$0xf]
  %v367 = vld [vmem:[%s2 + $0x2b8] sm:$0xf]
  %v368 = vld [vmem:[%s2 + $0x2bc] sm:$0xf]
  %v369 = vld [vmem:[%s2 + $0x2c0] sm:$0xf]
  %v370 = vld [vmem:[%s2 + $0x2c4] sm:$0xf]
  %v371 = vld [vmem:[%s2 + $0x2c8] sm:$0xf]
  %v372 = vld [vmem:[%s2 + $0x2cc] sm:$0xf]
  %v373 = vld [vmem:[%s2 + $0x2d0] sm:$0xf]
  %v374 = vld [vmem:[%s2 + $0x2d4] sm:$0xf]
  %v375 = vld [vmem:[%s2 + $0x2d8] sm:$0xf]
  %v376 = vld [vmem:[%s2 + $0x2dc] sm:$0xf]
  %v377 = vld [vmem:[%s2 + $0x2e0] sm:$0xf]
  %v378 = vld [vmem:[%s2 + $0x2e4] sm:$0xf]
  %v379 = vld [vmem:[%s2 + $0x2e8] sm:$0xf]
  %v380 = vld [vmem:[%s2 + $0x2ec] sm:$0xf]
  %v381 = vld [vmem:[%s2 + $0x2f0] sm:$0xf]
  %v382 = vld [vmem:[%s2 + $0x2f4] sm:$0xf]
  %v383 = vld [vmem:[%s2 + $0x2f8] sm:$0xf]
  %v384 = vld [vmem:[%s2 + $0x2fc] sm:$0xf]
  %v385 = vld [vmem:[%s2 + $0x300] sm:$0xf]
  %v386 = vld [vmem:[%s2 + $0x304] sm:$0xf]
  %v387 = vld [vmem:[%s2 + $0x308] sm:$0xf]
  %v388 = vld [vmem:[%s2 + $0x30c] sm:$0xf]
  %v389 = vld [vmem:[%s2 + $0x310] sm:$0xf]
  %v390 = vld [vmem:[%s2 + $0x314] sm:$0xf]
  %v391 = vld [vmem:[%s2 + $0x318] sm:$0xf]
  %v392 = vld [vmem:[%s2 + $0x31c] sm:$0xf]
  %v393 = vld [vmem:[%s2 + $0x320] sm:$0xf]
  %v394 = vld [vmem:[%s2 + $0x324] sm:$0xf]
  %v395 = vld [vmem:[%s2 + $0x328] sm:$0xf]
  %v396 = vld [vmem:[%s2 + $0x32c] sm:$0xf]
  %v397 = vld [vmem:[%s2 + $0x330] sm:$0xf]
  %v398 = vld [vmem:[%s2 + $0x334] sm:$0xf]
  %v399 = vld [vmem:[%s2 + $0x338] sm:$0xf]
  %v400 = vld [vmem:[%s2 + $0x33c] sm:$0xf]
  %v401 = vld [vmem:[%s2 + $0x340] sm:$0xf]
  %v402 = vld [vmem:[%s2 + $0x344] sm:$0xf]
  %v403 = vld [vmem:[%s2 + $0x348] sm:$0xf]
  %v404 = vld [vmem:[%s2 + $0x34c] sm:$0xf]
  %v405 = vld [vmem:[%s2 + $0x350] sm:$0xf]
  %v406 = vld [vmem:[%s2 + $0x354] sm:$0xf]
  %v407 = vld [vmem:[%s2 + $0x358] sm:$0xf]
  %v408 = vld [vmem:[%s2 + $0x35c] sm:$0xf]
  %v409 = vld [vmem:[%s2 + $0x360] sm:$0xf]
  %v410 = vld [vmem:[%s2 + $0x364] sm:$0xf]
  %v411 = vld [vmem:[%s2 + $0x368] sm:$0xf]
  %v412 = vld [vmem:[%s2 + $0x36c] sm:$0xf]
  %v413 = vld [vmem:[%s2 + $0x370] sm:$0xf]
  %v414 = vld [vmem:[%s2 + $0x374] sm:$0xf]
  %v415 = vld [vmem:[%s2 + $0x378] sm:$0xf]
  %v416 = vld [vmem:[%s2 + $0x37c] sm:$0xf]
  %v529 = vunpack.c.l.b16 %v81
  %v530 = vunpack.c.h.b16 %v81
  %v531 = vunpack.c.l.b16 %v82
  %v532 = vunpack.c.h.b16 %v82
  %v533 = vunpack.c.l.b16 %v83
  %v534 = vunpack.c.h.b16 %v83
  %v535 = vunpack.c.l.b16 %v84
  %v536 = vunpack.c.h.b16 %v84
  %v537 = vunpack.c.l.b16 %v85
  %v538 = vunpack.c.h.b16 %v85
  %v539 = vunpack.c.l.b16 %v86
  %v540 = vunpack.c.h.b16 %v86
  %v541 = vunpack.c.l.b16 %v87
  %v542 = vunpack.c.h.b16 %v87
  %v543 = vunpack.c.l.b16 %v88
  %v544 = vunpack.c.h.b16 %v88
  %v545 = vunpack.c.l.b16 %v89
  %v546 = vunpack.c.h.b16 %v89
  %v547 = vunpack.c.l.b16 %v90
  %v548 = vunpack.c.h.b16 %v90
  %v549 = vunpack.c.l.b16 %v91
  %v550 = vunpack.c.h.b16 %v91
  %v551 = vunpack.c.l.b16 %v92
  %v552 = vunpack.c.h.b16 %v92
  %v553 = vunpack.c.l.b16 %v93
  %v554 = vunpack.c.h.b16 %v93
  %v555 = vunpack.c.l.b16 %v94
  %v556 = vunpack.c.h.b16 %v94
  %v557 = vunpack.c.l.b16 %v95
  %v558 = vunpack.c.h.b16 %v95
  %v559 = vunpack.c.l.b16 %v96
  %v560 = vunpack.c.h.b16 %v96
  %v561 = vunpack.c.l.b16 %v97
  %v562 = vunpack.c.h.b16 %v97
  %v563 = vunpack.c.l.b16 %v98
  %v564 = vunpack.c.h.b16 %v98
  %v565 = vunpack.c.l.b16 %v99
  %v566 = vunpack.c.h.b16 %v99
  %v567 = vunpack.c.l.b16 %v100
  %v568 = vunpack.c.h.b16 %v100
  %v569 = vunpack.c.l.b16 %v101
  %v570 = vunpack.c.h.b16 %v101
  %v571 = vunpack.c.l.b16 %v102
  %v572 = vunpack.c.h.b16 %v102
  %v573 = vunpack.c.l.b16 %v103
  %v574 = vunpack.c.h.b16 %v103
  %v575 = vunpack.c.l.b16 %v104
  %v576 = vunpack.c.h.b16 %v104
  %v577 = vunpack.c.l.b16 %v105
  %v578 = vunpack.c.h.b16 %v105
  %v579 = vunpack.c.l.b16 %v106
  %v580 = vunpack.c.h.b16 %v106
  %v581 = vunpack.c.l.b16 %v107
  %v582 = vunpack.c.h.b16 %v107
  %v583 = vunpack.c.l.b16 %v108
  %v584 = vunpack.c.h.b16 %v108
  %v585 = vunpack.c.l.b16 %v109
  %v586 = vunpack.c.h.b16 %v109
  %v587 = vunpack.c.l.b16 %v110
  %v588 = vunpack.c.h.b16 %v110
  %v589 = vunpack.c.l.b16 %v111
  %v590 = vunpack.c.h.b16 %v111
  %v591 = vunpack.c.l.b16 %v112
  %v592 = vunpack.c.h.b16 %v112
  %v593 = vunpack.c.l.b16 %v113
  %v594 = vunpack.c.h.b16 %v113
  %v595 = vunpack.c.l.b16 %v114
  %v596 = vunpack.c.h.b16 %v114
  %v597 = vunpack.c.l.b16 %v115
  %v598 = vunpack.c.h.b16 %v115
  %v599 = vunpack.c.l.b16 %v116
  %v600 = vunpack.c.h.b16 %v116
  %v601 = vunpack.c.l.b16 %v117
  %v602 = vunpack.c.h.b16 %v117
  %v603 = vunpack.c.l.b16 %v118
  %v604 = vunpack.c.h.b16 %v118
  %v605 = vunpack.c.l.b16 %v119
  %v606 = vunpack.c.h.b16 %v119
  %v607 = vunpack.c.l.b16 %v120
  %v608 = vunpack.c.h.b16 %v120
  %v609 = vunpack.c.l.b16 %v121
  %v610 = vunpack.c.h.b16 %v121
  %v611 = vunpack.c.l.b16 %v122
  %v612 = vunpack.c.h.b16 %v122
  %v613 = vunpack.c.l.b16 %v123
  %v614 = vunpack.c.h.b16 %v123
  %v615 = vunpack.c.l.b16 %v124
  %v616 = vunpack.c.h.b16 %v124
  %v617 = vunpack.c.l.b16 %v125
  %v618 = vunpack.c.h.b16 %v125
  %v619 = vunpack.c.l.b16 %v126
  %v620 = vunpack.c.h.b16 %v126
  %v621 = vunpack.c.l.b16 %v127
  %v622 = vunpack.c.h.b16 %v127
  %v623 = vunpack.c.l.b16 %v128
  %v624 = vunpack.c.h.b16 %v128
  %v625 = vunpack.c.l.b16 %v129
  %v626 = vunpack.c.h.b16 %v129
  %v627 = vunpack.c.l.b16 %v130
  %v628 = vunpack.c.h.b16 %v130
  %v629 = vunpack.c.l.b16 %v131
  %v630 = vunpack.c.h.b16 %v131
  %v631 = vunpack.c.l.b16 %v132
  %v632 = vunpack.c.h.b16 %v132
  %v633 = vunpack.c.l.b16 %v133
  %v634 = vunpack.c.h.b16 %v133
  %v635 = vunpack.c.l.b16 %v134
  %v636 = vunpack.c.h.b16 %v134
  %v637 = vunpack.c.l.b16 %v135
  %v638 = vunpack.c.h.b16 %v135
  %v639 = vunpack.c.l.b16 %v136
  %v640 = vunpack.c.h.b16 %v136
  %v641 = vunpack.c.l.b16 %v137
  %v642 = vunpack.c.h.b16 %v137
  %v643 = vunpack.c.l.b16 %v138
  %v644 = vunpack.c.h.b16 %v138
  %v645 = vunpack.c.l.b16 %v139
  %v646 = vunpack.c.h.b16 %v139
  %v647 = vunpack.c.l.b16 %v140
  %v648 = vunpack.c.h.b16 %v140
  %v649 = vunpack.c.l.b16 %v141
  %v650 = vunpack.c.h.b16 %v141
  %v651 = vunpack.c.l.b16 %v142
  %v652 = vunpack.c.h.b16 %v142
  %v653 = vunpack.c.l.b16 %v143
  %v654 = vunpack.c.h.b16 %v143
  %v655 = vunpack.c.l.b16 %v144
  %v656 = vunpack.c.h.b16 %v144
  %v657 = vunpack.c.l.b16 %v145
  %v658 = vunpack.c.h.b16 %v145
  %v659 = vunpack.c.l.b16 %v146
  %v660 = vunpack.c.h.b16 %v146
  %v661 = vunpack.c.l.b16 %v147
  %v662 = vunpack.c.h.b16 %v147
  %v663 = vunpack.c.l.b16 %v148
  %v664 = vunpack.c.h.b16 %v148
  %v665 = vunpack.c.l.b16 %v149
  %v666 = vunpack.c.h.b16 %v149
  %v667 = vunpack.c.l.b16 %v150
  %v668 = vunpack.c.h.b16 %v150
  %v669 = vunpack.c.l.b16 %v151
  %v670 = vunpack.c.h.b16 %v151
  %v671 = vunpack.c.l.b16 %v152
  %v672 = vunpack.c.h.b16 %v152
  %v673 = vunpack.c.l.b16 %v153
  %v674 = vunpack.c.h.b16 %v153
  %v675 = vunpack.c.l.b16 %v154
  %v676 = vunpack.c.h.b16 %v154
  %v677 = vunpack.c.l.b16 %v155
  %v678 = vunpack.c.h.b16 %v155
  %v679 = vunpack.c.l.b16 %v156
  %v680 = vunpack.c.h.b16 %v156
  %v681 = vunpack.c.l.b16 %v157
  %v682 = vunpack.c.h.b16 %v157
  %v683 = vunpack.c.l.b16 %v158
  %v684 = vunpack.c.h.b16 %v158
  %v685 = vunpack.c.l.b16 %v159
  %v686 = vunpack.c.h.b16 %v159
  %v687 = vunpack.c.l.b16 %v160
  %v688 = vunpack.c.h.b16 %v160
  %v689 = vunpack.c.l.b16 %v161
  %v690 = vunpack.c.h.b16 %v161
  %v691 = vunpack.c.l.b16 %v162
  %v692 = vunpack.c.h.b16 %v162
  %v693 = vunpack.c.l.b16 %v163
  %v694 = vunpack.c.h.b16 %v163
  %v695 = vunpack.c.l.b16 %v164
  %v696 = vunpack.c.h.b16 %v164
  %v697 = vunpack.c.l.b16 %v165
  %v698 = vunpack.c.h.b16 %v165
  %v699 = vunpack.c.l.b16 %v166
  %v700 = vunpack.c.h.b16 %v166
  %v701 = vunpack.c.l.b16 %v167
  %v702 = vunpack.c.h.b16 %v167
  %v703 = vunpack.c.l.b16 %v168
  %v704 = vunpack.c.h.b16 %v168
  %v705 = vunpack.c.l.b16 %v169
  %v706 = vunpack.c.h.b16 %v169
  %v707 = vunpack.c.l.b16 %v170
  %v708 = vunpack.c.h.b16 %v170
  %v709 = vunpack.c.l.b16 %v171
  %v710 = vunpack.c.h.b16 %v171
  %v711 = vunpack.c.l.b16 %v172
  %v712 = vunpack.c.h.b16 %v172
  %v713 = vunpack.c.l.b16 %v173
  %v714 = vunpack.c.h.b16 %v173
  %v715 = vunpack.c.l.b16 %v174
  %v716 = vunpack.c.h.b16 %v174
  %v717 = vunpack.c.l.b16 %v175
  %v718 = vunpack.c.h.b16 %v175
  %v719 = vunpack.c.l.b16 %v176
  %v720 = vunpack.c.h.b16 %v176
  %v721 = vunpack.c.l.b16 %v177
  %v722 = vunpack.c.h.b16 %v177
  %v723 = vunpack.c.l.b16 %v178
  %v724 = vunpack.c.h.b16 %v178
  %v725 = vunpack.c.l.b16 %v179
  %v726 = vunpack.c.h.b16 %v179
  %v727 = vunpack.c.l.b16 %v180
  %v728 = vunpack.c.h.b16 %v180
  %v729 = vunpack.c.l.b16 %v181
  %v730 = vunpack.c.h.b16 %v181
  %v731 = vunpack.c.l.b16 %v182
  %v732 = vunpack.c.h.b16 %v182
  %v733 = vunpack.c.l.b16 %v183
  %v734 = vunpack.c.h.b16 %v183
  %v735 = vunpack.c.l.b16 %v184
  %v736 = vunpack.c.h.b16 %v184
  %v737 = vunpack.c.l.b16 %v185
  %v738 = vunpack.c.h.b16 %v185
  %v739 = vunpack.c.l.b16 %v186
  %v740 = vunpack.c.h.b16 %v186
  %v741 = vunpack.c.l.b16 %v187
  %v742 = vunpack.c.h.b16 %v187
  %v743 = vunpack.c.l.b16 %v188
  %v744 = vunpack.c.h.b16 %v188
  %v745 = vunpack.c.l.b16 %v189
  %v746 = vunpack.c.h.b16 %v189
  %v747 = vunpack.c.l.b16 %v190
  %v748 = vunpack.c.h.b16 %v190
  %v749 = vunpack.c.l.b16 %v191
  %v750 = vunpack.c.h.b16 %v191
  %v751 = vunpack.c.l.b16 %v192
  %v752 = vunpack.c.h.b16 %v192
  %v753 = vpack.c.b16 %v543, %v529
  %v754 = vpack.c.b16 %v544, %v530
  %v755 = vpack.c.b16 %v545, %v531
  %v756 = vpack.c.b16 %v546, %v532
  %v757 = vpack.c.b16 %v547, %v533
  %v758 = vpack.c.b16 %v548, %v534
  %v759 = vpack.c.b16 %v549, %v535
  %v760 = vpack.c.b16 %v550, %v536
  %v761 = vpack.c.b16 %v551, %v537
  %v762 = vpack.c.b16 %v552, %v538
  %v763 = vpack.c.b16 %v553, %v539
  %v764 = vpack.c.b16 %v554, %v540
  %v765 = vpack.c.b16 %v555, %v541
  %v766 = vpack.c.b16 %v556, %v542
  %v767 = vpack.c.b16 %v571, %v557
  %v768 = vpack.c.b16 %v572, %v558
  %v769 = vpack.c.b16 %v573, %v559
  %v770 = vpack.c.b16 %v574, %v560
  %v771 = vpack.c.b16 %v575, %v561
  %v772 = vpack.c.b16 %v576, %v562
  %v773 = vpack.c.b16 %v577, %v563
  %v774 = vpack.c.b16 %v578, %v564
  %v775 = vpack.c.b16 %v579, %v565
  %v776 = vpack.c.b16 %v580, %v566
  %v777 = vpack.c.b16 %v581, %v567
  %v778 = vpack.c.b16 %v582, %v568
  %v779 = vpack.c.b16 %v583, %v569
  %v780 = vpack.c.b16 %v584, %v570
  %v781 = vpack.c.b16 %v599, %v585
  %v782 = vpack.c.b16 %v600, %v586
  %v783 = vpack.c.b16 %v601, %v587
  %v784 = vpack.c.b16 %v602, %v588
  %v785 = vpack.c.b16 %v603, %v589
  %v786 = vpack.c.b16 %v604, %v590
  %v787 = vpack.c.b16 %v605, %v591
  %v788 = vpack.c.b16 %v606, %v592
  %v789 = vpack.c.b16 %v607, %v593
  %v790 = vpack.c.b16 %v608, %v594
  %v791 = vpack.c.b16 %v609, %v595
  %v792 = vpack.c.b16 %v610, %v596
  %v793 = vpack.c.b16 %v611, %v597
  %v794 = vpack.c.b16 %v612, %v598
  %v795 = vpack.c.b16 %v627, %v613
  %v796 = vpack.c.b16 %v628, %v614
  %v797 = vpack.c.b16 %v629, %v615
  %v798 = vpack.c.b16 %v630, %v616
  %v799 = vpack.c.b16 %v631, %v617
  %v800 = vpack.c.b16 %v632, %v618
  %v801 = vpack.c.b16 %v633, %v619
  %v802 = vpack.c.b16 %v634, %v620
  %v803 = vpack.c.b16 %v635, %v621
  %v804 = vpack.c.b16 %v636, %v622
  %v805 = vpack.c.b16 %v637, %v623
  %v806 = vpack.c.b16 %v638, %v624
  %v807 = vpack.c.b16 %v639, %v625
  %v808 = vpack.c.b16 %v640, %v626
  %v809 = vpack.c.b16 %v655, %v641
  %v810 = vpack.c.b16 %v656, %v642
  %v811 = vpack.c.b16 %v657, %v643
  %v812 = vpack.c.b16 %v658, %v644
  %v813 = vpack.c.b16 %v659, %v645
  %v814 = vpack.c.b16 %v660, %v646
  %v815 = vpack.c.b16 %v661, %v647
  %v816 = vpack.c.b16 %v662, %v648
  %v817 = vpack.c.b16 %v663, %v649
  %v818 = vpack.c.b16 %v664, %v650
  %v819 = vpack.c.b16 %v665, %v651
  %v820 = vpack.c.b16 %v666, %v652
  %v821 = vpack.c.b16 %v667, %v653
  %v822 = vpack.c.b16 %v668, %v654
  %v823 = vpack.c.b16 %v683, %v669
  %v824 = vpack.c.b16 %v684, %v670
  %v825 = vpack.c.b16 %v685, %v671
  %v826 = vpack.c.b16 %v686, %v672
  %v827 = vpack.c.b16 %v687, %v673
  %v828 = vpack.c.b16 %v688, %v674
  %v829 = vpack.c.b16 %v689, %v675
  %v830 = vpack.c.b16 %v690, %v676
  %v831 = vpack.c.b16 %v691, %v677
  %v832 = vpack.c.b16 %v692, %v678
  %v833 = vpack.c.b16 %v693, %v679
  %v834 = vpack.c.b16 %v694, %v680
  %v835 = vpack.c.b16 %v695, %v681
  %v836 = vpack.c.b16 %v696, %v682
  %v837 = vpack.c.b16 %v711, %v697
  %v838 = vpack.c.b16 %v712, %v698
  %v839 = vpack.c.b16 %v713, %v699
  %v840 = vpack.c.b16 %v714, %v700
  %v841 = vpack.c.b16 %v715, %v701
  %v842 = vpack.c.b16 %v716, %v702
  %v843 = vpack.c.b16 %v717, %v703
  %v844 = vpack.c.b16 %v718, %v704
  %v845 = vpack.c.b16 %v719, %v705
  %v846 = vpack.c.b16 %v720, %v706
  %v847 = vpack.c.b16 %v721, %v707
  %v848 = vpack.c.b16 %v722, %v708
  %v849 = vpack.c.b16 %v723, %v709
  %v850 = vpack.c.b16 %v724, %v710
  %v851 = vpack.c.b16 %v739, %v725
  %v852 = vpack.c.b16 %v740, %v726
  %v853 = vpack.c.b16 %v741, %v727
  %v854 = vpack.c.b16 %v742, %v728
  %v855 = vpack.c.b16 %v743, %v729
  %v856 = vpack.c.b16 %v744, %v730
  %v857 = vpack.c.b16 %v745, %v731
  %v858 = vpack.c.b16 %v746, %v732
  %v859 = vpack.c.b16 %v747, %v733
  %v860 = vpack.c.b16 %v748, %v734
  %v861 = vpack.c.b16 %v749, %v735
  %v862 = vpack.c.b16 %v750, %v736
  %v863 = vpack.c.b16 %v751, %v737
  %v864 = vpack.c.b16 %v752, %v738
  %v1201 = vunpack.c.l.b16 %v193
  %v1202 = vunpack.c.l.b16 %v194
  %v1203 = vunpack.c.l.b16 %v195
  %v1204 = vunpack.c.l.b16 %v196
  %v1205 = vunpack.c.l.b16 %v197
  %v1206 = vunpack.c.l.b16 %v198
  %v1207 = vunpack.c.l.b16 %v199
  %v1208 = vunpack.c.l.b16 %v200
  %v1209 = vunpack.c.l.b16 %v201
  %v1210 = vunpack.c.l.b16 %v202
  %v1211 = vunpack.c.l.b16 %v203
  %v1212 = vunpack.c.l.b16 %v204
  %v1213 = vunpack.c.l.b16 %v205
  %v1214 = vunpack.c.l.b16 %v206
  %v1215 = vunpack.c.l.b16 %v207
  %v1216 = vunpack.c.l.b16 %v208
  %v1217 = vunpack.c.l.b16 %v209
  %v1218 = vunpack.c.l.b16 %v210
  %v1219 = vunpack.c.l.b16 %v211
  %v1220 = vunpack.c.l.b16 %v212
  %v1221 = vunpack.c.l.b16 %v213
  %v1222 = vunpack.c.l.b16 %v214
  %v1223 = vunpack.c.l.b16 %v215
  %v1224 = vunpack.c.l.b16 %v216
  %v1225 = vunpack.c.l.b16 %v217
  %v1226 = vunpack.c.l.b16 %v218
  %v1227 = vunpack.c.l.b16 %v219
  %v1228 = vunpack.c.l.b16 %v220
  %v1229 = vunpack.c.l.b16 %v221
  %v1230 = vunpack.c.l.b16 %v222
  %v1231 = vunpack.c.l.b16 %v223
  %v1232 = vunpack.c.l.b16 %v224
  %v1233 = vunpack.c.l.b16 %v225
  %v1234 = vunpack.c.l.b16 %v226
  %v1235 = vunpack.c.l.b16 %v227
  %v1236 = vunpack.c.l.b16 %v228
  %v1237 = vunpack.c.l.b16 %v229
  %v1238 = vunpack.c.l.b16 %v230
  %v1239 = vunpack.c.l.b16 %v231
  %v1240 = vunpack.c.l.b16 %v232
  %v1241 = vunpack.c.l.b16 %v233
  %v1242 = vunpack.c.l.b16 %v234
  %v1243 = vunpack.c.l.b16 %v235
  %v1244 = vunpack.c.l.b16 %v236
  %v1245 = vunpack.c.l.b16 %v237
  %v1246 = vunpack.c.l.b16 %v238
  %v1247 = vunpack.c.l.b16 %v239
  %v1248 = vunpack.c.l.b16 %v240
  %v1249 = vunpack.c.l.b16 %v241
  %v1250 = vunpack.c.l.b16 %v242
  %v1251 = vunpack.c.l.b16 %v243
  %v1252 = vunpack.c.l.b16 %v244
  %v1253 = vunpack.c.l.b16 %v245
  %v1254 = vunpack.c.l.b16 %v246
  %v1255 = vunpack.c.l.b16 %v247
  %v1256 = vunpack.c.l.b16 %v248
  %v1257 = vunpack.c.l.b16 %v249
  %v1258 = vunpack.c.l.b16 %v250
  %v1259 = vunpack.c.l.b16 %v251
  %v1260 = vunpack.c.l.b16 %v252
  %v1261 = vunpack.c.l.b16 %v253
  %v1262 = vunpack.c.l.b16 %v254
  %v1263 = vunpack.c.l.b16 %v255
  %v1264 = vunpack.c.l.b16 %v256
  %v1265 = vunpack.c.l.b16 %v257
  %v1266 = vunpack.c.l.b16 %v258
  %v1267 = vunpack.c.l.b16 %v259
  %v1268 = vunpack.c.l.b16 %v260
  %v1269 = vunpack.c.l.b16 %v261
  %v1270 = vunpack.c.l.b16 %v262
  %v1271 = vunpack.c.l.b16 %v263
  %v1272 = vunpack.c.l.b16 %v264
  %v1273 = vunpack.c.l.b16 %v265
  %v1274 = vunpack.c.l.b16 %v266
  %v1275 = vunpack.c.l.b16 %v267
  %v1276 = vunpack.c.l.b16 %v268
  %v1277 = vunpack.c.l.b16 %v269
  %v1278 = vunpack.c.l.b16 %v270
  %v1279 = vunpack.c.l.b16 %v271
  %v1280 = vunpack.c.l.b16 %v272
  %v1281 = vunpack.c.l.b16 %v273
  %v1282 = vunpack.c.l.b16 %v274
  %v1283 = vunpack.c.l.b16 %v275
  %v1284 = vunpack.c.l.b16 %v276
  %v1285 = vunpack.c.l.b16 %v277
  %v1286 = vunpack.c.l.b16 %v278
  %v1287 = vunpack.c.l.b16 %v279
  %v1288 = vunpack.c.l.b16 %v280
  %v1289 = vunpack.c.l.b16 %v281
  %v1290 = vunpack.c.l.b16 %v282
  %v1291 = vunpack.c.l.b16 %v283
  %v1292 = vunpack.c.l.b16 %v284
  %v1293 = vunpack.c.l.b16 %v285
  %v1294 = vunpack.c.l.b16 %v286
  %v1295 = vunpack.c.l.b16 %v287
  %v1296 = vunpack.c.l.b16 %v288
  %v1297 = vunpack.c.l.b16 %v289
  %v1298 = vunpack.c.l.b16 %v290
  %v1299 = vunpack.c.l.b16 %v291
  %v1300 = vunpack.c.l.b16 %v292
  %v1301 = vunpack.c.l.b16 %v293
  %v1302 = vunpack.c.l.b16 %v294
  %v1303 = vunpack.c.l.b16 %v295
  %v1304 = vunpack.c.l.b16 %v296
  %v1305 = vunpack.c.l.b16 %v297
  %v1306 = vunpack.c.l.b16 %v298
  %v1307 = vunpack.c.l.b16 %v299
  %v1308 = vunpack.c.l.b16 %v300
  %v1309 = vunpack.c.l.b16 %v301
  %v1310 = vunpack.c.l.b16 %v302
  %v1311 = vunpack.c.l.b16 %v303
  %v1312 = vunpack.c.l.b16 %v304
  %v1313 = vunpack.c.l.b16 %v305
  %v1314 = vunpack.c.l.b16 %v306
  %v1315 = vunpack.c.l.b16 %v307
  %v1316 = vunpack.c.l.b16 %v308
  %v1317 = vunpack.c.l.b16 %v309
  %v1318 = vunpack.c.l.b16 %v310
  %v1319 = vunpack.c.l.b16 %v311
  %v1320 = vunpack.c.l.b16 %v312
  %v1321 = vunpack.c.l.b16 %v313
  %v1322 = vunpack.c.l.b16 %v314
  %v1323 = vunpack.c.l.b16 %v315
  %v1324 = vunpack.c.l.b16 %v316
  %v1325 = vunpack.c.l.b16 %v317
  %v1326 = vunpack.c.l.b16 %v318
  %v1327 = vunpack.c.l.b16 %v319
  %v1328 = vunpack.c.l.b16 %v320
  %v1329 = vunpack.c.l.b16 %v321
  %v1330 = vunpack.c.l.b16 %v322
  %v1331 = vunpack.c.l.b16 %v323
  %v1332 = vunpack.c.l.b16 %v324
  %v1333 = vunpack.c.l.b16 %v325
  %v1334 = vunpack.c.l.b16 %v326
  %v1335 = vunpack.c.l.b16 %v327
  %v1336 = vunpack.c.l.b16 %v328
  %v1337 = vunpack.c.l.b16 %v329
  %v1338 = vunpack.c.l.b16 %v330
  %v1339 = vunpack.c.l.b16 %v331
  %v1340 = vunpack.c.l.b16 %v332
  %v1341 = vunpack.c.l.b16 %v333
  %v1342 = vunpack.c.l.b16 %v334
  %v1343 = vunpack.c.l.b16 %v335
  %v1344 = vunpack.c.l.b16 %v336
  %v1345 = vunpack.c.l.b16 %v337
  %v1346 = vunpack.c.l.b16 %v338
  %v1347 = vunpack.c.l.b16 %v339
  %v1348 = vunpack.c.l.b16 %v340
  %v1349 = vunpack.c.l.b16 %v341
  %v1350 = vunpack.c.l.b16 %v342
  %v1351 = vunpack.c.l.b16 %v343
  %v1352 = vunpack.c.l.b16 %v344
  %v1353 = vunpack.c.l.b16 %v345
  %v1354 = vunpack.c.l.b16 %v346
  %v1355 = vunpack.c.l.b16 %v347
  %v1356 = vunpack.c.l.b16 %v348
  %v1357 = vunpack.c.l.b16 %v349
  %v1358 = vunpack.c.l.b16 %v350
  %v1359 = vunpack.c.l.b16 %v351
  %v1360 = vunpack.c.l.b16 %v352
  %v1361 = vunpack.c.l.b16 %v353
  %v1362 = vunpack.c.l.b16 %v354
  %v1363 = vunpack.c.l.b16 %v355
  %v1364 = vunpack.c.l.b16 %v356
  %v1365 = vunpack.c.l.b16 %v357
  %v1366 = vunpack.c.l.b16 %v358
  %v1367 = vunpack.c.l.b16 %v359
  %v1368 = vunpack.c.l.b16 %v360
  %v1369 = vunpack.c.l.b16 %v361
  %v1370 = vunpack.c.l.b16 %v362
  %v1371 = vunpack.c.l.b16 %v363
  %v1372 = vunpack.c.l.b16 %v364
  %v1373 = vunpack.c.l.b16 %v365
  %v1374 = vunpack.c.l.b16 %v366
  %v1375 = vunpack.c.l.b16 %v367
  %v1376 = vunpack.c.l.b16 %v368
  %v1377 = vunpack.c.l.b16 %v369
  %v1378 = vunpack.c.l.b16 %v370
  %v1379 = vunpack.c.l.b16 %v371
  %v1380 = vunpack.c.l.b16 %v372
  %v1381 = vunpack.c.l.b16 %v373
  %v1382 = vunpack.c.l.b16 %v374
  %v1383 = vunpack.c.l.b16 %v375
  %v1384 = vunpack.c.l.b16 %v376
  %v1385 = vunpack.c.l.b16 %v377
  %v1386 = vunpack.c.l.b16 %v378
  %v1387 = vunpack.c.l.b16 %v379
  %v1388 = vunpack.c.l.b16 %v380
  %v1389 = vunpack.c.l.b16 %v381
  %v1390 = vunpack.c.l.b16 %v382
  %v1391 = vunpack.c.l.b16 %v383
  %v1392 = vunpack.c.l.b16 %v384
  %v1393 = vunpack.c.l.b16 %v385
  %v1394 = vunpack.c.l.b16 %v386
  %v1395 = vunpack.c.l.b16 %v387
  %v1396 = vunpack.c.l.b16 %v388
  %v1397 = vunpack.c.l.b16 %v389
  %v1398 = vunpack.c.l.b16 %v390
  %v1399 = vunpack.c.l.b16 %v391
  %v1400 = vunpack.c.l.b16 %v392
  %v1401 = vunpack.c.l.b16 %v393
  %v1402 = vunpack.c.l.b16 %v394
  %v1403 = vunpack.c.l.b16 %v395
  %v1404 = vunpack.c.l.b16 %v396
  %v1405 = vunpack.c.l.b16 %v397
  %v1406 = vunpack.c.l.b16 %v398
  %v1407 = vunpack.c.l.b16 %v399
  %v1408 = vunpack.c.l.b16 %v400
  %v1409 = vunpack.c.l.b16 %v401
  %v1410 = vunpack.c.l.b16 %v402
  %v1411 = vunpack.c.l.b16 %v403
  %v1412 = vunpack.c.l.b16 %v404
  %v1413 = vunpack.c.l.b16 %v405
  %v1414 = vunpack.c.l.b16 %v406
  %v1415 = vunpack.c.l.b16 %v407
  %v1416 = vunpack.c.l.b16 %v408
  %v1417 = vunpack.c.l.b16 %v409
  %v1418 = vunpack.c.l.b16 %v410
  %v1419 = vunpack.c.l.b16 %v411
  %v1420 = vunpack.c.l.b16 %v412
  %v1421 = vunpack.c.l.b16 %v413
  %v1422 = vunpack.c.l.b16 %v414
  %v1423 = vunpack.c.l.b16 %v415
  %v1424 = vunpack.c.l.b16 %v416
  %v1425 = vpack.c.b16 %v1202, %v1201
  %v1426 = vpack.c.b16 %v1204, %v1203
  %v1427 = vpack.c.b16 %v1206, %v1205
  %v1428 = vpack.c.b16 %v1208, %v1207
  %v1429 = vpack.c.b16 %v1210, %v1209
  %v1430 = vpack.c.b16 %v1212, %v1211
  %v1431 = vpack.c.b16 %v1214, %v1213
  %v1432 = vpack.c.b16 %v1216, %v1215
  %v1433 = vpack.c.b16 %v1218, %v1217
  %v1434 = vpack.c.b16 %v1220, %v1219
  %v1435 = vpack.c.b16 %v1222, %v1221
  %v1436 = vpack.c.b16 %v1224, %v1223
  %v1437 = vpack.c.b16 %v1226, %v1225
  %v1438 = vpack.c.b16 %v1228, %v1227
  %v1439 = vpack.c.b16 %v1230, %v1229
  %v1440 = vpack.c.b16 %v1232, %v1231
  %v1441 = vpack.c.b16 %v1234, %v1233
  %v1442 = vpack.c.b16 %v1236, %v1235
  %v1443 = vpack.c.b16 %v1238, %v1237
  %v1444 = vpack.c.b16 %v1240, %v1239
  %v1445 = vpack.c.b16 %v1242, %v1241
  %v1446 = vpack.c.b16 %v1244, %v1243
  %v1447 = vpack.c.b16 %v1246, %v1245
  %v1448 = vpack.c.b16 %v1248, %v1247
  %v1449 = vpack.c.b16 %v1250, %v1249
  %v1450 = vpack.c.b16 %v1252, %v1251
  %v1451 = vpack.c.b16 %v1254, %v1253
  %v1452 = vpack.c.b16 %v1256, %v1255
  %v1453 = vpack.c.b16 %v1258, %v1257
  %v1454 = vpack.c.b16 %v1260, %v1259
  %v1455 = vpack.c.b16 %v1262, %v1261
  %v1456 = vpack.c.b16 %v1264, %v1263
  %v1457 = vpack.c.b16 %v1266, %v1265
  %v1458 = vpack.c.b16 %v1268, %v1267
  %v1459 = vpack.c.b16 %v1270, %v1269
  %v1460 = vpack.c.b16 %v1272, %v1271
  %v1461 = vpack.c.b16 %v1274, %v1273
  %v1462 = vpack.c.b16 %v1276, %v1275
  %v1463 = vpack.c.b16 %v1278, %v1277
  %v1464 = vpack.c.b16 %v1280, %v1279
  %v1465 = vpack.c.b16 %v1282, %v1281
  %v1466 = vpack.c.b16 %v1284, %v1283
  %v1467 = vpack.c.b16 %v1286, %v1285
  %v1468 = vpack.c.b16 %v1288, %v1287
  %v1469 = vpack.c.b16 %v1290, %v1289
  %v1470 = vpack.c.b16 %v1292, %v1291
  %v1471 = vpack.c.b16 %v1294, %v1293
  %v1472 = vpack.c.b16 %v1296, %v1295
  %v1473 = vpack.c.b16 %v1298, %v1297
  %v1474 = vpack.c.b16 %v1300, %v1299
  %v1475 = vpack.c.b16 %v1302, %v1301
  %v1476 = vpack.c.b16 %v1304, %v1303
  %v1477 = vpack.c.b16 %v1306, %v1305
  %v1478 = vpack.c.b16 %v1308, %v1307
  %v1479 = vpack.c.b16 %v1310, %v1309
  %v1480 = vpack.c.b16 %v1312, %v1311
  %v1481 = vpack.c.b16 %v1314, %v1313
  %v1482 = vpack.c.b16 %v1316, %v1315
  %v1483 = vpack.c.b16 %v1318, %v1317
  %v1484 = vpack.c.b16 %v1320, %v1319
  %v1485 = vpack.c.b16 %v1322, %v1321
  %v1486 = vpack.c.b16 %v1324, %v1323
  %v1487 = vpack.c.b16 %v1326, %v1325
  %v1488 = vpack.c.b16 %v1328, %v1327
  %v1489 = vpack.c.b16 %v1330, %v1329
  %v1490 = vpack.c.b16 %v1332, %v1331
  %v1491 = vpack.c.b16 %v1334, %v1333
  %v1492 = vpack.c.b16 %v1336, %v1335
  %v1493 = vpack.c.b16 %v1338, %v1337
  %v1494 = vpack.c.b16 %v1340, %v1339
  %v1495 = vpack.c.b16 %v1342, %v1341
  %v1496 = vpack.c.b16 %v1344, %v1343
  %v1497 = vpack.c.b16 %v1346, %v1345
  %v1498 = vpack.c.b16 %v1348, %v1347
  %v1499 = vpack.c.b16 %v1350, %v1349
  %v1500 = vpack.c.b16 %v1352, %v1351
  %v1501 = vpack.c.b16 %v1354, %v1353
  %v1502 = vpack.c.b16 %v1356, %v1355
  %v1503 = vpack.c.b16 %v1358, %v1357
  %v1504 = vpack.c.b16 %v1360, %v1359
  %v1505 = vpack.c.b16 %v1362, %v1361
  %v1506 = vpack.c.b16 %v1364, %v1363
  %v1507 = vpack.c.b16 %v1366, %v1365
  %v1508 = vpack.c.b16 %v1368, %v1367
  %v1509 = vpack.c.b16 %v1370, %v1369
  %v1510 = vpack.c.b16 %v1372, %v1371
  %v1511 = vpack.c.b16 %v1374, %v1373
  %v1512 = vpack.c.b16 %v1376, %v1375
  %v1513 = vpack.c.b16 %v1378, %v1377
  %v1514 = vpack.c.b16 %v1380, %v1379
  %v1515 = vpack.c.b16 %v1382, %v1381
  %v1516 = vpack.c.b16 %v1384, %v1383
  %v1517 = vpack.c.b16 %v1386, %v1385
  %v1518 = vpack.c.b16 %v1388, %v1387
  %v1519 = vpack.c.b16 %v1390, %v1389
  %v1520 = vpack.c.b16 %v1392, %v1391
  %v1521 = vpack.c.b16 %v1394, %v1393
  %v1522 = vpack.c.b16 %v1396, %v1395
  %v1523 = vpack.c.b16 %v1398, %v1397
  %v1524 = vpack.c.b16 %v1400, %v1399
  %v1525 = vpack.c.b16 %v1402, %v1401
  %v1526 = vpack.c.b16 %v1404, %v1403
  %v1527 = vpack.c.b16 %v1406, %v1405
  %v1528 = vpack.c.b16 %v1408, %v1407
  %v1529 = vpack.c.b16 %v1410, %v1409
  %v1530 = vpack.c.b16 %v1412, %v1411
  %v1531 = vpack.c.b16 %v1414, %v1413
  %v1532 = vpack.c.b16 %v1416, %v1415
  %v1533 = vpack.c.b16 %v1418, %v1417
  %v1534 = vpack.c.b16 %v1420, %v1419
  %v1535 = vpack.c.b16 %v1422, %v1421
  %v1536 = vpack.c.b16 %v1424, %v1423
  %1649 = vmatprep.subr.bf16.mxu0 0
  %1650 = vmatpush1.bf16.msra.mxu0 %v1425
  %1651 = vmatprep.subr.bf16.mxu0 0
  %1652 = vmatpush1.bf16.msra.mxu0 %v1426
  %1653 = vmatprep.subr.bf16.mxu0 0
  %1654 = vmatpush1.bf16.msra.mxu0 %v1427
  %1655 = vmatprep.subr.bf16.mxu0 0
  %1656 = vmatpush1.bf16.msra.mxu0 %v1428
  %1657 = vmatprep.subr.bf16.mxu0 0
  %1658 = vmatpush1.bf16.msra.mxu0 %v1429
  %1659 = vmatprep.subr.bf16.mxu0 0
  %1660 = vmatpush1.bf16.msra.mxu0 %v1430
  %1661 = vmatprep.subr.bf16.mxu0 0
  %1662 = vmatpush1.bf16.msra.mxu0 %v1431
  %1663 = vmatprep.subr.bf16.mxu0 0
  %1664 = vmatpush1.bf16.msra.mxu0 %v1432
  %1665 = vmatprep.subr.bf16.mxu0 0
  %1666 = vmatpush1.bf16.msra.mxu0 %v1433
  %1667 = vmatprep.subr.bf16.mxu0 0
  %1668 = vmatpush1.bf16.msra.mxu0 %v1434
  %1669 = vmatprep.subr.bf16.mxu0 0
  %1670 = vmatpush1.bf16.msra.mxu0 %v1435
  %1671 = vmatprep.subr.bf16.mxu0 0
  %1672 = vmatpush1.bf16.msra.mxu0 %v1436
  %1673 = vmatprep.subr.bf16.mxu0 0
  %1674 = vmatpush1.bf16.msra.mxu0 %v1437
  %1675 = vmatprep.subr.bf16.mxu0 0
  %1676 = vmatpush1.bf16.msra.mxu0 %v1438
  %1677 = vmatprep.subr.bf16.mxu0 0
  %1678 = vmatpush1.bf16.msra.mxu0 %v1439
  %1679 = vmatprep.subr.bf16.mxu0 0
  %1680 = vmatpush1.bf16.msra.mxu0 %v1440
  %1681 = vmatprep.mubr.bf16.mxu0 %v754
  %1682 = vmatmul.mubr.bf16.gmra.mrb[0].mxu0 %v753
  %v1683 = vpop.f32.mrb[0].mxu0
  %v1684 = vadd.f32 0.0, %v1683
  %v1685 = vpop.f32.mrb[0].mxu0
  %v1686 = vpop.f32.mrb[0].mxu0
  %v1687 = vadd.f32 0.0, %v1686
  %v1688 = vpop.f32.mrb[0].mxu0
  %1689 = vmatprep.mubr.bf16.mxu0 %v768
  %1690 = vmatmul.mubr.bf16.gmra.mrb[0].mxu0 %v767
  %v1691 = vpop.f32.mrb[0].mxu0
  %v1692 = vadd.f32 0.0, %v1691
  %v1693 = vpop.f32.mrb[0].mxu0
  %v1694 = vpop.f32.mrb[0].mxu0
  %v1695 = vadd.f32 0.0, %v1694
  %v1696 = vpop.f32.mrb[0].mxu0
  %1697 = vmatprep.mubr.bf16.mxu0 %v782
  %1698 = vmatmul.mubr.bf16.gmra.mrb[0].mxu0 %v781
  %v1699 = vpop.f32.mrb[0].mxu0
  %v1700 = vadd.f32 0.0, %v1699
  %v1701 = vpop.f32.mrb[0].mxu0
  %v1702 = vpop.f32.mrb[0].mxu0
  %v1703 = vadd.f32 0.0, %v1702
  %v1704 = vpop.f32.mrb[0].mxu0
  %1705 = vmatprep.mubr.bf16.mxu0 %v796
  %1706 = vmatmul.mubr.bf16.gmra.mrb[0].mxu0 %v795
  %v1707 = vpop.f32.mrb[0].mxu0
  %v1708 = vadd.f32 0.0, %v1707
  %v1709 = vpop.f32.mrb[0].mxu0
  %v1710 = vpop.f32.mrb[0].mxu0
  %v1711 = vadd.f32 0.0, %v1710
  %v1712 = vpop.f32.mrb[0].mxu0
  %1713 = vmatprep.mubr.bf16.mxu0 %v810
  %1714 = vmatmul.mubr.bf16.gmra.mrb[0].mxu0 %v809
  %v1715 = vpop.f32.mrb[0].mxu0
  %v1716 = vadd.f32 0.0, %v1715
  %v1717 = vpop.f32.mrb[0].mxu0
  %v1718 = vpop.f32.mrb[0].mxu0
  %v1719 = vadd.f32 0.0, %v1718
  %v1720 = vpop.f32.mrb[0].mxu0
  %1721 = vmatprep.mubr.bf16.mxu0 %v824
  %1722 = vmatmul.mubr.bf16.gmra.mrb[0].mxu0 %v823
  %v1723 = vpop.f32.mrb[0].mxu0
  %v1724 = vadd.f32 0.0, %v1723
  %v1725 = vpop.f32.mrb[0].mxu0
  %v1726 = vpop.f32.mrb[0].mxu0
  %v1727 = vadd.f32 0.0, %v1726
  %v1728 = vpop.f32.mrb[0].mxu0
  %1729 = vmatprep.mubr.bf16.mxu0 %v838
  %1730 = vmatmul.mubr.bf16.gmra.mrb[0].mxu0 %v837
  %v1731 = vpop.f32.mrb[0].mxu0
  %v1732 = vadd.f32 0.0, %v1731
  %v1733 = vpop.f32.mrb[0].mxu0
  %v1734 = vpop.f32.mrb[0].mxu0
  %v1735 = vadd.f32 0.0, %v1734
  %v1736 = vpop.f32.mrb[0].mxu0
  %1737 = vmatprep.mubr.bf16.mxu0 %v852
  %1738 = vmatmul.mubr.bf16.gmra.mrb[0].mxu0 %v851
  %v1739 = vpop.f32.mrb[0].mxu0
  %v1740 = vadd.f32 0.0, %v1739
  %v1741 = vpop.f32.mrb[0].mxu0
  %v1742 = vpop.f32.mrb[0].mxu0
  %v1743 = vadd.f32 0.0, %v1742
  %v1744 = vpop.f32.mrb[0].mxu0
  %1745 = vdwg.mxu0
  %1746 = vmatprep.subr.bf16.mxu0 0
  %1747 = vmatpush1.bf16.msra.mxu0 %v1441
  %1748 = vmatprep.subr.bf16.mxu0 0
  %1749 = vmatpush1.bf16.msra.mxu0 %v1442
  %1750 = vmatprep.subr.bf16.mxu0 0
  %1751 = vmatpush1.bf16.msra.mxu0 %v1443
  %1752 = vmatprep.subr.bf16.mxu0 0
  %1753 = vmatpush1.bf16.msra.mxu0 %v1444
  %1754 = vmatprep.subr.bf16.mxu0 0
  %1755 = vmatpush1.bf16.msra.mxu0 %v1445
  %1756 = vmatprep.subr.bf16.mxu0 0
  %1757 = vmatpush1.bf16.msra.mxu0 %v1446
  %1758 = vmatprep.subr.bf16.mxu0 0
  %1759 = vmatpush1.bf16.msra.mxu0 %v1447
  %1760 = vmatprep.subr.bf16.mxu0 0
  %1761 = vmatpush1.bf16.msra.mxu0 %v1448
  %1762 = vmatprep.subr.bf16.mxu0 0
  %1763 = vmatpush1.bf16.msra.mxu0 %v1449
  %1764 = vmatprep.subr.bf16.mxu0 0
  %1765 = vmatpush1.bf16.msra.mxu0 %v1450
  %1766 = vmatprep.subr.bf16.mxu0 0
  %1767 = vmatpush1.bf16.msra.mxu0 %v1451
  %1768 = vmatprep.subr.bf16.mxu0 0
  %1769 = vmatpush1.bf16.msra.mxu0 %v1452
  %1770 = vmatprep.subr.bf16.mxu0 0
  %1771 = vmatpush1.bf16.msra.mxu0 %v1453
  %1772 = vmatprep.subr.bf16.mxu0 0
  %1773 = vmatpush1.bf16.msra.mxu0 %v1454
  %1774 = vmatprep.subr.bf16.mxu0 0
  %1775 = vmatpush1.bf16.msra.mxu0 %v1455
  %1776 = vmatprep.subr.bf16.mxu0 0
  %1777 = vmatpush1.bf16.msra.mxu0 %v1456
  %1778 = vmatprep.mubr.bf16.mxu0 %v756
  %1779 = vmatmul.mubr.bf16.gmra.mrb[0].mxu0 %v755
  %v1780 = vpop.f32.mrb[0].mxu0
  %v1781 = vadd.f32 %v1684, %v1780
  %v1782 = vpop.f32.mrb[0].mxu0
  %v1783 = vpop.f32.mrb[0].mxu0
  %v1784 = vadd.f32 %v1687, %v1783
  %v1785 = vpop.f32.mrb[0].mxu0
  %1786 = vmatprep.mubr.bf16.mxu0 %v770
  %1787 = vmatmul.mubr.bf16.gmra.mrb[0].mxu0 %v769
  %v1788 = vpop.f32.mrb[0].mxu0
  %v1789 = vadd.f32 %v1692, %v1788
  %v1790 = vpop.f32.mrb[0].mxu0
  %v1791 = vpop.f32.mrb[0].mxu0
  %v1792 = vadd.f32 %v1695, %v1791
  %v1793 = vpop.f32.mrb[0].mxu0
  %1794 = vmatprep.mubr.bf16.mxu0 %v784
  %1795 = vmatmul.mubr.bf16.gmra.mrb[0].mxu0 %v783
  %v1796 = vpop.f32.mrb[0].mxu0
  %v1797 = vadd.f32 %v1700, %v1796
  %v1798 = vpop.f32.mrb[0].mxu0
  %v1799 = vpop.f32.mrb[0].mxu0
  %v1800 = vadd.f32 %v1703, %v1799
  %v1801 = vpop.f32.mrb[0].mxu0
  %1802 = vmatprep.mubr.bf16.mxu0 %v798
  %1803 = vmatmul.mubr.bf16.gmra.mrb[0].mxu0 %v797
  %v1804 = vpop.f32.mrb[0].mxu0
  %v1805 = vadd.f32 %v1708, %v1804
  %v1806 = vpop.f32.mrb[0].mxu0
  %v1807 = vpop.f32.mrb[0].mxu0
  %v1808 = vadd.f32 %v1711, %v1807
  %v1809 = vpop.f32.mrb[0].mxu0
  %1810 = vmatprep.mubr.bf16.mxu0 %v812
  %1811 = vmatmul.mubr.bf16.gmra.mrb[0].mxu0 %v811
  %v1812 = vpop.f32.mrb[0].mxu0
  %v1813 = vadd.f32 %v1716, %v1812
  %v1814 = vpop.f32.mrb[0].mxu0
  %v1815 = vpop.f32.mrb[0].mxu0
  %v1816 = vadd.f32 %v1719, %v1815
  %v1817 = vpop.f32.mrb[0].mxu0
  %1818 = vmatprep.mubr.bf16.mxu0 %v826
  %1819 = vmatmul.mubr.bf16.gmra.mrb[0].mxu0 %v825
  %v1820 = vpop.f32.mrb[0].mxu0
  %v1821 = vadd.f32 %v1724, %v1820
  %v1822 = vpop.f32.mrb[0].mxu0
  %v1823 = vpop.f32.mrb[0].mxu0
  %v1824 = vadd.f32 %v1727, %v1823
  %v1825 = vpop.f32.mrb[0].mxu0
  %1826 = vmatprep.mubr.bf16.mxu0 %v840
  %1827 = vmatmul.mubr.bf16.gmra.mrb[0].mxu0 %v839
  %v1828 = vpop.f32.mrb[0].mxu0
  %v1829 = vadd.f32 %v1732, %v1828
  %v1830 = vpop.f32.mrb[0].mxu0
  %v1831 = vpop.f32.mrb[0].mxu0
  %v1832 = vadd.f32 %v1735, %v1831
  %v1833 = vpop.f32.mrb[0].mxu0
  %1834 = vmatprep.mubr.bf16.mxu0 %v854
  %1835 = vmatmul.mubr.bf16.gmra.mrb[0].mxu0 %v853
  %v1836 = vpop.f32.mrb[0].mxu0
  %v1837 = vadd.f32 %v1740, %v1836
  %v1838 = vpop.f32.mrb[0].mxu0
  %v1839 = vpop.f32.mrb[0].mxu0
  %v1840 = vadd.f32 %v1743, %v1839
  %v1841 = vpop.f32.mrb[0].mxu0
  %1842 = vdwg.mxu0
  %1843 = vmatprep.subr.bf16.mxu0 0
  %1844 = vmatpush1.bf16.msra.mxu0 %v1457
  %1845 = vmatprep.subr.bf16.mxu0 0
  %1846 = vmatpush1.bf16.msra.mxu0 %v1458
  %1847 = vmatprep.subr.bf16.mxu0 0
  %1848 = vmatpush1.bf16.msra.mxu0 %v1459
  %1849 = vmatprep.subr.bf16.mxu0 0
  %1850 = vmatpush1.bf16.msra.mxu0 %v1460
  %1851 = vmatprep.subr.bf16.mxu0 0
  %1852 = vmatpush1.bf16.msra.mxu0 %v1461
  %1853 = vmatprep.subr.bf16.mxu0 0
  %1854 = vmatpush1.bf16.msra.mxu0 %v1462
  %1855 = vmatprep.subr.bf16.mxu0 0
  %1856 = vmatpush1.bf16.msra.mxu0 %v1463
  %1857 = vmatprep.subr.bf16.mxu0 0
  %1858 = vmatpush1.bf16.msra.mxu0 %v1464
  %1859 = vmatprep.subr.bf16.mxu0 0
  %1860 = vmatpush1.bf16.msra.mxu0 %v1465
  %1861 = vmatprep.subr.bf16.mxu0 0
  %1862 = vmatpush1.bf16.msra.mxu0 %v1466
  %1863 = vmatprep.subr.bf16.mxu0 0
  %1864 = vmatpush1.bf16.msra.mxu0 %v1467
  %1865 = vmatprep.subr.bf16.mxu0 0
  %1866 = vmatpush1.bf16.msra.mxu0 %v1468
  %1867 = vmatprep.subr.bf16.mxu0 0
  %1868 = vmatpush1.bf16.msra.mxu0 %v1469
  %1869 = vmatprep.subr.bf16.mxu0 0
  %1870 = vmatpush1.bf16.msra.mxu0 %v1470
  %1871 = vmatprep.subr.bf16.mxu0 0
  %1872 = vmatpush1.bf16.msra.mxu0 %v1471
  %1873 = vmatprep.subr.bf16.mxu0 0
  %1874 = vmatpush1.bf16.msra.mxu0 %v1472
  %1875 = vmatprep.mubr.bf16.mxu0 %v758
  %1876 = vmatmul.mubr.bf16.gmra.mrb[0].mxu0 %v757
  %v1877 = vpop.f32.mrb[0].mxu0
  %v1878 = vadd.f32 %v1781, %v1877
  %v1879 = vpop.f32.mrb[0].mxu0
  %v1880 = vpop.f32.mrb[0].mxu0
  %v1881 = vadd.f32 %v1784, %v1880
  %v1882 = vpop.f32.mrb[0].mxu0
  %1883 = vmatprep.mubr.bf16.mxu0 %v772
  %1884 = vmatmul.mubr.bf16.gmra.mrb[0].mxu0 %v771
  %v1885 = vpop.f32.mrb[0].mxu0
  %v1886 = vadd.f32 %v1789, %v1885
  %v1887 = vpop.f32.mrb[0].mxu0
  %v1888 = vpop.f32.mrb[0].mxu0
  %v1889 = vadd.f32 %v1792, %v1888
  %v1890 = vpop.f32.mrb[0].mxu0
  %1891 = vmatprep.mubr.bf16.mxu0 %v786
  %1892 = vmatmul.mubr.bf16.gmra.mrb[0].mxu0 %v785
  %v1893 = vpop.f32.mrb[0].mxu0
  %v1894 = vadd.f32 %v1797, %v1893
  %v1895 = vpop.f32.mrb[0].mxu0
  %v1896 = vpop.f32.mrb[0].mxu0
  %v1897 = vadd.f32 %v1800, %v1896
  %v1898 = vpop.f32.mrb[0].mxu0
  %1899 = vmatprep.mubr.bf16.mxu0 %v800
  %1900 = vmatmul.mubr.bf16.gmra.mrb[0].mxu0 %v799
  %v1901 = vpop.f32.mrb[0].mxu0
  %v1902 = vadd.f32 %v1805, %v1901
  %v1903 = vpop.f32.mrb[0].mxu0
  %v1904 = vpop.f32.mrb[0].mxu0
  %v1905 = vadd.f32 %v1808, %v1904
  %v1906 = vpop.f32.mrb[0].mxu0
  %1907 = vmatprep.mubr.bf16.mxu0 %v814
  %1908 = vmatmul.mubr.bf16.gmra.mrb[0].mxu0 %v813
  %v1909 = vpop.f32.mrb[0].mxu0
  %v1910 = vadd.f32 %v1813, %v1909
  %v1911 = vpop.f32.mrb[0].mxu0
  %v1912 = vpop.f32.mrb[0].mxu0
  %v1913 = vadd.f32 %v1816, %v1912
  %v1914 = vpop.f32.mrb[0].mxu0
  %1915 = vmatprep.mubr.bf16.mxu0 %v828
  %1916 = vmatmul.mubr.bf16.gmra.mrb[0].mxu0 %v827
  %v1917 = vpop.f32.mrb[0].mxu0
  %v1918 = vadd.f32 %v1821, %v1917
  %v1919 = vpop.f32.mrb[0].mxu0
  %v1920 = vpop.f32.mrb[0].mxu0
  %v1921 = vadd.f32 %v1824, %v1920
  %v1922 = vpop.f32.mrb[0].mxu0
  %1923 = vmatprep.mubr.bf16.mxu0 %v842
  %1924 = vmatmul.mubr.bf16.gmra.mrb[0].mxu0 %v841
  %v1925 = vpop.f32.mrb[0].mxu0
  %v1926 = vadd.f32 %v1829, %v1925
  %v1927 = vpop.f32.mrb[0].mxu0
  %v1928 = vpop.f32.mrb[0].mxu0
  %v1929 = vadd.f32 %v1832, %v1928
  %v1930 = vpop.f32.mrb[0].mxu0
  %1931 = vmatprep.mubr.bf16.mxu0 %v856
  %1932 = vmatmul.mubr.bf16.gmra.mrb[0].mxu0 %v855
  %v1933 = vpop.f32.mrb[0].mxu0
  %v1934 = vadd.f32 %v1837, %v1933
  %v1935 = vpop.f32.mrb[0].mxu0
  %v1936 = vpop.f32.mrb[0].mxu0
  %v1937 = vadd.f32 %v1840, %v1936
  %v1938 = vpop.f32.mrb[0].mxu0
  %1939 = vdwg.mxu0
  %1940 = vmatprep.subr.bf16.mxu0 0
  %1941 = vmatpush1.bf16.msra.mxu0 %v1473
  %1942 = vmatprep.subr.bf16.mxu0 0
  %1943 = vmatpush1.bf16.msra.mxu0 %v1474
  %1944 = vmatprep.subr.bf16.mxu0 0
  %1945 = vmatpush1.bf16.msra.mxu0 %v1475
  %1946 = vmatprep.subr.bf16.mxu0 0
  %1947 = vmatpush1.bf16.msra.mxu0 %v1476
  %1948 = vmatprep.subr.bf16.mxu0 0
  %1949 = vmatpush1.bf16.msra.mxu0 %v1477
  %1950 = vmatprep.subr.bf16.mxu0 0
  %1951 = vmatpush1.bf16.msra.mxu0 %v1478
  %1952 = vmatprep.subr.bf16.mxu0 0
  %1953 = vmatpush1.bf16.msra.mxu0 %v1479
  %1954 = vmatprep.subr.bf16.mxu0 0
  %1955 = vmatpush1.bf16.msra.mxu0 %v1480
  %1956 = vmatprep.subr.bf16.mxu0 0
  %1957 = vmatpush1.bf16.msra.mxu0 %v1481
  %1958 = vmatprep.subr.bf16.mxu0 0
  %1959 = vmatpush1.bf16.msra.mxu0 %v1482
  %1960 = vmatprep.subr.bf16.mxu0 0
  %1961 = vmatpush1.bf16.msra.mxu0 %v1483
  %1962 = vmatprep.subr.bf16.mxu0 0
  %1963 = vmatpush1.bf16.msra.mxu0 %v1484
  %1964 = vmatprep.subr.bf16.mxu0 0
  %1965 = vmatpush1.bf16.msra.mxu0 %v1485
  %1966 = vmatprep.subr.bf16.mxu0 0
  %1967 = vmatpush1.bf16.msra.mxu0 %v1486
  %1968 = vmatprep.subr.bf16.mxu0 0
  %1969 = vmatpush1.bf16.msra.mxu0 %v1487
  %1970 = vmatprep.subr.bf16.mxu0 0
  %1971 = vmatpush1.bf16.msra.mxu0 %v1488
  %1972 = vmatprep.mubr.bf16.mxu0 %v760
  %1973 = vmatmul.mubr.bf16.gmra.mrb[0].mxu0 %v759
  %v1974 = vpop.f32.mrb[0].mxu0
  %v1975 = vadd.f32 %v1878, %v1974
  %v1976 = vpop.f32.mrb[0].mxu0
  %v1977 = vpop.f32.mrb[0].mxu0
  %v1978 = vadd.f32 %v1881, %v1977
  %v1979 = vpop.f32.mrb[0].mxu0
  %1980 = vmatprep.mubr.bf16.mxu0 %v774
  %1981 = vmatmul.mubr.bf16.gmra.mrb[0].mxu0 %v773
  %v1982 = vpop.f32.mrb[0].mxu0
  %v1983 = vadd.f32 %v1886, %v1982
  %v1984 = vpop.f32.mrb[0].mxu0
  %v1985 = vpop.f32.mrb[0].mxu0
  %v1986 = vadd.f32 %v1889, %v1985
  %v1987 = vpop.f32.mrb[0].mxu0
  %1988 = vmatprep.mubr.bf16.mxu0 %v788
  %1989 = vmatmul.mubr.bf16.gmra.mrb[0].mxu0 %v787
  %v1990 = vpop.f32.mrb[0].mxu0
  %v1991 = vadd.f32 %v1894, %v1990
  %v1992 = vpop.f32.mrb[0].mxu0
  %v1993 = vpop.f32.mrb[0].mxu0
  %v1994 = vadd.f32 %v1897, %v1993
  %v1995 = vpop.f32.mrb[0].mxu0
  %1996 = vmatprep.mubr.bf16.mxu0 %v802
  %1997 = vmatmul.mubr.bf16.gmra.mrb[0].mxu0 %v801
  %v1998 = vpop.f32.mrb[0].mxu0
  %v1999 = vadd.f32 %v1902, %v1998
  %v2000 = vpop.f32.mrb[0].mxu0
  %v2001 = vpop.f32.mrb[0].mxu0
  %v2002 = vadd.f32 %v1905, %v2001
  %v2003 = vpop.f32.mrb[0].mxu0
  %2004 = vmatprep.mubr.bf16.mxu0 %v816
  %2005 = vmatmul.mubr.bf16.gmra.mrb[0].mxu0 %v815
  %v2006 = vpop.f32.mrb[0].mxu0
  %v2007 = vadd.f32 %v1910, %v2006
  %v2008 = vpop.f32.mrb[0].mxu0
  %v2009 = vpop.f32.mrb[0].mxu0
  %v2010 = vadd.f32 %v1913, %v2009
  %v2011 = vpop.f32.mrb[0].mxu0
  %2012 = vmatprep.mubr.bf16.mxu0 %v830
  %2013 = vmatmul.mubr.bf16.gmra.mrb[0].mxu0 %v829
  %v2014 = vpop.f32.mrb[0].mxu0
  %v2015 = vadd.f32 %v1918, %v2014
  %v2016 = vpop.f32.mrb[0].mxu0
  %v2017 = vpop.f32.mrb[0].mxu0
  %v2018 = vadd.f32 %v1921, %v2017
  %v2019 = vpop.f32.mrb[0].mxu0
  %2020 = vmatprep.mubr.bf16.mxu0 %v844
  %2021 = vmatmul.mubr.bf16.gmra.mrb[0].mxu0 %v843
  %v2022 = vpop.f32.mrb[0].mxu0
  %v2023 = vadd.f32 %v1926, %v2022
  %v2024 = vpop.f32.mrb[0].mxu0
  %v2025 = vpop.f32.mrb[0].mxu0
  %v2026 = vadd.f32 %v1929, %v2025
  %v2027 = vpop.f32.mrb[0].mxu0
  %2028 = vmatprep.mubr.bf16.mxu0 %v858
  %2029 = vmatmul.mubr.bf16.gmra.mrb[0].mxu0 %v857
  %v2030 = vpop.f32.mrb[0].mxu0
  %v2031 = vadd.f32 %v1934, %v2030
  %v2032 = vpop.f32.mrb[0].mxu0
  %v2033 = vpop.f32.mrb[0].mxu0
  %v2034 = vadd.f32 %v1937, %v2033
  %v2035 = vpop.f32.mrb[0].mxu0
  %2036 = vdwg.mxu0
  %2037 = vmatprep.subr.bf16.mxu0 0
  %2038 = vmatpush1.bf16.msra.mxu0 %v1489
  %2039 = vmatprep.subr.bf16.mxu0 0
  %2040 = vmatpush1.bf16.msra.mxu0 %v1490
  %2041 = vmatprep.subr.bf16.mxu0 0
  %2042 = vmatpush1.bf16.msra.mxu0 %v1491
  %2043 = vmatprep.subr.bf16.mxu0 0
  %2044 = vmatpush1.bf16.msra.mxu0 %v1492
  %2045 = vmatprep.subr.bf16.mxu0 0
  %2046 = vmatpush1.bf16.msra.mxu0 %v1493
  %2047 = vmatprep.subr.bf16.mxu0 0
  %2048 = vmatpush1.bf16.msra.mxu0 %v1494
  %2049 = vmatprep.subr.bf16.mxu0 0
  %2050 = vmatpush1.bf16.msra.mxu0 %v1495
  %2051 = vmatprep.subr.bf16.mxu0 0
  %2052 = vmatpush1.bf16.msra.mxu0 %v1496
  %2053 = vmatprep.subr.bf16.mxu0 0
  %2054 = vmatpush1.bf16.msra.mxu0 %v1497
  %2055 = vmatprep.subr.bf16.mxu0 0
  %2056 = vmatpush1.bf16.msra.mxu0 %v1498
  %2057 = vmatprep.subr.bf16.mxu0 0
  %2058 = vmatpush1.bf16.msra.mxu0 %v1499
  %2059 = vmatprep.subr.bf16.mxu0 0
  %2060 = vmatpush1.bf16.msra.mxu0 %v1500
  %2061 = vmatprep.subr.bf16.mxu0 0
  %2062 = vmatpush1.bf16.msra.mxu0 %v1501
  %2063 = vmatprep.subr.bf16.mxu0 0
  %2064 = vmatpush1.bf16.msra.mxu0 %v1502
  %2065 = vmatprep.subr.bf16.mxu0 0
  %2066 = vmatpush1.bf16.msra.mxu0 %v1503
  %2067 = vmatprep.subr.bf16.mxu0 0
  %2068 = vmatpush1.bf16.msra.mxu0 %v1504
  %2069 = vmatprep.mubr.bf16.mxu0 %v762
  %2070 = vmatmul.mubr.bf16.gmra.mrb[0].mxu0 %v761
  %v2071 = vpop.f32.mrb[0].mxu0
  %v2072 = vadd.f32 %v1975, %v2071
  %v2073 = vpop.f32.mrb[0].mxu0
  %v2074 = vpop.f32.mrb[0].mxu0
  %v2075 = vadd.f32 %v1978, %v2074
  %v2076 = vpop.f32.mrb[0].mxu0
  %2077 = vmatprep.mubr.bf16.mxu0 %v776
  %2078 = vmatmul.mubr.bf16.gmra.mrb[0].mxu0 %v775
  %v2079 = vpop.f32.mrb[0].mxu0
  %v2080 = vadd.f32 %v1983, %v2079
  %v2081 = vpop.f32.mrb[0].mxu0
  %v2082 = vpop.f32.mrb[0].mxu0
  %v2083 = vadd.f32 %v1986, %v2082
  %v2084 = vpop.f32.mrb[0].mxu0
  %2085 = vmatprep.mubr.bf16.mxu0 %v790
  %2086 = vmatmul.mubr.bf16.gmra.mrb[0].mxu0 %v789
  %v2087 = vpop.f32.mrb[0].mxu0
  %v2088 = vadd.f32 %v1991, %v2087
  %v2089 = vpop.f32.mrb[0].mxu0
  %v2090 = vpop.f32.mrb[0].mxu0
  %v2091 = vadd.f32 %v1994, %v2090
  %v2092 = vpop.f32.mrb[0].mxu0
  %2093 = vmatprep.mubr.bf16.mxu0 %v804
  %2094 = vmatmul.mubr.bf16.gmra.mrb[0].mxu0 %v803
  %v2095 = vpop.f32.mrb[0].mxu0
  %v2096 = vadd.f32 %v1999, %v2095
  %v2097 = vpop.f32.mrb[0].mxu0
  %v2098 = vpop.f32.mrb[0].mxu0
  %v2099 = vadd.f32 %v2002, %v2098
  %v2100 = vpop.f32.mrb[0].mxu0
  %2101 = vmatprep.mubr.bf16.mxu0 %v818
  %2102 = vmatmul.mubr.bf16.gmra.mrb[0].mxu0 %v817
  %v2103 = vpop.f32.mrb[0].mxu0
  %v2104 = vadd.f32 %v2007, %v2103
  %v2105 = vpop.f32.mrb[0].mxu0
  %v2106 = vpop.f32.mrb[0].mxu0
  %v2107 = vadd.f32 %v2010, %v2106
  %v2108 = vpop.f32.mrb[0].mxu0
  %2109 = vmatprep.mubr.bf16.mxu0 %v832
  %2110 = vmatmul.mubr.bf16.gmra.mrb[0].mxu0 %v831
  %v2111 = vpop.f32.mrb[0].mxu0
  %v2112 = vadd.f32 %v2015, %v2111
  %v2113 = vpop.f32.mrb[0].mxu0
  %v2114 = vpop.f32.mrb[0].mxu0
  %v2115 = vadd.f32 %v2018, %v2114
  %v2116 = vpop.f32.mrb[0].mxu0
  %2117 = vmatprep.mubr.bf16.mxu0 %v846
  %2118 = vmatmul.mubr.bf16.gmra.mrb[0].mxu0 %v845
  %v2119 = vpop.f32.mrb[0].mxu0
  %v2120 = vadd.f32 %v2023, %v2119
  %v2121 = vpop.f32.mrb[0].mxu0
  %v2122 = vpop.f32.mrb[0].mxu0
  %v2123 = vadd.f32 %v2026, %v2122
  %v2124 = vpop.f32.mrb[0].mxu0
  %2125 = vmatprep.mubr.bf16.mxu0 %v860
  %2126 = vmatmul.mubr.bf16.gmra.mrb[0].mxu0 %v859
  %v2127 = vpop.f32.mrb[0].mxu0
  %v2128 = vadd.f32 %v2031, %v2127
  %v2129 = vpop.f32.mrb[0].mxu0
  %v2130 = vpop.f32.mrb[0].mxu0
  %v2131 = vadd.f32 %v2034, %v2130
  %v2132 = vpop.f32.mrb[0].mxu0
  %2133 = vdwg.mxu0
  %2134 = vmatprep.subr.bf16.mxu0 0
  %2135 = vmatpush1.bf16.msra.mxu0 %v1505
  %2136 = vmatprep.subr.bf16.mxu0 0
  %2137 = vmatpush1.bf16.msra.mxu0 %v1506
  %2138 = vmatprep.subr.bf16.mxu0 0
  %2139 = vmatpush1.bf16.msra.mxu0 %v1507
  %2140 = vmatprep.subr.bf16.mxu0 0
  %2141 = vmatpush1.bf16.msra.mxu0 %v1508
  %2142 = vmatprep.subr.bf16.mxu0 0
  %2143 = vmatpush1.bf16.msra.mxu0 %v1509
  %2144 = vmatprep.subr.bf16.mxu0 0
  %2145 = vmatpush1.bf16.msra.mxu0 %v1510
  %2146 = vmatprep.subr.bf16.mxu0 0
  %2147 = vmatpush1.bf16.msra.mxu0 %v1511
  %2148 = vmatprep.subr.bf16.mxu0 0
  %2149 = vmatpush1.bf16.msra.mxu0 %v1512
  %2150 = vmatprep.subr.bf16.mxu0 0
  %2151 = vmatpush1.bf16.msra.mxu0 %v1513
  %2152 = vmatprep.subr.bf16.mxu0 0
  %2153 = vmatpush1.bf16.msra.mxu0 %v1514
  %2154 = vmatprep.subr.bf16.mxu0 0
  %2155 = vmatpush1.bf16.msra.mxu0 %v1515
  %2156 = vmatprep.subr.bf16.mxu0 0
  %2157 = vmatpush1.bf16.msra.mxu0 %v1516
  %2158 = vmatprep.subr.bf16.mxu0 0
  %2159 = vmatpush1.bf16.msra.mxu0 %v1517
  %2160 = vmatprep.subr.bf16.mxu0 0
  %2161 = vmatpush1.bf16.msra.mxu0 %v1518
  %2162 = vmatprep.subr.bf16.mxu0 0
  %2163 = vmatpush1.bf16.msra.mxu0 %v1519
  %2164 = vmatprep.subr.bf16.mxu0 0
  %2165 = vmatpush1.bf16.msra.mxu0 %v1520
  %2166 = vmatprep.mubr.bf16.mxu0 %v764
  %2167 = vmatmul.mubr.bf16.gmra.mrb[0].mxu0 %v763
  %v2168 = vpop.f32.mrb[0].mxu0
  %v2169 = vadd.f32 %v2072, %v2168
  %v2170 = vpop.f32.mrb[0].mxu0
  %v2171 = vpop.f32.mrb[0].mxu0
  %v2172 = vadd.f32 %v2075, %v2171
  %v2173 = vpop.f32.mrb[0].mxu0
  %2174 = vmatprep.mubr.bf16.mxu0 %v778
  %2175 = vmatmul.mubr.bf16.gmra.mrb[0].mxu0 %v777
  %v2176 = vpop.f32.mrb[0].mxu0
  %v2177 = vadd.f32 %v2080, %v2176
  %v2178 = vpop.f32.mrb[0].mxu0
  %v2179 = vpop.f32.mrb[0].mxu0
  %v2180 = vadd.f32 %v2083, %v2179
  %v2181 = vpop.f32.mrb[0].mxu0
  %2182 = vmatprep.mubr.bf16.mxu0 %v792
  %2183 = vmatmul.mubr.bf16.gmra.mrb[0].mxu0 %v791
  %v2184 = vpop.f32.mrb[0].mxu0
  %v2185 = vadd.f32 %v2088, %v2184
  %v2186 = vpop.f32.mrb[0].mxu0
  %v2187 = vpop.f32.mrb[0].mxu0
  %v2188 = vadd.f32 %v2091, %v2187
  %v2189 = vpop.f32.mrb[0].mxu0
  %2190 = vmatprep.mubr.bf16.mxu0 %v806
  %2191 = vmatmul.mubr.bf16.gmra.mrb[0].mxu0 %v805
  %v2192 = vpop.f32.mrb[0].mxu0
  %v2193 = vadd.f32 %v2096, %v2192
  %v2194 = vpop.f32.mrb[0].mxu0
  %v2195 = vpop.f32.mrb[0].mxu0
  %v2196 = vadd.f32 %v2099, %v2195
  %v2197 = vpop.f32.mrb[0].mxu0
  %2198 = vmatprep.mubr.bf16.mxu0 %v820
  %2199 = vmatmul.mubr.bf16.gmra.mrb[0].mxu0 %v819
  %v2200 = vpop.f32.mrb[0].mxu0
  %v2201 = vadd.f32 %v2104, %v2200
  %v2202 = vpop.f32.mrb[0].mxu0
  %v2203 = vpop.f32.mrb[0].mxu0
  %v2204 = vadd.f32 %v2107, %v2203
  %v2205 = vpop.f32.mrb[0].mxu0
  %2206 = vmatprep.mubr.bf16.mxu0 %v834
  %2207 = vmatmul.mubr.bf16.gmra.mrb[0].mxu0 %v833
  %v2208 = vpop.f32.mrb[0].mxu0
  %v2209 = vadd.f32 %v2112, %v2208
  %v2210 = vpop.f32.mrb[0].mxu0
  %v2211 = vpop.f32.mrb[0].mxu0
  %v2212 = vadd.f32 %v2115, %v2211
  %v2213 = vpop.f32.mrb[0].mxu0
  %2214 = vmatprep.mubr.bf16.mxu0 %v848
  %2215 = vmatmul.mubr.bf16.gmra.mrb[0].mxu0 %v847
  %v2216 = vpop.f32.mrb[0].mxu0
  %v2217 = vadd.f32 %v2120, %v2216
  %v2218 = vpop.f32.mrb[0].mxu0
  %v2219 = vpop.f32.mrb[0].mxu0
  %v2220 = vadd.f32 %v2123, %v2219
  %v2221 = vpop.f32.mrb[0].mxu0
  %2222 = vmatprep.mubr.bf16.mxu0 %v862
  %2223 = vmatmul.mubr.bf16.gmra.mrb[0].mxu0 %v861
  %v2224 = vpop.f32.mrb[0].mxu0
  %v2225 = vadd.f32 %v2128, %v2224
  %v2226 = vpop.f32.mrb[0].mxu0
  %v2227 = vpop.f32.mrb[0].mxu0
  %v2228 = vadd.f32 %v2131, %v2227
  %v2229 = vpop.f32.mrb[0].mxu0
  %2230 = vdwg.mxu0
  %2231 = vmatprep.subr.bf16.mxu0 0
  %2232 = vmatpush1.bf16.msra.mxu0 %v1521
  %2233 = vmatprep.subr.bf16.mxu0 0
  %2234 = vmatpush1.bf16.msra.mxu0 %v1522
  %2235 = vmatprep.subr.bf16.mxu0 0
  %2236 = vmatpush1.bf16.msra.mxu0 %v1523
  %2237 = vmatprep.subr.bf16.mxu0 0
  %2238 = vmatpush1.bf16.msra.mxu0 %v1524
  %2239 = vmatprep.subr.bf16.mxu0 0
  %2240 = vmatpush1.bf16.msra.mxu0 %v1525
  %2241 = vmatprep.subr.bf16.mxu0 0
  %2242 = vmatpush1.bf16.msra.mxu0 %v1526
  %2243 = vmatprep.subr.bf16.mxu0 0
  %2244 = vmatpush1.bf16.msra.mxu0 %v1527
  %2245 = vmatprep.subr.bf16.mxu0 0
  %2246 = vmatpush1.bf16.msra.mxu0 %v1528
  %2247 = vmatprep.subr.bf16.mxu0 0
  %2248 = vmatpush1.bf16.msra.mxu0 %v1529
  %2249 = vmatprep.subr.bf16.mxu0 0
  %2250 = vmatpush1.bf16.msra.mxu0 %v1530
  %2251 = vmatprep.subr.bf16.mxu0 0
  %2252 = vmatpush1.bf16.msra.mxu0 %v1531
  %2253 = vmatprep.subr.bf16.mxu0 0
  %2254 = vmatpush1.bf16.msra.mxu0 %v1532
  %2255 = vmatprep.subr.bf16.mxu0 0
  %2256 = vmatpush1.bf16.msra.mxu0 %v1533
  %2257 = vmatprep.subr.bf16.mxu0 0
  %2258 = vmatpush1.bf16.msra.mxu0 %v1534
  %2259 = vmatprep.subr.bf16.mxu0 0
  %2260 = vmatpush1.bf16.msra.mxu0 %v1535
  %2261 = vmatprep.subr.bf16.mxu0 0
  %2262 = vmatpush1.bf16.msra.mxu0 %v1536
  %2263 = vmatprep.mubr.bf16.mxu0 %v766
  %2264 = vmatmul.mubr.bf16.gmra.mrb[0].mxu0 %v765
  %v2265 = vpop.f32.mrb[0].mxu0
  %v2266 = vadd.f32 %v2169, %v2265
  %v2267 = vpop.f32.mrb[0].mxu0
  %v2268 = vpop.f32.mrb[0].mxu0
  %v2269 = vadd.f32 %v2172, %v2268
  %v2270 = vpop.f32.mrb[0].mxu0
  %2271 = vmatprep.mubr.bf16.mxu0 %v780
  %2272 = vmatmul.mubr.bf16.gmra.mrb[0].mxu0 %v779
  %v2273 = vpop.f32.mrb[0].mxu0
  %v2274 = vadd.f32 %v2177, %v2273
  %v2275 = vpop.f32.mrb[0].mxu0
  %v2276 = vpop.f32.mrb[0].mxu0
  %v2277 = vadd.f32 %v2180, %v2276
  %v2278 = vpop.f32.mrb[0].mxu0
  %2279 = vmatprep.mubr.bf16.mxu0 %v794
  %2280 = vmatmul.mubr.bf16.gmra.mrb[0].mxu0 %v793
  %v2281 = vpop.f32.mrb[0].mxu0
  %v2282 = vadd.f32 %v2185, %v2281
  %v2283 = vpop.f32.mrb[0].mxu0
  %v2284 = vpop.f32.mrb[0].mxu0
  %v2285 = vadd.f32 %v2188, %v2284
  %v2286 = vpop.f32.mrb[0].mxu0
  %2287 = vmatprep.mubr.bf16.mxu0 %v808
  %2288 = vmatmul.mubr.bf16.gmra.mrb[0].mxu0 %v807
  %v2289 = vpop.f32.mrb[0].mxu0
  %v2290 = vadd.f32 %v2193, %v2289
  %v2291 = vpop.f32.mrb[0].mxu0
  %v2292 = vpop.f32.mrb[0].mxu0
  %v2293 = vadd.f32 %v2196, %v2292
  %v2294 = vpop.f32.mrb[0].mxu0
  %2295 = vmatprep.mubr.bf16.mxu0 %v822
  %2296 = vmatmul.mubr.bf16.gmra.mrb[0].mxu0 %v821
  %v2297 = vpop.f32.mrb[0].mxu0
  %v2298 = vadd.f32 %v2201, %v2297
  %v2299 = vpop.f32.mrb[0].mxu0
  %v2300 = vpop.f32.mrb[0].mxu0
  %v2301 = vadd.f32 %v2204, %v2300
  %v2302 = vpop.f32.mrb[0].mxu0
  %2303 = vmatprep.mubr.bf16.mxu0 %v836
  %2304 = vmatmul.mubr.bf16.gmra.mrb[0].mxu0 %v835
  %v2305 = vpop.f32.mrb[0].mxu0
  %v2306 = vadd.f32 %v2209, %v2305
  %v2307 = vpop.f32.mrb[0].mxu0
  %v2308 = vpop.f32.mrb[0].mxu0
  %v2309 = vadd.f32 %v2212, %v2308
  %v2310 = vpop.f32.mrb[0].mxu0
  %2311 = vmatprep.mubr.bf16.mxu0 %v850
  %2312 = vmatmul.mubr.bf16.gmra.mrb[0].mxu0 %v849
  %v2313 = vpop.f32.mrb[0].mxu0
  %v2314 = vadd.f32 %v2217, %v2313
  %v2315 = vpop.f32.mrb[0].mxu0
  %v2316 = vpop.f32.mrb[0].mxu0
  %v2317 = vadd.f32 %v2220, %v2316
  %v2318 = vpop.f32.mrb[0].mxu0
  %2319 = vmatprep.mubr.bf16.mxu0 %v864
  %2320 = vmatmul.mubr.bf16.gmra.mrb[0].mxu0 %v863
  %v2321 = vpop.f32.mrb[0].mxu0
  %v2322 = vadd.f32 %v2225, %v2321
  %v2323 = vpop.f32.mrb[0].mxu0
  %v2324 = vpop.f32.mrb[0].mxu0
  %v2325 = vadd.f32 %v2228, %v2324
  %v2326 = vpop.f32.mrb[0].mxu0
  %2327 = vdwg.mxu0
  %v2328 = vld [vmem:[%s69] sm:$0xff]
  %v2329 = vld [vmem:[%s69 + $0x8] sm:$0xff]
  %v2330 = vld [vmem:[%s69 + $0x10] sm:$0xff]
  %v2331 = vld [vmem:[%s69 + $0x18] sm:$0xff]
  %v2332 = vld [vmem:[%s69 + $0x20] sm:$0xff]
  %v2333 = vld [vmem:[%s69 + $0x28] sm:$0xff]
  %v2334 = vld [vmem:[%s69 + $0x30] sm:$0xff]
  %v2335 = vld [vmem:[%s69 + $0x38] sm:$0xff]
  %v2336 = vld [vmem:[%s69 + $0x40] sm:$0xff]
  %v2337 = vld [vmem:[%s69 + $0x48] sm:$0xff]
  %v2338 = vld [vmem:[%s69 + $0x50] sm:$0xff]
  %v2339 = vld [vmem:[%s69 + $0x58] sm:$0xff]
  %v2340 = vld [vmem:[%s69 + $0x60] sm:$0xff]
  %v2341 = vld [vmem:[%s69 + $0x68] sm:$0xff]
  %v2342 = vld [vmem:[%s69 + $0x70] sm:$0xff]
  %v2343 = vld [vmem:[%s69 + $0x78] sm:$0xff]
  %vm2344 = vcmp.eq.f32.partialorder %v2328, 0.0
  %vm2345 = vcmp.eq.f32.partialorder %v2329, 0.0
  %vm2346 = vcmp.eq.f32.partialorder %v2330, 0.0
  %vm2347 = vcmp.eq.f32.partialorder %v2331, 0.0
  %vm2348 = vcmp.eq.f32.partialorder %v2332, 0.0
  %vm2349 = vcmp.eq.f32.partialorder %v2333, 0.0
  %vm2350 = vcmp.eq.f32.partialorder %v2334, 0.0
  %vm2351 = vcmp.eq.f32.partialorder %v2335, 0.0
  %vm2352 = vcmp.eq.f32.partialorder %v2336, 0.0
  %vm2353 = vcmp.eq.f32.partialorder %v2337, 0.0
  %vm2354 = vcmp.eq.f32.partialorder %v2338, 0.0
  %vm2355 = vcmp.eq.f32.partialorder %v2339, 0.0
  %vm2356 = vcmp.eq.f32.partialorder %v2340, 0.0
  %vm2357 = vcmp.eq.f32.partialorder %v2341, 0.0
  %vm2358 = vcmp.eq.f32.partialorder %v2342, 0.0
  %vm2359 = vcmp.eq.f32.partialorder %v2343, 0.0
  %v2360 = vsel %vm2344, 1.0, %v2328
  %v2361 = vsel %vm2345, 1.0, %v2329
  %v2362 = vsel %vm2346, 1.0, %v2330
  %v2363 = vsel %vm2347, 1.0, %v2331
  %v2364 = vsel %vm2348, 1.0, %v2332
  %v2365 = vsel %vm2349, 1.0, %v2333
  %v2366 = vsel %vm2350, 1.0, %v2334
  %v2367 = vsel %vm2351, 1.0, %v2335
  %v2368 = vsel %vm2352, 1.0, %v2336
  %v2369 = vsel %vm2353, 1.0, %v2337
  %v2370 = vsel %vm2354, 1.0, %v2338
  %v2371 = vsel %vm2355, 1.0, %v2339
  %v2372 = vsel %vm2356, 1.0, %v2340
  %v2373 = vsel %vm2357, 1.0, %v2341
  %v2374 = vsel %vm2358, 1.0, %v2342
  %v2375 = vsel %vm2359, 1.0, %v2343
  %v2376 = vrcp.pop %v2360
  %v2377 = vrcp.pop %v2361
  %v2378 = vrcp.pop %v2362
  %v2379 = vrcp.pop %v2363
  %v2380 = vrcp.pop %v2364
  %v2381 = vrcp.pop %v2365
  %v2382 = vrcp.pop %v2366
  %v2383 = vrcp.pop %v2367
  %v2384 = vrcp.pop %v2368
  %v2385 = vrcp.pop %v2369
  %v2386 = vrcp.pop %v2370
  %v2387 = vrcp.pop %v2371
  %v2388 = vrcp.pop %v2372
  %v2389 = vrcp.pop %v2373
  %v2390 = vrcp.pop %v2374
  %v2391 = vrcp.pop %v2375
  %2393 = vset.pattern.permute.xlu0 0
  %2394 = vperm.xlu0 %2393, %v2376
  %v2395 = vpop.permute.xlu0 %2394
  %2398 = vset.pattern.permute.xlu0 0
  %2399 = vperm.xlu0 %2398, %v2377
  %v2400 = vpop.permute.xlu0 %2399
  %2403 = vset.pattern.permute.xlu0 0
  %2404 = vperm.xlu0 %2403, %v2378
  %v2405 = vpop.permute.xlu0 %2404
  %2408 = vset.pattern.permute.xlu0 0
  %2409 = vperm.xlu0 %2408, %v2379
  %v2410 = vpop.permute.xlu0 %2409
  %2413 = vset.pattern.permute.xlu0 0
  %2414 = vperm.xlu0 %2413, %v2380
  %v2415 = vpop.permute.xlu0 %2414
  %2418 = vset.pattern.permute.xlu0 0
  %2419 = vperm.xlu0 %2418, %v2381
  %v2420 = vpop.permute.xlu0 %2419
  %2423 = vset.pattern.permute.xlu0 0
  %2424 = vperm.xlu0 %2423, %v2382
  %v2425 = vpop.permute.xlu0 %2424
  %2428 = vset.pattern.permute.xlu0 0
  %2429 = vperm.xlu0 %2428, %v2383
  %v2430 = vpop.permute.xlu0 %2429
  %2433 = vset.pattern.permute.xlu0 0
  %2434 = vperm.xlu0 %2433, %v2384
  %v2435 = vpop.permute.xlu0 %2434
  %2438 = vset.pattern.permute.xlu0 0
  %2439 = vperm.xlu0 %2438, %v2385
  %v2440 = vpop.permute.xlu0 %2439
  %2443 = vset.pattern.permute.xlu0 0
  %2444 = vperm.xlu0 %2443, %v2386
  %v2445 = vpop.permute.xlu0 %2444
  %2448 = vset.pattern.permute.xlu0 0
  %2449 = vperm.xlu0 %2448, %v2387
  %v2450 = vpop.permute.xlu0 %2449
  %2453 = vset.pattern.permute.xlu0 0
  %2454 = vperm.xlu0 %2453, %v2388
  %v2455 = vpop.permute.xlu0 %2454
  %2458 = vset.pattern.permute.xlu0 0
  %2459 = vperm.xlu0 %2458, %v2389
  %v2460 = vpop.permute.xlu0 %2459
  %2463 = vset.pattern.permute.xlu0 0
  %2464 = vperm.xlu0 %2463, %v2390
  %v2465 = vpop.permute.xlu0 %2464
  %2468 = vset.pattern.permute.xlu0 0
  %2469 = vperm.xlu0 %2468, %v2391
  %v2470 = vpop.permute.xlu0 %2469
  %v2472 = vmul.f32 %v2266, %v2395
  %v2473 = vmul.f32 %v2269, %v2400
  %v2474 = vmul.f32 %v2274, %v2405
  %v2475 = vmul.f32 %v2277, %v2410
  %v2476 = vmul.f32 %v2282, %v2415
  %v2477 = vmul.f32 %v2285, %v2420
  %v2478 = vmul.f32 %v2290, %v2425
  %v2479 = vmul.f32 %v2293, %v2430
  %v2480 = vmul.f32 %v2298, %v2435
  %v2481 = vmul.f32 %v2301, %v2440
  %v2482 = vmul.f32 %v2306, %v2445
  %v2483 = vmul.f32 %v2309, %v2450
  %v2484 = vmul.f32 %v2314, %v2455
  %v2485 = vmul.f32 %v2317, %v2460
  %v2486 = vmul.f32 %v2322, %v2465
  %v2487 = vmul.f32 %v2325, %v2470
  %v2488 = vld [vmem:[%s3] sm:$0x1]
  %v2490 = vlaneseq
  %v2491 = vshrl.u32 %v2490, 7
  %v2492 = vsub.s32 0, %v2491
  %v2493 = vrot.slane %v2488, %v2492
  %v2495 = vadd.f32 %v2472, %v2493
  %v2496 = vadd.f32 %v2473, %v2493
  %v2497 = vadd.f32 %v2474, %v2493
  %v2498 = vadd.f32 %v2475, %v2493
  %v2499 = vadd.f32 %v2476, %v2493
  %v2500 = vadd.f32 %v2477, %v2493
  %v2501 = vadd.f32 %v2478, %v2493
  %v2502 = vadd.f32 %v2479, %v2493
  %v2503 = vadd.f32 %v2480, %v2493
  %v2504 = vadd.f32 %v2481, %v2493
  %v2505 = vadd.f32 %v2482, %v2493
  %v2506 = vadd.f32 %v2483, %v2493
  %v2507 = vadd.f32 %v2484, %v2493
  %v2508 = vadd.f32 %v2485, %v2493
  %v2509 = vadd.f32 %v2486, %v2493
  %v2510 = vadd.f32 %v2487, %v2493
  %v2511 = vsel %vm2344, 1, 0
  %v2512 = vsel %vm2345, 1, 0
  %v2513 = vsel %vm2346, 1, 0
  %v2514 = vsel %vm2347, 1, 0
  %v2515 = vsel %vm2348, 1, 0
  %v2516 = vsel %vm2349, 1, 0
  %v2517 = vsel %vm2350, 1, 0
  %v2518 = vsel %vm2351, 1, 0
  %v2519 = vsel %vm2352, 1, 0
  %v2520 = vsel %vm2353, 1, 0
  %v2521 = vsel %vm2354, 1, 0
  %v2522 = vsel %vm2355, 1, 0
  %v2523 = vsel %vm2356, 1, 0
  %v2524 = vsel %vm2357, 1, 0
  %v2525 = vsel %vm2358, 1, 0
  %v2526 = vsel %vm2359, 1, 0
  %2527 = vset.pattern.permute.xlu0 0
  %2528 = vperm.xlu0 %2527, %v2511
  %v2529 = vpop.permute.xlu0 %2528
  %2530 = vset.pattern.permute.xlu0 0
  %2531 = vperm.xlu0 %2530, %v2512
  %v2532 = vpop.permute.xlu0 %2531
  %2533 = vset.pattern.permute.xlu0 0
  %2534 = vperm.xlu0 %2533, %v2513
  %v2535 = vpop.permute.xlu0 %2534
  %2536 = vset.pattern.permute.xlu0 0
  %2537 = vperm.xlu0 %2536, %v2514
  %v2538 = vpop.permute.xlu0 %2537
  %2539 = vset.pattern.permute.xlu0 0
  %2540 = vperm.xlu0 %2539, %v2515
  %v2541 = vpop.permute.xlu0 %2540
  %2542 = vset.pattern.permute.xlu0 0
  %2543 = vperm.xlu0 %2542, %v2516
  %v2544 = vpop.permute.xlu0 %2543
  %2545 = vset.pattern.permute.xlu0 0
  %2546 = vperm.xlu0 %2545, %v2517
  %v2547 = vpop.permute.xlu0 %2546
  %2548 = vset.pattern.permute.xlu0 0
  %2549 = vperm.xlu0 %2548, %v2518
  %v2550 = vpop.permute.xlu0 %2549
  %2551 = vset.pattern.permute.xlu0 0
  %2552 = vperm.xlu0 %2551, %v2519
  %v2553 = vpop.permute.xlu0 %2552
  %2554 = vset.pattern.permute.xlu0 0
  %2555 = vperm.xlu0 %2554, %v2520
  %v2556 = vpop.permute.xlu0 %2555
  %2557 = vset.pattern.permute.xlu0 0
  %2558 = vperm.xlu0 %2557, %v2521
  %v2559 = vpop.permute.xlu0 %2558
  %2560 = vset.pattern.permute.xlu0 0
  %2561 = vperm.xlu0 %2560, %v2522
  %v2562 = vpop.permute.xlu0 %2561
  %2563 = vset.pattern.permute.xlu0 0
  %2564 = vperm.xlu0 %2563, %v2523
  %v2565 = vpop.permute.xlu0 %2564
  %2566 = vset.pattern.permute.xlu0 0
  %2567 = vperm.xlu0 %2566, %v2524
  %v2568 = vpop.permute.xlu0 %2567
  %2569 = vset.pattern.permute.xlu0 0
  %2570 = vperm.xlu0 %2569, %v2525
  %v2571 = vpop.permute.xlu0 %2570
  %2572 = vset.pattern.permute.xlu0 0
  %2573 = vperm.xlu0 %2572, %v2526
  %v2574 = vpop.permute.xlu0 %2573
  %vm2575 = vcmp.eq.s32.totalorder %v2529, 1
  %vm2576 = vcmp.eq.s32.totalorder %v2532, 1
  %vm2577 = vcmp.eq.s32.totalorder %v2535, 1
  %vm2578 = vcmp.eq.s32.totalorder %v2538, 1
  %vm2579 = vcmp.eq.s32.totalorder %v2541, 1
  %vm2580 = vcmp.eq.s32.totalorder %v2544, 1
  %vm2581 = vcmp.eq.s32.totalorder %v2547, 1
  %vm2582 = vcmp.eq.s32.totalorder %v2550, 1
  %vm2583 = vcmp.eq.s32.totalorder %v2553, 1
  %vm2584 = vcmp.eq.s32.totalorder %v2556, 1
  %vm2585 = vcmp.eq.s32.totalorder %v2559, 1
  %vm2586 = vcmp.eq.s32.totalorder %v2562, 1
  %vm2587 = vcmp.eq.s32.totalorder %v2565, 1
  %vm2588 = vcmp.eq.s32.totalorder %v2568, 1
  %vm2589 = vcmp.eq.s32.totalorder %v2571, 1
  %vm2590 = vcmp.eq.s32.totalorder %v2574, 1
  %v2591 = vsel %vm2575, 0.0, %v2495
  %v2592 = vsel %vm2576, 0.0, %v2496
  %v2593 = vsel %vm2577, 0.0, %v2497
  %v2594 = vsel %vm2578, 0.0, %v2498
  %v2595 = vsel %vm2579, 0.0, %v2499
  %v2596 = vsel %vm2580, 0.0, %v2500
  %v2597 = vsel %vm2581, 0.0, %v2501
  %v2598 = vsel %vm2582, 0.0, %v2502
  %v2599 = vsel %vm2583, 0.0, %v2503
  %v2600 = vsel %vm2584, 0.0, %v2504
  %v2601 = vsel %vm2585, 0.0, %v2505
  %v2602 = vsel %vm2586, 0.0, %v2506
  %v2603 = vsel %vm2587, 0.0, %v2507
  %v2604 = vsel %vm2588, 0.0, %v2508
  %v2605 = vsel %vm2589, 0.0, %v2509
  %v2606 = vsel %vm2590, 0.0, %v2510
  %v2607 = vpack.c.bf16 %v2592, %v2591
  %v2608 = vpack.c.bf16 %v2594, %v2593
  %v2609 = vpack.c.bf16 %v2596, %v2595
  %v2610 = vpack.c.bf16 %v2598, %v2597
  %v2611 = vpack.c.bf16 %v2600, %v2599
  %v2612 = vpack.c.bf16 %v2602, %v2601
  %v2613 = vpack.c.bf16 %v2604, %v2603
  %v2614 = vpack.c.bf16 %v2606, %v2605
  %v2623 = vunpack.c.l.b16 %v2607
  %v2624 = vunpack.c.h.b16 %v2607
  %v2625 = vunpack.c.l.b16 %v2608
  %v2626 = vunpack.c.h.b16 %v2608
  %v2627 = vunpack.c.l.b16 %v2609
  %v2628 = vunpack.c.h.b16 %v2609
  %v2629 = vunpack.c.l.b16 %v2610
  %v2630 = vunpack.c.h.b16 %v2610
  %v2631 = vunpack.c.l.b16 %v2611
  %v2632 = vunpack.c.h.b16 %v2611
  %v2633 = vunpack.c.l.b16 %v2612
  %v2634 = vunpack.c.h.b16 %v2612
  %v2635 = vunpack.c.l.b16 %v2613
  %v2636 = vunpack.c.h.b16 %v2613
  %v2637 = vunpack.c.l.b16 %v2614
  %v2638 = vunpack.c.h.b16 %v2614
  %v2639 = vpack.c.b16 %v2623, %v2623
  %v2640 = vpack.c.b16 %v2624, %v2624
  %v2641 = vpack.c.b16 %v2625, %v2625
  %v2642 = vpack.c.b16 %v2626, %v2626
  %v2643 = vpack.c.b16 %v2627, %v2627
  %v2644 = vpack.c.b16 %v2628, %v2628
  %v2645 = vpack.c.b16 %v2629, %v2629
  %v2646 = vpack.c.b16 %v2630, %v2630
  %v2647 = vpack.c.b16 %v2631, %v2631
  %v2648 = vpack.c.b16 %v2632, %v2632
  %v2649 = vpack.c.b16 %v2633, %v2633
  %v2650 = vpack.c.b16 %v2634, %v2634
  %v2651 = vpack.c.b16 %v2635, %v2635
  %v2652 = vpack.c.b16 %v2636, %v2636
  %v2653 = vpack.c.b16 %v2637, %v2637
  %v2654 = vpack.c.b16 %v2638, %v2638
  %2671 = vst [vmem:[%s77] sm:$0xf] %v2639
  %2672 = vst [vmem:[%s77 + $0x4] sm:$0xf] %v2640
  %2673 = vst [vmem:[%s77 + $0x8] sm:$0xf] %v2641
  %2674 = vst [vmem:[%s77 + $0xc] sm:$0xf] %v2642
  %2675 = vst [vmem:[%s77 + $0x10] sm:$0xf] %v2643
  %2676 = vst [vmem:[%s77 + $0x14] sm:$0xf] %v2644
  %2677 = vst [vmem:[%s77 + $0x18] sm:$0xf] %v2645
  %2678 = vst [vmem:[%s77 + $0x1c] sm:$0xf] %v2646
  %2679 = vst [vmem:[%s77 + $0x20] sm:$0xf] %v2647
  %2680 = vst [vmem:[%s77 + $0x24] sm:$0xf] %v2648
  %2681 = vst [vmem:[%s77 + $0x28] sm:$0xf] %v2649
  %2682 = vst [vmem:[%s77 + $0x2c] sm:$0xf] %v2650
  %2683 = vst [vmem:[%s77 + $0x30] sm:$0xf] %v2651
  %2684 = vst [vmem:[%s77 + $0x34] sm:$0xf] %v2652
  %2685 = vst [vmem:[%s77 + $0x38] sm:$0xf] %v2653
  %2686 = vst [vmem:[%s77 + $0x3c] sm:$0xf] %v2654
  %p2687 = scmp.eq.s32.totalorder 0, 0
  // Predicated region
  $region18: #{partial_conv_net.17} parent=0 // pred_check
    %p2688 = pneg %p2687
  $region19: #{partial_conv_net.17} parent=0 // pred_check_branch
    %2690 = sbr.rel (%p2688) target = $region21
  $region20: #{partial_conv_net.17} parent=0 // pred_region
    %2691 = vst [vmem:[%s5] sm:$0xff] 0.0
  $region21: #{partial_conv_net.17} parent=0 // pred_fallthru
    _
  %v2692 = vadd.f32 %v2591, %v2592
  %v2693 = vadd.f32 %v2692, %v2593
  %v2694 = vadd.f32 %v2693, %v2594
  %v2695 = vadd.f32 %v2694, %v2595
  %v2696 = vadd.f32 %v2695, %v2596
  %v2697 = vadd.f32 %v2696, %v2597
  %v2698 = vadd.f32 %v2697, %v2598
  %v2699 = vadd.f32 %v2698, %v2599
  %v2700 = vadd.f32 %v2699, %v2600
  %v2701 = vadd.f32 %v2700, %v2601
  %v2702 = vadd.f32 %v2701, %v2602
  %v2703 = vadd.f32 %v2702, %v2603
  %v2704 = vadd.f32 %v2703, %v2604
  %v2705 = vadd.f32 %v2704, %v2605
  %v2706 = vadd.f32 %v2705, %v2606
  %v2707 = vrot.slane %v2706, 4
  %v2708 = vadd.f32 %v2706, %v2707
  %v2709 = vrot.slane %v2708, 2
  %v2710 = vadd.f32 %v2708, %v2709
  %v2711 = vrot.slane %v2710, 1
  %v2712 = vadd.f32 %v2710, %v2711
  %v2713 = vmul.f32 %v2591, %v2591
  %v2714 = vmul.f32 %v2592, %v2592
  %v2715 = vmul.f32 %v2593, %v2593
  %v2716 = vmul.f32 %v2594, %v2594
  %v2717 = vmul.f32 %v2595, %v2595
  %v2718 = vmul.f32 %v2596, %v2596
  %v2719 = vmul.f32 %v2597, %v2597
  %v2720 = vmul.f32 %v2598, %v2598
  %v2721 = vmul.f32 %v2599, %v2599
  %v2722 = vmul.f32 %v2600, %v2600
  %v2723 = vmul.f32 %v2601, %v2601
  %v2724 = vmul.f32 %v2602, %v2602
  %v2725 = vmul.f32 %v2603, %v2603
  %v2726 = vmul.f32 %v2604, %v2604
  %v2727 = vmul.f32 %v2605, %v2605
  %v2728 = vmul.f32 %v2606, %v2606
  %v2729 = vadd.f32 %v2713, %v2714
  %v2730 = vadd.f32 %v2729, %v2715
  %v2731 = vadd.f32 %v2730, %v2716
  %v2732 = vadd.f32 %v2731, %v2717
  %v2733 = vadd.f32 %v2732, %v2718
  %v2734 = vadd.f32 %v2733, %v2719
  %v2735 = vadd.f32 %v2734, %v2720
  %v2736 = vadd.f32 %v2735, %v2721
  %v2737 = vadd.f32 %v2736, %v2722
  %v2738 = vadd.f32 %v2737, %v2723
  %v2739 = vadd.f32 %v2738, %v2724
  %v2740 = vadd.f32 %v2739, %v2725
  %v2741 = vadd.f32 %v2740, %v2726
  %v2742 = vadd.f32 %v2741, %v2727
  %v2743 = vadd.f32 %v2742, %v2728
  %v2744 = vrot.slane %v2743, 4
  %v2745 = vadd.f32 %v2743, %v2744
  %v2746 = vrot.slane %v2745, 2
  %v2747 = vadd.f32 %v2745, %v2746
  %v2748 = vrot.slane %v2747, 1
  %v2749 = vadd.f32 %v2747, %v2748
  %v2750 = vld [vmem:[%s5] sm:$0xff]
  %vm2751 = vcmask 1040384
  %v2752 = vsel %vm2751, %v2712, %v2749
  %vm2753 = vcmask 1041408
  %v2754 = vsel %vm2753, %v2752, 0.0
  %v2755 = vadd.f32 %v2750, %v2754
  %2756 = vst [vmem:[%s5] sm:$0xff] %v2755
  %s2757 = sadd.s32 0, 0
  %s2758 = smul.u32 16, %s2757
  %p2759 = scmp.lt.s32.totalorder %s2758, 15
  %s2760 = scalar_select %p2759, %s2758, 15
  %s2761 = smul.addr %s2760, 4
  %s2762 = scalar_lea.vmem %s4, %s2761
  // Predicated region
  $region22: #{partial_conv_net.17} parent=0 // pred_check
    _
  $region23: #{partial_conv_net.17} parent=0 // pred_check_branch
    %2764 = sbr.rel (0) target = $region25
  $region24: #{partial_conv_net.17} parent=0 // pred_region
    %s2765 = sadd.s32 0, 0
    %s2766 = smul.u32 16, %s2765
  $region25: #{partial_conv_net.17} parent=0 // pred_fallthru
    _
  // Predicated region
  $region26: #{partial_conv_net.17} parent=0 // pred_check
    _
  $region27: #{partial_conv_net.17} parent=0 // pred_check_branch
    %2768 = sbr.rel (0) target = $region29
  $region28: #{partial_conv_net.17} parent=0 // pred_region
    _
  $region29: #{partial_conv_net.17} parent=0 // pred_fallthru
    _
  // Predicated region
  $region30: #{partial_conv_net.17} parent=0 // pred_check
    _
  $region31: #{partial_conv_net.17} parent=0 // pred_check_branch
    %2770 = sbr.rel (0) target = $region33
  $region32: #{partial_conv_net.17} parent=0 // pred_region
    %s2771 = sadd.s32 0, 0
    %s2772 = smul.u32 16, %s2771
    %p2773 = scmp.lt.s32.totalorder %s2772, 15
    %s2774 = scalar_select %p2773, %s2772, 15
    %s2775 = smul.addr %s2774, 4
    %s2776 = scalar_lea.vmem %s4, %s2775
  $region33: #{partial_conv_net.17} parent=0 // pred_fallthru
    _
  // Predicated region
  $region34: #{partial_conv_net.17} parent=0 // pred_check
    _
  $region35: #{partial_conv_net.17} parent=0 // pred_check_branch
    %2778 = sbr.rel (0) target = $region37
  $region36: #{partial_conv_net.17} parent=0 // pred_region
    _
  $region37: #{partial_conv_net.17} parent=0 // pred_fallthru
    _

// kernel: partial_conv_net.19
$region0: #{partial_conv_net.19}
  #allocation0 [shape = 'u32[]', space=smem, size = 0x4, offset = 0x4, fixed_abs, tag = 'smem constant byte address 0x4 - core index']
  #allocation1 [shape = 'u32[144,128]{1,0:T(1,128)}', space=vmem, size = 0x12000, scoped, tag = 'internal scratch']
  %s0 = inlined_call_operand.vmem [shape: bf16[512,640], index: 0, kind: input, shape index: {}]
  %s1 = inlined_call_operand.vmem [shape: f32[512,1], index: 1, kind: input, shape index: {}]
  %s2 = inlined_call_operand.vmem [shape: bf16[640,128], index: 2, kind: input, shape index: {}]
  %s3 = inlined_call_operand.vmem [shape: f32[1,128], index: 3, kind: input, shape index: {}]
  %s4 = inlined_call_operand.vmem [shape: bf16[512,128], index: 4, kind: output, shape index: {}]
  %s5 = sld [smem:[#allocation0]]
  $region26: #{partial_conv_net.19} parent=0
    _
  %s7 = ssub.s32 1, %s5
  %s8 = scalar_select 0, %s7, %s5
  // Predicated region
  $region2: #{partial_conv_net.19} parent=0 // pred_check
    _
  $region3: #{partial_conv_net.19} parent=0 // pred_check_branch
    %10 = sbr.rel (0) target = $region5
  $region4: #{partial_conv_net.19} parent=0 // pred_region
    _
  $region5: #{partial_conv_net.19} parent=0 // pred_fallthru
    _
  // Predicated region
  $region6: #{partial_conv_net.19} parent=0 // pred_check
    _
  $region7: #{partial_conv_net.19} parent=0 // pred_check_branch
    %12 = sbr.rel (0) target = $region9
  $region8: #{partial_conv_net.19} parent=0 // pred_region
    _
  $region9: #{partial_conv_net.19} parent=0 // pred_fallthru
    _
  // Predicated region
  $region10: #{partial_conv_net.19} parent=0 // pred_check
    _
  $region11: #{partial_conv_net.19} parent=0 // pred_check_branch
    %14 = sbr.rel (0) target = $region13
  $region12: #{partial_conv_net.19} parent=0 // pred_region
    _
  $region13: #{partial_conv_net.19} parent=0 // pred_fallthru
    _
  // Predicated region
  $region14: #{partial_conv_net.19} parent=0 // pred_check
    _
  $region15: #{partial_conv_net.19} parent=0 // pred_check_branch
    %16 = sbr.rel (0) target = $region17
  $region16: #{partial_conv_net.19} parent=0 // pred_region
    _
  $region17: #{partial_conv_net.19} parent=0 // pred_fallthru
    _
  %v18 = vld [vmem:[%s0] sm:$0xff]
  %v19 = vld [vmem:[%s0 + $0x8] sm:$0xff]
  %v20 = vld [vmem:[%s0 + $0x10] sm:$0xf]
  %v21 = vld [vmem:[%s0 + $0x14] sm:$0xff]
  %v22 = vld [vmem:[%s0 + $0x1c] sm:$0xff]
  %v23 = vld [vmem:[%s0 + $0x24] sm:$0xf]
  %v24 = vld [vmem:[%s0 + $0x28] sm:$0xff]
  %v25 = vld [vmem:[%s0 + $0x30] sm:$0xff]
  %v26 = vld [vmem:[%s0 + $0x38] sm:$0xf]
  %v27 = vld [vmem:[%s0 + $0x3c] sm:$0xff]
  %v28 = vld [vmem:[%s0 + $0x44] sm:$0xff]
  %v29 = vld [vmem:[%s0 + $0x4c] sm:$0xf]
  %v30 = vld [vmem:[%s0 + $0x50] sm:$0xff]
  %v31 = vld [vmem:[%s0 + $0x58] sm:$0xff]
  %v32 = vld [vmem:[%s0 + $0x60] sm:$0xf]
  %v33 = vld [vmem:[%s0 + $0x64] sm:$0xff]
  %v34 = vld [vmem:[%s0 + $0x6c] sm:$0xff]
  %v35 = vld [vmem:[%s0 + $0x74] sm:$0xf]
  %v36 = vld [vmem:[%s0 + $0x78] sm:$0xff]
  %v37 = vld [vmem:[%s0 + $0x80] sm:$0xff]
  %v38 = vld [vmem:[%s0 + $0x88] sm:$0xf]
  %v39 = vld [vmem:[%s0 + $0x8c] sm:$0xff]
  %v40 = vld [vmem:[%s0 + $0x94] sm:$0xff]
  %v41 = vld [vmem:[%s0 + $0x9c] sm:$0xf]
  %v42 = vld [vmem:[%s0 + $0xa0] sm:$0xff]
  %v43 = vld [vmem:[%s0 + $0xa8] sm:$0xff]
  %v44 = vld [vmem:[%s0 + $0xb0] sm:$0xf]
  %v45 = vld [vmem:[%s0 + $0xb4] sm:$0xff]
  %v46 = vld [vmem:[%s0 + $0xbc] sm:$0xff]
  %v47 = vld [vmem:[%s0 + $0xc4] sm:$0xf]
  %v48 = vld [vmem:[%s0 + $0xc8] sm:$0xff]
  %v49 = vld [vmem:[%s0 + $0xd0] sm:$0xff]
  %v50 = vld [vmem:[%s0 + $0xd8] sm:$0xf]
  %v51 = vld [vmem:[%s0 + $0xdc] sm:$0xff]
  %v52 = vld [vmem:[%s0 + $0xe4] sm:$0xff]
  %v53 = vld [vmem:[%s0 + $0xec] sm:$0xf]
  %v54 = vld [vmem:[%s0 + $0xf0] sm:$0xff]
  %v55 = vld [vmem:[%s0 + $0xf8] sm:$0xff]
  %v56 = vld [vmem:[%s0 + $0x100] sm:$0xf]
  %v57 = vld [vmem:[%s0 + $0x104] sm:$0xff]
  %v58 = vld [vmem:[%s0 + $0x10c] sm:$0xff]
  %v59 = vld [vmem:[%s0 + $0x114] sm:$0xf]
  %v60 = vld [vmem:[%s0 + $0x118] sm:$0xff]
  %v61 = vld [vmem:[%s0 + $0x120] sm:$0xff]
  %v62 = vld [vmem:[%s0 + $0x128] sm:$0xf]
  %v63 = vld [vmem:[%s0 + $0x12c] sm:$0xff]
  %v64 = vld [vmem:[%s0 + $0x134] sm:$0xff]
  %v65 = vld [vmem:[%s0 + $0x13c] sm:$0xf]
  %v66 = vld [vmem:[%s0 + $0x140] sm:$0xff]
  %v67 = vld [vmem:[%s0 + $0x148] sm:$0xff]
  %v68 = vld [vmem:[%s0 + $0x150] sm:$0xf]
  %v69 = vld [vmem:[%s0 + $0x154] sm:$0xff]
  %v70 = vld [vmem:[%s0 + $0x15c] sm:$0xff]
  %v71 = vld [vmem:[%s0 + $0x164] sm:$0xf]
  %v72 = vld [vmem:[%s0 + $0x168] sm:$0xff]
  %v73 = vld [vmem:[%s0 + $0x170] sm:$0xff]
  %v74 = vld [vmem:[%s0 + $0x178] sm:$0xf]
  %v75 = vld [vmem:[%s0 + $0x17c] sm:$0xff]
  %v76 = vld [vmem:[%s0 + $0x184] sm:$0xff]
  %v77 = vld [vmem:[%s0 + $0x18c] sm:$0xf]
  %v78 = vld [vmem:[%s0 + $0x190] sm:$0xff]
  %v79 = vld [vmem:[%s0 + $0x198] sm:$0xff]
  %v80 = vld [vmem:[%s0 + $0x1a0] sm:$0xf]
  %v81 = vld [vmem:[%s0 + $0x1a4] sm:$0xff]
  %v82 = vld [vmem:[%s0 + $0x1ac] sm:$0xff]
  %v83 = vld [vmem:[%s0 + $0x1b4] sm:$0xf]
  %v84 = vld [vmem:[%s0 + $0x1b8] sm:$0xff]
  %v85 = vld [vmem:[%s0 + $0x1c0] sm:$0xff]
  %v86 = vld [vmem:[%s0 + $0x1c8] sm:$0xf]
  %v87 = vld [vmem:[%s0 + $0x1cc] sm:$0xff]
  %v88 = vld [vmem:[%s0 + $0x1d4] sm:$0xff]
  %v89 = vld [vmem:[%s0 + $0x1dc] sm:$0xf]
  %v90 = vld [vmem:[%s0 + $0x1e0] sm:$0xff]
  %v91 = vld [vmem:[%s0 + $0x1e8] sm:$0xff]
  %v92 = vld [vmem:[%s0 + $0x1f0] sm:$0xf]
  %v93 = vld [vmem:[%s0 + $0x1f4] sm:$0xff]
  %v94 = vld [vmem:[%s0 + $0x1fc] sm:$0xff]
  %v95 = vld [vmem:[%s0 + $0x204] sm:$0xf]
  %v96 = vld [vmem:[%s0 + $0x208] sm:$0xff]
  %v97 = vld [vmem:[%s0 + $0x210] sm:$0xff]
  %v98 = vld [vmem:[%s0 + $0x218] sm:$0xf]
  %v99 = vld [vmem:[%s0 + $0x21c] sm:$0xff]
  %v100 = vld [vmem:[%s0 + $0x224] sm:$0xff]
  %v101 = vld [vmem:[%s0 + $0x22c] sm:$0xf]
  %v102 = vld [vmem:[%s0 + $0x230] sm:$0xff]
  %v103 = vld [vmem:[%s0 + $0x238] sm:$0xff]
  %v104 = vld [vmem:[%s0 + $0x240] sm:$0xf]
  %v105 = vld [vmem:[%s0 + $0x244] sm:$0xff]
  %v106 = vld [vmem:[%s0 + $0x24c] sm:$0xff]
  %v107 = vld [vmem:[%s0 + $0x254] sm:$0xf]
  %v108 = vld [vmem:[%s0 + $0x258] sm:$0xff]
  %v109 = vld [vmem:[%s0 + $0x260] sm:$0xff]
  %v110 = vld [vmem:[%s0 + $0x268] sm:$0xf]
  %v111 = vld [vmem:[%s0 + $0x26c] sm:$0xff]
  %v112 = vld [vmem:[%s0 + $0x274] sm:$0xff]
  %v113 = vld [vmem:[%s0 + $0x27c] sm:$0xf]
  %v114 = vld [vmem:[%s0 + $0x280] sm:$0xff]
  %v115 = vld [vmem:[%s0 + $0x288] sm:$0xff]
  %v116 = vld [vmem:[%s0 + $0x290] sm:$0xf]
  %v117 = vld [vmem:[%s0 + $0x294] sm:$0xff]
  %v118 = vld [vmem:[%s0 + $0x29c] sm:$0xff]
  %v119 = vld [vmem:[%s0 + $0x2a4] sm:$0xf]
  %v120 = vld [vmem:[%s0 + $0x2a8] sm:$0xff]
  %v121 = vld [vmem:[%s0 + $0x2b0] sm:$0xff]
  %v122 = vld [vmem:[%s0 + $0x2b8] sm:$0xf]
  %v123 = vld [vmem:[%s0 + $0x2bc] sm:$0xff]
  %v124 = vld [vmem:[%s0 + $0x2c4] sm:$0xff]
  %v125 = vld [vmem:[%s0 + $0x2cc] sm:$0xf]
  %v126 = vld [vmem:[%s0 + $0x2d0] sm:$0xff]
  %v127 = vld [vmem:[%s0 + $0x2d8] sm:$0xff]
  %v128 = vld [vmem:[%s0 + $0x2e0] sm:$0xf]
  %v129 = vld [vmem:[%s0 + $0x2e4] sm:$0xff]
  %v130 = vld [vmem:[%s0 + $0x2ec] sm:$0xff]
  %v131 = vld [vmem:[%s0 + $0x2f4] sm:$0xf]
  %v132 = vld [vmem:[%s0 + $0x2f8] sm:$0xff]
  %v133 = vld [vmem:[%s0 + $0x300] sm:$0xff]
  %v134 = vld [vmem:[%s0 + $0x308] sm:$0xf]
  %v135 = vld [vmem:[%s0 + $0x30c] sm:$0xff]
  %v136 = vld [vmem:[%s0 + $0x314] sm:$0xff]
  %v137 = vld [vmem:[%s0 + $0x31c] sm:$0xf]
  %v138 = vld [vmem:[%s0 + $0x320] sm:$0xff]
  %v139 = vld [vmem:[%s0 + $0x328] sm:$0xff]
  %v140 = vld [vmem:[%s0 + $0x330] sm:$0xf]
  %v141 = vld [vmem:[%s0 + $0x334] sm:$0xff]
  %v142 = vld [vmem:[%s0 + $0x33c] sm:$0xff]
  %v143 = vld [vmem:[%s0 + $0x344] sm:$0xf]
  %v144 = vld [vmem:[%s0 + $0x348] sm:$0xff]
  %v145 = vld [vmem:[%s0 + $0x350] sm:$0xff]
  %v146 = vld [vmem:[%s0 + $0x358] sm:$0xf]
  %v147 = vld [vmem:[%s0 + $0x35c] sm:$0xff]
  %v148 = vld [vmem:[%s0 + $0x364] sm:$0xff]
  %v149 = vld [vmem:[%s0 + $0x36c] sm:$0xf]
  %v150 = vld [vmem:[%s0 + $0x370] sm:$0xff]
  %v151 = vld [vmem:[%s0 + $0x378] sm:$0xff]
  %v152 = vld [vmem:[%s0 + $0x380] sm:$0xf]
  %v153 = vld [vmem:[%s0 + $0x384] sm:$0xff]
  %v154 = vld [vmem:[%s0 + $0x38c] sm:$0xff]
  %v155 = vld [vmem:[%s0 + $0x394] sm:$0xf]
  %v156 = vld [vmem:[%s0 + $0x398] sm:$0xff]
  %v157 = vld [vmem:[%s0 + $0x3a0] sm:$0xff]
  %v158 = vld [vmem:[%s0 + $0x3a8] sm:$0xf]
  %v159 = vld [vmem:[%s0 + $0x3ac] sm:$0xff]
  %v160 = vld [vmem:[%s0 + $0x3b4] sm:$0xff]
  %v161 = vld [vmem:[%s0 + $0x3bc] sm:$0xf]
  %v162 = vld [vmem:[%s0 + $0x3c0] sm:$0xff]
  %v163 = vld [vmem:[%s0 + $0x3c8] sm:$0xff]
  %v164 = vld [vmem:[%s0 + $0x3d0] sm:$0xf]
  %v165 = vld [vmem:[%s0 + $0x3d4] sm:$0xff]
  %v166 = vld [vmem:[%s0 + $0x3dc] sm:$0xff]
  %v167 = vld [vmem:[%s0 + $0x3e4] sm:$0xf]
  %v168 = vld [vmem:[%s0 + $0x3e8] sm:$0xff]
  %v169 = vld [vmem:[%s0 + $0x3f0] sm:$0xff]
  %v170 = vld [vmem:[%s0 + $0x3f8] sm:$0xf]
  %v171 = vld [vmem:[%s0 + $0x3fc] sm:$0xff]
  %v172 = vld [vmem:[%s0 + $0x404] sm:$0xff]
  %v173 = vld [vmem:[%s0 + $0x40c] sm:$0xf]
  %v174 = vld [vmem:[%s0 + $0x410] sm:$0xff]
  %v175 = vld [vmem:[%s0 + $0x418] sm:$0xff]
  %v176 = vld [vmem:[%s0 + $0x420] sm:$0xf]
  %v177 = vld [vmem:[%s0 + $0x424] sm:$0xff]
  %v178 = vld [vmem:[%s0 + $0x42c] sm:$0xff]
  %v179 = vld [vmem:[%s0 + $0x434] sm:$0xf]
  %v180 = vld [vmem:[%s0 + $0x438] sm:$0xff]
  %v181 = vld [vmem:[%s0 + $0x440] sm:$0xff]
  %v182 = vld [vmem:[%s0 + $0x448] sm:$0xf]
  %v183 = vld [vmem:[%s0 + $0x44c] sm:$0xff]
  %v184 = vld [vmem:[%s0 + $0x454] sm:$0xff]
  %v185 = vld [vmem:[%s0 + $0x45c] sm:$0xf]
  %v186 = vld [vmem:[%s0 + $0x460] sm:$0xff]
  %v187 = vld [vmem:[%s0 + $0x468] sm:$0xff]
  %v188 = vld [vmem:[%s0 + $0x470] sm:$0xf]
  %v189 = vld [vmem:[%s0 + $0x474] sm:$0xff]
  %v190 = vld [vmem:[%s0 + $0x47c] sm:$0xff]
  %v191 = vld [vmem:[%s0 + $0x484] sm:$0xf]
  %v192 = vld [vmem:[%s0 + $0x488] sm:$0xff]
  %v193 = vld [vmem:[%s0 + $0x490] sm:$0xff]
  %v194 = vld [vmem:[%s0 + $0x498] sm:$0xf]
  %v195 = vld [vmem:[%s0 + $0x49c] sm:$0xff]
  %v196 = vld [vmem:[%s0 + $0x4a4] sm:$0xff]
  %v197 = vld [vmem:[%s0 + $0x4ac] sm:$0xf]
  %v198 = vld [vmem:[%s0 + $0x4b0] sm:$0xff]
  %v199 = vld [vmem:[%s0 + $0x4b8] sm:$0xff]
  %v200 = vld [vmem:[%s0 + $0x4c0] sm:$0xf]
  %v201 = vld [vmem:[%s0 + $0x4c4] sm:$0xff]
  %v202 = vld [vmem:[%s0 + $0x4cc] sm:$0xff]
  %v203 = vld [vmem:[%s0 + $0x4d4] sm:$0xf]
  %v204 = vld [vmem:[%s0 + $0x4d8] sm:$0xff]
  %v205 = vld [vmem:[%s0 + $0x4e0] sm:$0xff]
  %v206 = vld [vmem:[%s0 + $0x4e8] sm:$0xf]
  %v207 = vld [vmem:[%s0 + $0x4ec] sm:$0xff]
  %v208 = vld [vmem:[%s0 + $0x4f4] sm:$0xff]
  %v209 = vld [vmem:[%s0 + $0x4fc] sm:$0xf]
  %v210 = vld [vmem:[%s2] sm:$0xf]
  %v211 = vld [vmem:[%s2 + $0x4] sm:$0xf]
  %v212 = vld [vmem:[%s2 + $0x8] sm:$0xf]
  %v213 = vld [vmem:[%s2 + $0xc] sm:$0xf]
  %v214 = vld [vmem:[%s2 + $0x10] sm:$0xf]
  %v215 = vld [vmem:[%s2 + $0x14] sm:$0xf]
  %v216 = vld [vmem:[%s2 + $0x18] sm:$0xf]
  %v217 = vld [vmem:[%s2 + $0x1c] sm:$0xf]
  %v218 = vld [vmem:[%s2 + $0x20] sm:$0xf]
  %v219 = vld [vmem:[%s2 + $0x24] sm:$0xf]
  %v220 = vld [vmem:[%s2 + $0x28] sm:$0xf]
  %v221 = vld [vmem:[%s2 + $0x2c] sm:$0xf]
  %v222 = vld [vmem:[%s2 + $0x30] sm:$0xf]
  %v223 = vld [vmem:[%s2 + $0x34] sm:$0xf]
  %v224 = vld [vmem:[%s2 + $0x38] sm:$0xf]
  %v225 = vld [vmem:[%s2 + $0x3c] sm:$0xf]
  %v226 = vld [vmem:[%s2 + $0x40] sm:$0xf]
  %v227 = vld [vmem:[%s2 + $0x44] sm:$0xf]
  %v228 = vld [vmem:[%s2 + $0x48] sm:$0xf]
  %v229 = vld [vmem:[%s2 + $0x4c] sm:$0xf]
  %v230 = vld [vmem:[%s2 + $0x50] sm:$0xf]
  %v231 = vld [vmem:[%s2 + $0x54] sm:$0xf]
  %v232 = vld [vmem:[%s2 + $0x58] sm:$0xf]
  %v233 = vld [vmem:[%s2 + $0x5c] sm:$0xf]
  %v234 = vld [vmem:[%s2 + $0x60] sm:$0xf]
  %v235 = vld [vmem:[%s2 + $0x64] sm:$0xf]
  %v236 = vld [vmem:[%s2 + $0x68] sm:$0xf]
  %v237 = vld [vmem:[%s2 + $0x6c] sm:$0xf]
  %v238 = vld [vmem:[%s2 + $0x70] sm:$0xf]
  %v239 = vld [vmem:[%s2 + $0x74] sm:$0xf]
  %v240 = vld [vmem:[%s2 + $0x78] sm:$0xf]
  %v241 = vld [vmem:[%s2 + $0x7c] sm:$0xf]
  %v242 = vld [vmem:[%s2 + $0x80] sm:$0xf]
  %v243 = vld [vmem:[%s2 + $0x84] sm:$0xf]
  %v244 = vld [vmem:[%s2 + $0x88] sm:$0xf]
  %v245 = vld [vmem:[%s2 + $0x8c] sm:$0xf]
  %v246 = vld [vmem:[%s2 + $0x90] sm:$0xf]
  %v247 = vld [vmem:[%s2 + $0x94] sm:$0xf]
  %v248 = vld [vmem:[%s2 + $0x98] sm:$0xf]
  %v249 = vld [vmem:[%s2 + $0x9c] sm:$0xf]
  %v250 = vld [vmem:[%s2 + $0xa0] sm:$0xf]
  %v251 = vld [vmem:[%s2 + $0xa4] sm:$0xf]
  %v252 = vld [vmem:[%s2 + $0xa8] sm:$0xf]
  %v253 = vld [vmem:[%s2 + $0xac] sm:$0xf]
  %v254 = vld [vmem:[%s2 + $0xb0] sm:$0xf]
  %v255 = vld [vmem:[%s2 + $0xb4] sm:$0xf]
  %v256 = vld [vmem:[%s2 + $0xb8] sm:$0xf]
  %v257 = vld [vmem:[%s2 + $0xbc] sm:$0xf]
  %v258 = vld [vmem:[%s2 + $0xc0] sm:$0xf]
  %v259 = vld [vmem:[%s2 + $0xc4] sm:$0xf]
  %v260 = vld [vmem:[%s2 + $0xc8] sm:$0xf]
  %v261 = vld [vmem:[%s2 + $0xcc] sm:$0xf]
  %v262 = vld [vmem:[%s2 + $0xd0] sm:$0xf]
  %v263 = vld [vmem:[%s2 + $0xd4] sm:$0xf]
  %v264 = vld [vmem:[%s2 + $0xd8] sm:$0xf]
  %v265 = vld [vmem:[%s2 + $0xdc] sm:$0xf]
  %v266 = vld [vmem:[%s2 + $0xe0] sm:$0xf]
  %v267 = vld [vmem:[%s2 + $0xe4] sm:$0xf]
  %v268 = vld [vmem:[%s2 + $0xe8] sm:$0xf]
  %v269 = vld [vmem:[%s2 + $0xec] sm:$0xf]
  %v270 = vld [vmem:[%s2 + $0xf0] sm:$0xf]
  %v271 = vld [vmem:[%s2 + $0xf4] sm:$0xf]
  %v272 = vld [vmem:[%s2 + $0xf8] sm:$0xf]
  %v273 = vld [vmem:[%s2 + $0xfc] sm:$0xf]
  %v274 = vld [vmem:[%s2 + $0x100] sm:$0xf]
  %v275 = vld [vmem:[%s2 + $0x104] sm:$0xf]
  %v276 = vld [vmem:[%s2 + $0x108] sm:$0xf]
  %v277 = vld [vmem:[%s2 + $0x10c] sm:$0xf]
  %v278 = vld [vmem:[%s2 + $0x110] sm:$0xf]
  %v279 = vld [vmem:[%s2 + $0x114] sm:$0xf]
  %v280 = vld [vmem:[%s2 + $0x118] sm:$0xf]
  %v281 = vld [vmem:[%s2 + $0x11c] sm:$0xf]
  %v282 = vld [vmem:[%s2 + $0x120] sm:$0xf]
  %v283 = vld [vmem:[%s2 + $0x124] sm:$0xf]
  %v284 = vld [vmem:[%s2 + $0x128] sm:$0xf]
  %v285 = vld [vmem:[%s2 + $0x12c] sm:$0xf]
  %v286 = vld [vmem:[%s2 + $0x130] sm:$0xf]
  %v287 = vld [vmem:[%s2 + $0x134] sm:$0xf]
  %v288 = vld [vmem:[%s2 + $0x138] sm:$0xf]
  %v289 = vld [vmem:[%s2 + $0x13c] sm:$0xf]
  %v482 = vunpack.c.l.b16 %v18
  %v483 = vunpack.c.h.b16 %v18
  %v484 = vunpack.c.l.b16 %v19
  %v485 = vunpack.c.h.b16 %v19
  %v486 = vunpack.c.l.b16 %v20
  %v487 = vunpack.c.l.b16 %v21
  %v488 = vunpack.c.h.b16 %v21
  %v489 = vunpack.c.l.b16 %v22
  %v490 = vunpack.c.h.b16 %v22
  %v491 = vunpack.c.l.b16 %v23
  %v492 = vunpack.c.l.b16 %v24
  %v493 = vunpack.c.h.b16 %v24
  %v494 = vunpack.c.l.b16 %v25
  %v495 = vunpack.c.h.b16 %v25
  %v496 = vunpack.c.l.b16 %v26
  %v497 = vunpack.c.l.b16 %v27
  %v498 = vunpack.c.h.b16 %v27
  %v499 = vunpack.c.l.b16 %v28
  %v500 = vunpack.c.h.b16 %v28
  %v501 = vunpack.c.l.b16 %v29
  %v502 = vunpack.c.l.b16 %v30
  %v503 = vunpack.c.h.b16 %v30
  %v504 = vunpack.c.l.b16 %v31
  %v505 = vunpack.c.h.b16 %v31
  %v506 = vunpack.c.l.b16 %v32
  %v507 = vunpack.c.l.b16 %v33
  %v508 = vunpack.c.h.b16 %v33
  %v509 = vunpack.c.l.b16 %v34
  %v510 = vunpack.c.h.b16 %v34
  %v511 = vunpack.c.l.b16 %v35
  %v512 = vunpack.c.l.b16 %v36
  %v513 = vunpack.c.h.b16 %v36
  %v514 = vunpack.c.l.b16 %v37
  %v515 = vunpack.c.h.b16 %v37
  %v516 = vunpack.c.l.b16 %v38
  %v517 = vunpack.c.l.b16 %v39
  %v518 = vunpack.c.h.b16 %v39
  %v519 = vunpack.c.l.b16 %v40
  %v520 = vunpack.c.h.b16 %v40
  %v521 = vunpack.c.l.b16 %v41
  %v522 = vunpack.c.l.b16 %v42
  %v523 = vunpack.c.h.b16 %v42
  %v524 = vunpack.c.l.b16 %v43
  %v525 = vunpack.c.h.b16 %v43
  %v526 = vunpack.c.l.b16 %v44
  %v527 = vunpack.c.l.b16 %v45
  %v528 = vunpack.c.h.b16 %v45
  %v529 = vunpack.c.l.b16 %v46
  %v530 = vunpack.c.h.b16 %v46
  %v531 = vunpack.c.l.b16 %v47
  %v532 = vunpack.c.l.b16 %v48
  %v533 = vunpack.c.h.b16 %v48
  %v534 = vunpack.c.l.b16 %v49
  %v535 = vunpack.c.h.b16 %v49
  %v536 = vunpack.c.l.b16 %v50
  %v537 = vunpack.c.l.b16 %v51
  %v538 = vunpack.c.h.b16 %v51
  %v539 = vunpack.c.l.b16 %v52
  %v540 = vunpack.c.h.b16 %v52
  %v541 = vunpack.c.l.b16 %v53
  %v542 = vunpack.c.l.b16 %v54
  %v543 = vunpack.c.h.b16 %v54
  %v544 = vunpack.c.l.b16 %v55
  %v545 = vunpack.c.h.b16 %v55
  %v546 = vunpack.c.l.b16 %v56
  %v547 = vunpack.c.l.b16 %v57
  %v548 = vunpack.c.h.b16 %v57
  %v549 = vunpack.c.l.b16 %v58
  %v550 = vunpack.c.h.b16 %v58
  %v551 = vunpack.c.l.b16 %v59
  %v552 = vunpack.c.l.b16 %v60
  %v553 = vunpack.c.h.b16 %v60
  %v554 = vunpack.c.l.b16 %v61
  %v555 = vunpack.c.h.b16 %v61
  %v556 = vunpack.c.l.b16 %v62
  %v557 = vunpack.c.l.b16 %v63
  %v558 = vunpack.c.h.b16 %v63
  %v559 = vunpack.c.l.b16 %v64
  %v560 = vunpack.c.h.b16 %v64
  %v561 = vunpack.c.l.b16 %v65
  %v562 = vunpack.c.l.b16 %v66
  %v563 = vunpack.c.h.b16 %v66
  %v564 = vunpack.c.l.b16 %v67
  %v565 = vunpack.c.h.b16 %v67
  %v566 = vunpack.c.l.b16 %v68
  %v567 = vunpack.c.l.b16 %v69
  %v568 = vunpack.c.h.b16 %v69
  %v569 = vunpack.c.l.b16 %v70
  %v570 = vunpack.c.h.b16 %v70
  %v571 = vunpack.c.l.b16 %v71
  %v572 = vunpack.c.l.b16 %v72
  %v573 = vunpack.c.h.b16 %v72
  %v574 = vunpack.c.l.b16 %v73
  %v575 = vunpack.c.h.b16 %v73
  %v576 = vunpack.c.l.b16 %v74
  %v577 = vunpack.c.l.b16 %v75
  %v578 = vunpack.c.h.b16 %v75
  %v579 = vunpack.c.l.b16 %v76
  %v580 = vunpack.c.h.b16 %v76
  %v581 = vunpack.c.l.b16 %v77
  %v582 = vunpack.c.l.b16 %v78
  %v583 = vunpack.c.h.b16 %v78
  %v584 = vunpack.c.l.b16 %v79
  %v585 = vunpack.c.h.b16 %v79
  %v586 = vunpack.c.l.b16 %v80
  %v587 = vunpack.c.l.b16 %v81
  %v588 = vunpack.c.h.b16 %v81
  %v589 = vunpack.c.l.b16 %v82
  %v590 = vunpack.c.h.b16 %v82
  %v591 = vunpack.c.l.b16 %v83
  %v592 = vunpack.c.l.b16 %v84
  %v593 = vunpack.c.h.b16 %v84
  %v594 = vunpack.c.l.b16 %v85
  %v595 = vunpack.c.h.b16 %v85
  %v596 = vunpack.c.l.b16 %v86
  %v597 = vunpack.c.l.b16 %v87
  %v598 = vunpack.c.h.b16 %v87
  %v599 = vunpack.c.l.b16 %v88
  %v600 = vunpack.c.h.b16 %v88
  %v601 = vunpack.c.l.b16 %v89
  %v602 = vunpack.c.l.b16 %v90
  %v603 = vunpack.c.h.b16 %v90
  %v604 = vunpack.c.l.b16 %v91
  %v605 = vunpack.c.h.b16 %v91
  %v606 = vunpack.c.l.b16 %v92
  %v607 = vunpack.c.l.b16 %v93
  %v608 = vunpack.c.h.b16 %v93
  %v609 = vunpack.c.l.b16 %v94
  %v610 = vunpack.c.h.b16 %v94
  %v611 = vunpack.c.l.b16 %v95
  %v612 = vunpack.c.l.b16 %v96
  %v613 = vunpack.c.h.b16 %v96
  %v614 = vunpack.c.l.b16 %v97
  %v615 = vunpack.c.h.b16 %v97
  %v616 = vunpack.c.l.b16 %v98
  %v617 = vunpack.c.l.b16 %v99
  %v618 = vunpack.c.h.b16 %v99
  %v619 = vunpack.c.l.b16 %v100
  %v620 = vunpack.c.h.b16 %v100
  %v621 = vunpack.c.l.b16 %v101
  %v622 = vunpack.c.l.b16 %v102
  %v623 = vunpack.c.h.b16 %v102
  %v624 = vunpack.c.l.b16 %v103
  %v625 = vunpack.c.h.b16 %v103
  %v626 = vunpack.c.l.b16 %v104
  %v627 = vunpack.c.l.b16 %v105
  %v628 = vunpack.c.h.b16 %v105
  %v629 = vunpack.c.l.b16 %v106
  %v630 = vunpack.c.h.b16 %v106
  %v631 = vunpack.c.l.b16 %v107
  %v632 = vunpack.c.l.b16 %v108
  %v633 = vunpack.c.h.b16 %v108
  %v634 = vunpack.c.l.b16 %v109
  %v635 = vunpack.c.h.b16 %v109
  %v636 = vunpack.c.l.b16 %v110
  %v637 = vunpack.c.l.b16 %v111
  %v638 = vunpack.c.h.b16 %v111
  %v639 = vunpack.c.l.b16 %v112
  %v640 = vunpack.c.h.b16 %v112
  %v641 = vunpack.c.l.b16 %v113
  %v642 = vunpack.c.l.b16 %v114
  %v643 = vunpack.c.h.b16 %v114
  %v644 = vunpack.c.l.b16 %v115
  %v645 = vunpack.c.h.b16 %v115
  %v646 = vunpack.c.l.b16 %v116
  %v647 = vunpack.c.l.b16 %v117
  %v648 = vunpack.c.h.b16 %v117
  %v649 = vunpack.c.l.b16 %v118
  %v650 = vunpack.c.h.b16 %v118
  %v651 = vunpack.c.l.b16 %v119
  %v652 = vunpack.c.l.b16 %v120
  %v653 = vunpack.c.h.b16 %v120
  %v654 = vunpack.c.l.b16 %v121
  %v655 = vunpack.c.h.b16 %v121
  %v656 = vunpack.c.l.b16 %v122
  %v657 = vunpack.c.l.b16 %v123
  %v658 = vunpack.c.h.b16 %v123
  %v659 = vunpack.c.l.b16 %v124
  %v660 = vunpack.c.h.b16 %v124
  %v661 = vunpack.c.l.b16 %v125
  %v662 = vunpack.c.l.b16 %v126
  %v663 = vunpack.c.h.b16 %v126
  %v664 = vunpack.c.l.b16 %v127
  %v665 = vunpack.c.h.b16 %v127
  %v666 = vunpack.c.l.b16 %v128
  %v667 = vunpack.c.l.b16 %v129
  %v668 = vunpack.c.h.b16 %v129
  %v669 = vunpack.c.l.b16 %v130
  %v670 = vunpack.c.h.b16 %v130
  %v671 = vunpack.c.l.b16 %v131
  %v672 = vunpack.c.l.b16 %v132
  %v673 = vunpack.c.h.b16 %v132
  %v674 = vunpack.c.l.b16 %v133
  %v675 = vunpack.c.h.b16 %v133
  %v676 = vunpack.c.l.b16 %v134
  %v677 = vunpack.c.l.b16 %v135
  %v678 = vunpack.c.h.b16 %v135
  %v679 = vunpack.c.l.b16 %v136
  %v680 = vunpack.c.h.b16 %v136
  %v681 = vunpack.c.l.b16 %v137
  %v682 = vunpack.c.l.b16 %v138
  %v683 = vunpack.c.h.b16 %v138
  %v684 = vunpack.c.l.b16 %v139
  %v685 = vunpack.c.h.b16 %v139
  %v686 = vunpack.c.l.b16 %v140
  %v687 = vunpack.c.l.b16 %v141
  %v688 = vunpack.c.h.b16 %v141
  %v689 = vunpack.c.l.b16 %v142
  %v690 = vunpack.c.h.b16 %v142
  %v691 = vunpack.c.l.b16 %v143
  %v692 = vunpack.c.l.b16 %v144
  %v693 = vunpack.c.h.b16 %v144
  %v694 = vunpack.c.l.b16 %v145
  %v695 = vunpack.c.h.b16 %v145
  %v696 = vunpack.c.l.b16 %v146
  %v697 = vunpack.c.l.b16 %v147
  %v698 = vunpack.c.h.b16 %v147
  %v699 = vunpack.c.l.b16 %v148
  %v700 = vunpack.c.h.b16 %v148
  %v701 = vunpack.c.l.b16 %v149
  %v702 = vunpack.c.l.b16 %v150
  %v703 = vunpack.c.h.b16 %v150
  %v704 = vunpack.c.l.b16 %v151
  %v705 = vunpack.c.h.b16 %v151
  %v706 = vunpack.c.l.b16 %v152
  %v707 = vunpack.c.l.b16 %v153
  %v708 = vunpack.c.h.b16 %v153
  %v709 = vunpack.c.l.b16 %v154
  %v710 = vunpack.c.h.b16 %v154
  %v711 = vunpack.c.l.b16 %v155
  %v712 = vunpack.c.l.b16 %v156
  %v713 = vunpack.c.h.b16 %v156
  %v714 = vunpack.c.l.b16 %v157
  %v715 = vunpack.c.h.b16 %v157
  %v716 = vunpack.c.l.b16 %v158
  %v717 = vunpack.c.l.b16 %v159
  %v718 = vunpack.c.h.b16 %v159
  %v719 = vunpack.c.l.b16 %v160
  %v720 = vunpack.c.h.b16 %v160
  %v721 = vunpack.c.l.b16 %v161
  %v722 = vunpack.c.l.b16 %v162
  %v723 = vunpack.c.h.b16 %v162
  %v724 = vunpack.c.l.b16 %v163
  %v725 = vunpack.c.h.b16 %v163
  %v726 = vunpack.c.l.b16 %v164
  %v727 = vunpack.c.l.b16 %v165
  %v728 = vunpack.c.h.b16 %v165
  %v729 = vunpack.c.l.b16 %v166
  %v730 = vunpack.c.h.b16 %v166
  %v731 = vunpack.c.l.b16 %v167
  %v732 = vunpack.c.l.b16 %v168
  %v733 = vunpack.c.h.b16 %v168
  %v734 = vunpack.c.l.b16 %v169
  %v735 = vunpack.c.h.b16 %v169
  %v736 = vunpack.c.l.b16 %v170
  %v737 = vunpack.c.l.b16 %v171
  %v738 = vunpack.c.h.b16 %v171
  %v739 = vunpack.c.l.b16 %v172
  %v740 = vunpack.c.h.b16 %v172
  %v741 = vunpack.c.l.b16 %v173
  %v742 = vunpack.c.l.b16 %v174
  %v743 = vunpack.c.h.b16 %v174
  %v744 = vunpack.c.l.b16 %v175
  %v745 = vunpack.c.h.b16 %v175
  %v746 = vunpack.c.l.b16 %v176
  %v747 = vunpack.c.l.b16 %v177
  %v748 = vunpack.c.h.b16 %v177
  %v749 = vunpack.c.l.b16 %v178
  %v750 = vunpack.c.h.b16 %v178
  %v751 = vunpack.c.l.b16 %v179
  %v752 = vunpack.c.l.b16 %v180
  %v753 = vunpack.c.h.b16 %v180
  %v754 = vunpack.c.l.b16 %v181
  %v755 = vunpack.c.h.b16 %v181
  %v756 = vunpack.c.l.b16 %v182
  %v757 = vunpack.c.l.b16 %v183
  %v758 = vunpack.c.h.b16 %v183
  %v759 = vunpack.c.l.b16 %v184
  %v760 = vunpack.c.h.b16 %v184
  %v761 = vunpack.c.l.b16 %v185
  %v762 = vunpack.c.l.b16 %v186
  %v763 = vunpack.c.h.b16 %v186
  %v764 = vunpack.c.l.b16 %v187
  %v765 = vunpack.c.h.b16 %v187
  %v766 = vunpack.c.l.b16 %v188
  %v767 = vunpack.c.l.b16 %v189
  %v768 = vunpack.c.h.b16 %v189
  %v769 = vunpack.c.l.b16 %v190
  %v770 = vunpack.c.h.b16 %v190
  %v771 = vunpack.c.l.b16 %v191
  %v772 = vunpack.c.l.b16 %v192
  %v773 = vunpack.c.h.b16 %v192
  %v774 = vunpack.c.l.b16 %v193
  %v775 = vunpack.c.h.b16 %v193
  %v776 = vunpack.c.l.b16 %v194
  %v777 = vunpack.c.l.b16 %v195
  %v778 = vunpack.c.h.b16 %v195
  %v779 = vunpack.c.l.b16 %v196
  %v780 = vunpack.c.h.b16 %v196
  %v781 = vunpack.c.l.b16 %v197
  %v782 = vunpack.c.l.b16 %v198
  %v783 = vunpack.c.h.b16 %v198
  %v784 = vunpack.c.l.b16 %v199
  %v785 = vunpack.c.h.b16 %v199
  %v786 = vunpack.c.l.b16 %v200
  %v787 = vunpack.c.l.b16 %v201
  %v788 = vunpack.c.h.b16 %v201
  %v789 = vunpack.c.l.b16 %v202
  %v790 = vunpack.c.h.b16 %v202
  %v791 = vunpack.c.l.b16 %v203
  %v792 = vunpack.c.l.b16 %v204
  %v793 = vunpack.c.h.b16 %v204
  %v794 = vunpack.c.l.b16 %v205
  %v795 = vunpack.c.h.b16 %v205
  %v796 = vunpack.c.l.b16 %v206
  %v797 = vunpack.c.l.b16 %v207
  %v798 = vunpack.c.h.b16 %v207
  %v799 = vunpack.c.l.b16 %v208
  %v800 = vunpack.c.h.b16 %v208
  %v801 = vunpack.c.l.b16 %v209
  %v802 = vpack.c.b16 %v487, %v482
  %v803 = vpack.c.b16 %v488, %v483
  %v804 = vpack.c.b16 %v489, %v484
  %v805 = vpack.c.b16 %v490, %v485
  %v806 = vpack.c.b16 %v491, %v486
  %v807 = vpack.c.b16 %v497, %v492
  %v808 = vpack.c.b16 %v498, %v493
  %v809 = vpack.c.b16 %v499, %v494
  %v810 = vpack.c.b16 %v500, %v495
  %v811 = vpack.c.b16 %v501, %v496
  %v812 = vpack.c.b16 %v507, %v502
  %v813 = vpack.c.b16 %v508, %v503
  %v814 = vpack.c.b16 %v509, %v504
  %v815 = vpack.c.b16 %v510, %v505
  %v816 = vpack.c.b16 %v511, %v506
  %v817 = vpack.c.b16 %v517, %v512
  %v818 = vpack.c.b16 %v518, %v513
  %v819 = vpack.c.b16 %v519, %v514
  %v820 = vpack.c.b16 %v520, %v515
  %v821 = vpack.c.b16 %v521, %v516
  %v822 = vpack.c.b16 %v527, %v522
  %v823 = vpack.c.b16 %v528, %v523
  %v824 = vpack.c.b16 %v529, %v524
  %v825 = vpack.c.b16 %v530, %v525
  %v826 = vpack.c.b16 %v531, %v526
  %v827 = vpack.c.b16 %v537, %v532
  %v828 = vpack.c.b16 %v538, %v533
  %v829 = vpack.c.b16 %v539, %v534
  %v830 = vpack.c.b16 %v540, %v535
  %v831 = vpack.c.b16 %v541, %v536
  %v832 = vpack.c.b16 %v547, %v542
  %v833 = vpack.c.b16 %v548, %v543
  %v834 = vpack.c.b16 %v549, %v544
  %v835 = vpack.c.b16 %v550, %v545
  %v836 = vpack.c.b16 %v551, %v546
  %v837 = vpack.c.b16 %v557, %v552
  %v838 = vpack.c.b16 %v558, %v553
  %v839 = vpack.c.b16 %v559, %v554
  %v840 = vpack.c.b16 %v560, %v555
  %v841 = vpack.c.b16 %v561, %v556
  %v842 = vpack.c.b16 %v567, %v562
  %v843 = vpack.c.b16 %v568, %v563
  %v844 = vpack.c.b16 %v569, %v564
  %v845 = vpack.c.b16 %v570, %v565
  %v846 = vpack.c.b16 %v571, %v566
  %v847 = vpack.c.b16 %v577, %v572
  %v848 = vpack.c.b16 %v578, %v573
  %v849 = vpack.c.b16 %v579, %v574
  %v850 = vpack.c.b16 %v580, %v575
  %v851 = vpack.c.b16 %v581, %v576
  %v852 = vpack.c.b16 %v587, %v582
  %v853 = vpack.c.b16 %v588, %v583
  %v854 = vpack.c.b16 %v589, %v584
  %v855 = vpack.c.b16 %v590, %v585
  %v856 = vpack.c.b16 %v591, %v586
  %v857 = vpack.c.b16 %v597, %v592
  %v858 = vpack.c.b16 %v598, %v593
  %v859 = vpack.c.b16 %v599, %v594
  %v860 = vpack.c.b16 %v600, %v595
  %v861 = vpack.c.b16 %v601, %v596
  %v862 = vpack.c.b16 %v607, %v602
  %v863 = vpack.c.b16 %v608, %v603
  %v864 = vpack.c.b16 %v609, %v604
  %v865 = vpack.c.b16 %v610, %v605
  %v866 = vpack.c.b16 %v611, %v606
  %v867 = vpack.c.b16 %v617, %v612
  %v868 = vpack.c.b16 %v618, %v613
  %v869 = vpack.c.b16 %v619, %v614
  %v870 = vpack.c.b16 %v620, %v615
  %v871 = vpack.c.b16 %v621, %v616
  %v872 = vpack.c.b16 %v627, %v622
  %v873 = vpack.c.b16 %v628, %v623
  %v874 = vpack.c.b16 %v629, %v624
  %v875 = vpack.c.b16 %v630, %v625
  %v876 = vpack.c.b16 %v631, %v626
  %v877 = vpack.c.b16 %v637, %v632
  %v878 = vpack.c.b16 %v638, %v633
  %v879 = vpack.c.b16 %v639, %v634
  %v880 = vpack.c.b16 %v640, %v635
  %v881 = vpack.c.b16 %v641, %v636
  %v882 = vpack.c.b16 %v647, %v642
  %v883 = vpack.c.b16 %v648, %v643
  %v884 = vpack.c.b16 %v649, %v644
  %v885 = vpack.c.b16 %v650, %v645
  %v886 = vpack.c.b16 %v651, %v646
  %v887 = vpack.c.b16 %v657, %v652
  %v888 = vpack.c.b16 %v658, %v653
  %v889 = vpack.c.b16 %v659, %v654
  %v890 = vpack.c.b16 %v660, %v655
  %v891 = vpack.c.b16 %v661, %v656
  %v892 = vpack.c.b16 %v667, %v662
  %v893 = vpack.c.b16 %v668, %v663
  %v894 = vpack.c.b16 %v669, %v664
  %v895 = vpack.c.b16 %v670, %v665
  %v896 = vpack.c.b16 %v671, %v666
  %v897 = vpack.c.b16 %v677, %v672
  %v898 = vpack.c.b16 %v678, %v673
  %v899 = vpack.c.b16 %v679, %v674
  %v900 = vpack.c.b16 %v680, %v675
  %v901 = vpack.c.b16 %v681, %v676
  %v902 = vpack.c.b16 %v687, %v682
  %v903 = vpack.c.b16 %v688, %v683
  %v904 = vpack.c.b16 %v689, %v684
  %v905 = vpack.c.b16 %v690, %v685
  %v906 = vpack.c.b16 %v691, %v686
  %v907 = vpack.c.b16 %v697, %v692
  %v908 = vpack.c.b16 %v698, %v693
  %v909 = vpack.c.b16 %v699, %v694
  %v910 = vpack.c.b16 %v700, %v695
  %v911 = vpack.c.b16 %v701, %v696
  %v912 = vpack.c.b16 %v707, %v702
  %v913 = vpack.c.b16 %v708, %v703
  %v914 = vpack.c.b16 %v709, %v704
  %v915 = vpack.c.b16 %v710, %v705
  %v916 = vpack.c.b16 %v711, %v706
  %v917 = vpack.c.b16 %v717, %v712
  %v918 = vpack.c.b16 %v718, %v713
  %v919 = vpack.c.b16 %v719, %v714
  %v920 = vpack.c.b16 %v720, %v715
  %v921 = vpack.c.b16 %v721, %v716
  %v922 = vpack.c.b16 %v727, %v722
  %v923 = vpack.c.b16 %v728, %v723
  %v924 = vpack.c.b16 %v729, %v724
  %v925 = vpack.c.b16 %v730, %v725
  %v926 = vpack.c.b16 %v731, %v726
  %v927 = vpack.c.b16 %v737, %v732
  %v928 = vpack.c.b16 %v738, %v733
  %v929 = vpack.c.b16 %v739, %v734
  %v930 = vpack.c.b16 %v740, %v735
  %v931 = vpack.c.b16 %v741, %v736
  %v932 = vpack.c.b16 %v747, %v742
  %v933 = vpack.c.b16 %v748, %v743
  %v934 = vpack.c.b16 %v749, %v744
  %v935 = vpack.c.b16 %v750, %v745
  %v936 = vpack.c.b16 %v751, %v746
  %v937 = vpack.c.b16 %v757, %v752
  %v938 = vpack.c.b16 %v758, %v753
  %v939 = vpack.c.b16 %v759, %v754
  %v940 = vpack.c.b16 %v760, %v755
  %v941 = vpack.c.b16 %v761, %v756
  %v942 = vpack.c.b16 %v767, %v762
  %v943 = vpack.c.b16 %v768, %v763
  %v944 = vpack.c.b16 %v769, %v764
  %v945 = vpack.c.b16 %v770, %v765
  %v946 = vpack.c.b16 %v771, %v766
  %v947 = vpack.c.b16 %v777, %v772
  %v948 = vpack.c.b16 %v778, %v773
  %v949 = vpack.c.b16 %v779, %v774
  %v950 = vpack.c.b16 %v780, %v775
  %v951 = vpack.c.b16 %v781, %v776
  %v952 = vpack.c.b16 %v787, %v782
  %v953 = vpack.c.b16 %v788, %v783
  %v954 = vpack.c.b16 %v789, %v784
  %v955 = vpack.c.b16 %v790, %v785
  %v956 = vpack.c.b16 %v791, %v786
  %v957 = vpack.c.b16 %v797, %v792
  %v958 = vpack.c.b16 %v798, %v793
  %v959 = vpack.c.b16 %v799, %v794
  %v960 = vpack.c.b16 %v800, %v795
  %v961 = vpack.c.b16 %v801, %v796
  %v1202 = vunpack.c.l.b16 %v210
  %v1203 = vunpack.c.l.b16 %v211
  %v1204 = vunpack.c.l.b16 %v212
  %v1205 = vunpack.c.l.b16 %v213
  %v1206 = vunpack.c.l.b16 %v214
  %v1207 = vunpack.c.l.b16 %v215
  %v1208 = vunpack.c.l.b16 %v216
  %v1209 = vunpack.c.l.b16 %v217
  %v1210 = vunpack.c.l.b16 %v218
  %v1211 = vunpack.c.l.b16 %v219
  %v1212 = vunpack.c.l.b16 %v220
  %v1213 = vunpack.c.l.b16 %v221
  %v1214 = vunpack.c.l.b16 %v222
  %v1215 = vunpack.c.l.b16 %v223
  %v1216 = vunpack.c.l.b16 %v224
  %v1217 = vunpack.c.l.b16 %v225
  %v1218 = vunpack.c.l.b16 %v226
  %v1219 = vunpack.c.l.b16 %v227
  %v1220 = vunpack.c.l.b16 %v228
  %v1221 = vunpack.c.l.b16 %v229
  %v1222 = vunpack.c.l.b16 %v230
  %v1223 = vunpack.c.l.b16 %v231
  %v1224 = vunpack.c.l.b16 %v232
  %v1225 = vunpack.c.l.b16 %v233
  %v1226 = vunpack.c.l.b16 %v234
  %v1227 = vunpack.c.l.b16 %v235
  %v1228 = vunpack.c.l.b16 %v236
  %v1229 = vunpack.c.l.b16 %v237
  %v1230 = vunpack.c.l.b16 %v238
  %v1231 = vunpack.c.l.b16 %v239
  %v1232 = vunpack.c.l.b16 %v240
  %v1233 = vunpack.c.l.b16 %v241
  %v1234 = vunpack.c.l.b16 %v242
  %v1235 = vunpack.c.l.b16 %v243
  %v1236 = vunpack.c.l.b16 %v244
  %v1237 = vunpack.c.l.b16 %v245
  %v1238 = vunpack.c.l.b16 %v246
  %v1239 = vunpack.c.l.b16 %v247
  %v1240 = vunpack.c.l.b16 %v248
  %v1241 = vunpack.c.l.b16 %v249
  %v1242 = vunpack.c.l.b16 %v250
  %v1243 = vunpack.c.l.b16 %v251
  %v1244 = vunpack.c.l.b16 %v252
  %v1245 = vunpack.c.l.b16 %v253
  %v1246 = vunpack.c.l.b16 %v254
  %v1247 = vunpack.c.l.b16 %v255
  %v1248 = vunpack.c.l.b16 %v256
  %v1249 = vunpack.c.l.b16 %v257
  %v1250 = vunpack.c.l.b16 %v258
  %v1251 = vunpack.c.l.b16 %v259
  %v1252 = vunpack.c.l.b16 %v260
  %v1253 = vunpack.c.l.b16 %v261
  %v1254 = vunpack.c.l.b16 %v262
  %v1255 = vunpack.c.l.b16 %v263
  %v1256 = vunpack.c.l.b16 %v264
  %v1257 = vunpack.c.l.b16 %v265
  %v1258 = vunpack.c.l.b16 %v266
  %v1259 = vunpack.c.l.b16 %v267
  %v1260 = vunpack.c.l.b16 %v268
  %v1261 = vunpack.c.l.b16 %v269
  %v1262 = vunpack.c.l.b16 %v270
  %v1263 = vunpack.c.l.b16 %v271
  %v1264 = vunpack.c.l.b16 %v272
  %v1265 = vunpack.c.l.b16 %v273
  %v1266 = vunpack.c.l.b16 %v274
  %v1267 = vunpack.c.l.b16 %v275
  %v1268 = vunpack.c.l.b16 %v276
  %v1269 = vunpack.c.l.b16 %v277
  %v1270 = vunpack.c.l.b16 %v278
  %v1271 = vunpack.c.l.b16 %v279
  %v1272 = vunpack.c.l.b16 %v280
  %v1273 = vunpack.c.l.b16 %v281
  %v1274 = vunpack.c.l.b16 %v282
  %v1275 = vunpack.c.l.b16 %v283
  %v1276 = vunpack.c.l.b16 %v284
  %v1277 = vunpack.c.l.b16 %v285
  %v1278 = vunpack.c.l.b16 %v286
  %v1279 = vunpack.c.l.b16 %v287
  %v1280 = vunpack.c.l.b16 %v288
  %v1281 = vunpack.c.l.b16 %v289
  %v1282 = vpack.c.b16 %v1203, %v1202
  %v1283 = vpack.c.b16 %v1205, %v1204
  %v1284 = vpack.c.b16 %v1207, %v1206
  %v1285 = vpack.c.b16 %v1209, %v1208
  %v1286 = vpack.c.b16 %v1211, %v1210
  %v1287 = vpack.c.b16 %v1213, %v1212
  %v1288 = vpack.c.b16 %v1215, %v1214
  %v1289 = vpack.c.b16 %v1217, %v1216
  %v1290 = vpack.c.b16 %v1219, %v1218
  %v1291 = vpack.c.b16 %v1221, %v1220
  %v1292 = vpack.c.b16 %v1223, %v1222
  %v1293 = vpack.c.b16 %v1225, %v1224
  %v1294 = vpack.c.b16 %v1227, %v1226
  %v1295 = vpack.c.b16 %v1229, %v1228
  %v1296 = vpack.c.b16 %v1231, %v1230
  %v1297 = vpack.c.b16 %v1233, %v1232
  %v1298 = vpack.c.b16 %v1235, %v1234
  %v1299 = vpack.c.b16 %v1237, %v1236
  %v1300 = vpack.c.b16 %v1239, %v1238
  %v1301 = vpack.c.b16 %v1241, %v1240
  %v1302 = vpack.c.b16 %v1243, %v1242
  %v1303 = vpack.c.b16 %v1245, %v1244
  %v1304 = vpack.c.b16 %v1247, %v1246
  %v1305 = vpack.c.b16 %v1249, %v1248
  %v1306 = vpack.c.b16 %v1251, %v1250
  %v1307 = vpack.c.b16 %v1253, %v1252
  %v1308 = vpack.c.b16 %v1255, %v1254
  %v1309 = vpack.c.b16 %v1257, %v1256
  %v1310 = vpack.c.b16 %v1259, %v1258
  %v1311 = vpack.c.b16 %v1261, %v1260
  %v1312 = vpack.c.b16 %v1263, %v1262
  %v1313 = vpack.c.b16 %v1265, %v1264
  %v1314 = vpack.c.b16 %v1267, %v1266
  %v1315 = vpack.c.b16 %v1269, %v1268
  %v1316 = vpack.c.b16 %v1271, %v1270
  %v1317 = vpack.c.b16 %v1273, %v1272
  %v1318 = vpack.c.b16 %v1275, %v1274
  %v1319 = vpack.c.b16 %v1277, %v1276
  %v1320 = vpack.c.b16 %v1279, %v1278
  %v1321 = vpack.c.b16 %v1281, %v1280
  %1362 = vmatprep.subr.bf16.mxu0 0
  %1363 = vmatpush1.bf16.msra.mxu0 %v1282
  %1364 = vmatprep.subr.bf16.mxu0 0
  %1365 = vmatpush1.bf16.msra.mxu0 %v1283
  %1366 = vmatprep.subr.bf16.mxu0 0
  %1367 = vmatpush1.bf16.msra.mxu0 %v1284
  %1368 = vmatprep.subr.bf16.mxu0 0
  %1369 = vmatpush1.bf16.msra.mxu0 %v1285
  %1370 = vmatprep.subr.bf16.mxu0 0
  %1371 = vmatpush1.bf16.msra.mxu0 %v1286
  %1372 = vmatprep.subr.bf16.mxu0 0
  %1373 = vmatpush1.bf16.msra.mxu0 %v1287
  %1374 = vmatprep.subr.bf16.mxu0 0
  %1375 = vmatpush1.bf16.msra.mxu0 %v1288
  %1376 = vmatprep.subr.bf16.mxu0 0
  %1377 = vmatpush1.bf16.msra.mxu0 %v1289
  %1378 = vmatprep.subr.bf16.mxu0 0
  %1379 = vmatpush1.bf16.msra.mxu0 %v1290
  %1380 = vmatprep.subr.bf16.mxu0 0
  %1381 = vmatpush1.bf16.msra.mxu0 %v1291
  %1382 = vmatprep.subr.bf16.mxu0 0
  %1383 = vmatpush1.bf16.msra.mxu0 %v1292
  %1384 = vmatprep.subr.bf16.mxu0 0
  %1385 = vmatpush1.bf16.msra.mxu0 %v1293
  %1386 = vmatprep.subr.bf16.mxu0 0
  %1387 = vmatpush1.bf16.msra.mxu0 %v1294
  %1388 = vmatprep.subr.bf16.mxu0 0
  %1389 = vmatpush1.bf16.msra.mxu0 %v1295
  %1390 = vmatprep.subr.bf16.mxu0 0
  %1391 = vmatpush1.bf16.msra.mxu0 %v1296
  %1392 = vmatprep.subr.bf16.mxu0 0
  %1393 = vmatpush1.bf16.msra.mxu0 %v1297
  %1394 = vmatprep.mubr.bf16.mxu0 %v803
  %1395 = vmatmul.mubr.bf16.gmra.mrb[0].mxu0 %v802
  %v1396 = vpop.f32.mrb[0].mxu0
  %v1397 = vadd.f32 0.0, %v1396
  %v1398 = vpop.f32.mrb[0].mxu0
  %v1399 = vpop.f32.mrb[0].mxu0
  %v1400 = vadd.f32 0.0, %v1399
  %v1401 = vpop.f32.mrb[0].mxu0
  %1402 = vmatprep.mubr.bf16.mxu0 %v808
  %1403 = vmatmul.mubr.bf16.gmra.mrb[0].mxu0 %v807
  %v1404 = vpop.f32.mrb[0].mxu0
  %v1405 = vadd.f32 0.0, %v1404
  %v1406 = vpop.f32.mrb[0].mxu0
  %v1407 = vpop.f32.mrb[0].mxu0
  %v1408 = vadd.f32 0.0, %v1407
  %v1409 = vpop.f32.mrb[0].mxu0
  %1410 = vmatprep.mubr.bf16.mxu0 %v813
  %1411 = vmatmul.mubr.bf16.gmra.mrb[0].mxu0 %v812
  %v1412 = vpop.f32.mrb[0].mxu0
  %v1413 = vadd.f32 0.0, %v1412
  %v1414 = vpop.f32.mrb[0].mxu0
  %v1415 = vpop.f32.mrb[0].mxu0
  %v1416 = vadd.f32 0.0, %v1415
  %v1417 = vpop.f32.mrb[0].mxu0
  %1418 = vmatprep.mubr.bf16.mxu0 %v818
  %1419 = vmatmul.mubr.bf16.gmra.mrb[0].mxu0 %v817
  %v1420 = vpop.f32.mrb[0].mxu0
  %v1421 = vadd.f32 0.0, %v1420
  %v1422 = vpop.f32.mrb[0].mxu0
  %v1423 = vpop.f32.mrb[0].mxu0
  %v1424 = vadd.f32 0.0, %v1423
  %v1425 = vpop.f32.mrb[0].mxu0
  %1426 = vmatprep.mubr.bf16.mxu0 %v823
  %1427 = vmatmul.mubr.bf16.gmra.mrb[0].mxu0 %v822
  %v1428 = vpop.f32.mrb[0].mxu0
  %v1429 = vadd.f32 0.0, %v1428
  %v1430 = vpop.f32.mrb[0].mxu0
  %v1431 = vpop.f32.mrb[0].mxu0
  %v1432 = vadd.f32 0.0, %v1431
  %v1433 = vpop.f32.mrb[0].mxu0
  %1434 = vmatprep.mubr.bf16.mxu0 %v828
  %1435 = vmatmul.mubr.bf16.gmra.mrb[0].mxu0 %v827
  %v1436 = vpop.f32.mrb[0].mxu0
  %v1437 = vadd.f32 0.0, %v1436
  %v1438 = vpop.f32.mrb[0].mxu0
  %v1439 = vpop.f32.mrb[0].mxu0
  %v1440 = vadd.f32 0.0, %v1439
  %v1441 = vpop.f32.mrb[0].mxu0
  %1442 = vmatprep.mubr.bf16.mxu0 %v833
  %1443 = vmatmul.mubr.bf16.gmra.mrb[0].mxu0 %v832
  %v1444 = vpop.f32.mrb[0].mxu0
  %v1445 = vadd.f32 0.0, %v1444
  %v1446 = vpop.f32.mrb[0].mxu0
  %v1447 = vpop.f32.mrb[0].mxu0
  %v1448 = vadd.f32 0.0, %v1447
  %v1449 = vpop.f32.mrb[0].mxu0
  %1450 = vmatprep.mubr.bf16.mxu0 %v838
  %1451 = vmatmul.mubr.bf16.gmra.mrb[0].mxu0 %v837
  %v1452 = vpop.f32.mrb[0].mxu0
  %v1453 = vadd.f32 0.0, %v1452
  %v1454 = vpop.f32.mrb[0].mxu0
  %v1455 = vpop.f32.mrb[0].mxu0
  %v1456 = vadd.f32 0.0, %v1455
  %v1457 = vpop.f32.mrb[0].mxu0
  %1458 = vmatprep.mubr.bf16.mxu0 %v843
  %1459 = vmatmul.mubr.bf16.gmra.mrb[0].mxu0 %v842
  %v1460 = vpop.f32.mrb[0].mxu0
  %v1461 = vadd.f32 0.0, %v1460
  %v1462 = vpop.f32.mrb[0].mxu0
  %v1463 = vpop.f32.mrb[0].mxu0
  %v1464 = vadd.f32 0.0, %v1463
  %v1465 = vpop.f32.mrb[0].mxu0
  %1466 = vmatprep.mubr.bf16.mxu0 %v848
  %1467 = vmatmul.mubr.bf16.gmra.mrb[0].mxu0 %v847
  %v1468 = vpop.f32.mrb[0].mxu0
  %v1469 = vadd.f32 0.0, %v1468
  %v1470 = vpop.f32.mrb[0].mxu0
  %v1471 = vpop.f32.mrb[0].mxu0
  %v1472 = vadd.f32 0.0, %v1471
  %v1473 = vpop.f32.mrb[0].mxu0
  %1474 = vmatprep.mubr.bf16.mxu0 %v853
  %1475 = vmatmul.mubr.bf16.gmra.mrb[0].mxu0 %v852
  %v1476 = vpop.f32.mrb[0].mxu0
  %v1477 = vadd.f32 0.0, %v1476
  %v1478 = vpop.f32.mrb[0].mxu0
  %v1479 = vpop.f32.mrb[0].mxu0
  %v1480 = vadd.f32 0.0, %v1479
  %v1481 = vpop.f32.mrb[0].mxu0
  %1482 = vmatprep.mubr.bf16.mxu0 %v858
  %1483 = vmatmul.mubr.bf16.gmra.mrb[0].mxu0 %v857
  %v1484 = vpop.f32.mrb[0].mxu0
  %v1485 = vadd.f32 0.0, %v1484
  %v1486 = vpop.f32.mrb[0].mxu0
  %v1487 = vpop.f32.mrb[0].mxu0
  %v1488 = vadd.f32 0.0, %v1487
  %v1489 = vpop.f32.mrb[0].mxu0
  %1490 = vmatprep.mubr.bf16.mxu0 %v863
  %1491 = vmatmul.mubr.bf16.gmra.mrb[0].mxu0 %v862
  %v1492 = vpop.f32.mrb[0].mxu0
  %v1493 = vadd.f32 0.0, %v1492
  %v1494 = vpop.f32.mrb[0].mxu0
  %v1495 = vpop.f32.mrb[0].mxu0
  %v1496 = vadd.f32 0.0, %v1495
  %v1497 = vpop.f32.mrb[0].mxu0
  %1498 = vmatprep.mubr.bf16.mxu0 %v868
  %1499 = vmatmul.mubr.bf16.gmra.mrb[0].mxu0 %v867
  %v1500 = vpop.f32.mrb[0].mxu0
  %v1501 = vadd.f32 0.0, %v1500
  %v1502 = vpop.f32.mrb[0].mxu0
  %v1503 = vpop.f32.mrb[0].mxu0
  %v1504 = vadd.f32 0.0, %v1503
  %v1505 = vpop.f32.mrb[0].mxu0
  %1506 = vmatprep.mubr.bf16.mxu0 %v873
  %1507 = vmatmul.mubr.bf16.gmra.mrb[0].mxu0 %v872
  %v1508 = vpop.f32.mrb[0].mxu0
  %v1509 = vadd.f32 0.0, %v1508
  %v1510 = vpop.f32.mrb[0].mxu0
  %v1511 = vpop.f32.mrb[0].mxu0
  %v1512 = vadd.f32 0.0, %v1511
  %v1513 = vpop.f32.mrb[0].mxu0
  %1514 = vmatprep.mubr.bf16.mxu0 %v878
  %1515 = vmatmul.mubr.bf16.gmra.mrb[0].mxu0 %v877
  %v1516 = vpop.f32.mrb[0].mxu0
  %v1517 = vadd.f32 0.0, %v1516
  %v1518 = vpop.f32.mrb[0].mxu0
  %v1519 = vpop.f32.mrb[0].mxu0
  %v1520 = vadd.f32 0.0, %v1519
  %v1521 = vpop.f32.mrb[0].mxu0
  %1522 = vmatprep.mubr.bf16.mxu0 %v883
  %1523 = vmatmul.mubr.bf16.gmra.mrb[0].mxu0 %v882
  %v1524 = vpop.f32.mrb[0].mxu0
  %v1525 = vadd.f32 0.0, %v1524
  %v1526 = vpop.f32.mrb[0].mxu0
  %v1527 = vpop.f32.mrb[0].mxu0
  %v1528 = vadd.f32 0.0, %v1527
  %v1529 = vpop.f32.mrb[0].mxu0
  %1530 = vmatprep.mubr.bf16.mxu0 %v888
  %1531 = vmatmul.mubr.bf16.gmra.mrb[0].mxu0 %v887
  %v1532 = vpop.f32.mrb[0].mxu0
  %v1533 = vadd.f32 0.0, %v1532
  %v1534 = vpop.f32.mrb[0].mxu0
  %v1535 = vpop.f32.mrb[0].mxu0
  %v1536 = vadd.f32 0.0, %v1535
  %v1537 = vpop.f32.mrb[0].mxu0
  %1538 = vmatprep.mubr.bf16.mxu0 %v893
  %1539 = vmatmul.mubr.bf16.gmra.mrb[0].mxu0 %v892
  %v1540 = vpop.f32.mrb[0].mxu0
  %v1541 = vadd.f32 0.0, %v1540
  %v1542 = vpop.f32.mrb[0].mxu0
  %v1543 = vpop.f32.mrb[0].mxu0
  %v1544 = vadd.f32 0.0, %v1543
  %v1545 = vpop.f32.mrb[0].mxu0
  %1546 = vmatprep.mubr.bf16.mxu0 %v898
  %1547 = vmatmul.mubr.bf16.gmra.mrb[0].mxu0 %v897
  %v1548 = vpop.f32.mrb[0].mxu0
  %v1549 = vadd.f32 0.0, %v1548
  %v1550 = vpop.f32.mrb[0].mxu0
  %v1551 = vpop.f32.mrb[0].mxu0
  %v1552 = vadd.f32 0.0, %v1551
  %v1553 = vpop.f32.mrb[0].mxu0
  %1554 = vmatprep.mubr.bf16.mxu0 %v903
  %1555 = vmatmul.mubr.bf16.gmra.mrb[0].mxu0 %v902
  %v1556 = vpop.f32.mrb[0].mxu0
  %v1557 = vadd.f32 0.0, %v1556
  %v1558 = vpop.f32.mrb[0].mxu0
  %v1559 = vpop.f32.mrb[0].mxu0
  %v1560 = vadd.f32 0.0, %v1559
  %v1561 = vpop.f32.mrb[0].mxu0
  %1562 = vmatprep.mubr.bf16.mxu0 %v908
  %1563 = vmatmul.mubr.bf16.gmra.mrb[0].mxu0 %v907
  %v1564 = vpop.f32.mrb[0].mxu0
  %v1565 = vadd.f32 0.0, %v1564
  %v1566 = vpop.f32.mrb[0].mxu0
  %v1567 = vpop.f32.mrb[0].mxu0
  %v1568 = vadd.f32 0.0, %v1567
  %v1569 = vpop.f32.mrb[0].mxu0
  %1570 = vmatprep.mubr.bf16.mxu0 %v913
  %1571 = vmatmul.mubr.bf16.gmra.mrb[0].mxu0 %v912
  %v1572 = vpop.f32.mrb[0].mxu0
  %v1573 = vadd.f32 0.0, %v1572
  %v1574 = vpop.f32.mrb[0].mxu0
  %v1575 = vpop.f32.mrb[0].mxu0
  %v1576 = vadd.f32 0.0, %v1575
  %v1577 = vpop.f32.mrb[0].mxu0
  %1578 = vmatprep.mubr.bf16.mxu0 %v918
  %1579 = vmatmul.mubr.bf16.gmra.mrb[0].mxu0 %v917
  %v1580 = vpop.f32.mrb[0].mxu0
  %v1581 = vadd.f32 0.0, %v1580
  %v1582 = vpop.f32.mrb[0].mxu0
  %v1583 = vpop.f32.mrb[0].mxu0
  %v1584 = vadd.f32 0.0, %v1583
  %v1585 = vpop.f32.mrb[0].mxu0
  %1586 = vmatprep.mubr.bf16.mxu0 %v923
  %1587 = vmatmul.mubr.bf16.gmra.mrb[0].mxu0 %v922
  %v1588 = vpop.f32.mrb[0].mxu0
  %v1589 = vadd.f32 0.0, %v1588
  %v1590 = vpop.f32.mrb[0].mxu0
  %v1591 = vpop.f32.mrb[0].mxu0
  %v1592 = vadd.f32 0.0, %v1591
  %v1593 = vpop.f32.mrb[0].mxu0
  %1594 = vmatprep.mubr.bf16.mxu0 %v928
  %1595 = vmatmul.mubr.bf16.gmra.mrb[0].mxu0 %v927
  %v1596 = vpop.f32.mrb[0].mxu0
  %v1597 = vadd.f32 0.0, %v1596
  %v1598 = vpop.f32.mrb[0].mxu0
  %v1599 = vpop.f32.mrb[0].mxu0
  %v1600 = vadd.f32 0.0, %v1599
  %v1601 = vpop.f32.mrb[0].mxu0
  %1602 = vmatprep.mubr.bf16.mxu0 %v933
  %1603 = vmatmul.mubr.bf16.gmra.mrb[0].mxu0 %v932
  %v1604 = vpop.f32.mrb[0].mxu0
  %v1605 = vadd.f32 0.0, %v1604
  %v1606 = vpop.f32.mrb[0].mxu0
  %v1607 = vpop.f32.mrb[0].mxu0
  %v1608 = vadd.f32 0.0, %v1607
  %v1609 = vpop.f32.mrb[0].mxu0
  %1610 = vmatprep.mubr.bf16.mxu0 %v938
  %1611 = vmatmul.mubr.bf16.gmra.mrb[0].mxu0 %v937
  %v1612 = vpop.f32.mrb[0].mxu0
  %v1613 = vadd.f32 0.0, %v1612
  %v1614 = vpop.f32.mrb[0].mxu0
  %v1615 = vpop.f32.mrb[0].mxu0
  %v1616 = vadd.f32 0.0, %v1615
  %v1617 = vpop.f32.mrb[0].mxu0
  %1618 = vmatprep.mubr.bf16.mxu0 %v943
  %1619 = vmatmul.mubr.bf16.gmra.mrb[0].mxu0 %v942
  %v1620 = vpop.f32.mrb[0].mxu0
  %v1621 = vadd.f32 0.0, %v1620
  %v1622 = vpop.f32.mrb[0].mxu0
  %v1623 = vpop.f32.mrb[0].mxu0
  %v1624 = vadd.f32 0.0, %v1623
  %v1625 = vpop.f32.mrb[0].mxu0
  %1626 = vmatprep.mubr.bf16.mxu0 %v948
  %1627 = vmatmul.mubr.bf16.gmra.mrb[0].mxu0 %v947
  %v1628 = vpop.f32.mrb[0].mxu0
  %v1629 = vadd.f32 0.0, %v1628
  %v1630 = vpop.f32.mrb[0].mxu0
  %v1631 = vpop.f32.mrb[0].mxu0
  %v1632 = vadd.f32 0.0, %v1631
  %v1633 = vpop.f32.mrb[0].mxu0
  %1634 = vmatprep.mubr.bf16.mxu0 %v953
  %1635 = vmatmul.mubr.bf16.gmra.mrb[0].mxu0 %v952
  %v1636 = vpop.f32.mrb[0].mxu0
  %v1637 = vadd.f32 0.0, %v1636
  %v1638 = vpop.f32.mrb[0].mxu0
  %v1639 = vpop.f32.mrb[0].mxu0
  %v1640 = vadd.f32 0.0, %v1639
  %v1641 = vpop.f32.mrb[0].mxu0
  %1642 = vmatprep.mubr.bf16.mxu0 %v958
  %1643 = vmatmul.mubr.bf16.gmra.mrb[0].mxu0 %v957
  %v1644 = vpop.f32.mrb[0].mxu0
  %v1645 = vadd.f32 0.0, %v1644
  %v1646 = vpop.f32.mrb[0].mxu0
  %v1647 = vpop.f32.mrb[0].mxu0
  %v1648 = vadd.f32 0.0, %v1647
  %v1649 = vpop.f32.mrb[0].mxu0
  %1650 = vdwg.mxu0
  %1651 = vmatprep.subr.bf16.mxu0 0
  %1652 = vmatpush1.bf16.msra.mxu0 %v1298
  %1653 = vmatprep.subr.bf16.mxu0 0
  %1654 = vmatpush1.bf16.msra.mxu0 %v1299
  %1655 = vmatprep.subr.bf16.mxu0 0
  %1656 = vmatpush1.bf16.msra.mxu0 %v1300
  %1657 = vmatprep.subr.bf16.mxu0 0
  %1658 = vmatpush1.bf16.msra.mxu0 %v1301
  %1659 = vmatprep.subr.bf16.mxu0 0
  %1660 = vmatpush1.bf16.msra.mxu0 %v1302
  %1661 = vmatprep.subr.bf16.mxu0 0
  %1662 = vmatpush1.bf16.msra.mxu0 %v1303
  %1663 = vmatprep.subr.bf16.mxu0 0
  %1664 = vmatpush1.bf16.msra.mxu0 %v1304
  %1665 = vmatprep.subr.bf16.mxu0 0
  %1666 = vmatpush1.bf16.msra.mxu0 %v1305
  %1667 = vmatprep.subr.bf16.mxu0 0
  %1668 = vmatpush1.bf16.msra.mxu0 %v1306
  %1669 = vmatprep.subr.bf16.mxu0 0
  %1670 = vmatpush1.bf16.msra.mxu0 %v1307
  %1671 = vmatprep.subr.bf16.mxu0 0
  %1672 = vmatpush1.bf16.msra.mxu0 %v1308
  %1673 = vmatprep.subr.bf16.mxu0 0
  %1674 = vmatpush1.bf16.msra.mxu0 %v1309
  %1675 = vmatprep.subr.bf16.mxu0 0
  %1676 = vmatpush1.bf16.msra.mxu0 %v1310
  %1677 = vmatprep.subr.bf16.mxu0 0
  %1678 = vmatpush1.bf16.msra.mxu0 %v1311
  %1679 = vmatprep.subr.bf16.mxu0 0
  %1680 = vmatpush1.bf16.msra.mxu0 %v1312
  %1681 = vmatprep.subr.bf16.mxu0 0
  %1682 = vmatpush1.bf16.msra.mxu0 %v1313
  %1683 = vmatprep.mubr.bf16.mxu0 %v805
  %1684 = vmatmul.mubr.bf16.gmra.mrb[0].mxu0 %v804
  %v1685 = vpop.f32.mrb[0].mxu0
  %v1686 = vadd.f32 %v1397, %v1685
  %v1687 = vpop.f32.mrb[0].mxu0
  %v1688 = vpop.f32.mrb[0].mxu0
  %v1689 = vadd.f32 %v1400, %v1688
  %v1690 = vpop.f32.mrb[0].mxu0
  %1691 = vmatprep.mubr.bf16.mxu0 %v810
  %1692 = vmatmul.mubr.bf16.gmra.mrb[0].mxu0 %v809
  %v1693 = vpop.f32.mrb[0].mxu0
  %v1694 = vadd.f32 %v1405, %v1693
  %v1695 = vpop.f32.mrb[0].mxu0
  %v1696 = vpop.f32.mrb[0].mxu0
  %v1697 = vadd.f32 %v1408, %v1696
  %v1698 = vpop.f32.mrb[0].mxu0
  %1699 = vmatprep.mubr.bf16.mxu0 %v815
  %1700 = vmatmul.mubr.bf16.gmra.mrb[0].mxu0 %v814
  %v1701 = vpop.f32.mrb[0].mxu0
  %v1702 = vadd.f32 %v1413, %v1701
  %v1703 = vpop.f32.mrb[0].mxu0
  %v1704 = vpop.f32.mrb[0].mxu0
  %v1705 = vadd.f32 %v1416, %v1704
  %v1706 = vpop.f32.mrb[0].mxu0
  %1707 = vmatprep.mubr.bf16.mxu0 %v820
  %1708 = vmatmul.mubr.bf16.gmra.mrb[0].mxu0 %v819
  %v1709 = vpop.f32.mrb[0].mxu0
  %v1710 = vadd.f32 %v1421, %v1709
  %v1711 = vpop.f32.mrb[0].mxu0
  %v1712 = vpop.f32.mrb[0].mxu0
  %v1713 = vadd.f32 %v1424, %v1712
  %v1714 = vpop.f32.mrb[0].mxu0
  %1715 = vmatprep.mubr.bf16.mxu0 %v825
  %1716 = vmatmul.mubr.bf16.gmra.mrb[0].mxu0 %v824
  %v1717 = vpop.f32.mrb[0].mxu0
  %v1718 = vadd.f32 %v1429, %v1717
  %v1719 = vpop.f32.mrb[0].mxu0
  %v1720 = vpop.f32.mrb[0].mxu0
  %v1721 = vadd.f32 %v1432, %v1720
  %v1722 = vpop.f32.mrb[0].mxu0
  %1723 = vmatprep.mubr.bf16.mxu0 %v830
  %1724 = vmatmul.mubr.bf16.gmra.mrb[0].mxu0 %v829
  %v1725 = vpop.f32.mrb[0].mxu0
  %v1726 = vadd.f32 %v1437, %v1725
  %v1727 = vpop.f32.mrb[0].mxu0
  %v1728 = vpop.f32.mrb[0].mxu0
  %v1729 = vadd.f32 %v1440, %v1728
  %v1730 = vpop.f32.mrb[0].mxu0
  %1731 = vmatprep.mubr.bf16.mxu0 %v835
  %1732 = vmatmul.mubr.bf16.gmra.mrb[0].mxu0 %v834
  %v1733 = vpop.f32.mrb[0].mxu0
  %v1734 = vadd.f32 %v1445, %v1733
  %v1735 = vpop.f32.mrb[0].mxu0
  %v1736 = vpop.f32.mrb[0].mxu0
  %v1737 = vadd.f32 %v1448, %v1736
  %v1738 = vpop.f32.mrb[0].mxu0
  %1739 = vmatprep.mubr.bf16.mxu0 %v840
  %1740 = vmatmul.mubr.bf16.gmra.mrb[0].mxu0 %v839
  %v1741 = vpop.f32.mrb[0].mxu0
  %v1742 = vadd.f32 %v1453, %v1741
  %v1743 = vpop.f32.mrb[0].mxu0
  %v1744 = vpop.f32.mrb[0].mxu0
  %v1745 = vadd.f32 %v1456, %v1744
  %v1746 = vpop.f32.mrb[0].mxu0
  %1747 = vmatprep.mubr.bf16.mxu0 %v845
  %1748 = vmatmul.mubr.bf16.gmra.mrb[0].mxu0 %v844
  %v1749 = vpop.f32.mrb[0].mxu0
  %v1750 = vadd.f32 %v1461, %v1749
  %v1751 = vpop.f32.mrb[0].mxu0
  %v1752 = vpop.f32.mrb[0].mxu0
  %v1753 = vadd.f32 %v1464, %v1752
  %v1754 = vpop.f32.mrb[0].mxu0
  %1755 = vmatprep.mubr.bf16.mxu0 %v850
  %1756 = vmatmul.mubr.bf16.gmra.mrb[0].mxu0 %v849
  %v1757 = vpop.f32.mrb[0].mxu0
  %v1758 = vadd.f32 %v1469, %v1757
  %v1759 = vpop.f32.mrb[0].mxu0
  %v1760 = vpop.f32.mrb[0].mxu0
  %v1761 = vadd.f32 %v1472, %v1760
  %v1762 = vpop.f32.mrb[0].mxu0
  %1763 = vmatprep.mubr.bf16.mxu0 %v855
  %1764 = vmatmul.mubr.bf16.gmra.mrb[0].mxu0 %v854
  %v1765 = vpop.f32.mrb[0].mxu0
  %v1766 = vadd.f32 %v1477, %v1765
  %v1767 = vpop.f32.mrb[0].mxu0
  %v1768 = vpop.f32.mrb[0].mxu0
  %v1769 = vadd.f32 %v1480, %v1768
  %v1770 = vpop.f32.mrb[0].mxu0
  %1771 = vmatprep.mubr.bf16.mxu0 %v860
  %1772 = vmatmul.mubr.bf16.gmra.mrb[0].mxu0 %v859
  %v1773 = vpop.f32.mrb[0].mxu0
  %v1774 = vadd.f32 %v1485, %v1773
  %v1775 = vpop.f32.mrb[0].mxu0
  %v1776 = vpop.f32.mrb[0].mxu0
  %v1777 = vadd.f32 %v1488, %v1776
  %v1778 = vpop.f32.mrb[0].mxu0
  %1779 = vmatprep.mubr.bf16.mxu0 %v865
  %1780 = vmatmul.mubr.bf16.gmra.mrb[0].mxu0 %v864
  %v1781 = vpop.f32.mrb[0].mxu0
  %v1782 = vadd.f32 %v1493, %v1781
  %v1783 = vpop.f32.mrb[0].mxu0
  %v1784 = vpop.f32.mrb[0].mxu0
  %v1785 = vadd.f32 %v1496, %v1784
  %v1786 = vpop.f32.mrb[0].mxu0
  %1787 = vmatprep.mubr.bf16.mxu0 %v870
  %1788 = vmatmul.mubr.bf16.gmra.mrb[0].mxu0 %v869
  %v1789 = vpop.f32.mrb[0].mxu0
  %v1790 = vadd.f32 %v1501, %v1789
  %v1791 = vpop.f32.mrb[0].mxu0
  %v1792 = vpop.f32.mrb[0].mxu0
  %v1793 = vadd.f32 %v1504, %v1792
  %v1794 = vpop.f32.mrb[0].mxu0
  %1795 = vmatprep.mubr.bf16.mxu0 %v875
  %1796 = vmatmul.mubr.bf16.gmra.mrb[0].mxu0 %v874
  %v1797 = vpop.f32.mrb[0].mxu0
  %v1798 = vadd.f32 %v1509, %v1797
  %v1799 = vpop.f32.mrb[0].mxu0
  %v1800 = vpop.f32.mrb[0].mxu0
  %v1801 = vadd.f32 %v1512, %v1800
  %v1802 = vpop.f32.mrb[0].mxu0
  %1803 = vmatprep.mubr.bf16.mxu0 %v880
  %1804 = vmatmul.mubr.bf16.gmra.mrb[0].mxu0 %v879
  %v1805 = vpop.f32.mrb[0].mxu0
  %v1806 = vadd.f32 %v1517, %v1805
  %v1807 = vpop.f32.mrb[0].mxu0
  %v1808 = vpop.f32.mrb[0].mxu0
  %v1809 = vadd.f32 %v1520, %v1808
  %v1810 = vpop.f32.mrb[0].mxu0
  %1811 = vmatprep.mubr.bf16.mxu0 %v885
  %1812 = vmatmul.mubr.bf16.gmra.mrb[0].mxu0 %v884
  %v1813 = vpop.f32.mrb[0].mxu0
  %v1814 = vadd.f32 %v1525, %v1813
  %v1815 = vpop.f32.mrb[0].mxu0
  %v1816 = vpop.f32.mrb[0].mxu0
  %v1817 = vadd.f32 %v1528, %v1816
  %v1818 = vpop.f32.mrb[0].mxu0
  %1819 = vmatprep.mubr.bf16.mxu0 %v890
  %1820 = vmatmul.mubr.bf16.gmra.mrb[0].mxu0 %v889
  %v1821 = vpop.f32.mrb[0].mxu0
  %v1822 = vadd.f32 %v1533, %v1821
  %v1823 = vpop.f32.mrb[0].mxu0
  %v1824 = vpop.f32.mrb[0].mxu0
  %v1825 = vadd.f32 %v1536, %v1824
  %v1826 = vpop.f32.mrb[0].mxu0
  %1827 = vmatprep.mubr.bf16.mxu0 %v895
  %1828 = vmatmul.mubr.bf16.gmra.mrb[0].mxu0 %v894
  %v1829 = vpop.f32.mrb[0].mxu0
  %v1830 = vadd.f32 %v1541, %v1829
  %v1831 = vpop.f32.mrb[0].mxu0
  %v1832 = vpop.f32.mrb[0].mxu0
  %v1833 = vadd.f32 %v1544, %v1832
  %v1834 = vpop.f32.mrb[0].mxu0
  %1835 = vmatprep.mubr.bf16.mxu0 %v900
  %1836 = vmatmul.mubr.bf16.gmra.mrb[0].mxu0 %v899
  %v1837 = vpop.f32.mrb[0].mxu0
  %v1838 = vadd.f32 %v1549, %v1837
  %v1839 = vpop.f32.mrb[0].mxu0
  %v1840 = vpop.f32.mrb[0].mxu0
  %v1841 = vadd.f32 %v1552, %v1840
  %v1842 = vpop.f32.mrb[0].mxu0
  %1843 = vmatprep.mubr.bf16.mxu0 %v905
  %1844 = vmatmul.mubr.bf16.gmra.mrb[0].mxu0 %v904
  %v1845 = vpop.f32.mrb[0].mxu0
  %v1846 = vadd.f32 %v1557, %v1845
  %v1847 = vpop.f32.mrb[0].mxu0
  %v1848 = vpop.f32.mrb[0].mxu0
  %v1849 = vadd.f32 %v1560, %v1848
  %v1850 = vpop.f32.mrb[0].mxu0
  %1851 = vmatprep.mubr.bf16.mxu0 %v910
  %1852 = vmatmul.mubr.bf16.gmra.mrb[0].mxu0 %v909
  %v1853 = vpop.f32.mrb[0].mxu0
  %v1854 = vadd.f32 %v1565, %v1853
  %v1855 = vpop.f32.mrb[0].mxu0
  %v1856 = vpop.f32.mrb[0].mxu0
  %v1857 = vadd.f32 %v1568, %v1856
  %v1858 = vpop.f32.mrb[0].mxu0
  %1859 = vmatprep.mubr.bf16.mxu0 %v915
  %1860 = vmatmul.mubr.bf16.gmra.mrb[0].mxu0 %v914
  %v1861 = vpop.f32.mrb[0].mxu0
  %v1862 = vadd.f32 %v1573, %v1861
  %v1863 = vpop.f32.mrb[0].mxu0
  %v1864 = vpop.f32.mrb[0].mxu0
  %v1865 = vadd.f32 %v1576, %v1864
  %v1866 = vpop.f32.mrb[0].mxu0
  %1867 = vmatprep.mubr.bf16.mxu0 %v920
  %1868 = vmatmul.mubr.bf16.gmra.mrb[0].mxu0 %v919
  %v1869 = vpop.f32.mrb[0].mxu0
  %v1870 = vadd.f32 %v1581, %v1869
  %v1871 = vpop.f32.mrb[0].mxu0
  %v1872 = vpop.f32.mrb[0].mxu0
  %v1873 = vadd.f32 %v1584, %v1872
  %v1874 = vpop.f32.mrb[0].mxu0
  %1875 = vmatprep.mubr.bf16.mxu0 %v925
  %1876 = vmatmul.mubr.bf16.gmra.mrb[0].mxu0 %v924
  %v1877 = vpop.f32.mrb[0].mxu0
  %v1878 = vadd.f32 %v1589, %v1877
  %v1879 = vpop.f32.mrb[0].mxu0
  %v1880 = vpop.f32.mrb[0].mxu0
  %v1881 = vadd.f32 %v1592, %v1880
  %v1882 = vpop.f32.mrb[0].mxu0
  %1883 = vmatprep.mubr.bf16.mxu0 %v930
  %1884 = vmatmul.mubr.bf16.gmra.mrb[0].mxu0 %v929
  %v1885 = vpop.f32.mrb[0].mxu0
  %v1886 = vadd.f32 %v1597, %v1885
  %v1887 = vpop.f32.mrb[0].mxu0
  %v1888 = vpop.f32.mrb[0].mxu0
  %v1889 = vadd.f32 %v1600, %v1888
  %v1890 = vpop.f32.mrb[0].mxu0
  %1891 = vmatprep.mubr.bf16.mxu0 %v935
  %1892 = vmatmul.mubr.bf16.gmra.mrb[0].mxu0 %v934
  %v1893 = vpop.f32.mrb[0].mxu0
  %v1894 = vadd.f32 %v1605, %v1893
  %v1895 = vpop.f32.mrb[0].mxu0
  %v1896 = vpop.f32.mrb[0].mxu0
  %v1897 = vadd.f32 %v1608, %v1896
  %v1898 = vpop.f32.mrb[0].mxu0
  %1899 = vmatprep.mubr.bf16.mxu0 %v940
  %1900 = vmatmul.mubr.bf16.gmra.mrb[0].mxu0 %v939
  %v1901 = vpop.f32.mrb[0].mxu0
  %v1902 = vadd.f32 %v1613, %v1901
  %v1903 = vpop.f32.mrb[0].mxu0
  %v1904 = vpop.f32.mrb[0].mxu0
  %v1905 = vadd.f32 %v1616, %v1904
  %v1906 = vpop.f32.mrb[0].mxu0
  %1907 = vmatprep.mubr.bf16.mxu0 %v945
  %1908 = vmatmul.mubr.bf16.gmra.mrb[0].mxu0 %v944
  %v1909 = vpop.f32.mrb[0].mxu0
  %v1910 = vadd.f32 %v1621, %v1909
  %v1911 = vpop.f32.mrb[0].mxu0
  %v1912 = vpop.f32.mrb[0].mxu0
  %v1913 = vadd.f32 %v1624, %v1912
  %v1914 = vpop.f32.mrb[0].mxu0
  %1915 = vmatprep.mubr.bf16.mxu0 %v950
  %1916 = vmatmul.mubr.bf16.gmra.mrb[0].mxu0 %v949
  %v1917 = vpop.f32.mrb[0].mxu0
  %v1918 = vadd.f32 %v1629, %v1917
  %v1919 = vpop.f32.mrb[0].mxu0
  %v1920 = vpop.f32.mrb[0].mxu0
  %v1921 = vadd.f32 %v1632, %v1920
  %v1922 = vpop.f32.mrb[0].mxu0
  %1923 = vmatprep.mubr.bf16.mxu0 %v955
  %1924 = vmatmul.mubr.bf16.gmra.mrb[0].mxu0 %v954
  %v1925 = vpop.f32.mrb[0].mxu0
  %v1926 = vadd.f32 %v1637, %v1925
  %v1927 = vpop.f32.mrb[0].mxu0
  %v1928 = vpop.f32.mrb[0].mxu0
  %v1929 = vadd.f32 %v1640, %v1928
  %v1930 = vpop.f32.mrb[0].mxu0
  %1931 = vmatprep.mubr.bf16.mxu0 %v960
  %1932 = vmatmul.mubr.bf16.gmra.mrb[0].mxu0 %v959
  %v1933 = vpop.f32.mrb[0].mxu0
  %v1934 = vadd.f32 %v1645, %v1933
  %v1935 = vpop.f32.mrb[0].mxu0
  %v1936 = vpop.f32.mrb[0].mxu0
  %v1937 = vadd.f32 %v1648, %v1936
  %v1938 = vpop.f32.mrb[0].mxu0
  %1939 = vdwg.mxu0
  %1940 = vmatprep.subr.bf16.mxu0 0
  %1941 = vmatpush1.bf16.msra.mxu0 %v1314
  %1942 = vmatprep.subr.bf16.mxu0 0
  %1943 = vmatpush1.bf16.msra.mxu0 %v1315
  %1944 = vmatprep.subr.bf16.mxu0 0
  %1945 = vmatpush1.bf16.msra.mxu0 %v1316
  %1946 = vmatprep.subr.bf16.mxu0 0
  %1947 = vmatpush1.bf16.msra.mxu0 %v1317
  %1948 = vmatprep.subr.bf16.mxu0 0
  %1949 = vmatpush1.bf16.msra.mxu0 %v1318
  %1950 = vmatprep.subr.bf16.mxu0 0
  %1951 = vmatpush1.bf16.msra.mxu0 %v1319
  %1952 = vmatprep.subr.bf16.mxu0 0
  %1953 = vmatpush1.bf16.msra.mxu0 %v1320
  %1954 = vmatprep.subr.bf16.mxu0 0
  %1955 = vmatpush1.bf16.msra.mxu0 %v1321
  %1956 = vmatprep.subr.bf16.mxu0 0
  %1957 = vmatpush1.bf16.msra.mxu0 0
  %1958 = vmatprep.subr.bf16.mxu0 0
  %1959 = vmatpush1.bf16.msra.mxu0 0
  %1960 = vmatprep.subr.bf16.mxu0 0
  %1961 = vmatpush1.bf16.msra.mxu0 0
  %1962 = vmatprep.subr.bf16.mxu0 0
  %1963 = vmatpush1.bf16.msra.mxu0 0
  %1964 = vmatprep.subr.bf16.mxu0 0
  %1965 = vmatpush1.bf16.msra.mxu0 0
  %1966 = vmatprep.subr.bf16.mxu0 0
  %1967 = vmatpush1.bf16.msra.mxu0 0
  %1968 = vmatprep.subr.bf16.mxu0 0
  %1969 = vmatpush1.bf16.msra.mxu0 0
  %1970 = vmatprep.subr.bf16.mxu0 0
  %1971 = vmatpush1.bf16.msra.mxu0 0
  %1972 = vmatprep.mubr.bf16.mxu0 0
  %1973 = vmatmul.mubr.bf16.gmra.mrb[0].mxu0 %v806
  %v1974 = vpop.f32.mrb[0].mxu0
  %v1975 = vadd.f32 %v1686, %v1974
  %v1976 = vpop.f32.mrb[0].mxu0
  %v1977 = vpop.f32.mrb[0].mxu0
  %v1978 = vadd.f32 %v1689, %v1977
  %v1979 = vpop.f32.mrb[0].mxu0
  %1980 = vmatprep.mubr.bf16.mxu0 0
  %1981 = vmatmul.mubr.bf16.gmra.mrb[0].mxu0 %v811
  %v1982 = vpop.f32.mrb[0].mxu0
  %v1983 = vadd.f32 %v1694, %v1982
  %v1984 = vpop.f32.mrb[0].mxu0
  %v1985 = vpop.f32.mrb[0].mxu0
  %v1986 = vadd.f32 %v1697, %v1985
  %v1987 = vpop.f32.mrb[0].mxu0
  %1988 = vmatprep.mubr.bf16.mxu0 0
  %1989 = vmatmul.mubr.bf16.gmra.mrb[0].mxu0 %v816
  %v1990 = vpop.f32.mrb[0].mxu0
  %v1991 = vadd.f32 %v1702, %v1990
  %v1992 = vpop.f32.mrb[0].mxu0
  %v1993 = vpop.f32.mrb[0].mxu0
  %v1994 = vadd.f32 %v1705, %v1993
  %v1995 = vpop.f32.mrb[0].mxu0
  %1996 = vmatprep.mubr.bf16.mxu0 0
  %1997 = vmatmul.mubr.bf16.gmra.mrb[0].mxu0 %v821
  %v1998 = vpop.f32.mrb[0].mxu0
  %v1999 = vadd.f32 %v1710, %v1998
  %v2000 = vpop.f32.mrb[0].mxu0
  %v2001 = vpop.f32.mrb[0].mxu0
  %v2002 = vadd.f32 %v1713, %v2001
  %v2003 = vpop.f32.mrb[0].mxu0
  %2004 = vmatprep.mubr.bf16.mxu0 0
  %2005 = vmatmul.mubr.bf16.gmra.mrb[0].mxu0 %v826
  %v2006 = vpop.f32.mrb[0].mxu0
  %v2007 = vadd.f32 %v1718, %v2006
  %v2008 = vpop.f32.mrb[0].mxu0
  %v2009 = vpop.f32.mrb[0].mxu0
  %v2010 = vadd.f32 %v1721, %v2009
  %v2011 = vpop.f32.mrb[0].mxu0
  %2012 = vmatprep.mubr.bf16.mxu0 0
  %2013 = vmatmul.mubr.bf16.gmra.mrb[0].mxu0 %v831
  %v2014 = vpop.f32.mrb[0].mxu0
  %v2015 = vadd.f32 %v1726, %v2014
  %v2016 = vpop.f32.mrb[0].mxu0
  %v2017 = vpop.f32.mrb[0].mxu0
  %v2018 = vadd.f32 %v1729, %v2017
  %v2019 = vpop.f32.mrb[0].mxu0
  %2020 = vmatprep.mubr.bf16.mxu0 0
  %2021 = vmatmul.mubr.bf16.gmra.mrb[0].mxu0 %v836
  %v2022 = vpop.f32.mrb[0].mxu0
  %v2023 = vadd.f32 %v1734, %v2022
  %v2024 = vpop.f32.mrb[0].mxu0
  %v2025 = vpop.f32.mrb[0].mxu0
  %v2026 = vadd.f32 %v1737, %v2025
  %v2027 = vpop.f32.mrb[0].mxu0
  %2028 = vmatprep.mubr.bf16.mxu0 0
  %2029 = vmatmul.mubr.bf16.gmra.mrb[0].mxu0 %v841
  %v2030 = vpop.f32.mrb[0].mxu0
  %v2031 = vadd.f32 %v1742, %v2030
  %v2032 = vpop.f32.mrb[0].mxu0
  %v2033 = vpop.f32.mrb[0].mxu0
  %v2034 = vadd.f32 %v1745, %v2033
  %v2035 = vpop.f32.mrb[0].mxu0
  %2036 = vmatprep.mubr.bf16.mxu0 0
  %2037 = vmatmul.mubr.bf16.gmra.mrb[0].mxu0 %v846
  %v2038 = vpop.f32.mrb[0].mxu0
  %v2039 = vadd.f32 %v1750, %v2038
  %v2040 = vpop.f32.mrb[0].mxu0
  %v2041 = vpop.f32.mrb[0].mxu0
  %v2042 = vadd.f32 %v1753, %v2041
  %v2043 = vpop.f32.mrb[0].mxu0
  %2044 = vmatprep.mubr.bf16.mxu0 0
  %2045 = vmatmul.mubr.bf16.gmra.mrb[0].mxu0 %v851
  %v2046 = vpop.f32.mrb[0].mxu0
  %v2047 = vadd.f32 %v1758, %v2046
  %v2048 = vpop.f32.mrb[0].mxu0
  %v2049 = vpop.f32.mrb[0].mxu0
  %v2050 = vadd.f32 %v1761, %v2049
  %v2051 = vpop.f32.mrb[0].mxu0
  %2052 = vmatprep.mubr.bf16.mxu0 0
  %2053 = vmatmul.mubr.bf16.gmra.mrb[0].mxu0 %v856
  %v2054 = vpop.f32.mrb[0].mxu0
  %v2055 = vadd.f32 %v1766, %v2054
  %v2056 = vpop.f32.mrb[0].mxu0
  %v2057 = vpop.f32.mrb[0].mxu0
  %v2058 = vadd.f32 %v1769, %v2057
  %v2059 = vpop.f32.mrb[0].mxu0
  %2060 = vmatprep.mubr.bf16.mxu0 0
  %2061 = vmatmul.mubr.bf16.gmra.mrb[0].mxu0 %v861
  %v2062 = vpop.f32.mrb[0].mxu0
  %v2063 = vadd.f32 %v1774, %v2062
  %v2064 = vpop.f32.mrb[0].mxu0
  %v2065 = vpop.f32.mrb[0].mxu0
  %v2066 = vadd.f32 %v1777, %v2065
  %v2067 = vpop.f32.mrb[0].mxu0
  %2068 = vmatprep.mubr.bf16.mxu0 0
  %2069 = vmatmul.mubr.bf16.gmra.mrb[0].mxu0 %v866
  %v2070 = vpop.f32.mrb[0].mxu0
  %v2071 = vadd.f32 %v1782, %v2070
  %v2072 = vpop.f32.mrb[0].mxu0
  %v2073 = vpop.f32.mrb[0].mxu0
  %v2074 = vadd.f32 %v1785, %v2073
  %v2075 = vpop.f32.mrb[0].mxu0
  %2076 = vmatprep.mubr.bf16.mxu0 0
  %2077 = vmatmul.mubr.bf16.gmra.mrb[0].mxu0 %v871
  %v2078 = vpop.f32.mrb[0].mxu0
  %v2079 = vadd.f32 %v1790, %v2078
  %v2080 = vpop.f32.mrb[0].mxu0
  %v2081 = vpop.f32.mrb[0].mxu0
  %v2082 = vadd.f32 %v1793, %v2081
  %v2083 = vpop.f32.mrb[0].mxu0
  %2084 = vmatprep.mubr.bf16.mxu0 0
  %2085 = vmatmul.mubr.bf16.gmra.mrb[0].mxu0 %v876
  %v2086 = vpop.f32.mrb[0].mxu0
  %v2087 = vadd.f32 %v1798, %v2086
  %v2088 = vpop.f32.mrb[0].mxu0
  %v2089 = vpop.f32.mrb[0].mxu0
  %v2090 = vadd.f32 %v1801, %v2089
  %v2091 = vpop.f32.mrb[0].mxu0
  %2092 = vmatprep.mubr.bf16.mxu0 0
  %2093 = vmatmul.mubr.bf16.gmra.mrb[0].mxu0 %v881
  %v2094 = vpop.f32.mrb[0].mxu0
  %v2095 = vadd.f32 %v1806, %v2094
  %v2096 = vpop.f32.mrb[0].mxu0
  %v2097 = vpop.f32.mrb[0].mxu0
  %v2098 = vadd.f32 %v1809, %v2097
  %v2099 = vpop.f32.mrb[0].mxu0
  %2100 = vmatprep.mubr.bf16.mxu0 0
  %2101 = vmatmul.mubr.bf16.gmra.mrb[0].mxu0 %v886
  %v2102 = vpop.f32.mrb[0].mxu0
  %v2103 = vadd.f32 %v1814, %v2102
  %v2104 = vpop.f32.mrb[0].mxu0
  %v2105 = vpop.f32.mrb[0].mxu0
  %v2106 = vadd.f32 %v1817, %v2105
  %v2107 = vpop.f32.mrb[0].mxu0
  %2108 = vmatprep.mubr.bf16.mxu0 0
  %2109 = vmatmul.mubr.bf16.gmra.mrb[0].mxu0 %v891
  %v2110 = vpop.f32.mrb[0].mxu0
  %v2111 = vadd.f32 %v1822, %v2110
  %v2112 = vpop.f32.mrb[0].mxu0
  %v2113 = vpop.f32.mrb[0].mxu0
  %v2114 = vadd.f32 %v1825, %v2113
  %v2115 = vpop.f32.mrb[0].mxu0
  %2116 = vmatprep.mubr.bf16.mxu0 0
  %2117 = vmatmul.mubr.bf16.gmra.mrb[0].mxu0 %v896
  %v2118 = vpop.f32.mrb[0].mxu0
  %v2119 = vadd.f32 %v1830, %v2118
  %v2120 = vpop.f32.mrb[0].mxu0
  %v2121 = vpop.f32.mrb[0].mxu0
  %v2122 = vadd.f32 %v1833, %v2121
  %v2123 = vpop.f32.mrb[0].mxu0
  %2124 = vmatprep.mubr.bf16.mxu0 0
  %2125 = vmatmul.mubr.bf16.gmra.mrb[0].mxu0 %v901
  %v2126 = vpop.f32.mrb[0].mxu0
  %v2127 = vadd.f32 %v1838, %v2126
  %v2128 = vpop.f32.mrb[0].mxu0
  %v2129 = vpop.f32.mrb[0].mxu0
  %v2130 = vadd.f32 %v1841, %v2129
  %v2131 = vpop.f32.mrb[0].mxu0
  %2132 = vmatprep.mubr.bf16.mxu0 0
  %2133 = vmatmul.mubr.bf16.gmra.mrb[0].mxu0 %v906
  %v2134 = vpop.f32.mrb[0].mxu0
  %v2135 = vadd.f32 %v1846, %v2134
  %v2136 = vpop.f32.mrb[0].mxu0
  %v2137 = vpop.f32.mrb[0].mxu0
  %v2138 = vadd.f32 %v1849, %v2137
  %v2139 = vpop.f32.mrb[0].mxu0
  %2140 = vmatprep.mubr.bf16.mxu0 0
  %2141 = vmatmul.mubr.bf16.gmra.mrb[0].mxu0 %v911
  %v2142 = vpop.f32.mrb[0].mxu0
  %v2143 = vadd.f32 %v1854, %v2142
  %v2144 = vpop.f32.mrb[0].mxu0
  %v2145 = vpop.f32.mrb[0].mxu0
  %v2146 = vadd.f32 %v1857, %v2145
  %v2147 = vpop.f32.mrb[0].mxu0
  %2148 = vmatprep.mubr.bf16.mxu0 0
  %2149 = vmatmul.mubr.bf16.gmra.mrb[0].mxu0 %v916
  %v2150 = vpop.f32.mrb[0].mxu0
  %v2151 = vadd.f32 %v1862, %v2150
  %v2152 = vpop.f32.mrb[0].mxu0
  %v2153 = vpop.f32.mrb[0].mxu0
  %v2154 = vadd.f32 %v1865, %v2153
  %v2155 = vpop.f32.mrb[0].mxu0
  %2156 = vmatprep.mubr.bf16.mxu0 0
  %2157 = vmatmul.mubr.bf16.gmra.mrb[0].mxu0 %v921
  %v2158 = vpop.f32.mrb[0].mxu0
  %v2159 = vadd.f32 %v1870, %v2158
  %v2160 = vpop.f32.mrb[0].mxu0
  %v2161 = vpop.f32.mrb[0].mxu0
  %v2162 = vadd.f32 %v1873, %v2161
  %v2163 = vpop.f32.mrb[0].mxu0
  %2164 = vmatprep.mubr.bf16.mxu0 0
  %2165 = vmatmul.mubr.bf16.gmra.mrb[0].mxu0 %v926
  %v2166 = vpop.f32.mrb[0].mxu0
  %v2167 = vadd.f32 %v1878, %v2166
  %v2168 = vpop.f32.mrb[0].mxu0
  %v2169 = vpop.f32.mrb[0].mxu0
  %v2170 = vadd.f32 %v1881, %v2169
  %v2171 = vpop.f32.mrb[0].mxu0
  %2172 = vmatprep.mubr.bf16.mxu0 0
  %2173 = vmatmul.mubr.bf16.gmra.mrb[0].mxu0 %v931
  %v2174 = vpop.f32.mrb[0].mxu0
  %v2175 = vadd.f32 %v1886, %v2174
  %v2176 = vpop.f32.mrb[0].mxu0
  %v2177 = vpop.f32.mrb[0].mxu0
  %v2178 = vadd.f32 %v1889, %v2177
  %v2179 = vpop.f32.mrb[0].mxu0
  %2180 = vmatprep.mubr.bf16.mxu0 0
  %2181 = vmatmul.mubr.bf16.gmra.mrb[0].mxu0 %v936
  %v2182 = vpop.f32.mrb[0].mxu0
  %v2183 = vadd.f32 %v1894, %v2182
  %v2184 = vpop.f32.mrb[0].mxu0
  %v2185 = vpop.f32.mrb[0].mxu0
  %v2186 = vadd.f32 %v1897, %v2185
  %v2187 = vpop.f32.mrb[0].mxu0
  %2188 = vmatprep.mubr.bf16.mxu0 0
  %2189 = vmatmul.mubr.bf16.gmra.mrb[0].mxu0 %v941
  %v2190 = vpop.f32.mrb[0].mxu0
  %v2191 = vadd.f32 %v1902, %v2190
  %v2192 = vpop.f32.mrb[0].mxu0
  %v2193 = vpop.f32.mrb[0].mxu0
  %v2194 = vadd.f32 %v1905, %v2193
  %v2195 = vpop.f32.mrb[0].mxu0
  %2196 = vmatprep.mubr.bf16.mxu0 0
  %2197 = vmatmul.mubr.bf16.gmra.mrb[0].mxu0 %v946
  %v2198 = vpop.f32.mrb[0].mxu0
  %v2199 = vadd.f32 %v1910, %v2198
  %v2200 = vpop.f32.mrb[0].mxu0
  %v2201 = vpop.f32.mrb[0].mxu0
  %v2202 = vadd.f32 %v1913, %v2201
  %v2203 = vpop.f32.mrb[0].mxu0
  %2204 = vmatprep.mubr.bf16.mxu0 0
  %2205 = vmatmul.mubr.bf16.gmra.mrb[0].mxu0 %v951
  %v2206 = vpop.f32.mrb[0].mxu0
  %v2207 = vadd.f32 %v1918, %v2206
  %v2208 = vpop.f32.mrb[0].mxu0
  %v2209 = vpop.f32.mrb[0].mxu0
  %v2210 = vadd.f32 %v1921, %v2209
  %v2211 = vpop.f32.mrb[0].mxu0
  %2212 = vmatprep.mubr.bf16.mxu0 0
  %2213 = vmatmul.mubr.bf16.gmra.mrb[0].mxu0 %v956
  %v2214 = vpop.f32.mrb[0].mxu0
  %v2215 = vadd.f32 %v1926, %v2214
  %v2216 = vpop.f32.mrb[0].mxu0
  %v2217 = vpop.f32.mrb[0].mxu0
  %v2218 = vadd.f32 %v1929, %v2217
  %v2219 = vpop.f32.mrb[0].mxu0
  %2220 = vmatprep.mubr.bf16.mxu0 0
  %2221 = vmatmul.mubr.bf16.gmra.mrb[0].mxu0 %v961
  %v2222 = vpop.f32.mrb[0].mxu0
  %v2223 = vadd.f32 %v1934, %v2222
  %v2224 = vpop.f32.mrb[0].mxu0
  %v2225 = vpop.f32.mrb[0].mxu0
  %v2226 = vadd.f32 %v1937, %v2225
  %v2227 = vpop.f32.mrb[0].mxu0
  %2228 = vdwg.mxu0
  %v2229 = vld [vmem:[%s1] sm:$0xff]
  %v2230 = vld [vmem:[%s1 + $0x8] sm:$0xff]
  %v2231 = vld [vmem:[%s1 + $0x10] sm:$0xff]
  %v2232 = vld [vmem:[%s1 + $0x18] sm:$0xff]
  %v2233 = vld [vmem:[%s1 + $0x20] sm:$0xff]
  %v2234 = vld [vmem:[%s1 + $0x28] sm:$0xff]
  %v2235 = vld [vmem:[%s1 + $0x30] sm:$0xff]
  %v2236 = vld [vmem:[%s1 + $0x38] sm:$0xff]
  %v2237 = vld [vmem:[%s1 + $0x40] sm:$0xff]
  %v2238 = vld [vmem:[%s1 + $0x48] sm:$0xff]
  %v2239 = vld [vmem:[%s1 + $0x50] sm:$0xff]
  %v2240 = vld [vmem:[%s1 + $0x58] sm:$0xff]
  %v2241 = vld [vmem:[%s1 + $0x60] sm:$0xff]
  %v2242 = vld [vmem:[%s1 + $0x68] sm:$0xff]
  %v2243 = vld [vmem:[%s1 + $0x70] sm:$0xff]
  %v2244 = vld [vmem:[%s1 + $0x78] sm:$0xff]
  %v2245 = vld [vmem:[%s1 + $0x80] sm:$0xff]
  %v2246 = vld [vmem:[%s1 + $0x88] sm:$0xff]
  %v2247 = vld [vmem:[%s1 + $0x90] sm:$0xff]
  %v2248 = vld [vmem:[%s1 + $0x98] sm:$0xff]
  %v2249 = vld [vmem:[%s1 + $0xa0] sm:$0xff]
  %v2250 = vld [vmem:[%s1 + $0xa8] sm:$0xff]
  %v2251 = vld [vmem:[%s1 + $0xb0] sm:$0xff]
  %v2252 = vld [vmem:[%s1 + $0xb8] sm:$0xff]
  %v2253 = vld [vmem:[%s1 + $0xc0] sm:$0xff]
  %v2254 = vld [vmem:[%s1 + $0xc8] sm:$0xff]
  %v2255 = vld [vmem:[%s1 + $0xd0] sm:$0xff]
  %v2256 = vld [vmem:[%s1 + $0xd8] sm:$0xff]
  %v2257 = vld [vmem:[%s1 + $0xe0] sm:$0xff]
  %v2258 = vld [vmem:[%s1 + $0xe8] sm:$0xff]
  %v2259 = vld [vmem:[%s1 + $0xf0] sm:$0xff]
  %v2260 = vld [vmem:[%s1 + $0xf8] sm:$0xff]
  %v2261 = vld [vmem:[%s1 + $0x100] sm:$0xff]
  %v2262 = vld [vmem:[%s1 + $0x108] sm:$0xff]
  %v2263 = vld [vmem:[%s1 + $0x110] sm:$0xff]
  %v2264 = vld [vmem:[%s1 + $0x118] sm:$0xff]
  %v2265 = vld [vmem:[%s1 + $0x120] sm:$0xff]
  %v2266 = vld [vmem:[%s1 + $0x128] sm:$0xff]
  %v2267 = vld [vmem:[%s1 + $0x130] sm:$0xff]
  %v2268 = vld [vmem:[%s1 + $0x138] sm:$0xff]
  %v2269 = vld [vmem:[%s1 + $0x140] sm:$0xff]
  %v2270 = vld [vmem:[%s1 + $0x148] sm:$0xff]
  %v2271 = vld [vmem:[%s1 + $0x150] sm:$0xff]
  %v2272 = vld [vmem:[%s1 + $0x158] sm:$0xff]
  %v2273 = vld [vmem:[%s1 + $0x160] sm:$0xff]
  %v2274 = vld [vmem:[%s1 + $0x168] sm:$0xff]
  %v2275 = vld [vmem:[%s1 + $0x170] sm:$0xff]
  %v2276 = vld [vmem:[%s1 + $0x178] sm:$0xff]
  %v2277 = vld [vmem:[%s1 + $0x180] sm:$0xff]
  %v2278 = vld [vmem:[%s1 + $0x188] sm:$0xff]
  %v2279 = vld [vmem:[%s1 + $0x190] sm:$0xff]
  %v2280 = vld [vmem:[%s1 + $0x198] sm:$0xff]
  %v2281 = vld [vmem:[%s1 + $0x1a0] sm:$0xff]
  %v2282 = vld [vmem:[%s1 + $0x1a8] sm:$0xff]
  %v2283 = vld [vmem:[%s1 + $0x1b0] sm:$0xff]
  %v2284 = vld [vmem:[%s1 + $0x1b8] sm:$0xff]
  %v2285 = vld [vmem:[%s1 + $0x1c0] sm:$0xff]
  %v2286 = vld [vmem:[%s1 + $0x1c8] sm:$0xff]
  %v2287 = vld [vmem:[%s1 + $0x1d0] sm:$0xff]
  %v2288 = vld [vmem:[%s1 + $0x1d8] sm:$0xff]
  %v2289 = vld [vmem:[%s1 + $0x1e0] sm:$0xff]
  %v2290 = vld [vmem:[%s1 + $0x1e8] sm:$0xff]
  %v2291 = vld [vmem:[%s1 + $0x1f0] sm:$0xff]
  %v2292 = vld [vmem:[%s1 + $0x1f8] sm:$0xff]
  %vm2293 = vcmp.eq.f32.partialorder %v2229, 0.0
  %vm2294 = vcmp.eq.f32.partialorder %v2230, 0.0
  %vm2295 = vcmp.eq.f32.partialorder %v2231, 0.0
  %vm2296 = vcmp.eq.f32.partialorder %v2232, 0.0
  %vm2297 = vcmp.eq.f32.partialorder %v2233, 0.0
  %vm2298 = vcmp.eq.f32.partialorder %v2234, 0.0
  %vm2299 = vcmp.eq.f32.partialorder %v2235, 0.0
  %vm2300 = vcmp.eq.f32.partialorder %v2236, 0.0
  %vm2301 = vcmp.eq.f32.partialorder %v2237, 0.0
  %vm2302 = vcmp.eq.f32.partialorder %v2238, 0.0
  %vm2303 = vcmp.eq.f32.partialorder %v2239, 0.0
  %vm2304 = vcmp.eq.f32.partialorder %v2240, 0.0
  %vm2305 = vcmp.eq.f32.partialorder %v2241, 0.0
  %vm2306 = vcmp.eq.f32.partialorder %v2242, 0.0
  %vm2307 = vcmp.eq.f32.partialorder %v2243, 0.0
  %vm2308 = vcmp.eq.f32.partialorder %v2244, 0.0
  %vm2309 = vcmp.eq.f32.partialorder %v2245, 0.0
  %vm2310 = vcmp.eq.f32.partialorder %v2246, 0.0
  %vm2311 = vcmp.eq.f32.partialorder %v2247, 0.0
  %vm2312 = vcmp.eq.f32.partialorder %v2248, 0.0
  %vm2313 = vcmp.eq.f32.partialorder %v2249, 0.0
  %vm2314 = vcmp.eq.f32.partialorder %v2250, 0.0
  %vm2315 = vcmp.eq.f32.partialorder %v2251, 0.0
  %vm2316 = vcmp.eq.f32.partialorder %v2252, 0.0
  %vm2317 = vcmp.eq.f32.partialorder %v2253, 0.0
  %vm2318 = vcmp.eq.f32.partialorder %v2254, 0.0
  %vm2319 = vcmp.eq.f32.partialorder %v2255, 0.0
  %vm2320 = vcmp.eq.f32.partialorder %v2256, 0.0
  %vm2321 = vcmp.eq.f32.partialorder %v2257, 0.0
  %vm2322 = vcmp.eq.f32.partialorder %v2258, 0.0
  %vm2323 = vcmp.eq.f32.partialorder %v2259, 0.0
  %vm2324 = vcmp.eq.f32.partialorder %v2260, 0.0
  %vm2325 = vcmp.eq.f32.partialorder %v2261, 0.0
  %vm2326 = vcmp.eq.f32.partialorder %v2262, 0.0
  %vm2327 = vcmp.eq.f32.partialorder %v2263, 0.0
  %vm2328 = vcmp.eq.f32.partialorder %v2264, 0.0
  %vm2329 = vcmp.eq.f32.partialorder %v2265, 0.0
  %vm2330 = vcmp.eq.f32.partialorder %v2266, 0.0
  %vm2331 = vcmp.eq.f32.partialorder %v2267, 0.0
  %vm2332 = vcmp.eq.f32.partialorder %v2268, 0.0
  %vm2333 = vcmp.eq.f32.partialorder %v2269, 0.0
  %vm2334 = vcmp.eq.f32.partialorder %v2270, 0.0
  %vm2335 = vcmp.eq.f32.partialorder %v2271, 0.0
  %vm2336 = vcmp.eq.f32.partialorder %v2272, 0.0
  %vm2337 = vcmp.eq.f32.partialorder %v2273, 0.0
  %vm2338 = vcmp.eq.f32.partialorder %v2274, 0.0
  %vm2339 = vcmp.eq.f32.partialorder %v2275, 0.0
  %vm2340 = vcmp.eq.f32.partialorder %v2276, 0.0
  %vm2341 = vcmp.eq.f32.partialorder %v2277, 0.0
  %vm2342 = vcmp.eq.f32.partialorder %v2278, 0.0
  %vm2343 = vcmp.eq.f32.partialorder %v2279, 0.0
  %vm2344 = vcmp.eq.f32.partialorder %v2280, 0.0
  %vm2345 = vcmp.eq.f32.partialorder %v2281, 0.0
  %vm2346 = vcmp.eq.f32.partialorder %v2282, 0.0
  %vm2347 = vcmp.eq.f32.partialorder %v2283, 0.0
  %vm2348 = vcmp.eq.f32.partialorder %v2284, 0.0
  %vm2349 = vcmp.eq.f32.partialorder %v2285, 0.0
  %vm2350 = vcmp.eq.f32.partialorder %v2286, 0.0
  %vm2351 = vcmp.eq.f32.partialorder %v2287, 0.0
  %vm2352 = vcmp.eq.f32.partialorder %v2288, 0.0
  %vm2353 = vcmp.eq.f32.partialorder %v2289, 0.0
  %vm2354 = vcmp.eq.f32.partialorder %v2290, 0.0
  %vm2355 = vcmp.eq.f32.partialorder %v2291, 0.0
  %vm2356 = vcmp.eq.f32.partialorder %v2292, 0.0
  %v2357 = vsel %vm2293, 1.0, %v2229
  %v2358 = vsel %vm2294, 1.0, %v2230
  %v2359 = vsel %vm2295, 1.0, %v2231
  %v2360 = vsel %vm2296, 1.0, %v2232
  %v2361 = vsel %vm2297, 1.0, %v2233
  %v2362 = vsel %vm2298, 1.0, %v2234
  %v2363 = vsel %vm2299, 1.0, %v2235
  %v2364 = vsel %vm2300, 1.0, %v2236
  %v2365 = vsel %vm2301, 1.0, %v2237
  %v2366 = vsel %vm2302, 1.0, %v2238
  %v2367 = vsel %vm2303, 1.0, %v2239
  %v2368 = vsel %vm2304, 1.0, %v2240
  %v2369 = vsel %vm2305, 1.0, %v2241
  %v2370 = vsel %vm2306, 1.0, %v2242
  %v2371 = vsel %vm2307, 1.0, %v2243
  %v2372 = vsel %vm2308, 1.0, %v2244
  %v2373 = vsel %vm2309, 1.0, %v2245
  %v2374 = vsel %vm2310, 1.0, %v2246
  %v2375 = vsel %vm2311, 1.0, %v2247
  %v2376 = vsel %vm2312, 1.0, %v2248
  %v2377 = vsel %vm2313, 1.0, %v2249
  %v2378 = vsel %vm2314, 1.0, %v2250
  %v2379 = vsel %vm2315, 1.0, %v2251
  %v2380 = vsel %vm2316, 1.0, %v2252
  %v2381 = vsel %vm2317, 1.0, %v2253
  %v2382 = vsel %vm2318, 1.0, %v2254
  %v2383 = vsel %vm2319, 1.0, %v2255
  %v2384 = vsel %vm2320, 1.0, %v2256
  %v2385 = vsel %vm2321, 1.0, %v2257
  %v2386 = vsel %vm2322, 1.0, %v2258
  %v2387 = vsel %vm2323, 1.0, %v2259
  %v2388 = vsel %vm2324, 1.0, %v2260
  %v2389 = vsel %vm2325, 1.0, %v2261
  %v2390 = vsel %vm2326, 1.0, %v2262
  %v2391 = vsel %vm2327, 1.0, %v2263
  %v2392 = vsel %vm2328, 1.0, %v2264
  %v2393 = vsel %vm2329, 1.0, %v2265
  %v2394 = vsel %vm2330, 1.0, %v2266
  %v2395 = vsel %vm2331, 1.0, %v2267
  %v2396 = vsel %vm2332, 1.0, %v2268
  %v2397 = vsel %vm2333, 1.0, %v2269
  %v2398 = vsel %vm2334, 1.0, %v2270
  %v2399 = vsel %vm2335, 1.0, %v2271
  %v2400 = vsel %vm2336, 1.0, %v2272
  %v2401 = vsel %vm2337, 1.0, %v2273
  %v2402 = vsel %vm2338, 1.0, %v2274
  %v2403 = vsel %vm2339, 1.0, %v2275
  %v2404 = vsel %vm2340, 1.0, %v2276
  %v2405 = vsel %vm2341, 1.0, %v2277
  %v2406 = vsel %vm2342, 1.0, %v2278
  %v2407 = vsel %vm2343, 1.0, %v2279
  %v2408 = vsel %vm2344, 1.0, %v2280
  %v2409 = vsel %vm2345, 1.0, %v2281
  %v2410 = vsel %vm2346, 1.0, %v2282
  %v2411 = vsel %vm2347, 1.0, %v2283
  %v2412 = vsel %vm2348, 1.0, %v2284
  %v2413 = vsel %vm2349, 1.0, %v2285
  %v2414 = vsel %vm2350, 1.0, %v2286
  %v2415 = vsel %vm2351, 1.0, %v2287
  %v2416 = vsel %vm2352, 1.0, %v2288
  %v2417 = vsel %vm2353, 1.0, %v2289
  %v2418 = vsel %vm2354, 1.0, %v2290
  %v2419 = vsel %vm2355, 1.0, %v2291
  %v2420 = vsel %vm2356, 1.0, %v2292
  %v2421 = vrcp.pop %v2357
  %v2422 = vrcp.pop %v2358
  %v2423 = vrcp.pop %v2359
  %v2424 = vrcp.pop %v2360
  %v2425 = vrcp.pop %v2361
  %v2426 = vrcp.pop %v2362
  %v2427 = vrcp.pop %v2363
  %v2428 = vrcp.pop %v2364
  %v2429 = vrcp.pop %v2365
  %v2430 = vrcp.pop %v2366
  %v2431 = vrcp.pop %v2367
  %v2432 = vrcp.pop %v2368
  %v2433 = vrcp.pop %v2369
  %v2434 = vrcp.pop %v2370
  %v2435 = vrcp.pop %v2371
  %v2436 = vrcp.pop %v2372
  %v2437 = vrcp.pop %v2373
  %v2438 = vrcp.pop %v2374
  %v2439 = vrcp.pop %v2375
  %v2440 = vrcp.pop %v2376
  %v2441 = vrcp.pop %v2377
  %v2442 = vrcp.pop %v2378
  %v2443 = vrcp.pop %v2379
  %v2444 = vrcp.pop %v2380
  %v2445 = vrcp.pop %v2381
  %v2446 = vrcp.pop %v2382
  %v2447 = vrcp.pop %v2383
  %v2448 = vrcp.pop %v2384
  %v2449 = vrcp.pop %v2385
  %v2450 = vrcp.pop %v2386
  %v2451 = vrcp.pop %v2387
  %v2452 = vrcp.pop %v2388
  %v2453 = vrcp.pop %v2389
  %v2454 = vrcp.pop %v2390
  %v2455 = vrcp.pop %v2391
  %v2456 = vrcp.pop %v2392
  %v2457 = vrcp.pop %v2393
  %v2458 = vrcp.pop %v2394
  %v2459 = vrcp.pop %v2395
  %v2460 = vrcp.pop %v2396
  %v2461 = vrcp.pop %v2397
  %v2462 = vrcp.pop %v2398
  %v2463 = vrcp.pop %v2399
  %v2464 = vrcp.pop %v2400
  %v2465 = vrcp.pop %v2401
  %v2466 = vrcp.pop %v2402
  %v2467 = vrcp.pop %v2403
  %v2468 = vrcp.pop %v2404
  %v2469 = vrcp.pop %v2405
  %v2470 = vrcp.pop %v2406
  %v2471 = vrcp.pop %v2407
  %v2472 = vrcp.pop %v2408
  %v2473 = vrcp.pop %v2409
  %v2474 = vrcp.pop %v2410
  %v2475 = vrcp.pop %v2411
  %v2476 = vrcp.pop %v2412
  %v2477 = vrcp.pop %v2413
  %v2478 = vrcp.pop %v2414
  %v2479 = vrcp.pop %v2415
  %v2480 = vrcp.pop %v2416
  %v2481 = vrcp.pop %v2417
  %v2482 = vrcp.pop %v2418
  %v2483 = vrcp.pop %v2419
  %v2484 = vrcp.pop %v2420
  %2486 = vset.pattern.permute.xlu0 0
  %2487 = vperm.xlu0 %2486, %v2421
  %v2488 = vpop.permute.xlu0 %2487
  %2491 = vset.pattern.permute.xlu0 0
  %2492 = vperm.xlu0 %2491, %v2422
  %v2493 = vpop.permute.xlu0 %2492
  %2496 = vset.pattern.permute.xlu0 0
  %2497 = vperm.xlu0 %2496, %v2423
  %v2498 = vpop.permute.xlu0 %2497
  %2501 = vset.pattern.permute.xlu0 0
  %2502 = vperm.xlu0 %2501, %v2424
  %v2503 = vpop.permute.xlu0 %2502
  %2506 = vset.pattern.permute.xlu0 0
  %2507 = vperm.xlu0 %2506, %v2425
  %v2508 = vpop.permute.xlu0 %2507
  %2511 = vset.pattern.permute.xlu0 0
  %2512 = vperm.xlu0 %2511, %v2426
  %v2513 = vpop.permute.xlu0 %2512
  %2516 = vset.pattern.permute.xlu0 0
  %2517 = vperm.xlu0 %2516, %v2427
  %v2518 = vpop.permute.xlu0 %2517
  %2521 = vset.pattern.permute.xlu0 0
  %2522 = vperm.xlu0 %2521, %v2428
  %v2523 = vpop.permute.xlu0 %2522
  %2526 = vset.pattern.permute.xlu0 0
  %2527 = vperm.xlu0 %2526, %v2429
  %v2528 = vpop.permute.xlu0 %2527
  %2531 = vset.pattern.permute.xlu0 0
  %2532 = vperm.xlu0 %2531, %v2430
  %v2533 = vpop.permute.xlu0 %2532
  %2536 = vset.pattern.permute.xlu0 0
  %2537 = vperm.xlu0 %2536, %v2431
  %v2538 = vpop.permute.xlu0 %2537
  %2541 = vset.pattern.permute.xlu0 0
  %2542 = vperm.xlu0 %2541, %v2432
  %v2543 = vpop.permute.xlu0 %2542
  %2546 = vset.pattern.permute.xlu0 0
  %2547 = vperm.xlu0 %2546, %v2433
  %v2548 = vpop.permute.xlu0 %2547
  %2551 = vset.pattern.permute.xlu0 0
  %2552 = vperm.xlu0 %2551, %v2434
  %v2553 = vpop.permute.xlu0 %2552
  %2556 = vset.pattern.permute.xlu0 0
  %2557 = vperm.xlu0 %2556, %v2435
  %v2558 = vpop.permute.xlu0 %2557
  %2561 = vset.pattern.permute.xlu0 0
  %2562 = vperm.xlu0 %2561, %v2436
  %v2563 = vpop.permute.xlu0 %2562
  %2566 = vset.pattern.permute.xlu0 0
  %2567 = vperm.xlu0 %2566, %v2437
  %v2568 = vpop.permute.xlu0 %2567
  %2571 = vset.pattern.permute.xlu0 0
  %2572 = vperm.xlu0 %2571, %v2438
  %v2573 = vpop.permute.xlu0 %2572
  %2576 = vset.pattern.permute.xlu0 0
  %2577 = vperm.xlu0 %2576, %v2439
  %v2578 = vpop.permute.xlu0 %2577
  %2581 = vset.pattern.permute.xlu0 0
  %2582 = vperm.xlu0 %2581, %v2440
  %v2583 = vpop.permute.xlu0 %2582
  %2586 = vset.pattern.permute.xlu0 0
  %2587 = vperm.xlu0 %2586, %v2441
  %v2588 = vpop.permute.xlu0 %2587
  %2591 = vset.pattern.permute.xlu0 0
  %2592 = vperm.xlu0 %2591, %v2442
  %v2593 = vpop.permute.xlu0 %2592
  %2596 = vset.pattern.permute.xlu0 0
  %2597 = vperm.xlu0 %2596, %v2443
  %v2598 = vpop.permute.xlu0 %2597
  %2601 = vset.pattern.permute.xlu0 0
  %2602 = vperm.xlu0 %2601, %v2444
  %v2603 = vpop.permute.xlu0 %2602
  %2606 = vset.pattern.permute.xlu0 0
  %2607 = vperm.xlu0 %2606, %v2445
  %v2608 = vpop.permute.xlu0 %2607
  %2611 = vset.pattern.permute.xlu0 0
  %2612 = vperm.xlu0 %2611, %v2446
  %v2613 = vpop.permute.xlu0 %2612
  %2616 = vset.pattern.permute.xlu0 0
  %2617 = vperm.xlu0 %2616, %v2447
  %v2618 = vpop.permute.xlu0 %2617
  %2621 = vset.pattern.permute.xlu0 0
  %2622 = vperm.xlu0 %2621, %v2448
  %v2623 = vpop.permute.xlu0 %2622
  %2626 = vset.pattern.permute.xlu0 0
  %2627 = vperm.xlu0 %2626, %v2449
  %v2628 = vpop.permute.xlu0 %2627
  %2631 = vset.pattern.permute.xlu0 0
  %2632 = vperm.xlu0 %2631, %v2450
  %v2633 = vpop.permute.xlu0 %2632
  %2636 = vset.pattern.permute.xlu0 0
  %2637 = vperm.xlu0 %2636, %v2451
  %v2638 = vpop.permute.xlu0 %2637
  %2641 = vset.pattern.permute.xlu0 0
  %2642 = vperm.xlu0 %2641, %v2452
  %v2643 = vpop.permute.xlu0 %2642
  %2646 = vset.pattern.permute.xlu0 0
  %2647 = vperm.xlu0 %2646, %v2453
  %v2648 = vpop.permute.xlu0 %2647
  %2651 = vset.pattern.permute.xlu0 0
  %2652 = vperm.xlu0 %2651, %v2454
  %v2653 = vpop.permute.xlu0 %2652
  %2656 = vset.pattern.permute.xlu0 0
  %2657 = vperm.xlu0 %2656, %v2455
  %v2658 = vpop.permute.xlu0 %2657
  %2661 = vset.pattern.permute.xlu0 0
  %2662 = vperm.xlu0 %2661, %v2456
  %v2663 = vpop.permute.xlu0 %2662
  %2666 = vset.pattern.permute.xlu0 0
  %2667 = vperm.xlu0 %2666, %v2457
  %v2668 = vpop.permute.xlu0 %2667
  %2671 = vset.pattern.permute.xlu0 0
  %2672 = vperm.xlu0 %2671, %v2458
  %v2673 = vpop.permute.xlu0 %2672
  %2676 = vset.pattern.permute.xlu0 0
  %2677 = vperm.xlu0 %2676, %v2459
  %v2678 = vpop.permute.xlu0 %2677
  %2681 = vset.pattern.permute.xlu0 0
  %2682 = vperm.xlu0 %2681, %v2460
  %v2683 = vpop.permute.xlu0 %2682
  %2686 = vset.pattern.permute.xlu0 0
  %2687 = vperm.xlu0 %2686, %v2461
  %v2688 = vpop.permute.xlu0 %2687
  %2691 = vset.pattern.permute.xlu0 0
  %2692 = vperm.xlu0 %2691, %v2462
  %v2693 = vpop.permute.xlu0 %2692
  %2696 = vset.pattern.permute.xlu0 0
  %2697 = vperm.xlu0 %2696, %v2463
  %v2698 = vpop.permute.xlu0 %2697
  %2701 = vset.pattern.permute.xlu0 0
  %2702 = vperm.xlu0 %2701, %v2464
  %v2703 = vpop.permute.xlu0 %2702
  %2706 = vset.pattern.permute.xlu0 0
  %2707 = vperm.xlu0 %2706, %v2465
  %v2708 = vpop.permute.xlu0 %2707
  %2711 = vset.pattern.permute.xlu0 0
  %2712 = vperm.xlu0 %2711, %v2466
  %v2713 = vpop.permute.xlu0 %2712
  %2716 = vset.pattern.permute.xlu0 0
  %2717 = vperm.xlu0 %2716, %v2467
  %v2718 = vpop.permute.xlu0 %2717
  %2721 = vset.pattern.permute.xlu0 0
  %2722 = vperm.xlu0 %2721, %v2468
  %v2723 = vpop.permute.xlu0 %2722
  %2726 = vset.pattern.permute.xlu0 0
  %2727 = vperm.xlu0 %2726, %v2469
  %v2728 = vpop.permute.xlu0 %2727
  %2731 = vset.pattern.permute.xlu0 0
  %2732 = vperm.xlu0 %2731, %v2470
  %v2733 = vpop.permute.xlu0 %2732
  %2736 = vset.pattern.permute.xlu0 0
  %2737 = vperm.xlu0 %2736, %v2471
  %v2738 = vpop.permute.xlu0 %2737
  %2741 = vset.pattern.permute.xlu0 0
  %2742 = vperm.xlu0 %2741, %v2472
  %v2743 = vpop.permute.xlu0 %2742
  %2746 = vset.pattern.permute.xlu0 0
  %2747 = vperm.xlu0 %2746, %v2473
  %v2748 = vpop.permute.xlu0 %2747
  %2751 = vset.pattern.permute.xlu0 0
  %2752 = vperm.xlu0 %2751, %v2474
  %v2753 = vpop.permute.xlu0 %2752
  %2756 = vset.pattern.permute.xlu0 0
  %2757 = vperm.xlu0 %2756, %v2475
  %v2758 = vpop.permute.xlu0 %2757
  %2761 = vset.pattern.permute.xlu0 0
  %2762 = vperm.xlu0 %2761, %v2476
  %v2763 = vpop.permute.xlu0 %2762
  %2766 = vset.pattern.permute.xlu0 0
  %2767 = vperm.xlu0 %2766, %v2477
  %v2768 = vpop.permute.xlu0 %2767
  %2771 = vset.pattern.permute.xlu0 0
  %2772 = vperm.xlu0 %2771, %v2478
  %v2773 = vpop.permute.xlu0 %2772
  %2776 = vset.pattern.permute.xlu0 0
  %2777 = vperm.xlu0 %2776, %v2479
  %v2778 = vpop.permute.xlu0 %2777
  %2781 = vset.pattern.permute.xlu0 0
  %2782 = vperm.xlu0 %2781, %v2480
  %v2783 = vpop.permute.xlu0 %2782
  %2786 = vset.pattern.permute.xlu0 0
  %2787 = vperm.xlu0 %2786, %v2481
  %v2788 = vpop.permute.xlu0 %2787
  %2791 = vset.pattern.permute.xlu0 0
  %2792 = vperm.xlu0 %2791, %v2482
  %v2793 = vpop.permute.xlu0 %2792
  %2796 = vset.pattern.permute.xlu0 0
  %2797 = vperm.xlu0 %2796, %v2483
  %v2798 = vpop.permute.xlu0 %2797
  %2801 = vset.pattern.permute.xlu0 0
  %2802 = vperm.xlu0 %2801, %v2484
  %v2803 = vpop.permute.xlu0 %2802
  %v2805 = vmul.f32 %v1975, %v2488
  %v2806 = vmul.f32 %v1978, %v2493
  %v2807 = vmul.f32 %v1983, %v2498
  %v2808 = vmul.f32 %v1986, %v2503
  %v2809 = vmul.f32 %v1991, %v2508
  %v2810 = vmul.f32 %v1994, %v2513
  %v2811 = vmul.f32 %v1999, %v2518
  %v2812 = vmul.f32 %v2002, %v2523
  %v2813 = vmul.f32 %v2007, %v2528
  %v2814 = vmul.f32 %v2010, %v2533
  %v2815 = vmul.f32 %v2015, %v2538
  %v2816 = vmul.f32 %v2018, %v2543
  %v2817 = vmul.f32 %v2023, %v2548
  %v2818 = vmul.f32 %v2026, %v2553
  %v2819 = vmul.f32 %v2031, %v2558
  %v2820 = vmul.f32 %v2034, %v2563
  %v2821 = vmul.f32 %v2039, %v2568
  %v2822 = vmul.f32 %v2042, %v2573
  %v2823 = vmul.f32 %v2047, %v2578
  %v2824 = vmul.f32 %v2050, %v2583
  %v2825 = vmul.f32 %v2055, %v2588
  %v2826 = vmul.f32 %v2058, %v2593
  %v2827 = vmul.f32 %v2063, %v2598
  %v2828 = vmul.f32 %v2066, %v2603
  %v2829 = vmul.f32 %v2071, %v2608
  %v2830 = vmul.f32 %v2074, %v2613
  %v2831 = vmul.f32 %v2079, %v2618
  %v2832 = vmul.f32 %v2082, %v2623
  %v2833 = vmul.f32 %v2087, %v2628
  %v2834 = vmul.f32 %v2090, %v2633
  %v2835 = vmul.f32 %v2095, %v2638
  %v2836 = vmul.f32 %v2098, %v2643
  %v2837 = vmul.f32 %v2103, %v2648
  %v2838 = vmul.f32 %v2106, %v2653
  %v2839 = vmul.f32 %v2111, %v2658
  %v2840 = vmul.f32 %v2114, %v2663
  %v2841 = vmul.f32 %v2119, %v2668
  %v2842 = vmul.f32 %v2122, %v2673
  %v2843 = vmul.f32 %v2127, %v2678
  %v2844 = vmul.f32 %v2130, %v2683
  %v2845 = vmul.f32 %v2135, %v2688
  %v2846 = vmul.f32 %v2138, %v2693
  %v2847 = vmul.f32 %v2143, %v2698
  %v2848 = vmul.f32 %v2146, %v2703
  %v2849 = vmul.f32 %v2151, %v2708
  %v2850 = vmul.f32 %v2154, %v2713
  %v2851 = vmul.f32 %v2159, %v2718
  %v2852 = vmul.f32 %v2162, %v2723
  %v2853 = vmul.f32 %v2167, %v2728
  %v2854 = vmul.f32 %v2170, %v2733
  %v2855 = vmul.f32 %v2175, %v2738
  %v2856 = vmul.f32 %v2178, %v2743
  %v2857 = vmul.f32 %v2183, %v2748
  %v2858 = vmul.f32 %v2186, %v2753
  %v2859 = vmul.f32 %v2191, %v2758
  %v2860 = vmul.f32 %v2194, %v2763
  %v2861 = vmul.f32 %v2199, %v2768
  %v2862 = vmul.f32 %v2202, %v2773
  %v2863 = vmul.f32 %v2207, %v2778
  %v2864 = vmul.f32 %v2210, %v2783
  %v2865 = vmul.f32 %v2215, %v2788
  %v2866 = vmul.f32 %v2218, %v2793
  %v2867 = vmul.f32 %v2223, %v2798
  %v2868 = vmul.f32 %v2226, %v2803
  %v2869 = vld [vmem:[%s3] sm:$0x1]
  %v2871 = vlaneseq
  %v2872 = vshrl.u32 %v2871, 7
  %v2873 = vsub.s32 0, %v2872
  %v2874 = vrot.slane %v2869, %v2873
  %v2876 = vadd.f32 %v2805, %v2874
  %v2877 = vadd.f32 %v2806, %v2874
  %v2878 = vadd.f32 %v2807, %v2874
  %v2879 = vadd.f32 %v2808, %v2874
  %v2880 = vadd.f32 %v2809, %v2874
  %v2881 = vadd.f32 %v2810, %v2874
  %v2882 = vadd.f32 %v2811, %v2874
  %v2883 = vadd.f32 %v2812, %v2874
  %v2884 = vadd.f32 %v2813, %v2874
  %v2885 = vadd.f32 %v2814, %v2874
  %v2886 = vadd.f32 %v2815, %v2874
  %v2887 = vadd.f32 %v2816, %v2874
  %v2888 = vadd.f32 %v2817, %v2874
  %v2889 = vadd.f32 %v2818, %v2874
  %v2890 = vadd.f32 %v2819, %v2874
  %v2891 = vadd.f32 %v2820, %v2874
  %v2892 = vadd.f32 %v2821, %v2874
  %v2893 = vadd.f32 %v2822, %v2874
  %v2894 = vadd.f32 %v2823, %v2874
  %v2895 = vadd.f32 %v2824, %v2874
  %v2896 = vadd.f32 %v2825, %v2874
  %v2897 = vadd.f32 %v2826, %v2874
  %v2898 = vadd.f32 %v2827, %v2874
  %v2899 = vadd.f32 %v2828, %v2874
  %v2900 = vadd.f32 %v2829, %v2874
  %v2901 = vadd.f32 %v2830, %v2874
  %v2902 = vadd.f32 %v2831, %v2874
  %v2903 = vadd.f32 %v2832, %v2874
  %v2904 = vadd.f32 %v2833, %v2874
  %v2905 = vadd.f32 %v2834, %v2874
  %v2906 = vadd.f32 %v2835, %v2874
  %v2907 = vadd.f32 %v2836, %v2874
  %v2908 = vadd.f32 %v2837, %v2874
  %v2909 = vadd.f32 %v2838, %v2874
  %v2910 = vadd.f32 %v2839, %v2874
  %v2911 = vadd.f32 %v2840, %v2874
  %v2912 = vadd.f32 %v2841, %v2874
  %v2913 = vadd.f32 %v2842, %v2874
  %v2914 = vadd.f32 %v2843, %v2874
  %v2915 = vadd.f32 %v2844, %v2874
  %v2916 = vadd.f32 %v2845, %v2874
  %v2917 = vadd.f32 %v2846, %v2874
  %v2918 = vadd.f32 %v2847, %v2874
  %v2919 = vadd.f32 %v2848, %v2874
  %v2920 = vadd.f32 %v2849, %v2874
  %v2921 = vadd.f32 %v2850, %v2874
  %v2922 = vadd.f32 %v2851, %v2874
  %v2923 = vadd.f32 %v2852, %v2874
  %v2924 = vadd.f32 %v2853, %v2874
  %v2925 = vadd.f32 %v2854, %v2874
  %v2926 = vadd.f32 %v2855, %v2874
  %v2927 = vadd.f32 %v2856, %v2874
  %v2928 = vadd.f32 %v2857, %v2874
  %v2929 = vadd.f32 %v2858, %v2874
  %v2930 = vadd.f32 %v2859, %v2874
  %v2931 = vadd.f32 %v2860, %v2874
  %v2932 = vadd.f32 %v2861, %v2874
  %v2933 = vadd.f32 %v2862, %v2874
  %v2934 = vadd.f32 %v2863, %v2874
  %v2935 = vadd.f32 %v2864, %v2874
  %v2936 = vadd.f32 %v2865, %v2874
  %v2937 = vadd.f32 %v2866, %v2874
  %v2938 = vadd.f32 %v2867, %v2874
  %v2939 = vadd.f32 %v2868, %v2874
  %v2940 = vsel %vm2293, 1, 0
  %v2941 = vsel %vm2294, 1, 0
  %v2942 = vsel %vm2295, 1, 0
  %v2943 = vsel %vm2296, 1, 0
  %v2944 = vsel %vm2297, 1, 0
  %v2945 = vsel %vm2298, 1, 0
  %v2946 = vsel %vm2299, 1, 0
  %v2947 = vsel %vm2300, 1, 0
  %v2948 = vsel %vm2301, 1, 0
  %v2949 = vsel %vm2302, 1, 0
  %v2950 = vsel %vm2303, 1, 0
  %v2951 = vsel %vm2304, 1, 0
  %v2952 = vsel %vm2305, 1, 0
  %v2953 = vsel %vm2306, 1, 0
  %v2954 = vsel %vm2307, 1, 0
  %v2955 = vsel %vm2308, 1, 0
  %v2956 = vsel %vm2309, 1, 0
  %v2957 = vsel %vm2310, 1, 0
  %v2958 = vsel %vm2311, 1, 0
  %v2959 = vsel %vm2312, 1, 0
  %v2960 = vsel %vm2313, 1, 0
  %v2961 = vsel %vm2314, 1, 0
  %v2962 = vsel %vm2315, 1, 0
  %v2963 = vsel %vm2316, 1, 0
  %v2964 = vsel %vm2317, 1, 0
  %v2965 = vsel %vm2318, 1, 0
  %v2966 = vsel %vm2319, 1, 0
  %v2967 = vsel %vm2320, 1, 0
  %v2968 = vsel %vm2321, 1, 0
  %v2969 = vsel %vm2322, 1, 0
  %v2970 = vsel %vm2323, 1, 0
  %v2971 = vsel %vm2324, 1, 0
  %v2972 = vsel %vm2325, 1, 0
  %v2973 = vsel %vm2326, 1, 0
  %v2974 = vsel %vm2327, 1, 0
  %v2975 = vsel %vm2328, 1, 0
  %v2976 = vsel %vm2329, 1, 0
  %v2977 = vsel %vm2330, 1, 0
  %v2978 = vsel %vm2331, 1, 0
  %v2979 = vsel %vm2332, 1, 0
  %v2980 = vsel %vm2333, 1, 0
  %v2981 = vsel %vm2334, 1, 0
  %v2982 = vsel %vm2335, 1, 0
  %v2983 = vsel %vm2336, 1, 0
  %v2984 = vsel %vm2337, 1, 0
  %v2985 = vsel %vm2338, 1, 0
  %v2986 = vsel %vm2339, 1, 0
  %v2987 = vsel %vm2340, 1, 0
  %v2988 = vsel %vm2341, 1, 0
  %v2989 = vsel %vm2342, 1, 0
  %v2990 = vsel %vm2343, 1, 0
  %v2991 = vsel %vm2344, 1, 0
  %v2992 = vsel %vm2345, 1, 0
  %v2993 = vsel %vm2346, 1, 0
  %v2994 = vsel %vm2347, 1, 0
  %v2995 = vsel %vm2348, 1, 0
  %v2996 = vsel %vm2349, 1, 0
  %v2997 = vsel %vm2350, 1, 0
  %v2998 = vsel %vm2351, 1, 0
  %v2999 = vsel %vm2352, 1, 0
  %v3000 = vsel %vm2353, 1, 0
  %v3001 = vsel %vm2354, 1, 0
  %v3002 = vsel %vm2355, 1, 0
  %v3003 = vsel %vm2356, 1, 0
  %3004 = vset.pattern.permute.xlu0 0
  %3005 = vperm.xlu0 %3004, %v2940
  %v3006 = vpop.permute.xlu0 %3005
  %3007 = vset.pattern.permute.xlu0 0
  %3008 = vperm.xlu0 %3007, %v2941
  %v3009 = vpop.permute.xlu0 %3008
  %3010 = vset.pattern.permute.xlu0 0
  %3011 = vperm.xlu0 %3010, %v2942
  %v3012 = vpop.permute.xlu0 %3011
  %3013 = vset.pattern.permute.xlu0 0
  %3014 = vperm.xlu0 %3013, %v2943
  %v3015 = vpop.permute.xlu0 %3014
  %3016 = vset.pattern.permute.xlu0 0
  %3017 = vperm.xlu0 %3016, %v2944
  %v3018 = vpop.permute.xlu0 %3017
  %3019 = vset.pattern.permute.xlu0 0
  %3020 = vperm.xlu0 %3019, %v2945
  %v3021 = vpop.permute.xlu0 %3020
  %3022 = vset.pattern.permute.xlu0 0
  %3023 = vperm.xlu0 %3022, %v2946
  %v3024 = vpop.permute.xlu0 %3023
  %3025 = vset.pattern.permute.xlu0 0
  %3026 = vperm.xlu0 %3025, %v2947
  %v3027 = vpop.permute.xlu0 %3026
  %3028 = vset.pattern.permute.xlu0 0
  %3029 = vperm.xlu0 %3028, %v2948
  %v3030 = vpop.permute.xlu0 %3029
  %3031 = vset.pattern.permute.xlu0 0
  %3032 = vperm.xlu0 %3031, %v2949
  %v3033 = vpop.permute.xlu0 %3032
  %3034 = vset.pattern.permute.xlu0 0
  %3035 = vperm.xlu0 %3034, %v2950
  %v3036 = vpop.permute.xlu0 %3035
  %3037 = vset.pattern.permute.xlu0 0
  %3038 = vperm.xlu0 %3037, %v2951
  %v3039 = vpop.permute.xlu0 %3038
  %3040 = vset.pattern.permute.xlu0 0
  %3041 = vperm.xlu0 %3040, %v2952
  %v3042 = vpop.permute.xlu0 %3041
  %3043 = vset.pattern.permute.xlu0 0
  %3044 = vperm.xlu0 %3043, %v2953
  %v3045 = vpop.permute.xlu0 %3044
  %3046 = vset.pattern.permute.xlu0 0
  %3047 = vperm.xlu0 %3046, %v2954
  %v3048 = vpop.permute.xlu0 %3047
  %3049 = vset.pattern.permute.xlu0 0
  %3050 = vperm.xlu0 %3049, %v2955
  %v3051 = vpop.permute.xlu0 %3050
  %3052 = vset.pattern.permute.xlu0 0
  %3053 = vperm.xlu0 %3052, %v2956
  %v3054 = vpop.permute.xlu0 %3053
  %3055 = vset.pattern.permute.xlu0 0
  %3056 = vperm.xlu0 %3055, %v2957
  %v3057 = vpop.permute.xlu0 %3056
  %3058 = vset.pattern.permute.xlu0 0
  %3059 = vperm.xlu0 %3058, %v2958
  %v3060 = vpop.permute.xlu0 %3059
  %3061 = vset.pattern.permute.xlu0 0
  %3062 = vperm.xlu0 %3061, %v2959
  %v3063 = vpop.permute.xlu0 %3062
  %3064 = vset.pattern.permute.xlu0 0
  %3065 = vperm.xlu0 %3064, %v2960
  %v3066 = vpop.permute.xlu0 %3065
  %3067 = vset.pattern.permute.xlu0 0
  %3068 = vperm.xlu0 %3067, %v2961
  %v3069 = vpop.permute.xlu0 %3068
  %3070 = vset.pattern.permute.xlu0 0
  %3071 = vperm.xlu0 %3070, %v2962
  %v3072 = vpop.permute.xlu0 %3071
  %3073 = vset.pattern.permute.xlu0 0
  %3074 = vperm.xlu0 %3073, %v2963
  %v3075 = vpop.permute.xlu0 %3074
  %3076 = vset.pattern.permute.xlu0 0
  %3077 = vperm.xlu0 %3076, %v2964
  %v3078 = vpop.permute.xlu0 %3077
  %3079 = vset.pattern.permute.xlu0 0
  %3080 = vperm.xlu0 %3079, %v2965
  %v3081 = vpop.permute.xlu0 %3080
  %3082 = vset.pattern.permute.xlu0 0
  %3083 = vperm.xlu0 %3082, %v2966
  %v3084 = vpop.permute.xlu0 %3083
  %3085 = vset.pattern.permute.xlu0 0
  %3086 = vperm.xlu0 %3085, %v2967
  %v3087 = vpop.permute.xlu0 %3086
  %3088 = vset.pattern.permute.xlu0 0
  %3089 = vperm.xlu0 %3088, %v2968
  %v3090 = vpop.permute.xlu0 %3089
  %3091 = vset.pattern.permute.xlu0 0
  %3092 = vperm.xlu0 %3091, %v2969
  %v3093 = vpop.permute.xlu0 %3092
  %3094 = vset.pattern.permute.xlu0 0
  %3095 = vperm.xlu0 %3094, %v2970
  %v3096 = vpop.permute.xlu0 %3095
  %3097 = vset.pattern.permute.xlu0 0
  %3098 = vperm.xlu0 %3097, %v2971
  %v3099 = vpop.permute.xlu0 %3098
  %3100 = vset.pattern.permute.xlu0 0
  %3101 = vperm.xlu0 %3100, %v2972
  %v3102 = vpop.permute.xlu0 %3101
  %3103 = vset.pattern.permute.xlu0 0
  %3104 = vperm.xlu0 %3103, %v2973
  %v3105 = vpop.permute.xlu0 %3104
  %3106 = vset.pattern.permute.xlu0 0
  %3107 = vperm.xlu0 %3106, %v2974
  %v3108 = vpop.permute.xlu0 %3107
  %3109 = vset.pattern.permute.xlu0 0
  %3110 = vperm.xlu0 %3109, %v2975
  %v3111 = vpop.permute.xlu0 %3110
  %3112 = vset.pattern.permute.xlu0 0
  %3113 = vperm.xlu0 %3112, %v2976
  %v3114 = vpop.permute.xlu0 %3113
  %3115 = vset.pattern.permute.xlu0 0
  %3116 = vperm.xlu0 %3115, %v2977
  %v3117 = vpop.permute.xlu0 %3116
  %3118 = vset.pattern.permute.xlu0 0
  %3119 = vperm.xlu0 %3118, %v2978
  %v3120 = vpop.permute.xlu0 %3119
  %3121 = vset.pattern.permute.xlu0 0
  %3122 = vperm.xlu0 %3121, %v2979
  %v3123 = vpop.permute.xlu0 %3122
  %3124 = vset.pattern.permute.xlu0 0
  %3125 = vperm.xlu0 %3124, %v2980
  %v3126 = vpop.permute.xlu0 %3125
  %3127 = vset.pattern.permute.xlu0 0
  %3128 = vperm.xlu0 %3127, %v2981
  %v3129 = vpop.permute.xlu0 %3128
  %3130 = vset.pattern.permute.xlu0 0
  %3131 = vperm.xlu0 %3130, %v2982
  %v3132 = vpop.permute.xlu0 %3131
  %3133 = vset.pattern.permute.xlu0 0
  %3134 = vperm.xlu0 %3133, %v2983
  %v3135 = vpop.permute.xlu0 %3134
  %3136 = vset.pattern.permute.xlu0 0
  %3137 = vperm.xlu0 %3136, %v2984
  %v3138 = vpop.permute.xlu0 %3137
  %3139 = vset.pattern.permute.xlu0 0
  %3140 = vperm.xlu0 %3139, %v2985
  %v3141 = vpop.permute.xlu0 %3140
  %3142 = vset.pattern.permute.xlu0 0
  %3143 = vperm.xlu0 %3142, %v2986
  %v3144 = vpop.permute.xlu0 %3143
  %3145 = vset.pattern.permute.xlu0 0
  %3146 = vperm.xlu0 %3145, %v2987
  %v3147 = vpop.permute.xlu0 %3146
  %3148 = vset.pattern.permute.xlu0 0
  %3149 = vperm.xlu0 %3148, %v2988
  %v3150 = vpop.permute.xlu0 %3149
  %3151 = vset.pattern.permute.xlu0 0
  %3152 = vperm.xlu0 %3151, %v2989
  %v3153 = vpop.permute.xlu0 %3152
  %3154 = vset.pattern.permute.xlu0 0
  %3155 = vperm.xlu0 %3154, %v2990
  %v3156 = vpop.permute.xlu0 %3155
  %3157 = vset.pattern.permute.xlu0 0
  %3158 = vperm.xlu0 %3157, %v2991
  %v3159 = vpop.permute.xlu0 %3158
  %3160 = vset.pattern.permute.xlu0 0
  %3161 = vperm.xlu0 %3160, %v2992
  %v3162 = vpop.permute.xlu0 %3161
  %3163 = vset.pattern.permute.xlu0 0
  %3164 = vperm.xlu0 %3163, %v2993
  %v3165 = vpop.permute.xlu0 %3164
  %3166 = vset.pattern.permute.xlu0 0
  %3167 = vperm.xlu0 %3166, %v2994
  %v3168 = vpop.permute.xlu0 %3167
  %3169 = vset.pattern.permute.xlu0 0
  %3170 = vperm.xlu0 %3169, %v2995
  %v3171 = vpop.permute.xlu0 %3170
  %3172 = vset.pattern.permute.xlu0 0
  %3173 = vperm.xlu0 %3172, %v2996
  %v3174 = vpop.permute.xlu0 %3173
  %3175 = vset.pattern.permute.xlu0 0
  %3176 = vperm.xlu0 %3175, %v2997
  %v3177 = vpop.permute.xlu0 %3176
  %3178 = vset.pattern.permute.xlu0 0
  %3179 = vperm.xlu0 %3178, %v2998
  %v3180 = vpop.permute.xlu0 %3179
  %3181 = vset.pattern.permute.xlu0 0
  %3182 = vperm.xlu0 %3181, %v2999
  %v3183 = vpop.permute.xlu0 %3182
  %3184 = vset.pattern.permute.xlu0 0
  %3185 = vperm.xlu0 %3184, %v3000
  %v3186 = vpop.permute.xlu0 %3185
  %3187 = vset.pattern.permute.xlu0 0
  %3188 = vperm.xlu0 %3187, %v3001
  %v3189 = vpop.permute.xlu0 %3188
  %3190 = vset.pattern.permute.xlu0 0
  %3191 = vperm.xlu0 %3190, %v3002
  %v3192 = vpop.permute.xlu0 %3191
  %3193 = vset.pattern.permute.xlu0 0
  %3194 = vperm.xlu0 %3193, %v3003
  %v3195 = vpop.permute.xlu0 %3194
  %vm3196 = vcmp.eq.s32.totalorder %v3006, 1
  %vm3197 = vcmp.eq.s32.totalorder %v3009, 1
  %vm3198 = vcmp.eq.s32.totalorder %v3012, 1
  %vm3199 = vcmp.eq.s32.totalorder %v3015, 1
  %vm3200 = vcmp.eq.s32.totalorder %v3018, 1
  %vm3201 = vcmp.eq.s32.totalorder %v3021, 1
  %vm3202 = vcmp.eq.s32.totalorder %v3024, 1
  %vm3203 = vcmp.eq.s32.totalorder %v3027, 1
  %vm3204 = vcmp.eq.s32.totalorder %v3030, 1
  %vm3205 = vcmp.eq.s32.totalorder %v3033, 1
  %vm3206 = vcmp.eq.s32.totalorder %v3036, 1
  %vm3207 = vcmp.eq.s32.totalorder %v3039, 1
  %vm3208 = vcmp.eq.s32.totalorder %v3042, 1
  %vm3209 = vcmp.eq.s32.totalorder %v3045, 1
  %vm3210 = vcmp.eq.s32.totalorder %v3048, 1
  %vm3211 = vcmp.eq.s32.totalorder %v3051, 1
  %vm3212 = vcmp.eq.s32.totalorder %v3054, 1
  %vm3213 = vcmp.eq.s32.totalorder %v3057, 1
  %vm3214 = vcmp.eq.s32.totalorder %v3060, 1
  %vm3215 = vcmp.eq.s32.totalorder %v3063, 1
  %vm3216 = vcmp.eq.s32.totalorder %v3066, 1
  %vm3217 = vcmp.eq.s32.totalorder %v3069, 1
  %vm3218 = vcmp.eq.s32.totalorder %v3072, 1
  %vm3219 = vcmp.eq.s32.totalorder %v3075, 1
  %vm3220 = vcmp.eq.s32.totalorder %v3078, 1
  %vm3221 = vcmp.eq.s32.totalorder %v3081, 1
  %vm3222 = vcmp.eq.s32.totalorder %v3084, 1
  %vm3223 = vcmp.eq.s32.totalorder %v3087, 1
  %vm3224 = vcmp.eq.s32.totalorder %v3090, 1
  %vm3225 = vcmp.eq.s32.totalorder %v3093, 1
  %vm3226 = vcmp.eq.s32.totalorder %v3096, 1
  %vm3227 = vcmp.eq.s32.totalorder %v3099, 1
  %vm3228 = vcmp.eq.s32.totalorder %v3102, 1
  %vm3229 = vcmp.eq.s32.totalorder %v3105, 1
  %vm3230 = vcmp.eq.s32.totalorder %v3108, 1
  %vm3231 = vcmp.eq.s32.totalorder %v3111, 1
  %vm3232 = vcmp.eq.s32.totalorder %v3114, 1
  %vm3233 = vcmp.eq.s32.totalorder %v3117, 1
  %vm3234 = vcmp.eq.s32.totalorder %v3120, 1
  %vm3235 = vcmp.eq.s32.totalorder %v3123, 1
  %vm3236 = vcmp.eq.s32.totalorder %v3126, 1
  %vm3237 = vcmp.eq.s32.totalorder %v3129, 1
  %vm3238 = vcmp.eq.s32.totalorder %v3132, 1
  %vm3239 = vcmp.eq.s32.totalorder %v3135, 1
  %vm3240 = vcmp.eq.s32.totalorder %v3138, 1
  %vm3241 = vcmp.eq.s32.totalorder %v3141, 1
  %vm3242 = vcmp.eq.s32.totalorder %v3144, 1
  %vm3243 = vcmp.eq.s32.totalorder %v3147, 1
  %vm3244 = vcmp.eq.s32.totalorder %v3150, 1
  %vm3245 = vcmp.eq.s32.totalorder %v3153, 1
  %vm3246 = vcmp.eq.s32.totalorder %v3156, 1
  %vm3247 = vcmp.eq.s32.totalorder %v3159, 1
  %vm3248 = vcmp.eq.s32.totalorder %v3162, 1
  %vm3249 = vcmp.eq.s32.totalorder %v3165, 1
  %vm3250 = vcmp.eq.s32.totalorder %v3168, 1
  %vm3251 = vcmp.eq.s32.totalorder %v3171, 1
  %vm3252 = vcmp.eq.s32.totalorder %v3174, 1
  %vm3253 = vcmp.eq.s32.totalorder %v3177, 1
  %vm3254 = vcmp.eq.s32.totalorder %v3180, 1
  %vm3255 = vcmp.eq.s32.totalorder %v3183, 1
  %vm3256 = vcmp.eq.s32.totalorder %v3186, 1
  %vm3257 = vcmp.eq.s32.totalorder %v3189, 1
  %vm3258 = vcmp.eq.s32.totalorder %v3192, 1
  %vm3259 = vcmp.eq.s32.totalorder %v3195, 1
  %v3260 = vsel %vm3196, 0.0, %v2876
  %v3261 = vsel %vm3197, 0.0, %v2877
  %v3262 = vsel %vm3198, 0.0, %v2878
  %v3263 = vsel %vm3199, 0.0, %v2879
  %v3264 = vsel %vm3200, 0.0, %v2880
  %v3265 = vsel %vm3201, 0.0, %v2881
  %v3266 = vsel %vm3202, 0.0, %v2882
  %v3267 = vsel %vm3203, 0.0, %v2883
  %v3268 = vsel %vm3204, 0.0, %v2884
  %v3269 = vsel %vm3205, 0.0, %v2885
  %v3270 = vsel %vm3206, 0.0, %v2886
  %v3271 = vsel %vm3207, 0.0, %v2887
  %v3272 = vsel %vm3208, 0.0, %v2888
  %v3273 = vsel %vm3209, 0.0, %v2889
  %v3274 = vsel %vm3210, 0.0, %v2890
  %v3275 = vsel %vm3211, 0.0, %v2891
  %v3276 = vsel %vm3212, 0.0, %v2892
  %v3277 = vsel %vm3213, 0.0, %v2893
  %v3278 = vsel %vm3214, 0.0, %v2894
  %v3279 = vsel %vm3215, 0.0, %v2895
  %v3280 = vsel %vm3216, 0.0, %v2896
  %v3281 = vsel %vm3217, 0.0, %v2897
  %v3282 = vsel %vm3218, 0.0, %v2898
  %v3283 = vsel %vm3219, 0.0, %v2899
  %v3284 = vsel %vm3220, 0.0, %v2900
  %v3285 = vsel %vm3221, 0.0, %v2901
  %v3286 = vsel %vm3222, 0.0, %v2902
  %v3287 = vsel %vm3223, 0.0, %v2903
  %v3288 = vsel %vm3224, 0.0, %v2904
  %v3289 = vsel %vm3225, 0.0, %v2905
  %v3290 = vsel %vm3226, 0.0, %v2906
  %v3291 = vsel %vm3227, 0.0, %v2907
  %v3292 = vsel %vm3228, 0.0, %v2908
  %v3293 = vsel %vm3229, 0.0, %v2909
  %v3294 = vsel %vm3230, 0.0, %v2910
  %v3295 = vsel %vm3231, 0.0, %v2911
  %v3296 = vsel %vm3232, 0.0, %v2912
  %v3297 = vsel %vm3233, 0.0, %v2913
  %v3298 = vsel %vm3234, 0.0, %v2914
  %v3299 = vsel %vm3235, 0.0, %v2915
  %v3300 = vsel %vm3236, 0.0, %v2916
  %v3301 = vsel %vm3237, 0.0, %v2917
  %v3302 = vsel %vm3238, 0.0, %v2918
  %v3303 = vsel %vm3239, 0.0, %v2919
  %v3304 = vsel %vm3240, 0.0, %v2920
  %v3305 = vsel %vm3241, 0.0, %v2921
  %v3306 = vsel %vm3242, 0.0, %v2922
  %v3307 = vsel %vm3243, 0.0, %v2923
  %v3308 = vsel %vm3244, 0.0, %v2924
  %v3309 = vsel %vm3245, 0.0, %v2925
  %v3310 = vsel %vm3246, 0.0, %v2926
  %v3311 = vsel %vm3247, 0.0, %v2927
  %v3312 = vsel %vm3248, 0.0, %v2928
  %v3313 = vsel %vm3249, 0.0, %v2929
  %v3314 = vsel %vm3250, 0.0, %v2930
  %v3315 = vsel %vm3251, 0.0, %v2931
  %v3316 = vsel %vm3252, 0.0, %v2932
  %v3317 = vsel %vm3253, 0.0, %v2933
  %v3318 = vsel %vm3254, 0.0, %v2934
  %v3319 = vsel %vm3255, 0.0, %v2935
  %v3320 = vsel %vm3256, 0.0, %v2936
  %v3321 = vsel %vm3257, 0.0, %v2937
  %v3322 = vsel %vm3258, 0.0, %v2938
  %v3323 = vsel %vm3259, 0.0, %v2939
  %v3324 = vpack.c.bf16 %v3261, %v3260
  %v3325 = vpack.c.bf16 %v3263, %v3262
  %v3326 = vpack.c.bf16 %v3265, %v3264
  %v3327 = vpack.c.bf16 %v3267, %v3266
  %v3328 = vpack.c.bf16 %v3269, %v3268
  %v3329 = vpack.c.bf16 %v3271, %v3270
  %v3330 = vpack.c.bf16 %v3273, %v3272
  %v3331 = vpack.c.bf16 %v3275, %v3274
  %v3332 = vpack.c.bf16 %v3277, %v3276
  %v3333 = vpack.c.bf16 %v3279, %v3278
  %v3334 = vpack.c.bf16 %v3281, %v3280
  %v3335 = vpack.c.bf16 %v3283, %v3282
  %v3336 = vpack.c.bf16 %v3285, %v3284
  %v3337 = vpack.c.bf16 %v3287, %v3286
  %v3338 = vpack.c.bf16 %v3289, %v3288
  %v3339 = vpack.c.bf16 %v3291, %v3290
  %v3340 = vpack.c.bf16 %v3293, %v3292
  %v3341 = vpack.c.bf16 %v3295, %v3294
  %v3342 = vpack.c.bf16 %v3297, %v3296
  %v3343 = vpack.c.bf16 %v3299, %v3298
  %v3344 = vpack.c.bf16 %v3301, %v3300
  %v3345 = vpack.c.bf16 %v3303, %v3302
  %v3346 = vpack.c.bf16 %v3305, %v3304
  %v3347 = vpack.c.bf16 %v3307, %v3306
  %v3348 = vpack.c.bf16 %v3309, %v3308
  %v3349 = vpack.c.bf16 %v3311, %v3310
  %v3350 = vpack.c.bf16 %v3313, %v3312
  %v3351 = vpack.c.bf16 %v3315, %v3314
  %v3352 = vpack.c.bf16 %v3317, %v3316
  %v3353 = vpack.c.bf16 %v3319, %v3318
  %v3354 = vpack.c.bf16 %v3321, %v3320
  %v3355 = vpack.c.bf16 %v3323, %v3322
  %v3388 = vunpack.c.l.b16 %v3324
  %v3389 = vunpack.c.h.b16 %v3324
  %v3390 = vunpack.c.l.b16 %v3325
  %v3391 = vunpack.c.h.b16 %v3325
  %v3392 = vunpack.c.l.b16 %v3326
  %v3393 = vunpack.c.h.b16 %v3326
  %v3394 = vunpack.c.l.b16 %v3327
  %v3395 = vunpack.c.h.b16 %v3327
  %v3396 = vunpack.c.l.b16 %v3328
  %v3397 = vunpack.c.h.b16 %v3328
  %v3398 = vunpack.c.l.b16 %v3329
  %v3399 = vunpack.c.h.b16 %v3329
  %v3400 = vunpack.c.l.b16 %v3330
  %v3401 = vunpack.c.h.b16 %v3330
  %v3402 = vunpack.c.l.b16 %v3331
  %v3403 = vunpack.c.h.b16 %v3331
  %v3404 = vunpack.c.l.b16 %v3332
  %v3405 = vunpack.c.h.b16 %v3332
  %v3406 = vunpack.c.l.b16 %v3333
  %v3407 = vunpack.c.h.b16 %v3333
  %v3408 = vunpack.c.l.b16 %v3334
  %v3409 = vunpack.c.h.b16 %v3334
  %v3410 = vunpack.c.l.b16 %v3335
  %v3411 = vunpack.c.h.b16 %v3335
  %v3412 = vunpack.c.l.b16 %v3336
  %v3413 = vunpack.c.h.b16 %v3336
  %v3414 = vunpack.c.l.b16 %v3337
  %v3415 = vunpack.c.h.b16 %v3337
  %v3416 = vunpack.c.l.b16 %v3338
  %v3417 = vunpack.c.h.b16 %v3338
  %v3418 = vunpack.c.l.b16 %v3339
  %v3419 = vunpack.c.h.b16 %v3339
  %v3420 = vunpack.c.l.b16 %v3340
  %v3421 = vunpack.c.h.b16 %v3340
  %v3422 = vunpack.c.l.b16 %v3341
  %v3423 = vunpack.c.h.b16 %v3341
  %v3424 = vunpack.c.l.b16 %v3342
  %v3425 = vunpack.c.h.b16 %v3342
  %v3426 = vunpack.c.l.b16 %v3343
  %v3427 = vunpack.c.h.b16 %v3343
  %v3428 = vunpack.c.l.b16 %v3344
  %v3429 = vunpack.c.h.b16 %v3344
  %v3430 = vunpack.c.l.b16 %v3345
  %v3431 = vunpack.c.h.b16 %v3345
  %v3432 = vunpack.c.l.b16 %v3346
  %v3433 = vunpack.c.h.b16 %v3346
  %v3434 = vunpack.c.l.b16 %v3347
  %v3435 = vunpack.c.h.b16 %v3347
  %v3436 = vunpack.c.l.b16 %v3348
  %v3437 = vunpack.c.h.b16 %v3348
  %v3438 = vunpack.c.l.b16 %v3349
  %v3439 = vunpack.c.h.b16 %v3349
  %v3440 = vunpack.c.l.b16 %v3350
  %v3441 = vunpack.c.h.b16 %v3350
  %v3442 = vunpack.c.l.b16 %v3351
  %v3443 = vunpack.c.h.b16 %v3351
  %v3444 = vunpack.c.l.b16 %v3352
  %v3445 = vunpack.c.h.b16 %v3352
  %v3446 = vunpack.c.l.b16 %v3353
  %v3447 = vunpack.c.h.b16 %v3353
  %v3448 = vunpack.c.l.b16 %v3354
  %v3449 = vunpack.c.h.b16 %v3354
  %v3450 = vunpack.c.l.b16 %v3355
  %v3451 = vunpack.c.h.b16 %v3355
  %v3452 = vpack.c.b16 %v3388, %v3388
  %v3453 = vpack.c.b16 %v3389, %v3389
  %v3454 = vpack.c.b16 %v3390, %v3390
  %v3455 = vpack.c.b16 %v3391, %v3391
  %v3456 = vpack.c.b16 %v3392, %v3392
  %v3457 = vpack.c.b16 %v3393, %v3393
  %v3458 = vpack.c.b16 %v3394, %v3394
  %v3459 = vpack.c.b16 %v3395, %v3395
  %v3460 = vpack.c.b16 %v3396, %v3396
  %v3461 = vpack.c.b16 %v3397, %v3397
  %v3462 = vpack.c.b16 %v3398, %v3398
  %v3463 = vpack.c.b16 %v3399, %v3399
  %v3464 = vpack.c.b16 %v3400, %v3400
  %v3465 = vpack.c.b16 %v3401, %v3401
  %v3466 = vpack.c.b16 %v3402, %v3402
  %v3467 = vpack.c.b16 %v3403, %v3403
  %v3468 = vpack.c.b16 %v3404, %v3404
  %v3469 = vpack.c.b16 %v3405, %v3405
  %v3470 = vpack.c.b16 %v3406, %v3406
  %v3471 = vpack.c.b16 %v3407, %v3407
  %v3472 = vpack.c.b16 %v3408, %v3408
  %v3473 = vpack.c.b16 %v3409, %v3409
  %v3474 = vpack.c.b16 %v3410, %v3410
  %v3475 = vpack.c.b16 %v3411, %v3411
  %v3476 = vpack.c.b16 %v3412, %v3412
  %v3477 = vpack.c.b16 %v3413, %v3413
  %v3478 = vpack.c.b16 %v3414, %v3414
  %v3479 = vpack.c.b16 %v3415, %v3415
  %v3480 = vpack.c.b16 %v3416, %v3416
  %v3481 = vpack.c.b16 %v3417, %v3417
  %v3482 = vpack.c.b16 %v3418, %v3418
  %v3483 = vpack.c.b16 %v3419, %v3419
  %v3484 = vpack.c.b16 %v3420, %v3420
  %v3485 = vpack.c.b16 %v3421, %v3421
  %v3486 = vpack.c.b16 %v3422, %v3422
  %v3487 = vpack.c.b16 %v3423, %v3423
  %v3488 = vpack.c.b16 %v3424, %v3424
  %v3489 = vpack.c.b16 %v3425, %v3425
  %v3490 = vpack.c.b16 %v3426, %v3426
  %v3491 = vpack.c.b16 %v3427, %v3427
  %v3492 = vpack.c.b16 %v3428, %v3428
  %v3493 = vpack.c.b16 %v3429, %v3429
  %v3494 = vpack.c.b16 %v3430, %v3430
  %v3495 = vpack.c.b16 %v3431, %v3431
  %v3496 = vpack.c.b16 %v3432, %v3432
  %v3497 = vpack.c.b16 %v3433, %v3433
  %v3498 = vpack.c.b16 %v3434, %v3434
  %v3499 = vpack.c.b16 %v3435, %v3435
  %v3500 = vpack.c.b16 %v3436, %v3436
  %v3501 = vpack.c.b16 %v3437, %v3437
  %v3502 = vpack.c.b16 %v3438, %v3438
  %v3503 = vpack.c.b16 %v3439, %v3439
  %v3504 = vpack.c.b16 %v3440, %v3440
  %v3505 = vpack.c.b16 %v3441, %v3441
  %v3506 = vpack.c.b16 %v3442, %v3442
  %v3507 = vpack.c.b16 %v3443, %v3443
  %v3508 = vpack.c.b16 %v3444, %v3444
  %v3509 = vpack.c.b16 %v3445, %v3445
  %v3510 = vpack.c.b16 %v3446, %v3446
  %v3511 = vpack.c.b16 %v3447, %v3447
  %v3512 = vpack.c.b16 %v3448, %v3448
  %v3513 = vpack.c.b16 %v3449, %v3449
  %v3514 = vpack.c.b16 %v3450, %v3450
  %v3515 = vpack.c.b16 %v3451, %v3451
  %3580 = vst [vmem:[%s4] sm:$0xf] %v3452
  %3581 = vst [vmem:[%s4 + $0x4] sm:$0xf] %v3453
  %3582 = vst [vmem:[%s4 + $0x8] sm:$0xf] %v3454
  %3583 = vst [vmem:[%s4 + $0xc] sm:$0xf] %v3455
  %3584 = vst [vmem:[%s4 + $0x10] sm:$0xf] %v3456
  %3585 = vst [vmem:[%s4 + $0x14] sm:$0xf] %v3457
  %3586 = vst [vmem:[%s4 + $0x18] sm:$0xf] %v3458
  %3587 = vst [vmem:[%s4 + $0x1c] sm:$0xf] %v3459
  %3588 = vst [vmem:[%s4 + $0x20] sm:$0xf] %v3460
  %3589 = vst [vmem:[%s4 + $0x24] sm:$0xf] %v3461
  %3590 = vst [vmem:[%s4 + $0x28] sm:$0xf] %v3462
  %3591 = vst [vmem:[%s4 + $0x2c] sm:$0xf] %v3463
  %3592 = vst [vmem:[%s4 + $0x30] sm:$0xf] %v3464
  %3593 = vst [vmem:[%s4 + $0x34] sm:$0xf] %v3465
  %3594 = vst [vmem:[%s4 + $0x38] sm:$0xf] %v3466
  %3595 = vst [vmem:[%s4 + $0x3c] sm:$0xf] %v3467
  %3596 = vst [vmem:[%s4 + $0x40] sm:$0xf] %v3468
  %3597 = vst [vmem:[%s4 + $0x44] sm:$0xf] %v3469
  %3598 = vst [vmem:[%s4 + $0x48] sm:$0xf] %v3470
  %3599 = vst [vmem:[%s4 + $0x4c] sm:$0xf] %v3471
  %3600 = vst [vmem:[%s4 + $0x50] sm:$0xf] %v3472
  %3601 = vst [vmem:[%s4 + $0x54] sm:$0xf] %v3473
  %3602 = vst [vmem:[%s4 + $0x58] sm:$0xf] %v3474
  %3603 = vst [vmem:[%s4 + $0x5c] sm:$0xf] %v3475
  %3604 = vst [vmem:[%s4 + $0x60] sm:$0xf] %v3476
  %3605 = vst [vmem:[%s4 + $0x64] sm:$0xf] %v3477
  %3606 = vst [vmem:[%s4 + $0x68] sm:$0xf] %v3478
  %3607 = vst [vmem:[%s4 + $0x6c] sm:$0xf] %v3479
  %3608 = vst [vmem:[%s4 + $0x70] sm:$0xf] %v3480
  %3609 = vst [vmem:[%s4 + $0x74] sm:$0xf] %v3481
  %3610 = vst [vmem:[%s4 + $0x78] sm:$0xf] %v3482
  %3611 = vst [vmem:[%s4 + $0x7c] sm:$0xf] %v3483
  %3612 = vst [vmem:[%s4 + $0x80] sm:$0xf] %v3484
  %3613 = vst [vmem:[%s4 + $0x84] sm:$0xf] %v3485
  %3614 = vst [vmem:[%s4 + $0x88] sm:$0xf] %v3486
  %3615 = vst [vmem:[%s4 + $0x8c] sm:$0xf] %v3487
  %3616 = vst [vmem:[%s4 + $0x90] sm:$0xf] %v3488
  %3617 = vst [vmem:[%s4 + $0x94] sm:$0xf] %v3489
  %3618 = vst [vmem:[%s4 + $0x98] sm:$0xf] %v3490
  %3619 = vst [vmem:[%s4 + $0x9c] sm:$0xf] %v3491
  %3620 = vst [vmem:[%s4 + $0xa0] sm:$0xf] %v3492
  %3621 = vst [vmem:[%s4 + $0xa4] sm:$0xf] %v3493
  %3622 = vst [vmem:[%s4 + $0xa8] sm:$0xf] %v3494
  %3623 = vst [vmem:[%s4 + $0xac] sm:$0xf] %v3495
  %3624 = vst [vmem:[%s4 + $0xb0] sm:$0xf] %v3496
  %3625 = vst [vmem:[%s4 + $0xb4] sm:$0xf] %v3497
  %3626 = vst [vmem:[%s4 + $0xb8] sm:$0xf] %v3498
  %3627 = vst [vmem:[%s4 + $0xbc] sm:$0xf] %v3499
  %3628 = vst [vmem:[%s4 + $0xc0] sm:$0xf] %v3500
  %3629 = vst [vmem:[%s4 + $0xc4] sm:$0xf] %v3501
  %3630 = vst [vmem:[%s4 + $0xc8] sm:$0xf] %v3502
  %3631 = vst [vmem:[%s4 + $0xcc] sm:$0xf] %v3503
  %3632 = vst [vmem:[%s4 + $0xd0] sm:$0xf] %v3504
  %3633 = vst [vmem:[%s4 + $0xd4] sm:$0xf] %v3505
  %3634 = vst [vmem:[%s4 + $0xd8] sm:$0xf] %v3506
  %3635 = vst [vmem:[%s4 + $0xdc] sm:$0xf] %v3507
  %3636 = vst [vmem:[%s4 + $0xe0] sm:$0xf] %v3508
  %3637 = vst [vmem:[%s4 + $0xe4] sm:$0xf] %v3509
  %3638 = vst [vmem:[%s4 + $0xe8] sm:$0xf] %v3510
  %3639 = vst [vmem:[%s4 + $0xec] sm:$0xf] %v3511
  %3640 = vst [vmem:[%s4 + $0xf0] sm:$0xf] %v3512
  %3641 = vst [vmem:[%s4 + $0xf4] sm:$0xf] %v3513
  %3642 = vst [vmem:[%s4 + $0xf8] sm:$0xf] %v3514
  %3643 = vst [vmem:[%s4 + $0xfc] sm:$0xf] %v3515
  // Predicated region
  $region18: #{partial_conv_net.19} parent=0 // pred_check
    _
  $region19: #{partial_conv_net.19} parent=0 // pred_check_branch
    %3645 = sbr.rel (0) target = $region21
  $region20: #{partial_conv_net.19} parent=0 // pred_region
    _
  $region21: #{partial_conv_net.19} parent=0 // pred_fallthru
    _
  // Predicated region
  $region22: #{partial_conv_net.19} parent=0 // pred_check
    _
  $region23: #{partial_conv_net.19} parent=0 // pred_check_branch
    %3647 = sbr.rel (0) target = $region25
  $region24: #{partial_conv_net.19} parent=0 // pred_region
    _
  $region25: #{partial_conv_net.19} parent=0 // pred_fallthru
    _

</llo_original>
